<compile_context>
chip_gen: v6e
topology: v6e:2x2x1
jax: 0.10.0
libtpu: 0.0.40
codegen_flags: <defaults>
</compile_context>

<pallas_src>
import functools
import math

import jax
import jax.numpy as jnp
from jax.experimental import pallas as pl
from jax.experimental.pallas import tpu as pltpu

block_size = 128
n_embd = 384
n_head = 4
n_layer = 4
head_size = n_embd // n_head       # 96 (true head size; its 1/sqrt scale is folded into wqkv)
head_pad = 128                     # padded head size for lane-dense MXU tiles
EPS = 1e-5                         # PyTorch nn.LayerNorm default eps

# EUP approximate reciprocal in the softmax denominator (~1e-3 rel. error).
# Set to False for bit-closer parity with the PyTorch reference.
USE_APPROX_RECIPROCAL = True


def _layernorm(x, gamma, beta):
    mu = jnp.mean(x, axis=-1, keepdims=True)
    var = jnp.mean((x - mu) ** 2, axis=-1, keepdims=True)
    return (x - mu) * jax.lax.rsqrt(var + EPS) * gamma + beta


# ----------------------------------------------------------------------------
# Fused kernel: all transformer blocks + final LN + lm_head
# grid = (batch_tile, layer); activations carried in VMEM scratch over layers.
# ----------------------------------------------------------------------------
def gpt_stack_kernel(x_ref, bias_ref, g1_ref, bln1_ref, wqkv_ref, wo_ref, bo_ref,
                     g2_ref, bln2_ref, w1_ref, b1_ref, w2_ref, b2_ref,
                     gf_ref, bf_ref, wlm_ref, blm_ref,
                     logits_ref, act_ref):
    l = pl.program_id(1)
    HP = head_pad

    # Layer 0 of this batch tile: load the embedded tokens into resident scratch.
    @pl.when(l == 0)
    def _():
        act_ref[...] = x_ref[0]

    x = act_ref[...]                       # (T, C) fp32, carried across layers
    bias = bias_ref[...]                   # (T, T) additive causal mask (0 / -1e30)

    # ---- multi-head causal self-attention (pre-LN, residual) ----
    xn = _layernorm(x, g1_ref[l], bln1_ref[l])
    # fused QKV projection: (T, C) @ (C, 3*H*HP); Q columns pre-scaled by 1/sqrt(hs)
    qkv = jnp.dot(xn.astype(jnp.bfloat16), wqkv_ref[l],
                  preferred_element_type=jnp.float32)
    qkv16 = qkv.astype(jnp.bfloat16)       # single bf16 cast, sliced per head below

    sa = None
    for h in range(n_head):                # static unrolled loop (4 heads)
        q = qkv16[:, h * HP:(h + 1) * HP]
        k = qkv16[:, (n_head + h) * HP:(n_head + h + 1) * HP]
        v = qkv16[:, (2 * n_head + h) * HP:(2 * n_head + h + 1) * HP]
        att = jnp.dot(q, k.T, preferred_element_type=jnp.float32) + bias
        att = att - jnp.max(att, axis=-1, keepdims=True)
        p = jnp.exp(att)
        denom = jnp.sum(p, axis=-1, keepdims=True)
        if USE_APPROX_RECIPROCAL:
            p = p * pl.reciprocal(denom, approx=True)
        else:
            p = p / denom
        head = jnp.dot(p.astype(jnp.bfloat16), v,
                       preferred_element_type=jnp.float32)          # (T, HP)
        # accumulate through the output projection (no concat buffer)
        contrib = jnp.dot(head.astype(jnp.bfloat16),
                          wo_ref[l, pl.ds(h * HP, HP), :],
                          preferred_element_type=jnp.float32)
        sa = contrib if sa is None else sa + contrib
    x = x + sa + bo_ref[l]

    # ---- feed-forward (pre-LN, residual): Linear(C,4C) -> ReLU -> Linear(4C,C)
    xn2 = _layernorm(x, g2_ref[l], bln2_ref[l])
    h1 = jnp.dot(xn2.astype(jnp.bfloat16), w1_ref[l],
                 preferred_element_type=jnp.float32) + b1_ref[l]
    h1 = jnp.maximum(h1, 0.0)
    ff = jnp.dot(h1.astype(jnp.bfloat16), w2_ref[l],
                 preferred_element_type=jnp.float32) + b2_ref[l]
    x = x + ff
    act_ref[...] = x

    # ---- final LayerNorm + lm_head (padded vocab) on the last layer ----
    @pl.when(l == pl.num_programs(1) - 1)
    def _():
        xf = _layernorm(x, gf_ref[...], bf_ref[...])
        logits_ref[0] = jnp.dot(xf.astype(jnp.bfloat16), wlm_ref[...],
                                preferred_element_type=jnp.float32) + blm_ref[...]


# ----------------------------------------------------------------------------
# BlockSpec helpers
# ----------------------------------------------------------------------------
def _const_spec(shape):
    """Full-extent block whose index never changes -> DMA'd once, VMEM-resident."""
    nd = len(shape)
    return pl.BlockSpec(tuple(shape), lambda b, l, _nd=nd: (0,) * _nd)


_COMPILER_PARAMS = pltpu.CompilerParams(
    dimension_semantics=("parallel", "arbitrary"),   # batch tiles parallel, layers sequential
    vmem_limit_bytes=48 << 20,                       # fits v7x's 64 MiB VMEM
)


# ----------------------------------------------------------------------------
# Forward pass: (logits, loss) with targets=None -> loss is None
# ----------------------------------------------------------------------------
def gpt_forward(index, params):
    B, T = index.shape
    C = n_embd
    Vp = params["w_lm"].shape[1]

    # Embedding gather + position add in plain JAX (XLA fuses this).
    tok = jnp.take(params["tok_table"], index, axis=0)          # (B, T, C)
    pos = params["pos_table"][:T]                               # (T, C)
    x = (tok + pos[None, :, :]).astype(jnp.float32)             # (B, T, C)

    # Precomputed additive causal mask: 0 on/below diagonal, -1e30 above.
    row = jax.lax.broadcasted_iota(jnp.int32, (T, T), 0)
    col = jax.lax.broadcasted_iota(jnp.int32, (T, T), 1)
    bias = jnp.where(col <= row, 0.0, -1e30).astype(jnp.float32)

    args = (x, bias,
            params["g1"], params["bln1"], params["wqkv"], params["wo"],
            params["bo"], params["g2"], params["bln2"],
            params["w1"], params["b1"], params["w2"], params["b2"],
            params["gf"], params["bf"], params["w_lm"], params["b_lm"])

    in_specs = [
        pl.BlockSpec((1, T, C), lambda b, l: (b, 0, 0)),        # per-batch-tile x
        _const_spec(bias.shape),
        _const_spec(params["g1"].shape),
        _const_spec(params["bln1"].shape),
        _const_spec(params["wqkv"].shape),
        _const_spec(params["wo"].shape),
        _const_spec(params["bo"].shape),
        _const_spec(params["g2"].shape),
        _const_spec(params["bln2"].shape),
        _const_spec(params["w1"].shape),
        _const_spec(params["b1"].shape),
        _const_spec(params["w2"].shape),
        _const_spec(params["b2"].shape),
        _const_spec(params["gf"].shape),
        _const_spec(params["bf"].shape),
        _const_spec(params["w_lm"].shape),
        _const_spec(params["b_lm"].shape),
    ]

    logits_pad = pl.pallas_call(
        gpt_stack_kernel,
        out_shape=jax.ShapeDtypeStruct((B, T, Vp), jnp.float32),
        grid=(B, n_layer),
        in_specs=in_specs,
        out_specs=pl.BlockSpec((1, T, Vp), lambda b, l: (b, 0, 0)),
        scratch_shapes=[pltpu.VMEM((T, C), jnp.float32)],
        compiler_params=_COMPILER_PARAMS,
    )(*args)

    V = params["vocab_size"]
    logits = logits_pad[:, :, :V]                               # strip vocab padding
    # TODO(synk): cross-entropy loss path (targets != None) not implemented here.
    return logits, None


# ----------------------------------------------------------------------------
# Parameter init (deterministic, mirrors the PyTorch _init_weights scheme).
# Weights are bf16 (fp32 accumulation); attention scale folded into W_q.
# ----------------------------------------------------------------------------
def init_params(key, vocab_size):
    C, H, HS, HP, L = n_embd, n_head, head_size, head_pad, n_layer
    Vp = ((vocab_size + 127) // 128) * 128

    def nrm(k, shape):
        return 0.02 * jax.random.normal(k, shape, dtype=jnp.float32)

    keys = iter(jax.random.split(key, 2 + 4 * L + 1))

    tok_table = nrm(next(keys), (vocab_size, C))
    pos_table = nrm(next(keys), (block_size, C))

    wqkv_l, wo_l, w1_l, w2_l = [], [], [], []
    for _ in range(L):
        qkv_raw = nrm(next(keys), (C, 3, H, HS))                 # true head size
        # Fold the 1/sqrt(head_size) attention scale into the Q projection
        # (mathematically identical to scaling the attention scores).
        qkv_raw = qkv_raw.at[:, 0, :, :].multiply(1.0 / math.sqrt(HS))
        qkv_pad = jnp.zeros((C, 3, H, HP), jnp.float32).at[..., :HS].set(qkv_raw)
        wqkv_l.append(qkv_pad.reshape(C, 3 * H * HP))

        wo_raw = nrm(next(keys), (H, HS, C))
        wo_pad = jnp.zeros((H, HP, C), jnp.float32).at[:, :HS, :].set(wo_raw)
        wo_l.append(wo_pad.reshape(H * HP, C))

        w1_l.append(nrm(next(keys), (C, 4 * C)))
        w2_l.append(nrm(next(keys), (4 * C, C)))

    w_lm_raw = nrm(next(keys), (C, vocab_size))
    w_lm = jnp.zeros((C, Vp), jnp.float32).at[:, :vocab_size].set(w_lm_raw)

    return {
        "vocab_size": vocab_size,
        "tok_table": tok_table,
        "pos_table": pos_table,
        # per-layer weights stacked along axis 0 (kept VMEM-resident by the kernel)
        "wqkv": jnp.stack(wqkv_l).astype(jnp.bfloat16),          # (L, C, 3*H*HP)
        "wo":   jnp.stack(wo_l).astype(jnp.bfloat16),            # (L, H*HP, C)
        "bo":   jnp.zeros((L, 1, C), jnp.float32),
        "g1":   jnp.ones((L, 1, C), jnp.float32),
        "bln1": jnp.zeros((L, 1, C), jnp.float32),
        "g2":   jnp.ones((L, 1, C), jnp.float32),
        "bln2": jnp.zeros((L, 1, C), jnp.float32),
        "w1":   jnp.stack(w1_l).astype(jnp.bfloat16),            # (L, C, 4C)
        "b1":   jnp.zeros((L, 1, 4 * C), jnp.float32),
        "w2":   jnp.stack(w2_l).astype(jnp.bfloat16),            # (L, 4C, C)
        "b2":   jnp.zeros((L, 1, C), jnp.float32),
        "gf":   jnp.ones((1, C), jnp.float32),
        "bf":   jnp.zeros((1, C), jnp.float32),
        "w_lm": w_lm.astype(jnp.bfloat16),                       # (C, Vp)
        "b_lm": jnp.zeros((1, Vp), jnp.float32),
    }


if __name__ == "__main__":
    vocab_size = 65
    B, T = 2, 8

    key = jax.random.PRNGKey(0)
    pkey, ikey = jax.random.split(key)
    params = init_params(pkey, vocab_size)
    index = jax.random.randint(ikey, (B, T), 0, vocab_size, dtype=jnp.int32)

    logits, loss = gpt_forward(index, params)
    logits = jax.block_until_ready(logits)

    assert logits.shape == (B, T, vocab_size), logits.shape
    assert logits.dtype == jnp.float32
    assert bool(jnp.all(jnp.isfinite(logits)))
    print("KERNEL_OK")
</pallas_src>

<mosaic_0001>
module attributes {stable_mosaic.version = 11 : i64} {
  func.func @gpt_stack_kernel(%arg0: i32, %arg1: i32, %arg2: memref<1x8x384xf32, #tpu.memory_space<vmem>>, %arg3: memref<8x8xf32, #tpu.memory_space<vmem>>, %arg4: memref<4x1x384xf32, #tpu.memory_space<vmem>>, %arg5: memref<4x1x384xf32, #tpu.memory_space<vmem>>, %arg6: memref<4x384x1536xbf16, #tpu.memory_space<vmem>>, %arg7: memref<4x512x384xbf16, #tpu.memory_space<vmem>>, %arg8: memref<4x1x384xf32, #tpu.memory_space<vmem>>, %arg9: memref<4x1x384xf32, #tpu.memory_space<vmem>>, %arg10: memref<4x1x384xf32, #tpu.memory_space<vmem>>, %arg11: memref<4x384x1536xbf16, #tpu.memory_space<vmem>>, %arg12: memref<4x1x1536xf32, #tpu.memory_space<vmem>>, %arg13: memref<4x1536x384xbf16, #tpu.memory_space<vmem>>, %arg14: memref<4x1x384xf32, #tpu.memory_space<vmem>>, %arg15: memref<1x384xf32, #tpu.memory_space<vmem>>, %arg16: memref<1x384xf32, #tpu.memory_space<vmem>>, %arg17: memref<384x128xbf16, #tpu.memory_space<vmem>>, %arg18: memref<1x128xf32, #tpu.memory_space<vmem>>, %arg19: memref<1x8x128xf32, #tpu.memory_space<vmem>>, %arg20: memref<8x384xf32, #tpu.memory_space<vmem>>) attributes {dimension_semantics = [#tpu.dimension_semantics<parallel>, #tpu.dimension_semantics<arbitrary>], iteration_bounds = array<i64: 2, 4>, scalar_prefetch = 0 : i64, scratch_operands = 1 : i64, tpu.core_type = #tpu.core_type<tc>, window_params = [{transform_indices = @transform_0, window_bounds = array<i64: 1, 8, 384>}, {pipeline_mode = #tpu.pipeline_mode<synchronous>, transform_indices = @transform_1, window_bounds = array<i64: 8, 8>}, {pipeline_mode = #tpu.pipeline_mode<synchronous>, transform_indices = @transform_2, window_bounds = array<i64: 4, 1, 384>}, {pipeline_mode = #tpu.pipeline_mode<synchronous>, transform_indices = @transform_3, window_bounds = array<i64: 4, 1, 384>}, {pipeline_mode = #tpu.pipeline_mode<synchronous>, transform_indices = @transform_4, window_bounds = array<i64: 4, 384, 1536>}, {pipeline_mode = #tpu.pipeline_mode<synchronous>, transform_indices = @transform_5, window_bounds = array<i64: 4, 512, 384>}, {pipeline_mode = #tpu.pipeline_mode<synchronous>, transform_indices = @transform_6, window_bounds = array<i64: 4, 1, 384>}, {pipeline_mode = #tpu.pipeline_mode<synchronous>, transform_indices = @transform_7, window_bounds = array<i64: 4, 1, 384>}, {pipeline_mode = #tpu.pipeline_mode<synchronous>, transform_indices = @transform_8, window_bounds = array<i64: 4, 1, 384>}, {pipeline_mode = #tpu.pipeline_mode<synchronous>, transform_indices = @transform_9, window_bounds = array<i64: 4, 384, 1536>}, {pipeline_mode = #tpu.pipeline_mode<synchronous>, transform_indices = @transform_10, window_bounds = array<i64: 4, 1, 1536>}, {pipeline_mode = #tpu.pipeline_mode<synchronous>, transform_indices = @transform_11, window_bounds = array<i64: 4, 1536, 384>}, {pipeline_mode = #tpu.pipeline_mode<synchronous>, transform_indices = @transform_12, window_bounds = array<i64: 4, 1, 384>}, {pipeline_mode = #tpu.pipeline_mode<synchronous>, transform_indices = @transform_13, window_bounds = array<i64: 1, 384>}, {pipeline_mode = #tpu.pipeline_mode<synchronous>, transform_indices = @transform_14, window_bounds = array<i64: 1, 384>}, {pipeline_mode = #tpu.pipeline_mode<synchronous>, transform_indices = @transform_15, window_bounds = array<i64: 384, 128>}, {pipeline_mode = #tpu.pipeline_mode<synchronous>, transform_indices = @transform_16, window_bounds = array<i64: 1, 128>}, {transform_indices = @transform_17, window_bounds = array<i64: 1, 8, 128>}]} {
    %c0_i32 = arith.constant 0 : i32
    %0 = arith.cmpi eq, %arg1, %c0_i32 : i32
    %1 = arith.extui %0 : i1 to i32
    %c0_i32_0 = arith.constant 0 : i32
    %2 = arith.cmpi ne, %1, %c0_i32_0 : i32
    scf.if %2 {
      %c0_65 = arith.constant 0 : index
      %c0_66 = arith.constant 0 : index
      %c0_67 = arith.constant 0 : index
      %195 = vector.load %arg2[%c0_65, %c0_66, %c0_67] : memref<1x8x384xf32, #tpu.memory_space<vmem>>, vector<1x8x384xf32>
      %196 = vector.shape_cast %195 : vector<1x8x384xf32> to vector<8x384xf32>
      %c0_68 = arith.constant 0 : index
      %c0_69 = arith.constant 0 : index
      %197 = vector.load %arg20[%c0_68, %c0_69] : memref<8x384xf32, #tpu.memory_space<vmem>>, vector<8x384xf32>
      tpu.vector_store %arg20[%c0_68, %c0_69], %196 {strides = array<i32>} : memref<8x384xf32, #tpu.memory_space<vmem>>, vector<8x384xf32>,
    } else {
    }
    %c0 = arith.constant 0 : index
    %c0_1 = arith.constant 0 : index
    %3 = vector.load %arg20[%c0, %c0_1] : memref<8x384xf32, #tpu.memory_space<vmem>>, vector<8x384xf32>
    %c0_2 = arith.constant 0 : index
    %c0_3 = arith.constant 0 : index
    %4 = vector.load %arg3[%c0_2, %c0_3] : memref<8x8xf32, #tpu.memory_space<vmem>>, vector<8x8xf32>
    %5 = arith.index_cast %arg1 : i32 to index
    %c0_4 = arith.constant 0 : index
    %c0_5 = arith.constant 0 : index
    %6 = vector.load %arg4[%5, %c0_4, %c0_5] : memref<4x1x384xf32, #tpu.memory_space<vmem>>, vector<1x1x384xf32>
    %7 = vector.shape_cast %6 : vector<1x1x384xf32> to vector<1x384xf32>
    %8 = arith.index_cast %arg1 : i32 to index
    %c0_6 = arith.constant 0 : index
    %c0_7 = arith.constant 0 : index
    %9 = vector.load %arg5[%8, %c0_6, %c0_7] : memref<4x1x384xf32, #tpu.memory_space<vmem>>, vector<1x1x384xf32>
    %10 = vector.shape_cast %9 : vector<1x1x384xf32> to vector<1x384xf32>
    %cst = arith.constant dense<0.000000e+00> : vector<8xf32>
    %11 = vector.multi_reduction <add>, %3, %cst [1] : vector<8x384xf32> to vector<8xf32>
    %12 = vector.shape_cast %11 : vector<8xf32> to vector<8x1xf32>
    %cst_8 = arith.constant 3.840000e+02 : f32
    %13 = vector.broadcast %cst_8 : f32 to vector<8x1xf32>
    %14 = arith.divf %12, %13 : vector<8x1xf32>
    %15 = vector.broadcast %14 : vector<8x1xf32> to vector<8x384xf32>
    %16 = arith.subf %3, %15 : vector<8x384xf32>
    %17 = arith.mulf %16, %16 : vector<8x384xf32>
    %cst_9 = arith.constant dense<0.000000e+00> : vector<8xf32>
    %18 = vector.multi_reduction <add>, %17, %cst_9 [1] : vector<8x384xf32> to vector<8xf32>
    %19 = vector.shape_cast %18 : vector<8xf32> to vector<8x1xf32>
    %cst_10 = arith.constant 3.840000e+02 : f32
    %20 = vector.broadcast %cst_10 : f32 to vector<8x1xf32>
    %21 = arith.divf %19, %20 : vector<8x1xf32>
    %22 = vector.broadcast %14 : vector<8x1xf32> to vector<8x384xf32>
    %23 = arith.subf %3, %22 : vector<8x384xf32>
    %cst_11 = arith.constant 9.99999974E-6 : f32
    %24 = vector.broadcast %cst_11 : f32 to vector<8x1xf32>
    %25 = arith.addf %21, %24 : vector<8x1xf32>
    %26 = math.rsqrt %25 : vector<8x1xf32>
    %27 = vector.broadcast %26 : vector<8x1xf32> to vector<8x384xf32>
    %28 = arith.mulf %23, %27 : vector<8x384xf32>
    %29 = vector.broadcast %7 : vector<1x384xf32> to vector<8x384xf32>
    %30 = arith.mulf %28, %29 : vector<8x384xf32>
    %31 = vector.broadcast %10 : vector<1x384xf32> to vector<8x384xf32>
    %32 = arith.addf %30, %31 : vector<8x384xf32>
    %33 = arith.truncf %32 : vector<8x384xf32> to vector<8x384xbf16>
    %34 = arith.index_cast %arg1 : i32 to index
    %c0_12 = arith.constant 0 : index
    %c0_13 = arith.constant 0 : index
    %35 = vector.load %arg6[%34, %c0_12, %c0_13] : memref<4x384x1536xbf16, #tpu.memory_space<vmem>>, vector<1x384x1536xbf16>
    %36 = vector.shape_cast %35 : vector<1x384x1536xbf16> to vector<384x1536xbf16>
    %cst_14 = arith.constant dense<0.000000e+00> : vector<8x1536xf32>
    %37 = tpu.matmul %33, %36, %cst_14 {dimension_numbers = #tpu.dot_dimension_numbers<[1], [0], [0], [1], [0, 0, 1, 1], [], []>} : vector<8x384xbf16>, vector<384x1536xbf16>, vector<8x1536xf32> -> vector<8x1536xf32>
    %38 = arith.truncf %37 : vector<8x1536xf32> to vector<8x1536xbf16>
    %39 = vector.extract_strided_slice %38 {offsets = [0, 0], sizes = [8, 128], strides = [1, 1]} : vector<8x1536xbf16> to vector<8x128xbf16>
    %40 = vector.extract_strided_slice %38 {offsets = [0, 512], sizes = [8, 128], strides = [1, 1]} : vector<8x1536xbf16> to vector<8x128xbf16>
    %41 = vector.extract_strided_slice %38 {offsets = [0, 1024], sizes = [8, 128], strides = [1, 1]} : vector<8x1536xbf16> to vector<8x128xbf16>
    %42 = tpu.transpose %40, [1, 0] : vector<8x128xbf16> -> vector<128x8xbf16>
    %cst_15 = arith.constant dense<0.000000e+00> : vector<8x8xf32>
    %43 = tpu.matmul %39, %42, %cst_15 {dimension_numbers = #tpu.dot_dimension_numbers<[1], [0], [0], [1], [0, 0, 1, 1], [], []>} : vector<8x128xbf16>, vector<128x8xbf16>, vector<8x8xf32> -> vector<8x8xf32>
    %44 = arith.addf %43, %4 : vector<8x8xf32>
    %cst_16 = arith.constant dense<0xFF800000> : vector<8xf32>
    %45 = vector.multi_reduction <maximumf>, %44, %cst_16 [1] : vector<8x8xf32> to vector<8xf32>
    %46 = vector.shape_cast %45 : vector<8xf32> to vector<8x1xf32>
    %47 = vector.broadcast %46 : vector<8x1xf32> to vector<8x8xf32>
    %48 = arith.subf %44, %47 : vector<8x8xf32>
    %49 = math.exp %48 : vector<8x8xf32>
    %cst_17 = arith.constant dense<0.000000e+00> : vector<8xf32>
    %50 = vector.multi_reduction <add>, %49, %cst_17 [1] : vector<8x8xf32> to vector<8xf32>
    %51 = vector.shape_cast %50 : vector<8xf32> to vector<8x1xf32>
    %52 = tpu.reciprocal %51 {approx = true} : vector<8x1xf32> -> vector<8x1xf32>
    %53 = vector.broadcast %52 : vector<8x1xf32> to vector<8x8xf32>
    %54 = arith.mulf %49, %53 : vector<8x8xf32>
    %55 = arith.truncf %54 : vector<8x8xf32> to vector<8x8xbf16>
    %cst_18 = arith.constant dense<0.000000e+00> : vector<8x128xf32>
    %56 = tpu.matmul %55, %41, %cst_18 {dimension_numbers = #tpu.dot_dimension_numbers<[1], [0], [0], [1], [0, 0, 1, 1], [], []>} : vector<8x8xbf16>, vector<8x128xbf16>, vector<8x128xf32> -> vector<8x128xf32>
    %57 = arith.truncf %56 : vector<8x128xf32> to vector<8x128xbf16>
    %58 = arith.index_cast %arg1 : i32 to index
    %c0_19 = arith.constant 0 : index
    %c0_20 = arith.constant 0 : index
    %59 = vector.load %arg7[%58, %c0_19, %c0_20] : memref<4x512x384xbf16, #tpu.memory_space<vmem>>, vector<1x128x384xbf16>
    %60 = vector.shape_cast %59 : vector<1x128x384xbf16> to vector<128x384xbf16>
    %cst_21 = arith.constant dense<0.000000e+00> : vector<8x384xf32>
    %61 = tpu.matmul %57, %60, %cst_21 {dimension_numbers = #tpu.dot_dimension_numbers<[1], [0], [0], [1], [0, 0, 1, 1], [], []>} : vector<8x128xbf16>, vector<128x384xbf16>, vector<8x384xf32> -> vector<8x384xf32>
    %62 = vector.extract_strided_slice %38 {offsets = [0, 128], sizes = [8, 128], strides = [1, 1]} : vector<8x1536xbf16> to vector<8x128xbf16>
    %63 = vector.extract_strided_slice %38 {offsets = [0, 640], sizes = [8, 128], strides = [1, 1]} : vector<8x1536xbf16> to vector<8x128xbf16>
    %64 = vector.extract_strided_slice %38 {offsets = [0, 1152], sizes = [8, 128], strides = [1, 1]} : vector<8x1536xbf16> to vector<8x128xbf16>
    %65 = tpu.transpose %63, [1, 0] : vector<8x128xbf16> -> vector<128x8xbf16>
    %cst_22 = arith.constant dense<0.000000e+00> : vector<8x8xf32>
    %66 = tpu.matmul %62, %65, %cst_22 {dimension_numbers = #tpu.dot_dimension_numbers<[1], [0], [0], [1], [0, 0, 1, 1], [], []>} : vector<8x128xbf16>, vector<128x8xbf16>, vector<8x8xf32> -> vector<8x8xf32>
    %67 = arith.addf %66, %4 : vector<8x8xf32>
    %cst_23 = arith.constant dense<0xFF800000> : vector<8xf32>
    %68 = vector.multi_reduction <maximumf>, %67, %cst_23 [1] : vector<8x8xf32> to vector<8xf32>
    %69 = vector.shape_cast %68 : vector<8xf32> to vector<8x1xf32>
    %70 = vector.broadcast %69 : vector<8x1xf32> to vector<8x8xf32>
    %71 = arith.subf %67, %70 : vector<8x8xf32>
    %72 = math.exp %71 : vector<8x8xf32>
    %cst_24 = arith.constant dense<0.000000e+00> : vector<8xf32>
    %73 = vector.multi_reduction <add>, %72, %cst_24 [1] : vector<8x8xf32> to vector<8xf32>
    %74 = vector.shape_cast %73 : vector<8xf32> to vector<8x1xf32>
    %75 = tpu.reciprocal %74 {approx = true} : vector<8x1xf32> -> vector<8x1xf32>
    %76 = vector.broadcast %75 : vector<8x1xf32> to vector<8x8xf32>
    %77 = arith.mulf %72, %76 : vector<8x8xf32>
    %78 = arith.truncf %77 : vector<8x8xf32> to vector<8x8xbf16>
    %cst_25 = arith.constant dense<0.000000e+00> : vector<8x128xf32>
    %79 = tpu.matmul %78, %64, %cst_25 {dimension_numbers = #tpu.dot_dimension_numbers<[1], [0], [0], [1], [0, 0, 1, 1], [], []>} : vector<8x8xbf16>, vector<8x128xbf16>, vector<8x128xf32> -> vector<8x128xf32>
    %80 = arith.truncf %79 : vector<8x128xf32> to vector<8x128xbf16>
    %81 = arith.index_cast %arg1 : i32 to index
    %c128 = arith.constant 128 : index
    %c0_26 = arith.constant 0 : index
    %82 = vector.load %arg7[%81, %c128, %c0_26] : memref<4x512x384xbf16, #tpu.memory_space<vmem>>, vector<1x128x384xbf16>
    %83 = vector.shape_cast %82 : vector<1x128x384xbf16> to vector<128x384xbf16>
    %cst_27 = arith.constant dense<0.000000e+00> : vector<8x384xf32>
    %84 = tpu.matmul %80, %83, %cst_27 {dimension_numbers = #tpu.dot_dimension_numbers<[1], [0], [0], [1], [0, 0, 1, 1], [], []>} : vector<8x128xbf16>, vector<128x384xbf16>, vector<8x384xf32> -> vector<8x384xf32>
    %85 = arith.addf %61, %84 : vector<8x384xf32>
    %86 = vector.extract_strided_slice %38 {offsets = [0, 256], sizes = [8, 128], strides = [1, 1]} : vector<8x1536xbf16> to vector<8x128xbf16>
    %87 = vector.extract_strided_slice %38 {offsets = [0, 768], sizes = [8, 128], strides = [1, 1]} : vector<8x1536xbf16> to vector<8x128xbf16>
    %88 = vector.extract_strided_slice %38 {offsets = [0, 1280], sizes = [8, 128], strides = [1, 1]} : vector<8x1536xbf16> to vector<8x128xbf16>
    %89 = tpu.transpose %87, [1, 0] : vector<8x128xbf16> -> vector<128x8xbf16>
    %cst_28 = arith.constant dense<0.000000e+00> : vector<8x8xf32>
    %90 = tpu.matmul %86, %89, %cst_28 {dimension_numbers = #tpu.dot_dimension_numbers<[1], [0], [0], [1], [0, 0, 1, 1], [], []>} : vector<8x128xbf16>, vector<128x8xbf16>, vector<8x8xf32> -> vector<8x8xf32>
    %91 = arith.addf %90, %4 : vector<8x8xf32>
    %cst_29 = arith.constant dense<0xFF800000> : vector<8xf32>
    %92 = vector.multi_reduction <maximumf>, %91, %cst_29 [1] : vector<8x8xf32> to vector<8xf32>
    %93 = vector.shape_cast %92 : vector<8xf32> to vector<8x1xf32>
    %94 = vector.broadcast %93 : vector<8x1xf32> to vector<8x8xf32>
    %95 = arith.subf %91, %94 : vector<8x8xf32>
    %96 = math.exp %95 : vector<8x8xf32>
    %cst_30 = arith.constant dense<0.000000e+00> : vector<8xf32>
    %97 = vector.multi_reduction <add>, %96, %cst_30 [1] : vector<8x8xf32> to vector<8xf32>
    %98 = vector.shape_cast %97 : vector<8xf32> to vector<8x1xf32>
    %99 = tpu.reciprocal %98 {approx = true} : vector<8x1xf32> -> vector<8x1xf32>
    %100 = vector.broadcast %99 : vector<8x1xf32> to vector<8x8xf32>
    %101 = arith.mulf %96, %100 : vector<8x8xf32>
    %102 = arith.truncf %101 : vector<8x8xf32> to vector<8x8xbf16>
    %cst_31 = arith.constant dense<0.000000e+00> : vector<8x128xf32>
    %103 = tpu.matmul %102, %88, %cst_31 {dimension_numbers = #tpu.dot_dimension_numbers<[1], [0], [0], [1], [0, 0, 1, 1], [], []>} : vector<8x8xbf16>, vector<8x128xbf16>, vector<8x128xf32> -> vector<8x128xf32>
    %104 = arith.truncf %103 : vector<8x128xf32> to vector<8x128xbf16>
    %105 = arith.index_cast %arg1 : i32 to index
    %c256 = arith.constant 256 : index
    %c0_32 = arith.constant 0 : index
    %106 = vector.load %arg7[%105, %c256, %c0_32] : memref<4x512x384xbf16, #tpu.memory_space<vmem>>, vector<1x128x384xbf16>
    %107 = vector.shape_cast %106 : vector<1x128x384xbf16> to vector<128x384xbf16>
    %cst_33 = arith.constant dense<0.000000e+00> : vector<8x384xf32>
    %108 = tpu.matmul %104, %107, %cst_33 {dimension_numbers = #tpu.dot_dimension_numbers<[1], [0], [0], [1], [0, 0, 1, 1], [], []>} : vector<8x128xbf16>, vector<128x384xbf16>, vector<8x384xf32> -> vector<8x384xf32>
    %109 = arith.addf %85, %108 : vector<8x384xf32>
    %110 = vector.extract_strided_slice %38 {offsets = [0, 384], sizes = [8, 128], strides = [1, 1]} : vector<8x1536xbf16> to vector<8x128xbf16>
    %111 = vector.extract_strided_slice %38 {offsets = [0, 896], sizes = [8, 128], strides = [1, 1]} : vector<8x1536xbf16> to vector<8x128xbf16>
    %112 = vector.extract_strided_slice %38 {offsets = [0, 1408], sizes = [8, 128], strides = [1, 1]} : vector<8x1536xbf16> to vector<8x128xbf16>
    %113 = tpu.transpose %111, [1, 0] : vector<8x128xbf16> -> vector<128x8xbf16>
    %cst_34 = arith.constant dense<0.000000e+00> : vector<8x8xf32>
    %114 = tpu.matmul %110, %113, %cst_34 {dimension_numbers = #tpu.dot_dimension_numbers<[1], [0], [0], [1], [0, 0, 1, 1], [], []>} : vector<8x128xbf16>, vector<128x8xbf16>, vector<8x8xf32> -> vector<8x8xf32>
    %115 = arith.addf %114, %4 : vector<8x8xf32>
    %cst_35 = arith.constant dense<0xFF800000> : vector<8xf32>
    %116 = vector.multi_reduction <maximumf>, %115, %cst_35 [1] : vector<8x8xf32> to vector<8xf32>
    %117 = vector.shape_cast %116 : vector<8xf32> to vector<8x1xf32>
    %118 = vector.broadcast %117 : vector<8x1xf32> to vector<8x8xf32>
    %119 = arith.subf %115, %118 : vector<8x8xf32>
    %120 = math.exp %119 : vector<8x8xf32>
    %cst_36 = arith.constant dense<0.000000e+00> : vector<8xf32>
    %121 = vector.multi_reduction <add>, %120, %cst_36 [1] : vector<8x8xf32> to vector<8xf32>
    %122 = vector.shape_cast %121 : vector<8xf32> to vector<8x1xf32>
    %123 = tpu.reciprocal %122 {approx = true} : vector<8x1xf32> -> vector<8x1xf32>
    %124 = vector.broadcast %123 : vector<8x1xf32> to vector<8x8xf32>
    %125 = arith.mulf %120, %124 : vector<8x8xf32>
    %126 = arith.truncf %125 : vector<8x8xf32> to vector<8x8xbf16>
    %cst_37 = arith.constant dense<0.000000e+00> : vector<8x128xf32>
    %127 = tpu.matmul %126, %112, %cst_37 {dimension_numbers = #tpu.dot_dimension_numbers<[1], [0], [0], [1], [0, 0, 1, 1], [], []>} : vector<8x8xbf16>, vector<8x128xbf16>, vector<8x128xf32> -> vector<8x128xf32>
    %128 = arith.truncf %127 : vector<8x128xf32> to vector<8x128xbf16>
    %129 = arith.index_cast %arg1 : i32 to index
    %c384 = arith.constant 384 : index
    %c0_38 = arith.constant 0 : index
    %130 = vector.load %arg7[%129, %c384, %c0_38] : memref<4x512x384xbf16, #tpu.memory_space<vmem>>, vector<1x128x384xbf16>
    %131 = vector.shape_cast %130 : vector<1x128x384xbf16> to vector<128x384xbf16>
    %cst_39 = arith.constant dense<0.000000e+00> : vector<8x384xf32>
    %132 = tpu.matmul %128, %131, %cst_39 {dimension_numbers = #tpu.dot_dimension_numbers<[1], [0], [0], [1], [0, 0, 1, 1], [], []>} : vector<8x128xbf16>, vector<128x384xbf16>, vector<8x384xf32> -> vector<8x384xf32>
    %133 = arith.addf %109, %132 : vector<8x384xf32>
    %134 = arith.addf %3, %133 : vector<8x384xf32>
    %135 = arith.index_cast %arg1 : i32 to index
    %c0_40 = arith.constant 0 : index
    %c0_41 = arith.constant 0 : index
    %136 = vector.load %arg8[%135, %c0_40, %c0_41] : memref<4x1x384xf32, #tpu.memory_space<vmem>>, vector<1x1x384xf32>
    %137 = vector.shape_cast %136 : vector<1x1x384xf32> to vector<1x384xf32>
    %138 = vector.broadcast %137 : vector<1x384xf32> to vector<8x384xf32>
    %139 = arith.addf %134, %138 : vector<8x384xf32>
    %140 = arith.index_cast %arg1 : i32 to index
    %c0_42 = arith.constant 0 : index
    %c0_43 = arith.constant 0 : index
    %141 = vector.load %arg9[%140, %c0_42, %c0_43] : memref<4x1x384xf32, #tpu.memory_space<vmem>>, vector<1x1x384xf32>
    %142 = vector.shape_cast %141 : vector<1x1x384xf32> to vector<1x384xf32>
    %143 = arith.index_cast %arg1 : i32 to index
    %c0_44 = arith.constant 0 : index
    %c0_45 = arith.constant 0 : index
    %144 = vector.load %arg10[%143, %c0_44, %c0_45] : memref<4x1x384xf32, #tpu.memory_space<vmem>>, vector<1x1x384xf32>
    %145 = vector.shape_cast %144 : vector<1x1x384xf32> to vector<1x384xf32>
    %cst_46 = arith.constant dense<0.000000e+00> : vector<8xf32>
    %146 = vector.multi_reduction <add>, %139, %cst_46 [1] : vector<8x384xf32> to vector<8xf32>
    %147 = vector.shape_cast %146 : vector<8xf32> to vector<8x1xf32>
    %cst_47 = arith.constant 3.840000e+02 : f32
    %148 = vector.broadcast %cst_47 : f32 to vector<8x1xf32>
    %149 = arith.divf %147, %148 : vector<8x1xf32>
    %150 = vector.broadcast %149 : vector<8x1xf32> to vector<8x384xf32>
    %151 = arith.subf %139, %150 : vector<8x384xf32>
    %152 = arith.mulf %151, %151 : vector<8x384xf32>
    %cst_48 = arith.constant dense<0.000000e+00> : vector<8xf32>
    %153 = vector.multi_reduction <add>, %152, %cst_48 [1] : vector<8x384xf32> to vector<8xf32>
    %154 = vector.shape_cast %153 : vector<8xf32> to vector<8x1xf32>
    %cst_49 = arith.constant 3.840000e+02 : f32
    %155 = vector.broadcast %cst_49 : f32 to vector<8x1xf32>
    %156 = arith.divf %154, %155 : vector<8x1xf32>
    %157 = vector.broadcast %149 : vector<8x1xf32> to vector<8x384xf32>
    %158 = arith.subf %139, %157 : vector<8x384xf32>
    %cst_50 = arith.constant 9.99999974E-6 : f32
    %159 = vector.broadcast %cst_50 : f32 to vector<8x1xf32>
    %160 = arith.addf %156, %159 : vector<8x1xf32>
    %161 = math.rsqrt %160 : vector<8x1xf32>
    %162 = vector.broadcast %161 : vector<8x1xf32> to vector<8x384xf32>
    %163 = arith.mulf %158, %162 : vector<8x384xf32>
    %164 = vector.broadcast %142 : vector<1x384xf32> to vector<8x384xf32>
    %165 = arith.mulf %163, %164 : vector<8x384xf32>
    %166 = vector.broadcast %145 : vector<1x384xf32> to vector<8x384xf32>
    %167 = arith.addf %165, %166 : vector<8x384xf32>
    %168 = arith.truncf %167 : vector<8x384xf32> to vector<8x384xbf16>
    %169 = arith.index_cast %arg1 : i32 to index
    %c0_51 = arith.constant 0 : index
    %c0_52 = arith.constant 0 : index
    %170 = vector.load %arg11[%169, %c0_51, %c0_52] : memref<4x384x1536xbf16, #tpu.memory_space<vmem>>, vector<1x384x1536xbf16>
    %171 = vector.shape_cast %170 : vector<1x384x1536xbf16> to vector<384x1536xbf16>
    %cst_53 = arith.constant dense<0.000000e+00> : vector<8x1536xf32>
    %172 = tpu.matmul %168, %171, %cst_53 {dimension_numbers = #tpu.dot_dimension_numbers<[1], [0], [0], [1], [0, 0, 1, 1], [], []>} : vector<8x384xbf16>, vector<384x1536xbf16>, vector<8x1536xf32> -> vector<8x1536xf32>
    %173 = arith.index_cast %arg1 : i32 to index
    %c0_54 = arith.constant 0 : index
    %c0_55 = arith.constant 0 : index
    %174 = vector.load %arg12[%173, %c0_54, %c0_55] : memref<4x1x1536xf32, #tpu.memory_space<vmem>>, vector<1x1x1536xf32>
    %175 = vector.shape_cast %174 : vector<1x1x1536xf32> to vector<1x1536xf32>
    %176 = vector.broadcast %175 : vector<1x1536xf32> to vector<8x1536xf32>
    %177 = arith.addf %172, %176 : vector<8x1536xf32>
    %cst_56 = arith.constant 0.000000e+00 : f32
    %178 = vector.broadcast %cst_56 : f32 to vector<8x1536xf32>
    %179 = arith.maximumf %177, %178 : vector<8x1536xf32>
    %180 = arith.truncf %179 : vector<8x1536xf32> to vector<8x1536xbf16>
    %181 = arith.index_cast %arg1 : i32 to index
    %c0_57 = arith.constant 0 : index
    %c0_58 = arith.constant 0 : index
    %182 = vector.load %arg13[%181, %c0_57, %c0_58] : memref<4x1536x384xbf16, #tpu.memory_space<vmem>>, vector<1x1536x384xbf16>
    %183 = vector.shape_cast %182 : vector<1x1536x384xbf16> to vector<1536x384xbf16>
    %cst_59 = arith.constant dense<0.000000e+00> : vector<8x384xf32>
    %184 = tpu.matmul %180, %183, %cst_59 {dimension_numbers = #tpu.dot_dimension_numbers<[1], [0], [0], [1], [0, 0, 1, 1], [], []>} : vector<8x1536xbf16>, vector<1536x384xbf16>, vector<8x384xf32> -> vector<8x384xf32>
    %185 = arith.index_cast %arg1 : i32 to index
    %c0_60 = arith.constant 0 : index
    %c0_61 = arith.constant 0 : index
    %186 = vector.load %arg14[%185, %c0_60, %c0_61] : memref<4x1x384xf32, #tpu.memory_space<vmem>>, vector<1x1x384xf32>
    %187 = vector.shape_cast %186 : vector<1x1x384xf32> to vector<1x384xf32>
    %188 = vector.broadcast %187 : vector<1x384xf32> to vector<8x384xf32>
    %189 = arith.addf %184, %188 : vector<8x384xf32>
    %190 = arith.addf %139, %189 : vector<8x384xf32>
    %c0_62 = arith.constant 0 : index
    %c0_63 = arith.constant 0 : index
    %191 = vector.load %arg20[%c0_62, %c0_63] : memref<8x384xf32, #tpu.memory_space<vmem>>, vector<8x384xf32>
    tpu.vector_store %arg20[%c0_62, %c0_63], %190 {strides = array<i32>} : memref<8x384xf32, #tpu.memory_space<vmem>>, vector<8x384xf32>,
    %c3_i32 = arith.constant 3 : i32
    %192 = arith.cmpi eq, %arg1, %c3_i32 : i32
    %193 = arith.extui %192 : i1 to i32
    %c0_i32_64 = arith.constant 0 : i32
    %194 = arith.cmpi ne, %193, %c0_i32_64 : i32
    scf.if %194 {
      %c0_65 = arith.constant 0 : index
      %c0_66 = arith.constant 0 : index
      %195 = vector.load %arg15[%c0_65, %c0_66] : memref<1x384xf32, #tpu.memory_space<vmem>>, vector<1x384xf32>
      %c0_67 = arith.constant 0 : index
      %c0_68 = arith.constant 0 : index
      %196 = vector.load %arg16[%c0_67, %c0_68] : memref<1x384xf32, #tpu.memory_space<vmem>>, vector<1x384xf32>
      %cst_69 = arith.constant dense<0.000000e+00> : vector<8xf32>
      %197 = vector.multi_reduction <add>, %190, %cst_69 [1] : vector<8x384xf32> to vector<8xf32>
      %198 = vector.shape_cast %197 : vector<8xf32> to vector<8x1xf32>
      %cst_70 = arith.constant 3.840000e+02 : f32
      %199 = vector.broadcast %cst_70 : f32 to vector<8x1xf32>
      %200 = arith.divf %198, %199 : vector<8x1xf32>
      %201 = vector.broadcast %200 : vector<8x1xf32> to vector<8x384xf32>
      %202 = arith.subf %190, %201 : vector<8x384xf32>
      %203 = arith.mulf %202, %202 : vector<8x384xf32>
      %cst_71 = arith.constant dense<0.000000e+00> : vector<8xf32>
      %204 = vector.multi_reduction <add>, %203, %cst_71 [1] : vector<8x384xf32> to vector<8xf32>
      %205 = vector.shape_cast %204 : vector<8xf32> to vector<8x1xf32>
      %cst_72 = arith.constant 3.840000e+02 : f32
      %206 = vector.broadcast %cst_72 : f32 to vector<8x1xf32>
      %207 = arith.divf %205, %206 : vector<8x1xf32>
      %208 = vector.broadcast %200 : vector<8x1xf32> to vector<8x384xf32>
      %209 = arith.subf %190, %208 : vector<8x384xf32>
      %cst_73 = arith.constant 9.99999974E-6 : f32
      %210 = vector.broadcast %cst_73 : f32 to vector<8x1xf32>
      %211 = arith.addf %207, %210 : vector<8x1xf32>
      %212 = math.rsqrt %211 : vector<8x1xf32>
      %213 = vector.broadcast %212 : vector<8x1xf32> to vector<8x384xf32>
      %214 = arith.mulf %209, %213 : vector<8x384xf32>
      %215 = vector.broadcast %195 : vector<1x384xf32> to vector<8x384xf32>
      %216 = arith.mulf %214, %215 : vector<8x384xf32>
      %217 = vector.broadcast %196 : vector<1x384xf32> to vector<8x384xf32>
      %218 = arith.addf %216, %217 : vector<8x384xf32>
      %219 = arith.truncf %218 : vector<8x384xf32> to vector<8x384xbf16>
      %c0_74 = arith.constant 0 : index
      %c0_75 = arith.constant 0 : index
      %220 = vector.load %arg17[%c0_74, %c0_75] : memref<384x128xbf16, #tpu.memory_space<vmem>>, vector<384x128xbf16>
      %cst_76 = arith.constant dense<0.000000e+00> : vector<8x128xf32>
      %221 = tpu.matmul %219, %220, %cst_76 {dimension_numbers = #tpu.dot_dimension_numbers<[1], [0], [0], [1], [0, 0, 1, 1], [], []>} : vector<8x384xbf16>, vector<384x128xbf16>, vector<8x128xf32> -> vector<8x128xf32>
      %c0_77 = arith.constant 0 : index
      %c0_78 = arith.constant 0 : index
      %222 = vector.load %arg18[%c0_77, %c0_78] : memref<1x128xf32, #tpu.memory_space<vmem>>, vector<1x128xf32>
      %223 = vector.broadcast %222 : vector<1x128xf32> to vector<8x128xf32>
      %224 = arith.addf %221, %223 : vector<8x128xf32>
      %c0_79 = arith.constant 0 : index
      %c0_80 = arith.constant 0 : index
      %c0_81 = arith.constant 0 : index
      %225 = vector.load %arg19[%c0_79, %c0_80, %c0_81] : memref<1x8x128xf32, #tpu.memory_space<vmem>>, vector<1x8x128xf32>
      %226 = vector.shape_cast %225 : vector<1x8x128xf32> to vector<8x128xf32>
      %227 = vector.shape_cast %224 : vector<8x128xf32> to vector<1x8x128xf32>
      tpu.vector_store %arg19[%c0_79, %c0_80, %c0_81], %227 {strides = array<i32>} : memref<1x8x128xf32, #tpu.memory_space<vmem>>, vector<1x8x128xf32>,
    } else {
    }
    return
  }
  func.func @transform_0(%arg0: i32, %arg1: i32) -> (i32, i32, i32) {
    %c0_i32 = arith.constant 0 : i32
    %c0_i32_0 = arith.constant 0 : i32
    %c0_i32_1 = arith.constant 0 : i32
    return %arg0, %c0_i32, %c0_i32_0 : i32, i32, i32
  }
  func.func @transform_1(%arg0: i32, %arg1: i32) -> (i32, i32) {
    %c0_i32 = arith.constant 0 : i32
    %c0_i32_0 = arith.constant 0 : i32
    %c0_i32_1 = arith.constant 0 : i32
    return %c0_i32, %c0_i32_0 : i32, i32
  }
  func.func @transform_2(%arg0: i32, %arg1: i32) -> (i32, i32, i32) {
    %c0_i32 = arith.constant 0 : i32
    %c0_i32_0 = arith.constant 0 : i32
    %c0_i32_1 = arith.constant 0 : i32
    %c0_i32_2 = arith.constant 0 : i32
    return %c0_i32, %c0_i32_0, %c0_i32_1 : i32, i32, i32
  }
  func.func @transform_3(%arg0: i32, %arg1: i32) -> (i32, i32, i32) {
    %c0_i32 = arith.constant 0 : i32
    %c0_i32_0 = arith.constant 0 : i32
    %c0_i32_1 = arith.constant 0 : i32
    %c0_i32_2 = arith.constant 0 : i32
    return %c0_i32, %c0_i32_0, %c0_i32_1 : i32, i32, i32
  }
  func.func @transform_4(%arg0: i32, %arg1: i32) -> (i32, i32, i32) {
    %c0_i32 = arith.constant 0 : i32
    %c0_i32_0 = arith.constant 0 : i32
    %c0_i32_1 = arith.constant 0 : i32
    %c0_i32_2 = arith.constant 0 : i32
    return %c0_i32, %c0_i32_0, %c0_i32_1 : i32, i32, i32
  }
  func.func @transform_5(%arg0: i32, %arg1: i32) -> (i32, i32, i32) {
    %c0_i32 = arith.constant 0 : i32
    %c0_i32_0 = arith.constant 0 : i32
    %c0_i32_1 = arith.constant 0 : i32
    %c0_i32_2 = arith.constant 0 : i32
    return %c0_i32, %c0_i32_0, %c0_i32_1 : i32, i32, i32
  }
  func.func @transform_6(%arg0: i32, %arg1: i32) -> (i32, i32, i32) {
    %c0_i32 = arith.constant 0 : i32
    %c0_i32_0 = arith.constant 0 : i32
    %c0_i32_1 = arith.constant 0 : i32
    %c0_i32_2 = arith.constant 0 : i32
    return %c0_i32, %c0_i32_0, %c0_i32_1 : i32, i32, i32
  }
  func.func @transform_7(%arg0: i32, %arg1: i32) -> (i32, i32, i32) {
    %c0_i32 = arith.constant 0 : i32
    %c0_i32_0 = arith.constant 0 : i32
    %c0_i32_1 = arith.constant 0 : i32
    %c0_i32_2 = arith.constant 0 : i32
    return %c0_i32, %c0_i32_0, %c0_i32_1 : i32, i32, i32
  }
  func.func @transform_8(%arg0: i32, %arg1: i32) -> (i32, i32, i32) {
    %c0_i32 = arith.constant 0 : i32
    %c0_i32_0 = arith.constant 0 : i32
    %c0_i32_1 = arith.constant 0 : i32
    %c0_i32_2 = arith.constant 0 : i32
    return %c0_i32, %c0_i32_0, %c0_i32_1 : i32, i32, i32
  }
  func.func @transform_9(%arg0: i32, %arg1: i32) -> (i32, i32, i32) {
    %c0_i32 = arith.constant 0 : i32
    %c0_i32_0 = arith.constant 0 : i32
    %c0_i32_1 = arith.constant 0 : i32
    %c0_i32_2 = arith.constant 0 : i32
    return %c0_i32, %c0_i32_0, %c0_i32_1 : i32, i32, i32
  }
  func.func @transform_10(%arg0: i32, %arg1: i32) -> (i32, i32, i32) {
    %c0_i32 = arith.constant 0 : i32
    %c0_i32_0 = arith.constant 0 : i32
    %c0_i32_1 = arith.constant 0 : i32
    %c0_i32_2 = arith.constant 0 : i32
    return %c0_i32, %c0_i32_0, %c0_i32_1 : i32, i32, i32
  }
  func.func @transform_11(%arg0: i32, %arg1: i32) -> (i32, i32, i32) {
    %c0_i32 = arith.constant 0 : i32
    %c0_i32_0 = arith.constant 0 : i32
    %c0_i32_1 = arith.constant 0 : i32
    %c0_i32_2 = arith.constant 0 : i32
    return %c0_i32, %c0_i32_0, %c0_i32_1 : i32, i32, i32
  }
  func.func @transform_12(%arg0: i32, %arg1: i32) -> (i32, i32, i32) {
    %c0_i32 = arith.constant 0 : i32
    %c0_i32_0 = arith.constant 0 : i32
    %c0_i32_1 = arith.constant 0 : i32
    %c0_i32_2 = arith.constant 0 : i32
    return %c0_i32, %c0_i32_0, %c0_i32_1 : i32, i32, i32
  }
  func.func @transform_13(%arg0: i32, %arg1: i32) -> (i32, i32) {
    %c0_i32 = arith.constant 0 : i32
    %c0_i32_0 = arith.constant 0 : i32
    %c0_i32_1 = arith.constant 0 : i32
    return %c0_i32, %c0_i32_0 : i32, i32
  }
  func.func @transform_14(%arg0: i32, %arg1: i32) -> (i32, i32) {
    %c0_i32 = arith.constant 0 : i32
    %c0_i32_0 = arith.constant 0 : i32
    %c0_i32_1 = arith.constant 0 : i32
    return %c0_i32, %c0_i32_0 : i32, i32
  }
  func.func @transform_15(%arg0: i32, %arg1: i32) -> (i32, i32) {
    %c0_i32 = arith.constant 0 : i32
    %c0_i32_0 = arith.constant 0 : i32
    %c0_i32_1 = arith.constant 0 : i32
    return %c0_i32, %c0_i32_0 : i32, i32
  }
  func.func @transform_16(%arg0: i32, %arg1: i32) -> (i32, i32) {
    %c0_i32 = arith.constant 0 : i32
    %c0_i32_0 = arith.constant 0 : i32
    %c0_i32_1 = arith.constant 0 : i32
    return %c0_i32, %c0_i32_0 : i32, i32
  }
  func.func @transform_17(%arg0: i32, %arg1: i32) -> (i32, i32, i32) {
    %c0_i32 = arith.constant 0 : i32
    %c0_i32_0 = arith.constant 0 : i32
    %c0_i32_1 = arith.constant 0 : i32
    return %arg0, %c0_i32, %c0_i32_0 : i32, i32, i32
  }
}

</mosaic_0001>

<llo_original>
// kernel: tpu_custom_call.1
$region0: #{tpu_custom_call.1}
  #allocation0 [shape = 'u32[]', space=smem, size = 0x4, offset = 0x4, fixed_abs, tag = 'smem constant byte address 0x4 - core index']
  #allocation1 [shape = 'u32[144,128]{1,0:T(1,128)}', space=vmem, size = 0x12000, scoped, tag = 'internal scratch']
  #allocation2 [shape = 'f32[8,384]{1,0:T(8,128)}', space=vmem, size = 0x3000, scoped, tag = 'scratch operand']
  %s0 = inlined_call_operand.hbm [shape: f32[2,8,384], index: 0, kind: input, shape index: {}]
  %s1 = inlined_call_operand.hbm [shape: f32[8,8], index: 1, kind: input, shape index: {}]
  %s2 = inlined_call_operand.hbm [shape: f32[4,1,384], index: 2, kind: input, shape index: {}]
  %s3 = inlined_call_operand.hbm [shape: f32[4,1,384], index: 3, kind: input, shape index: {}]
  %s4 = inlined_call_operand.hbm [shape: bf16[4,384,1536], index: 4, kind: input, shape index: {}]
  %s5 = inlined_call_operand.hbm [shape: bf16[4,512,384], index: 5, kind: input, shape index: {}]
  %s6 = inlined_call_operand.hbm [shape: f32[4,1,384], index: 6, kind: input, shape index: {}]
  %s7 = inlined_call_operand.hbm [shape: f32[4,1,384], index: 7, kind: input, shape index: {}]
  %s8 = inlined_call_operand.hbm [shape: f32[4,1,384], index: 8, kind: input, shape index: {}]
  %s9 = inlined_call_operand.hbm [shape: bf16[4,384,1536], index: 9, kind: input, shape index: {}]
  %s10 = inlined_call_operand.hbm [shape: f32[4,1,1536], index: 10, kind: input, shape index: {}]
  %s11 = inlined_call_operand.hbm [shape: bf16[4,1536,384], index: 11, kind: input, shape index: {}]
  %s12 = inlined_call_operand.hbm [shape: f32[4,1,384], index: 12, kind: input, shape index: {}]
  %s13 = inlined_call_operand.hbm [shape: f32[1,384], index: 13, kind: input, shape index: {}]
  %s14 = inlined_call_operand.hbm [shape: f32[1,384], index: 14, kind: input, shape index: {}]
  %s15 = inlined_call_operand.hbm [shape: bf16[384,128], index: 15, kind: input, shape index: {}]
  %s16 = inlined_call_operand.hbm [shape: f32[1,128], index: 16, kind: input, shape index: {}]
  %s17 = inlined_call_operand.hbm [shape: f32[2,8,128], index: 17, kind: output, shape index: {}]
  %s18 = sld [smem:[#allocation0]]
  $region177: #{tpu_custom_call.1} parent=0
    _
  %s20 = ssub.s32 1, %s18
  %s21 = scalar_select 0, %s20, %s18
  $region1: #{tpu_custom_call.1} parent=0
    #allocation3 [shape = 'u8[24576]{0}', space=vmem, size = 0x6000, scoped, tag = 'input window, operand 0']
    #allocation4 [shape = 's32[2]{0}', space=sflag, size = 0x8, scoped, tag = 'scoped memory for tpu_custom_call.1']
    #allocation5 [shape = 's32[2]{0}', space=sflag, size = 0x8, scoped, tag = 'scoped memory for tpu_custom_call.1']
    #allocation6 [shape = 'u8[4096]{0}', space=vmem, size = 0x1000, scoped, tag = 'input window, operand 1, single buffered']
    #allocation7 [shape = 's32[1]{0}', space=sflag, size = 0x4, scoped, tag = 'scoped memory for tpu_custom_call.1']
    #allocation8 [shape = 'u8[6144]{0}', space=vmem, size = 0x1800, scoped, tag = 'input window, operand 2, single buffered']
    #allocation9 [shape = 'u8[6144]{0}', space=vmem, size = 0x1800, scoped, tag = 'input window, operand 3, single buffered']
    #allocation10 [shape = 's32[1]{0}', space=sflag, size = 0x4, scoped, tag = 'scoped memory for tpu_custom_call.1']
    #allocation11 [shape = 'u8[4718592]{0}', space=vmem, size = 0x480000, scoped, tag = 'input window, operand 4, single buffered']
    #allocation12 [shape = 'u8[1572864]{0}', space=vmem, size = 0x180000, scoped, tag = 'input window, operand 5, single buffered']
    #allocation13 [shape = 's32[1]{0}', space=sflag, size = 0x4, scoped, tag = 'scoped memory for tpu_custom_call.1']
    #allocation14 [shape = 'u8[6144]{0}', space=vmem, size = 0x1800, scoped, tag = 'input window, operand 6, single buffered']
    #allocation15 [shape = 'u8[6144]{0}', space=vmem, size = 0x1800, scoped, tag = 'input window, operand 7, single buffered']
    #allocation16 [shape = 's32[1]{0}', space=sflag, size = 0x4, scoped, tag = 'scoped memory for tpu_custom_call.1']
    #allocation17 [shape = 'u8[6144]{0}', space=vmem, size = 0x1800, scoped, tag = 'input window, operand 8, single buffered']
    #allocation18 [shape = 'u8[4718592]{0}', space=vmem, size = 0x480000, scoped, tag = 'input window, operand 9, single buffered']
    #allocation19 [shape = 's32[1]{0}', space=sflag, size = 0x4, scoped, tag = 'scoped memory for tpu_custom_call.1']
    #allocation20 [shape = 'u8[24576]{0}', space=vmem, size = 0x6000, scoped, tag = 'input window, operand 10, single buffered']
    #allocation21 [shape = 'u8[4718592]{0}', space=vmem, size = 0x480000, scoped, tag = 'input window, operand 11, single buffered']
    #allocation22 [shape = 's32[1]{0}', space=sflag, size = 0x4, scoped, tag = 'scoped memory for tpu_custom_call.1']
    #allocation23 [shape = 'u8[6144]{0}', space=vmem, size = 0x1800, scoped, tag = 'input window, operand 12, single buffered']
    #allocation24 [shape = 'u8[1536]{0}', space=vmem, size = 0x800, scoped, tag = 'input window, operand 13, single buffered']
    #allocation25 [shape = 's32[1]{0}', space=sflag, size = 0x4, scoped, tag = 'scoped memory for tpu_custom_call.1']
    #allocation26 [shape = 'u8[1536]{0}', space=vmem, size = 0x800, scoped, tag = 'input window, operand 14, single buffered']
    #allocation27 [shape = 'u8[98304]{0}', space=vmem, size = 0x18000, scoped, tag = 'input window, operand 15, single buffered']
    #allocation28 [shape = 's32[1]{0}', space=sflag, size = 0x4, scoped, tag = 'scoped memory for tpu_custom_call.1']
    #allocation29 [shape = 'u8[512]{0}', space=vmem, size = 0x400, scoped, tag = 'input window, operand 16, single buffered']
    #allocation30 [shape = 'u8[8192]{0}', space=vmem, size = 0x2000, scoped, tag = 'output window, operand 0']
    %22 = vsyncpa [#allocation4], 0
    %s23 = scalar_lea.sflag [#allocation4], 1
    %24 = vsyncpa %s23, 0
    %25 = vsyncpa [#allocation7], 0
    %26 = vsyncpa [#allocation10], 0
    %27 = vsyncpa [#allocation13], 0
    %28 = vsyncpa [#allocation16], 0
    %29 = vsyncpa [#allocation19], 0
    %30 = vsyncpa [#allocation22], 0
    %31 = vsyncpa [#allocation25], 0
    %32 = vsyncpa [#allocation28], 0
    %33 = vsyncpa [#allocation5], 0
    %s34 = scalar_lea.sflag [#allocation5], 1
    %35 = vsyncpa %s34, 0
    loop: start=0, step=1, limit=10
    $region2: #{tpu_custom_call.1} parent=1 // loop_pre_header
      _
    $region3: #{tpu_custom_call.1} parent=1 // loop_header
      %s37 = sphi 0, %s41
      %p38 = scmp.ge.s32.totalorder %s37, 10
      %s44 = sphi 0, %s56
      %s45 = sphi 0, %s52
      %s46 = sphi 0, %s44
      %s47 = sphi 0, %s45
      %s48 = sphi 0, %s46
      %s49 = sphi 0, %s47
      %s59 = sphi 0, %s61
      %s62 = sphi 0, %s59
      %s63 = sphi 0, %s62
      %s79 = sphi 0, %s63
      %s83 = sphi 0, %s83
      %s85 = sphi 0, %s83
      %s86 = sphi 0, %s85
      %s100 = sphi 0, %s86
      %s104 = sphi 0, %s104
      %s106 = sphi 0, %s104
      %s107 = sphi 0, %s106
      %s121 = sphi 0, %s107
      %s125 = sphi 0, %s125
      %s127 = sphi 0, %s125
      %s128 = sphi 0, %s127
      %s142 = sphi 0, %s128
      %s146 = sphi 0, %s146
      %s148 = sphi 0, %s146
      %s149 = sphi 0, %s148
      %s163 = sphi 0, %s149
      %s167 = sphi 0, %s167
      %s169 = sphi 0, %s167
      %s170 = sphi 0, %s169
      %s184 = sphi 0, %s170
      %s188 = sphi 0, %s188
      %s190 = sphi 0, %s188
      %s191 = sphi 0, %s190
      %s205 = sphi 0, %s191
      %s209 = sphi 0, %s209
      %s211 = sphi 0, %s209
      %s212 = sphi 0, %s211
      %s226 = sphi 0, %s212
      %s230 = sphi 0, %s230
      %s232 = sphi 0, %s230
      %s233 = sphi 0, %s232
      %s247 = sphi 0, %s233
      %s251 = sphi 0, %s251
      %s253 = sphi 0, %s251
      %s254 = sphi 0, %s253
      %s268 = sphi 0, %s254
      %s272 = sphi 0, %s272
      %s274 = sphi 0, %s272
      %s275 = sphi 0, %s274
      %s289 = sphi 0, %s275
      %s293 = sphi 0, %s293
      %s295 = sphi 0, %s293
      %s296 = sphi 0, %s295
      %s310 = sphi 0, %s296
      %s314 = sphi 0, %s314
      %s316 = sphi 0, %s314
      %s317 = sphi 0, %s316
      %s331 = sphi 0, %s317
      %s335 = sphi 0, %s335
      %s337 = sphi 0, %s335
      %s338 = sphi 0, %s337
      %s352 = sphi 0, %s338
      %s356 = sphi 0, %s356
      %s358 = sphi 0, %s356
      %s359 = sphi 0, %s358
      %s373 = sphi 0, %s359
      %s377 = sphi 0, %s377
      %s379 = sphi 0, %s377
      %s380 = sphi 0, %s379
      %s394 = sphi 0, %s380
      %s398 = sphi 0, %s398
      %s400 = sphi 0, %s398
      %s401 = sphi 0, %s400
      %s415 = sphi 0, %s401
      %s421 = sphi 0, %s423
      %s424 = sphi 0, %s421
      %s425 = sphi 0, %s424
      %s441 = sphi 0, %s425
    $region4: #{tpu_custom_call.1} parent=1 // loop_header_branch
      %40 = sbr.rel (%p38) target = $region8
    $region5: #{tpu_custom_call.1} parent=1 // loop_body
      %s42 = ssub.s32 %s37, 1
      %s43 = ssub.s32 %s37, 2
      %s50 = sadd.s32 1, %s45
      %p51 = scmp.ge.s32.totalorder %s50, 4
      %s52 = scalar_select %p51, 0, %s50
      %s53 = sadd.s32 1, %s44
      %s54 = scalar_select %p51, %s53, %s44
      %p55 = scmp.ge.s32.totalorder %s54, 2
      %s56 = scalar_select %p55, 0, %s54
      %s57 = ssub.s32 %s44, %s56
      %p58 = scmp.eq.s32.totalorder %s57, 0
      %s60 = sadd.s32 %s59, 1
      %s61 = scalar_select %p58, %s59, %s60
      %p64 = pneg %p58
      %p65 = scmp.eq.s32.totalorder %s37, 7
      %p66 = por %p64, %p65
      %p67 = scmp.ne.s32.totalorder %s59, %s62
      %p68 = scmp.eq.s32.totalorder %s37, 0
      %p69 = por %p67, %p68
      %p70 = scmp.ne.s32.totalorder %s59, %s62
      %p71 = scmp.eq.s32.totalorder %s42, 7
      %p72 = por %p70, %p71
      %p73 = scmp.ne.s32.totalorder %s62, %s63
      %p74 = scmp.eq.s32.totalorder %s42, 0
      %p75 = por %p73, %p74
      %p76 = scmp.ne.s32.totalorder %s62, %s63
      %p77 = scmp.eq.s32.totalorder %s43, 7
      %p78 = por %p76, %p77
      %p80 = scmp.ne.s32.totalorder %s63, %s79
      %p81 = scmp.eq.s32.totalorder %s43, 0
      %p82 = por %p80, %p81
      %s84 = sadd.s32 %s83, 1
      %p87 = scmp.eq.s32.totalorder %s37, 7
      %p88 = scmp.ne.s32.totalorder %s83, %s85
      %p89 = scmp.eq.s32.totalorder %s37, 0
      %p90 = por %p88, %p89
      %p91 = scmp.ne.s32.totalorder %s83, %s85
      %p92 = scmp.eq.s32.totalorder %s42, 7
      %p93 = por %p91, %p92
      %p94 = scmp.ne.s32.totalorder %s85, %s86
      %p95 = scmp.eq.s32.totalorder %s42, 0
      %p96 = por %p94, %p95
      %p97 = scmp.ne.s32.totalorder %s85, %s86
      %p98 = scmp.eq.s32.totalorder %s43, 7
      %p99 = por %p97, %p98
      %p101 = scmp.ne.s32.totalorder %s86, %s100
      %p102 = scmp.eq.s32.totalorder %s43, 0
      %p103 = por %p101, %p102
      %s105 = sadd.s32 %s104, 1
      %p108 = scmp.eq.s32.totalorder %s37, 7
      %p109 = scmp.ne.s32.totalorder %s104, %s106
      %p110 = scmp.eq.s32.totalorder %s37, 0
      %p111 = por %p109, %p110
      %p112 = scmp.ne.s32.totalorder %s104, %s106
      %p113 = scmp.eq.s32.totalorder %s42, 7
      %p114 = por %p112, %p113
      %p115 = scmp.ne.s32.totalorder %s106, %s107
      %p116 = scmp.eq.s32.totalorder %s42, 0
      %p117 = por %p115, %p116
      %p118 = scmp.ne.s32.totalorder %s106, %s107
      %p119 = scmp.eq.s32.totalorder %s43, 7
      %p120 = por %p118, %p119
      %p122 = scmp.ne.s32.totalorder %s107, %s121
      %p123 = scmp.eq.s32.totalorder %s43, 0
      %p124 = por %p122, %p123
      %s126 = sadd.s32 %s125, 1
      %p129 = scmp.eq.s32.totalorder %s37, 7
      %p130 = scmp.ne.s32.totalorder %s125, %s127
      %p131 = scmp.eq.s32.totalorder %s37, 0
      %p132 = por %p130, %p131
      %p133 = scmp.ne.s32.totalorder %s125, %s127
      %p134 = scmp.eq.s32.totalorder %s42, 7
      %p135 = por %p133, %p134
      %p136 = scmp.ne.s32.totalorder %s127, %s128
      %p137 = scmp.eq.s32.totalorder %s42, 0
      %p138 = por %p136, %p137
      %p139 = scmp.ne.s32.totalorder %s127, %s128
      %p140 = scmp.eq.s32.totalorder %s43, 7
      %p141 = por %p139, %p140
      %p143 = scmp.ne.s32.totalorder %s128, %s142
      %p144 = scmp.eq.s32.totalorder %s43, 0
      %p145 = por %p143, %p144
      %s147 = sadd.s32 %s146, 1
      %p150 = scmp.eq.s32.totalorder %s37, 7
      %p151 = scmp.ne.s32.totalorder %s146, %s148
      %p152 = scmp.eq.s32.totalorder %s37, 0
      %p153 = por %p151, %p152
      %p154 = scmp.ne.s32.totalorder %s146, %s148
      %p155 = scmp.eq.s32.totalorder %s42, 7
      %p156 = por %p154, %p155
      %p157 = scmp.ne.s32.totalorder %s148, %s149
      %p158 = scmp.eq.s32.totalorder %s42, 0
      %p159 = por %p157, %p158
      %p160 = scmp.ne.s32.totalorder %s148, %s149
      %p161 = scmp.eq.s32.totalorder %s43, 7
      %p162 = por %p160, %p161
      %p164 = scmp.ne.s32.totalorder %s149, %s163
      %p165 = scmp.eq.s32.totalorder %s43, 0
      %p166 = por %p164, %p165
      %s168 = sadd.s32 %s167, 1
      %p171 = scmp.eq.s32.totalorder %s37, 7
      %p172 = scmp.ne.s32.totalorder %s167, %s169
      %p173 = scmp.eq.s32.totalorder %s37, 0
      %p174 = por %p172, %p173
      %p175 = scmp.ne.s32.totalorder %s167, %s169
      %p176 = scmp.eq.s32.totalorder %s42, 7
      %p177 = por %p175, %p176
      %p178 = scmp.ne.s32.totalorder %s169, %s170
      %p179 = scmp.eq.s32.totalorder %s42, 0
      %p180 = por %p178, %p179
      %p181 = scmp.ne.s32.totalorder %s169, %s170
      %p182 = scmp.eq.s32.totalorder %s43, 7
      %p183 = por %p181, %p182
      %p185 = scmp.ne.s32.totalorder %s170, %s184
      %p186 = scmp.eq.s32.totalorder %s43, 0
      %p187 = por %p185, %p186
      %s189 = sadd.s32 %s188, 1
      %p192 = scmp.eq.s32.totalorder %s37, 7
      %p193 = scmp.ne.s32.totalorder %s188, %s190
      %p194 = scmp.eq.s32.totalorder %s37, 0
      %p195 = por %p193, %p194
      %p196 = scmp.ne.s32.totalorder %s188, %s190
      %p197 = scmp.eq.s32.totalorder %s42, 7
      %p198 = por %p196, %p197
      %p199 = scmp.ne.s32.totalorder %s190, %s191
      %p200 = scmp.eq.s32.totalorder %s42, 0
      %p201 = por %p199, %p200
      %p202 = scmp.ne.s32.totalorder %s190, %s191
      %p203 = scmp.eq.s32.totalorder %s43, 7
      %p204 = por %p202, %p203
      %p206 = scmp.ne.s32.totalorder %s191, %s205
      %p207 = scmp.eq.s32.totalorder %s43, 0
      %p208 = por %p206, %p207
      %s210 = sadd.s32 %s209, 1
      %p213 = scmp.eq.s32.totalorder %s37, 7
      %p214 = scmp.ne.s32.totalorder %s209, %s211
      %p215 = scmp.eq.s32.totalorder %s37, 0
      %p216 = por %p214, %p215
      %p217 = scmp.ne.s32.totalorder %s209, %s211
      %p218 = scmp.eq.s32.totalorder %s42, 7
      %p219 = por %p217, %p218
      %p220 = scmp.ne.s32.totalorder %s211, %s212
      %p221 = scmp.eq.s32.totalorder %s42, 0
      %p222 = por %p220, %p221
      %p223 = scmp.ne.s32.totalorder %s211, %s212
      %p224 = scmp.eq.s32.totalorder %s43, 7
      %p225 = por %p223, %p224
      %p227 = scmp.ne.s32.totalorder %s212, %s226
      %p228 = scmp.eq.s32.totalorder %s43, 0
      %p229 = por %p227, %p228
      %s231 = sadd.s32 %s230, 1
      %p234 = scmp.eq.s32.totalorder %s37, 7
      %p235 = scmp.ne.s32.totalorder %s230, %s232
      %p236 = scmp.eq.s32.totalorder %s37, 0
      %p237 = por %p235, %p236
      %p238 = scmp.ne.s32.totalorder %s230, %s232
      %p239 = scmp.eq.s32.totalorder %s42, 7
      %p240 = por %p238, %p239
      %p241 = scmp.ne.s32.totalorder %s232, %s233
      %p242 = scmp.eq.s32.totalorder %s42, 0
      %p243 = por %p241, %p242
      %p244 = scmp.ne.s32.totalorder %s232, %s233
      %p245 = scmp.eq.s32.totalorder %s43, 7
      %p246 = por %p244, %p245
      %p248 = scmp.ne.s32.totalorder %s233, %s247
      %p249 = scmp.eq.s32.totalorder %s43, 0
      %p250 = por %p248, %p249
      %s252 = sadd.s32 %s251, 1
      %p255 = scmp.eq.s32.totalorder %s37, 7
      %p256 = scmp.ne.s32.totalorder %s251, %s253
      %p257 = scmp.eq.s32.totalorder %s37, 0
      %p258 = por %p256, %p257
      %p259 = scmp.ne.s32.totalorder %s251, %s253
      %p260 = scmp.eq.s32.totalorder %s42, 7
      %p261 = por %p259, %p260
      %p262 = scmp.ne.s32.totalorder %s253, %s254
      %p263 = scmp.eq.s32.totalorder %s42, 0
      %p264 = por %p262, %p263
      %p265 = scmp.ne.s32.totalorder %s253, %s254
      %p266 = scmp.eq.s32.totalorder %s43, 7
      %p267 = por %p265, %p266
      %p269 = scmp.ne.s32.totalorder %s254, %s268
      %p270 = scmp.eq.s32.totalorder %s43, 0
      %p271 = por %p269, %p270
      %s273 = sadd.s32 %s272, 1
      %p276 = scmp.eq.s32.totalorder %s37, 7
      %p277 = scmp.ne.s32.totalorder %s272, %s274
      %p278 = scmp.eq.s32.totalorder %s37, 0
      %p279 = por %p277, %p278
      %p280 = scmp.ne.s32.totalorder %s272, %s274
      %p281 = scmp.eq.s32.totalorder %s42, 7
      %p282 = por %p280, %p281
      %p283 = scmp.ne.s32.totalorder %s274, %s275
      %p284 = scmp.eq.s32.totalorder %s42, 0
      %p285 = por %p283, %p284
      %p286 = scmp.ne.s32.totalorder %s274, %s275
      %p287 = scmp.eq.s32.totalorder %s43, 7
      %p288 = por %p286, %p287
      %p290 = scmp.ne.s32.totalorder %s275, %s289
      %p291 = scmp.eq.s32.totalorder %s43, 0
      %p292 = por %p290, %p291
      %s294 = sadd.s32 %s293, 1
      %p297 = scmp.eq.s32.totalorder %s37, 7
      %p298 = scmp.ne.s32.totalorder %s293, %s295
      %p299 = scmp.eq.s32.totalorder %s37, 0
      %p300 = por %p298, %p299
      %p301 = scmp.ne.s32.totalorder %s293, %s295
      %p302 = scmp.eq.s32.totalorder %s42, 7
      %p303 = por %p301, %p302
      %p304 = scmp.ne.s32.totalorder %s295, %s296
      %p305 = scmp.eq.s32.totalorder %s42, 0
      %p306 = por %p304, %p305
      %p307 = scmp.ne.s32.totalorder %s295, %s296
      %p308 = scmp.eq.s32.totalorder %s43, 7
      %p309 = por %p307, %p308
      %p311 = scmp.ne.s32.totalorder %s296, %s310
      %p312 = scmp.eq.s32.totalorder %s43, 0
      %p313 = por %p311, %p312
      %s315 = sadd.s32 %s314, 1
      %p318 = scmp.eq.s32.totalorder %s37, 7
      %p319 = scmp.ne.s32.totalorder %s314, %s316
      %p320 = scmp.eq.s32.totalorder %s37, 0
      %p321 = por %p319, %p320
      %p322 = scmp.ne.s32.totalorder %s314, %s316
      %p323 = scmp.eq.s32.totalorder %s42, 7
      %p324 = por %p322, %p323
      %p325 = scmp.ne.s32.totalorder %s316, %s317
      %p326 = scmp.eq.s32.totalorder %s42, 0
      %p327 = por %p325, %p326
      %p328 = scmp.ne.s32.totalorder %s316, %s317
      %p329 = scmp.eq.s32.totalorder %s43, 7
      %p330 = por %p328, %p329
      %p332 = scmp.ne.s32.totalorder %s317, %s331
      %p333 = scmp.eq.s32.totalorder %s43, 0
      %p334 = por %p332, %p333
      %s336 = sadd.s32 %s335, 1
      %p339 = scmp.eq.s32.totalorder %s37, 7
      %p340 = scmp.ne.s32.totalorder %s335, %s337
      %p341 = scmp.eq.s32.totalorder %s37, 0
      %p342 = por %p340, %p341
      %p343 = scmp.ne.s32.totalorder %s335, %s337
      %p344 = scmp.eq.s32.totalorder %s42, 7
      %p345 = por %p343, %p344
      %p346 = scmp.ne.s32.totalorder %s337, %s338
      %p347 = scmp.eq.s32.totalorder %s42, 0
      %p348 = por %p346, %p347
      %p349 = scmp.ne.s32.totalorder %s337, %s338
      %p350 = scmp.eq.s32.totalorder %s43, 7
      %p351 = por %p349, %p350
      %p353 = scmp.ne.s32.totalorder %s338, %s352
      %p354 = scmp.eq.s32.totalorder %s43, 0
      %p355 = por %p353, %p354
      %s357 = sadd.s32 %s356, 1
      %p360 = scmp.eq.s32.totalorder %s37, 7
      %p361 = scmp.ne.s32.totalorder %s356, %s358
      %p362 = scmp.eq.s32.totalorder %s37, 0
      %p363 = por %p361, %p362
      %p364 = scmp.ne.s32.totalorder %s356, %s358
      %p365 = scmp.eq.s32.totalorder %s42, 7
      %p366 = por %p364, %p365
      %p367 = scmp.ne.s32.totalorder %s358, %s359
      %p368 = scmp.eq.s32.totalorder %s42, 0
      %p369 = por %p367, %p368
      %p370 = scmp.ne.s32.totalorder %s358, %s359
      %p371 = scmp.eq.s32.totalorder %s43, 7
      %p372 = por %p370, %p371
      %p374 = scmp.ne.s32.totalorder %s359, %s373
      %p375 = scmp.eq.s32.totalorder %s43, 0
      %p376 = por %p374, %p375
      %s378 = sadd.s32 %s377, 1
      %p381 = scmp.eq.s32.totalorder %s37, 7
      %p382 = scmp.ne.s32.totalorder %s377, %s379
      %p383 = scmp.eq.s32.totalorder %s37, 0
      %p384 = por %p382, %p383
      %p385 = scmp.ne.s32.totalorder %s377, %s379
      %p386 = scmp.eq.s32.totalorder %s42, 7
      %p387 = por %p385, %p386
      %p388 = scmp.ne.s32.totalorder %s379, %s380
      %p389 = scmp.eq.s32.totalorder %s42, 0
      %p390 = por %p388, %p389
      %p391 = scmp.ne.s32.totalorder %s379, %s380
      %p392 = scmp.eq.s32.totalorder %s43, 7
      %p393 = por %p391, %p392
      %p395 = scmp.ne.s32.totalorder %s380, %s394
      %p396 = scmp.eq.s32.totalorder %s43, 0
      %p397 = por %p395, %p396
      %s399 = sadd.s32 %s398, 1
      %p402 = scmp.eq.s32.totalorder %s37, 7
      %p403 = scmp.ne.s32.totalorder %s398, %s400
      %p404 = scmp.eq.s32.totalorder %s37, 0
      %p405 = por %p403, %p404
      %p406 = scmp.ne.s32.totalorder %s398, %s400
      %p407 = scmp.eq.s32.totalorder %s42, 7
      %p408 = por %p406, %p407
      %p409 = scmp.ne.s32.totalorder %s400, %s401
      %p410 = scmp.eq.s32.totalorder %s42, 0
      %p411 = por %p409, %p410
      %p412 = scmp.ne.s32.totalorder %s400, %s401
      %p413 = scmp.eq.s32.totalorder %s43, 7
      %p414 = por %p412, %p413
      %p416 = scmp.ne.s32.totalorder %s401, %s415
      %p417 = scmp.eq.s32.totalorder %s43, 0
      %p418 = por %p416, %p417
      %s419 = ssub.s32 %s44, %s56
      %p420 = scmp.eq.s32.totalorder %s419, 0
      %s422 = sadd.s32 %s421, 1
      %s423 = scalar_select %p420, %s421, %s422
      %p426 = pneg %p420
      %p427 = scmp.eq.s32.totalorder %s37, 7
      %p428 = por %p426, %p427
      %p429 = scmp.ne.s32.totalorder %s421, %s424
      %p430 = scmp.eq.s32.totalorder %s37, 0
      %p431 = por %p429, %p430
      %p432 = scmp.ne.s32.totalorder %s421, %s424
      %p433 = scmp.eq.s32.totalorder %s42, 7
      %p434 = por %p432, %p433
      %p435 = scmp.ne.s32.totalorder %s424, %s425
      %p436 = scmp.eq.s32.totalorder %s42, 0
      %p437 = por %p435, %p436
      %p438 = scmp.ne.s32.totalorder %s424, %s425
      %p439 = scmp.eq.s32.totalorder %s43, 7
      %p440 = por %p438, %p439
      %p442 = scmp.ne.s32.totalorder %s425, %s441
      %p443 = scmp.eq.s32.totalorder %s43, 0
      %p444 = por %p442, %p443
      %p445 = scmp.le.s32.totalorder 1, %s37
      %p446 = scmp.lt.s32.totalorder %s37, 9
      %p447 = pnand %p445, %p446
      %p448 = pneg %p447
      // Predicated region
      $region9: #{tpu_custom_call.1} parent=5 // pred_check
        _
      $region10: #{tpu_custom_call.1} parent=5 // pred_check_branch
        %450 = sbr.rel (%p447) target = $region12
      $region11: #{tpu_custom_call.1} parent=5 // pred_region
        %s451 = ssub.s32 %s37, 1
        // Predicated region
        $region13: #{tpu_custom_call.1} parent=11 // pred_check
          %p452 = pneg %p96
        $region14: #{tpu_custom_call.1} parent=11 // pred_check_branch
          %454 = sbr.rel (%p452) target = $region16
        $region15: #{tpu_custom_call.1} parent=11 // pred_region
          %s456 = ssub.s32 128, 128
          %457 = vsyncadd [#allocation7], %s456
          %s459 = sshll.u32 [#allocation6], 4
          %s460 = int_to_ptr.vmem [resolvable:$true] %s459
          %462 = dma.hbm_to_vmem [thread:$0]  %s1, 128, %s460, [#allocation7]
        $region16: #{tpu_custom_call.1} parent=11 // pred_fallthru
          _
        // Predicated region
        $region17: #{tpu_custom_call.1} parent=11 // pred_check
          %p463 = pneg %p117
        $region18: #{tpu_custom_call.1} parent=11 // pred_check_branch
          %465 = sbr.rel (%p463) target = $region20
        $region19: #{tpu_custom_call.1} parent=11 // pred_region
          %s467 = ssub.s32 192, 192
          %468 = vsyncadd [#allocation7], %s467
          %s469 = sshll.u32 [#allocation8], 4
          %s470 = int_to_ptr.vmem [resolvable:$true] %s469
          %475 = dma.hbm_to_vmem [thread:$0]  %s2, 192, %s470, [#allocation7], 48, 48, 3
        $region20: #{tpu_custom_call.1} parent=11 // pred_fallthru
          _
        // Predicated region
        $region21: #{tpu_custom_call.1} parent=11 // pred_check
          %p476 = pneg %p138
        $region22: #{tpu_custom_call.1} parent=11 // pred_check_branch
          %478 = sbr.rel (%p476) target = $region24
        $region23: #{tpu_custom_call.1} parent=11 // pred_region
          %s480 = ssub.s32 192, 192
          %481 = vsyncadd [#allocation10], %s480
          %s482 = sshll.u32 [#allocation9], 4
          %s483 = int_to_ptr.vmem [resolvable:$true] %s482
          %488 = dma.hbm_to_vmem [thread:$0]  %s3, 192, %s483, [#allocation10], 48, 48, 3
        $region24: #{tpu_custom_call.1} parent=11 // pred_fallthru
          _
        // Predicated region
        $region25: #{tpu_custom_call.1} parent=11 // pred_check
          %p489 = pneg %p159
        $region26: #{tpu_custom_call.1} parent=11 // pred_check_branch
          %491 = sbr.rel (%p489) target = $region28
        $region27: #{tpu_custom_call.1} parent=11 // pred_region
          %s493 = ssub.s32 147456, 147456
          %494 = vsyncadd [#allocation10], %s493
          %s495 = sshll.u32 [#allocation11], 4
          %s496 = int_to_ptr.vmem [resolvable:$true] %s495
          %501 = dma.hbm_to_vmem [thread:$0]  %s4, 147456, %s496, [#allocation10], 768, 768, 48
        $region28: #{tpu_custom_call.1} parent=11 // pred_fallthru
          _
        // Predicated region
        $region29: #{tpu_custom_call.1} parent=11 // pred_check
          %p502 = pneg %p180
        $region30: #{tpu_custom_call.1} parent=11 // pred_check_branch
          %504 = sbr.rel (%p502) target = $region32
        $region31: #{tpu_custom_call.1} parent=11 // pred_region
          %s506 = ssub.s32 49152, 49152
          %507 = vsyncadd [#allocation13], %s506
          %s508 = sshll.u32 [#allocation12], 4
          %s509 = int_to_ptr.vmem [resolvable:$true] %s508
          %514 = dma.hbm_to_vmem [thread:$0]  %s5, 49152, %s509, [#allocation13], 192, 192, 12
        $region32: #{tpu_custom_call.1} parent=11 // pred_fallthru
          _
        // Predicated region
        $region33: #{tpu_custom_call.1} parent=11 // pred_check
          %p515 = pneg %p201
        $region34: #{tpu_custom_call.1} parent=11 // pred_check_branch
          %517 = sbr.rel (%p515) target = $region36
        $region35: #{tpu_custom_call.1} parent=11 // pred_region
          %s519 = ssub.s32 192, 192
          %520 = vsyncadd [#allocation13], %s519
          %s521 = sshll.u32 [#allocation14], 4
          %s522 = int_to_ptr.vmem [resolvable:$true] %s521
          %527 = dma.hbm_to_vmem [thread:$0]  %s6, 192, %s522, [#allocation13], 48, 48, 3
        $region36: #{tpu_custom_call.1} parent=11 // pred_fallthru
          _
        // Predicated region
        $region37: #{tpu_custom_call.1} parent=11 // pred_check
          %p528 = pneg %p222
        $region38: #{tpu_custom_call.1} parent=11 // pred_check_branch
          %530 = sbr.rel (%p528) target = $region40
        $region39: #{tpu_custom_call.1} parent=11 // pred_region
          %s532 = ssub.s32 192, 192
          %533 = vsyncadd [#allocation16], %s532
          %s534 = sshll.u32 [#allocation15], 4
          %s535 = int_to_ptr.vmem [resolvable:$true] %s534
          %540 = dma.hbm_to_vmem [thread:$0]  %s7, 192, %s535, [#allocation16], 48, 48, 3
        $region40: #{tpu_custom_call.1} parent=11 // pred_fallthru
          _
        // Predicated region
        $region41: #{tpu_custom_call.1} parent=11 // pred_check
          %p541 = pneg %p243
        $region42: #{tpu_custom_call.1} parent=11 // pred_check_branch
          %543 = sbr.rel (%p541) target = $region44
        $region43: #{tpu_custom_call.1} parent=11 // pred_region
          %s545 = ssub.s32 192, 192
          %546 = vsyncadd [#allocation16], %s545
          %s547 = sshll.u32 [#allocation17], 4
          %s548 = int_to_ptr.vmem [resolvable:$true] %s547
          %553 = dma.hbm_to_vmem [thread:$0]  %s8, 192, %s548, [#allocation16], 48, 48, 3
        $region44: #{tpu_custom_call.1} parent=11 // pred_fallthru
          _
        // Predicated region
        $region45: #{tpu_custom_call.1} parent=11 // pred_check
          %p554 = pneg %p264
        $region46: #{tpu_custom_call.1} parent=11 // pred_check_branch
          %556 = sbr.rel (%p554) target = $region48
        $region47: #{tpu_custom_call.1} parent=11 // pred_region
          %s558 = ssub.s32 147456, 147456
          %559 = vsyncadd [#allocation19], %s558
          %s560 = sshll.u32 [#allocation18], 4
          %s561 = int_to_ptr.vmem [resolvable:$true] %s560
          %566 = dma.hbm_to_vmem [thread:$0]  %s9, 147456, %s561, [#allocation19], 768, 768, 48
        $region48: #{tpu_custom_call.1} parent=11 // pred_fallthru
          _
        // Predicated region
        $region49: #{tpu_custom_call.1} parent=11 // pred_check
          %p567 = pneg %p285
        $region50: #{tpu_custom_call.1} parent=11 // pred_check_branch
          %569 = sbr.rel (%p567) target = $region52
        $region51: #{tpu_custom_call.1} parent=11 // pred_region
          %s571 = ssub.s32 768, 768
          %572 = vsyncadd [#allocation19], %s571
          %s573 = sshll.u32 [#allocation20], 4
          %s574 = int_to_ptr.vmem [resolvable:$true] %s573
          %579 = dma.hbm_to_vmem [thread:$0]  %s10, 768, %s574, [#allocation19], 192, 192, 12
        $region52: #{tpu_custom_call.1} parent=11 // pred_fallthru
          _
        // Predicated region
        $region53: #{tpu_custom_call.1} parent=11 // pred_check
          %p580 = pneg %p306
        $region54: #{tpu_custom_call.1} parent=11 // pred_check_branch
          %582 = sbr.rel (%p580) target = $region56
        $region55: #{tpu_custom_call.1} parent=11 // pred_region
          %s584 = ssub.s32 147456, 147456
          %585 = vsyncadd [#allocation22], %s584
          %s586 = sshll.u32 [#allocation21], 4
          %s587 = int_to_ptr.vmem [resolvable:$true] %s586
          %592 = dma.hbm_to_vmem [thread:$0]  %s11, 147456, %s587, [#allocation22], 192, 192, 12
        $region56: #{tpu_custom_call.1} parent=11 // pred_fallthru
          _
        // Predicated region
        $region57: #{tpu_custom_call.1} parent=11 // pred_check
          %p593 = pneg %p327
        $region58: #{tpu_custom_call.1} parent=11 // pred_check_branch
          %595 = sbr.rel (%p593) target = $region60
        $region59: #{tpu_custom_call.1} parent=11 // pred_region
          %s597 = ssub.s32 192, 192
          %598 = vsyncadd [#allocation22], %s597
          %s599 = sshll.u32 [#allocation23], 4
          %s600 = int_to_ptr.vmem [resolvable:$true] %s599
          %605 = dma.hbm_to_vmem [thread:$0]  %s12, 192, %s600, [#allocation22], 48, 48, 3
        $region60: #{tpu_custom_call.1} parent=11 // pred_fallthru
          _
        // Predicated region
        $region61: #{tpu_custom_call.1} parent=11 // pred_check
          %p606 = pneg %p348
        $region62: #{tpu_custom_call.1} parent=11 // pred_check_branch
          %608 = sbr.rel (%p606) target = $region64
        $region63: #{tpu_custom_call.1} parent=11 // pred_region
          %s610 = ssub.s32 48, 48
          %611 = vsyncadd [#allocation25], %s610
          %s613 = sshll.u32 [#allocation24], 4
          %s614 = int_to_ptr.vmem [resolvable:$true] %s613
          %616 = dma.hbm_to_vmem [thread:$0]  %s13, 48, %s614, [#allocation25]
        $region64: #{tpu_custom_call.1} parent=11 // pred_fallthru
          _
        // Predicated region
        $region65: #{tpu_custom_call.1} parent=11 // pred_check
          %p617 = pneg %p369
        $region66: #{tpu_custom_call.1} parent=11 // pred_check_branch
          %619 = sbr.rel (%p617) target = $region68
        $region67: #{tpu_custom_call.1} parent=11 // pred_region
          %s621 = ssub.s32 48, 48
          %622 = vsyncadd [#allocation25], %s621
          %s624 = sshll.u32 [#allocation26], 4
          %s625 = int_to_ptr.vmem [resolvable:$true] %s624
          %627 = dma.hbm_to_vmem [thread:$0]  %s14, 48, %s625, [#allocation25]
        $region68: #{tpu_custom_call.1} parent=11 // pred_fallthru
          _
        // Predicated region
        $region69: #{tpu_custom_call.1} parent=11 // pred_check
          %p628 = pneg %p390
        $region70: #{tpu_custom_call.1} parent=11 // pred_check_branch
          %630 = sbr.rel (%p628) target = $region72
        $region71: #{tpu_custom_call.1} parent=11 // pred_region
          %s632 = ssub.s32 3072, 3072
          %633 = vsyncadd [#allocation28], %s632
          %s634 = sshll.u32 [#allocation27], 4
          %s635 = int_to_ptr.vmem [resolvable:$true] %s634
          %640 = dma.hbm_to_vmem [thread:$0]  %s15, 3072, %s635, [#allocation28], 64, 64, 4
        $region72: #{tpu_custom_call.1} parent=11 // pred_fallthru
          _
        // Predicated region
        $region73: #{tpu_custom_call.1} parent=11 // pred_check
          %p641 = pneg %p411
        $region74: #{tpu_custom_call.1} parent=11 // pred_check_branch
          %643 = sbr.rel (%p641) target = $region76
        $region75: #{tpu_custom_call.1} parent=11 // pred_region
          %s645 = ssub.s32 16, 16
          %646 = vsyncadd [#allocation28], %s645
          %s648 = sshll.u32 [#allocation29], 4
          %s649 = int_to_ptr.vmem [resolvable:$true] %s648
          %651 = dma.hbm_to_vmem [thread:$0]  %s16, 16, %s649, [#allocation28]
        $region76: #{tpu_custom_call.1} parent=11 // pred_fallthru
          _
      $region12: #{tpu_custom_call.1} parent=5 // pred_fallthru
        _
      %p652 = scmp.lt.s32.totalorder %s37, 8
      // Predicated region
      $region77: #{tpu_custom_call.1} parent=5 // pred_check
        %p653 = pneg %p652
      $region78: #{tpu_custom_call.1} parent=5 // pred_check_branch
        %655 = sbr.rel (%p653) target = $region80
      $region79: #{tpu_custom_call.1} parent=5 // pred_region
        // Predicated region
        $region81: #{tpu_custom_call.1} parent=79 // pred_check
          %p656 = pneg %p69
        $region82: #{tpu_custom_call.1} parent=79 // pred_check_branch
          %658 = sbr.rel (%p656) target = $region84
        $region83: #{tpu_custom_call.1} parent=79 // pred_region
          %s659 = sand.u32 %s59, 1
          %s660 = scalar_lea.sflag [#allocation4], %s659
          %s661 = sand.u32 %s59, 1
          %s662 = smul.addr %s661, 24
          %s663 = scalar_lea.vmem [#allocation3], %s662
          %s665 = ssub.s32 384, 384
          %666 = vsyncadd %s660, %s665
          %s667 = smul.addr %s44, 3
          %s668 = smul.addr %s667, 128
          %s669 = scalar_lea.hbm %s0, %s668
          %s671 = sshll.u32 %s663, 4
          %s672 = int_to_ptr.vmem [resolvable:$true] %s671
          %674 = dma.hbm_to_vmem [thread:$0]  %s669, 384, %s672, %s660
        $region84: #{tpu_custom_call.1} parent=79 // pred_fallthru
          _
      $region80: #{tpu_custom_call.1} parent=5 // pred_fallthru
        _
      %p675 = scmp.le.s32.totalorder 1, %s37
      %p676 = scmp.lt.s32.totalorder %s37, 9
      %p677 = pnand %p675, %p676
      %p678 = pneg %p677
      // Predicated region
      $region85: #{tpu_custom_call.1} parent=5 // pred_check
        _
      $region86: #{tpu_custom_call.1} parent=5 // pred_check_branch
        %680 = sbr.rel (%p677) target = $region88
      $region87: #{tpu_custom_call.1} parent=5 // pred_region
        %s681 = ssub.s32 %s37, 1
        %s682 = sand.u32 %s62, 1
        %s683 = scalar_lea.sflag [#allocation4], %s682
        %s684 = sand.u32 %s62, 1
        %s685 = smul.addr %s684, 24
        %s686 = scalar_lea.vmem [#allocation3], %s685
        // Predicated region
        $region89: #{tpu_custom_call.1} parent=87 // pred_check
          %p687 = pneg %p75
        $region90: #{tpu_custom_call.1} parent=87 // pred_check_branch
          %689 = sbr.rel (%p687) target = $region92
        $region91: #{tpu_custom_call.1} parent=87 // pred_region
          %690 = dma.done %s683, 384
        $region92: #{tpu_custom_call.1} parent=87 // pred_fallthru
          _
        // Predicated region
        $region93: #{tpu_custom_call.1} parent=87 // pred_check
          %p691 = pneg %p96
        $region94: #{tpu_custom_call.1} parent=87 // pred_check_branch
          %693 = sbr.rel (%p691) target = $region96
        $region95: #{tpu_custom_call.1} parent=87 // pred_region
          %694 = dma.done [#allocation7], 128
        $region96: #{tpu_custom_call.1} parent=87 // pred_fallthru
          _
        // Predicated region
        $region97: #{tpu_custom_call.1} parent=87 // pred_check
          %p695 = pneg %p117
        $region98: #{tpu_custom_call.1} parent=87 // pred_check_branch
          %697 = sbr.rel (%p695) target = $region100
        $region99: #{tpu_custom_call.1} parent=87 // pred_region
          %698 = dma.done [#allocation7], 192
        $region100: #{tpu_custom_call.1} parent=87 // pred_fallthru
          _
        // Predicated region
        $region101: #{tpu_custom_call.1} parent=87 // pred_check
          %p699 = pneg %p138
        $region102: #{tpu_custom_call.1} parent=87 // pred_check_branch
          %701 = sbr.rel (%p699) target = $region104
        $region103: #{tpu_custom_call.1} parent=87 // pred_region
          %702 = dma.done [#allocation10], 192
        $region104: #{tpu_custom_call.1} parent=87 // pred_fallthru
          _
        // Predicated region
        $region105: #{tpu_custom_call.1} parent=87 // pred_check
          %p703 = pneg %p159
        $region106: #{tpu_custom_call.1} parent=87 // pred_check_branch
          %705 = sbr.rel (%p703) target = $region108
        $region107: #{tpu_custom_call.1} parent=87 // pred_region
          %706 = dma.done [#allocation10], 147456
        $region108: #{tpu_custom_call.1} parent=87 // pred_fallthru
          _
        // Predicated region
        $region109: #{tpu_custom_call.1} parent=87 // pred_check
          %p707 = pneg %p180
        $region110: #{tpu_custom_call.1} parent=87 // pred_check_branch
          %709 = sbr.rel (%p707) target = $region112
        $region111: #{tpu_custom_call.1} parent=87 // pred_region
          %710 = dma.done [#allocation13], 49152
        $region112: #{tpu_custom_call.1} parent=87 // pred_fallthru
          _
        // Predicated region
        $region113: #{tpu_custom_call.1} parent=87 // pred_check
          %p711 = pneg %p201
        $region114: #{tpu_custom_call.1} parent=87 // pred_check_branch
          %713 = sbr.rel (%p711) target = $region116
        $region115: #{tpu_custom_call.1} parent=87 // pred_region
          %714 = dma.done [#allocation13], 192
        $region116: #{tpu_custom_call.1} parent=87 // pred_fallthru
          _
        // Predicated region
        $region117: #{tpu_custom_call.1} parent=87 // pred_check
          %p715 = pneg %p222
        $region118: #{tpu_custom_call.1} parent=87 // pred_check_branch
          %717 = sbr.rel (%p715) target = $region120
        $region119: #{tpu_custom_call.1} parent=87 // pred_region
          %718 = dma.done [#allocation16], 192
        $region120: #{tpu_custom_call.1} parent=87 // pred_fallthru
          _
        // Predicated region
        $region121: #{tpu_custom_call.1} parent=87 // pred_check
          %p719 = pneg %p243
        $region122: #{tpu_custom_call.1} parent=87 // pred_check_branch
          %721 = sbr.rel (%p719) target = $region124
        $region123: #{tpu_custom_call.1} parent=87 // pred_region
          %722 = dma.done [#allocation16], 192
        $region124: #{tpu_custom_call.1} parent=87 // pred_fallthru
          _
        // Predicated region
        $region125: #{tpu_custom_call.1} parent=87 // pred_check
          %p723 = pneg %p264
        $region126: #{tpu_custom_call.1} parent=87 // pred_check_branch
          %725 = sbr.rel (%p723) target = $region128
        $region127: #{tpu_custom_call.1} parent=87 // pred_region
          %726 = dma.done [#allocation19], 147456
        $region128: #{tpu_custom_call.1} parent=87 // pred_fallthru
          _
        // Predicated region
        $region129: #{tpu_custom_call.1} parent=87 // pred_check
          %p727 = pneg %p285
        $region130: #{tpu_custom_call.1} parent=87 // pred_check_branch
          %729 = sbr.rel (%p727) target = $region132
        $region131: #{tpu_custom_call.1} parent=87 // pred_region
          %730 = dma.done [#allocation19], 768
        $region132: #{tpu_custom_call.1} parent=87 // pred_fallthru
          _
        // Predicated region
        $region133: #{tpu_custom_call.1} parent=87 // pred_check
          %p731 = pneg %p306
        $region134: #{tpu_custom_call.1} parent=87 // pred_check_branch
          %733 = sbr.rel (%p731) target = $region136
        $region135: #{tpu_custom_call.1} parent=87 // pred_region
          %734 = dma.done [#allocation22], 147456
        $region136: #{tpu_custom_call.1} parent=87 // pred_fallthru
          _
        // Predicated region
        $region137: #{tpu_custom_call.1} parent=87 // pred_check
          %p735 = pneg %p327
        $region138: #{tpu_custom_call.1} parent=87 // pred_check_branch
          %737 = sbr.rel (%p735) target = $region140
        $region139: #{tpu_custom_call.1} parent=87 // pred_region
          %738 = dma.done [#allocation22], 192
        $region140: #{tpu_custom_call.1} parent=87 // pred_fallthru
          _
        // Predicated region
        $region141: #{tpu_custom_call.1} parent=87 // pred_check
          %p739 = pneg %p348
        $region142: #{tpu_custom_call.1} parent=87 // pred_check_branch
          %741 = sbr.rel (%p739) target = $region144
        $region143: #{tpu_custom_call.1} parent=87 // pred_region
          %742 = dma.done [#allocation25], 48
        $region144: #{tpu_custom_call.1} parent=87 // pred_fallthru
          _
        // Predicated region
        $region145: #{tpu_custom_call.1} parent=87 // pred_check
          %p743 = pneg %p369
        $region146: #{tpu_custom_call.1} parent=87 // pred_check_branch
          %745 = sbr.rel (%p743) target = $region148
        $region147: #{tpu_custom_call.1} parent=87 // pred_region
          %746 = dma.done [#allocation25], 48
        $region148: #{tpu_custom_call.1} parent=87 // pred_fallthru
          _
        // Predicated region
        $region149: #{tpu_custom_call.1} parent=87 // pred_check
          %p747 = pneg %p390
        $region150: #{tpu_custom_call.1} parent=87 // pred_check_branch
          %749 = sbr.rel (%p747) target = $region152
        $region151: #{tpu_custom_call.1} parent=87 // pred_region
          %750 = dma.done [#allocation28], 3072
        $region152: #{tpu_custom_call.1} parent=87 // pred_fallthru
          _
        // Predicated region
        $region153: #{tpu_custom_call.1} parent=87 // pred_check
          %p751 = pneg %p411
        $region154: #{tpu_custom_call.1} parent=87 // pred_check_branch
          %753 = sbr.rel (%p751) target = $region156
        $region155: #{tpu_custom_call.1} parent=87 // pred_region
          %754 = dma.done [#allocation28], 16
        $region156: #{tpu_custom_call.1} parent=87 // pred_fallthru
          _
        %s755 = sand.u32 %s62, 1
        %s756 = scalar_lea.sflag [#allocation4], %s755
        %s757 = sand.u32 %s62, 1
        %s758 = smul.addr %s757, 24
        %s759 = scalar_lea.vmem [#allocation3], %s758
        %p760 = pneg %p75
        %p761 = pneg %p72
        %p762 = pneg %p96
        %p763 = pneg %p93
        %p764 = pneg %p117
        %p765 = pneg %p114
        %p766 = pneg %p138
        %p767 = pneg %p135
        %p768 = pneg %p159
        %p769 = pneg %p156
        %p770 = pneg %p180
        %p771 = pneg %p177
        %p772 = pneg %p201
        %p773 = pneg %p198
        %p774 = pneg %p222
        %p775 = pneg %p219
        %p776 = pneg %p243
        %p777 = pneg %p240
        %p778 = pneg %p264
        %p779 = pneg %p261
        %p780 = pneg %p285
        %p781 = pneg %p282
        %p782 = pneg %p306
        %p783 = pneg %p303
        %p784 = pneg %p327
        %p785 = pneg %p324
        %p786 = pneg %p348
        %p787 = pneg %p345
        %p788 = pneg %p369
        %p789 = pneg %p366
        %p790 = pneg %p390
        %p791 = pneg %p387
        %p792 = pneg %p411
        %p793 = pneg %p408
        %p794 = pneg %p437
        %p795 = pneg %p434
        %s796 = sand.u32 %s424, 1
        %s797 = scalar_lea.sflag [#allocation5], %s796
        %s798 = sand.u32 %s424, 1
        %s799 = smul.addr %s798, 8
        %s800 = scalar_lea.vmem [#allocation30], %s799
        %p802 = scmp.eq.s32.totalorder %s47, 0
        // Predicated region
        $region157: #{tpu_custom_call.1} parent=87 // pred_check
          %p803 = pneg %p802
        $region158: #{tpu_custom_call.1} parent=87 // pred_check_branch
          %805 = sbr.rel (%p803) target = $region160
        $region159: #{tpu_custom_call.1} parent=87 // pred_region
          %v806 = vld [vmem:[%s686] sm:$0xff]
          %v807 = vld [vmem:[%s686 + $0x8] sm:$0xff]
          %v808 = vld [vmem:[%s686 + $0x10] sm:$0xff]
          %809 = vst [vmem:[#allocation2] sm:$0xff] %v806
          %810 = vst [vmem:[#allocation2 + $0x8] sm:$0xff] %v807
          %811 = vst [vmem:[#allocation2 + $0x10] sm:$0xff] %v808
        $region160: #{tpu_custom_call.1} parent=87 // pred_fallthru
          _
        %v812 = vld [vmem:[#allocation2] sm:$0xff]
        %v813 = vld [vmem:[#allocation2 + $0x8] sm:$0xff]
        %v814 = vld [vmem:[#allocation2 + $0x10] sm:$0xff]
        %v815 = vld [vmem:[#allocation6] sm:$0xff]
        %s816 = smul.u32 %s47, 3
        %s817 = scalar_lea.vmem [#allocation8], %s816
        %v818 = vld [vmem:[%s817] sm:$0x7]
        %s819 = scalar_lea.vmem [#allocation9], %s816
        %v820 = vld [vmem:[%s819] sm:$0x7]
        %v821 = vadd.f32 %v812, %v813
        %v822 = vadd.f32 %v821, %v814
        %823 = vadd.xlane.f32.xlu0 %v822
        %v824 = vpop.xlane.xlu0 %823
        %v825 = vrcp.pop 384.0
        %v826 = vmul.f32 %v824, %v825
        %v827 = vsub.f32 %v812, %v826
        %v828 = vsub.f32 %v813, %v826
        %v829 = vsub.f32 %v814, %v826
        %v830 = vmul.f32 %v827, %v827
        %v831 = vmul.f32 %v828, %v828
        %v832 = vmul.f32 %v829, %v829
        %v833 = vadd.f32 %v830, %v831
        %v834 = vadd.f32 %v833, %v832
        %835 = vadd.xlane.f32.xlu0 %v834
        %v836 = vpop.xlane.xlu0 %835
        %v837 = vmul.f32 %v836, %v825
        %v838 = vadd.f32 %v837, 1e-05
        %v839 = vrsqrt.pop %v838
        %v840 = vmul.f32 %v827, %v839
        %v841 = vmul.f32 %v828, %v839
        %v842 = vmul.f32 %v829, %v839
        %v844 = vlaneseq
        %v845 = vshrl.u32 %v844, 7
        %v846 = vsub.s32 0, %v845
        %v847 = vrot.slane %v818, %v846
        %v848 = vlaneseq
        %v849 = vshrl.u32 %v848, 7
        %v850 = vsub.s32 1, %v849
        %v851 = vrot.slane %v818, %v850
        %v852 = vlaneseq
        %v853 = vshrl.u32 %v852, 7
        %v854 = vsub.s32 2, %v853
        %v855 = vrot.slane %v818, %v854
        %v859 = vmul.f32 %v840, %v847
        %v860 = vmul.f32 %v841, %v851
        %v861 = vmul.f32 %v842, %v855
        %v863 = vlaneseq
        %v864 = vshrl.u32 %v863, 7
        %v865 = vsub.s32 0, %v864
        %v866 = vrot.slane %v820, %v865
        %v867 = vlaneseq
        %v868 = vshrl.u32 %v867, 7
        %v869 = vsub.s32 1, %v868
        %v870 = vrot.slane %v820, %v869
        %v871 = vlaneseq
        %v872 = vshrl.u32 %v871, 7
        %v873 = vsub.s32 2, %v872
        %v874 = vrot.slane %v820, %v873
        %v878 = vadd.f32 %v859, %v866
        %v879 = vadd.f32 %v860, %v870
        %v880 = vadd.f32 %v861, %v874
        %v881 = vpack.c.bf16 %v878, %v878
        %v882 = vpack.c.bf16 %v879, %v879
        %v883 = vpack.c.bf16 %v880, %v880
        %s884 = smul.u32 %s47, 576
        %s885 = smul.addr %s884, 4
        %s886 = scalar_lea.vmem [#allocation11], %s885
        %v887 = vld [vmem:[%s886] sm:$0xff]
        %v888 = vld [vmem:[%s886 + $0x8] sm:$0xff]
        %v889 = vld [vmem:[%s886 + $0x10] sm:$0xff]
        %v890 = vld [vmem:[%s886 + $0x18] sm:$0xff]
        %v891 = vld [vmem:[%s886 + $0x20] sm:$0xff]
        %v892 = vld [vmem:[%s886 + $0x28] sm:$0xff]
        %v893 = vld [vmem:[%s886 + $0x30] sm:$0xff]
        %v894 = vld [vmem:[%s886 + $0x38] sm:$0xff]
        %v895 = vld [vmem:[%s886 + $0x40] sm:$0xff]
        %v896 = vld [vmem:[%s886 + $0x48] sm:$0xff]
        %v897 = vld [vmem:[%s886 + $0x50] sm:$0xff]
        %v898 = vld [vmem:[%s886 + $0x58] sm:$0xff]
        %v899 = vld [vmem:[%s886 + $0x60] sm:$0xff]
        %v900 = vld [vmem:[%s886 + $0x68] sm:$0xff]
        %v901 = vld [vmem:[%s886 + $0x70] sm:$0xff]
        %v902 = vld [vmem:[%s886 + $0x78] sm:$0xff]
        %v903 = vld [vmem:[%s886 + $0x80] sm:$0xff]
        %v904 = vld [vmem:[%s886 + $0x88] sm:$0xff]
        %v905 = vld [vmem:[%s886 + $0x90] sm:$0xff]
        %v906 = vld [vmem:[%s886 + $0x98] sm:$0xff]
        %v907 = vld [vmem:[%s886 + $0xa0] sm:$0xff]
        %v908 = vld [vmem:[%s886 + $0xa8] sm:$0xff]
        %v909 = vld [vmem:[%s886 + $0xb0] sm:$0xff]
        %v910 = vld [vmem:[%s886 + $0xb8] sm:$0xff]
        %v911 = vld [vmem:[%s886 + $0xc0] sm:$0xff]
        %v912 = vld [vmem:[%s886 + $0xc8] sm:$0xff]
        %v913 = vld [vmem:[%s886 + $0xd0] sm:$0xff]
        %v914 = vld [vmem:[%s886 + $0xd8] sm:$0xff]
        %v915 = vld [vmem:[%s886 + $0xe0] sm:$0xff]
        %v916 = vld [vmem:[%s886 + $0xe8] sm:$0xff]
        %v917 = vld [vmem:[%s886 + $0xf0] sm:$0xff]
        %v918 = vld [vmem:[%s886 + $0xf8] sm:$0xff]
        %v919 = vld [vmem:[%s886 + $0x100] sm:$0xff]
        %v920 = vld [vmem:[%s886 + $0x108] sm:$0xff]
        %v921 = vld [vmem:[%s886 + $0x110] sm:$0xff]
        %v922 = vld [vmem:[%s886 + $0x118] sm:$0xff]
        %v923 = vld [vmem:[%s886 + $0x120] sm:$0xff]
        %v924 = vld [vmem:[%s886 + $0x128] sm:$0xff]
        %v925 = vld [vmem:[%s886 + $0x130] sm:$0xff]
        %v926 = vld [vmem:[%s886 + $0x138] sm:$0xff]
        %v927 = vld [vmem:[%s886 + $0x140] sm:$0xff]
        %v928 = vld [vmem:[%s886 + $0x148] sm:$0xff]
        %v929 = vld [vmem:[%s886 + $0x150] sm:$0xff]
        %v930 = vld [vmem:[%s886 + $0x158] sm:$0xff]
        %v931 = vld [vmem:[%s886 + $0x160] sm:$0xff]
        %v932 = vld [vmem:[%s886 + $0x168] sm:$0xff]
        %v933 = vld [vmem:[%s886 + $0x170] sm:$0xff]
        %v934 = vld [vmem:[%s886 + $0x178] sm:$0xff]
        %v935 = vld [vmem:[%s886 + $0x180] sm:$0xff]
        %v936 = vld [vmem:[%s886 + $0x188] sm:$0xff]
        %v937 = vld [vmem:[%s886 + $0x190] sm:$0xff]
        %v938 = vld [vmem:[%s886 + $0x198] sm:$0xff]
        %v939 = vld [vmem:[%s886 + $0x1a0] sm:$0xff]
        %v940 = vld [vmem:[%s886 + $0x1a8] sm:$0xff]
        %v941 = vld [vmem:[%s886 + $0x1b0] sm:$0xff]
        %v942 = vld [vmem:[%s886 + $0x1b8] sm:$0xff]
        %v943 = vld [vmem:[%s886 + $0x1c0] sm:$0xff]
        %v944 = vld [vmem:[%s886 + $0x1c8] sm:$0xff]
        %v945 = vld [vmem:[%s886 + $0x1d0] sm:$0xff]
        %v946 = vld [vmem:[%s886 + $0x1d8] sm:$0xff]
        %v947 = vld [vmem:[%s886 + $0x1e0] sm:$0xff]
        %v948 = vld [vmem:[%s886 + $0x1e8] sm:$0xff]
        %v949 = vld [vmem:[%s886 + $0x1f0] sm:$0xff]
        %v950 = vld [vmem:[%s886 + $0x1f8] sm:$0xff]
        %v951 = vld [vmem:[%s886 + $0x200] sm:$0xff]
        %v952 = vld [vmem:[%s886 + $0x208] sm:$0xff]
        %v953 = vld [vmem:[%s886 + $0x210] sm:$0xff]
        %v954 = vld [vmem:[%s886 + $0x218] sm:$0xff]
        %v955 = vld [vmem:[%s886 + $0x220] sm:$0xff]
        %v956 = vld [vmem:[%s886 + $0x228] sm:$0xff]
        %v957 = vld [vmem:[%s886 + $0x230] sm:$0xff]
        %v958 = vld [vmem:[%s886 + $0x238] sm:$0xff]
        %v959 = vld [vmem:[%s886 + $0x240] sm:$0xff]
        %v960 = vld [vmem:[%s886 + $0x248] sm:$0xff]
        %v961 = vld [vmem:[%s886 + $0x250] sm:$0xff]
        %v962 = vld [vmem:[%s886 + $0x258] sm:$0xff]
        %v963 = vld [vmem:[%s886 + $0x260] sm:$0xff]
        %v964 = vld [vmem:[%s886 + $0x268] sm:$0xff]
        %v965 = vld [vmem:[%s886 + $0x270] sm:$0xff]
        %v966 = vld [vmem:[%s886 + $0x278] sm:$0xff]
        %v967 = vld [vmem:[%s886 + $0x280] sm:$0xff]
        %v968 = vld [vmem:[%s886 + $0x288] sm:$0xff]
        %v969 = vld [vmem:[%s886 + $0x290] sm:$0xff]
        %v970 = vld [vmem:[%s886 + $0x298] sm:$0xff]
        %v971 = vld [vmem:[%s886 + $0x2a0] sm:$0xff]
        %v972 = vld [vmem:[%s886 + $0x2a8] sm:$0xff]
        %v973 = vld [vmem:[%s886 + $0x2b0] sm:$0xff]
        %v974 = vld [vmem:[%s886 + $0x2b8] sm:$0xff]
        %v975 = vld [vmem:[%s886 + $0x2c0] sm:$0xff]
        %v976 = vld [vmem:[%s886 + $0x2c8] sm:$0xff]
        %v977 = vld [vmem:[%s886 + $0x2d0] sm:$0xff]
        %v978 = vld [vmem:[%s886 + $0x2d8] sm:$0xff]
        %v979 = vld [vmem:[%s886 + $0x2e0] sm:$0xff]
        %v980 = vld [vmem:[%s886 + $0x2e8] sm:$0xff]
        %v981 = vld [vmem:[%s886 + $0x2f0] sm:$0xff]
        %v982 = vld [vmem:[%s886 + $0x2f8] sm:$0xff]
        %v983 = vld [vmem:[%s886 + $0x300] sm:$0xff]
        %v984 = vld [vmem:[%s886 + $0x308] sm:$0xff]
        %v985 = vld [vmem:[%s886 + $0x310] sm:$0xff]
        %v986 = vld [vmem:[%s886 + $0x318] sm:$0xff]
        %v987 = vld [vmem:[%s886 + $0x320] sm:$0xff]
        %v988 = vld [vmem:[%s886 + $0x328] sm:$0xff]
        %v989 = vld [vmem:[%s886 + $0x330] sm:$0xff]
        %v990 = vld [vmem:[%s886 + $0x338] sm:$0xff]
        %v991 = vld [vmem:[%s886 + $0x340] sm:$0xff]
        %v992 = vld [vmem:[%s886 + $0x348] sm:$0xff]
        %v993 = vld [vmem:[%s886 + $0x350] sm:$0xff]
        %v994 = vld [vmem:[%s886 + $0x358] sm:$0xff]
        %v995 = vld [vmem:[%s886 + $0x360] sm:$0xff]
        %v996 = vld [vmem:[%s886 + $0x368] sm:$0xff]
        %v997 = vld [vmem:[%s886 + $0x370] sm:$0xff]
        %v998 = vld [vmem:[%s886 + $0x378] sm:$0xff]
        %v999 = vld [vmem:[%s886 + $0x380] sm:$0xff]
        %v1000 = vld [vmem:[%s886 + $0x388] sm:$0xff]
        %v1001 = vld [vmem:[%s886 + $0x390] sm:$0xff]
        %v1002 = vld [vmem:[%s886 + $0x398] sm:$0xff]
        %v1003 = vld [vmem:[%s886 + $0x3a0] sm:$0xff]
        %v1004 = vld [vmem:[%s886 + $0x3a8] sm:$0xff]
        %v1005 = vld [vmem:[%s886 + $0x3b0] sm:$0xff]
        %v1006 = vld [vmem:[%s886 + $0x3b8] sm:$0xff]
        %v1007 = vld [vmem:[%s886 + $0x3c0] sm:$0xff]
        %v1008 = vld [vmem:[%s886 + $0x3c8] sm:$0xff]
        %v1009 = vld [vmem:[%s886 + $0x3d0] sm:$0xff]
        %v1010 = vld [vmem:[%s886 + $0x3d8] sm:$0xff]
        %v1011 = vld [vmem:[%s886 + $0x3e0] sm:$0xff]
        %v1012 = vld [vmem:[%s886 + $0x3e8] sm:$0xff]
        %v1013 = vld [vmem:[%s886 + $0x3f0] sm:$0xff]
        %v1014 = vld [vmem:[%s886 + $0x3f8] sm:$0xff]
        %v1015 = vld [vmem:[%s886 + $0x400] sm:$0xff]
        %v1016 = vld [vmem:[%s886 + $0x408] sm:$0xff]
        %v1017 = vld [vmem:[%s886 + $0x410] sm:$0xff]
        %v1018 = vld [vmem:[%s886 + $0x418] sm:$0xff]
        %v1019 = vld [vmem:[%s886 + $0x420] sm:$0xff]
        %v1020 = vld [vmem:[%s886 + $0x428] sm:$0xff]
        %v1021 = vld [vmem:[%s886 + $0x430] sm:$0xff]
        %v1022 = vld [vmem:[%s886 + $0x438] sm:$0xff]
        %v1023 = vld [vmem:[%s886 + $0x440] sm:$0xff]
        %v1024 = vld [vmem:[%s886 + $0x448] sm:$0xff]
        %v1025 = vld [vmem:[%s886 + $0x450] sm:$0xff]
        %v1026 = vld [vmem:[%s886 + $0x458] sm:$0xff]
        %v1027 = vld [vmem:[%s886 + $0x460] sm:$0xff]
        %v1028 = vld [vmem:[%s886 + $0x468] sm:$0xff]
        %v1029 = vld [vmem:[%s886 + $0x470] sm:$0xff]
        %v1030 = vld [vmem:[%s886 + $0x478] sm:$0xff]
        %v1031 = vld [vmem:[%s886 + $0x480] sm:$0xff]
        %v1032 = vld [vmem:[%s886 + $0x488] sm:$0xff]
        %v1033 = vld [vmem:[%s886 + $0x490] sm:$0xff]
        %v1034 = vld [vmem:[%s886 + $0x498] sm:$0xff]
        %v1035 = vld [vmem:[%s886 + $0x4a0] sm:$0xff]
        %v1036 = vld [vmem:[%s886 + $0x4a8] sm:$0xff]
        %v1037 = vld [vmem:[%s886 + $0x4b0] sm:$0xff]
        %v1038 = vld [vmem:[%s886 + $0x4b8] sm:$0xff]
        %v1039 = vld [vmem:[%s886 + $0x4c0] sm:$0xff]
        %v1040 = vld [vmem:[%s886 + $0x4c8] sm:$0xff]
        %v1041 = vld [vmem:[%s886 + $0x4d0] sm:$0xff]
        %v1042 = vld [vmem:[%s886 + $0x4d8] sm:$0xff]
        %v1043 = vld [vmem:[%s886 + $0x4e0] sm:$0xff]
        %v1044 = vld [vmem:[%s886 + $0x4e8] sm:$0xff]
        %v1045 = vld [vmem:[%s886 + $0x4f0] sm:$0xff]
        %v1046 = vld [vmem:[%s886 + $0x4f8] sm:$0xff]
        %v1047 = vld [vmem:[%s886 + $0x500] sm:$0xff]
        %v1048 = vld [vmem:[%s886 + $0x508] sm:$0xff]
        %v1049 = vld [vmem:[%s886 + $0x510] sm:$0xff]
        %v1050 = vld [vmem:[%s886 + $0x518] sm:$0xff]
        %v1051 = vld [vmem:[%s886 + $0x520] sm:$0xff]
        %v1052 = vld [vmem:[%s886 + $0x528] sm:$0xff]
        %v1053 = vld [vmem:[%s886 + $0x530] sm:$0xff]
        %v1054 = vld [vmem:[%s886 + $0x538] sm:$0xff]
        %v1055 = vld [vmem:[%s886 + $0x540] sm:$0xff]
        %v1056 = vld [vmem:[%s886 + $0x548] sm:$0xff]
        %v1057 = vld [vmem:[%s886 + $0x550] sm:$0xff]
        %v1058 = vld [vmem:[%s886 + $0x558] sm:$0xff]
        %v1059 = vld [vmem:[%s886 + $0x560] sm:$0xff]
        %v1060 = vld [vmem:[%s886 + $0x568] sm:$0xff]
        %v1061 = vld [vmem:[%s886 + $0x570] sm:$0xff]
        %v1062 = vld [vmem:[%s886 + $0x578] sm:$0xff]
        %v1063 = vld [vmem:[%s886 + $0x580] sm:$0xff]
        %v1064 = vld [vmem:[%s886 + $0x588] sm:$0xff]
        %v1065 = vld [vmem:[%s886 + $0x590] sm:$0xff]
        %v1066 = vld [vmem:[%s886 + $0x598] sm:$0xff]
        %v1067 = vld [vmem:[%s886 + $0x5a0] sm:$0xff]
        %v1068 = vld [vmem:[%s886 + $0x5a8] sm:$0xff]
        %v1069 = vld [vmem:[%s886 + $0x5b0] sm:$0xff]
        %v1070 = vld [vmem:[%s886 + $0x5b8] sm:$0xff]
        %v1071 = vld [vmem:[%s886 + $0x5c0] sm:$0xff]
        %v1072 = vld [vmem:[%s886 + $0x5c8] sm:$0xff]
        %v1073 = vld [vmem:[%s886 + $0x5d0] sm:$0xff]
        %v1074 = vld [vmem:[%s886 + $0x5d8] sm:$0xff]
        %v1075 = vld [vmem:[%s886 + $0x5e0] sm:$0xff]
        %v1076 = vld [vmem:[%s886 + $0x5e8] sm:$0xff]
        %v1077 = vld [vmem:[%s886 + $0x5f0] sm:$0xff]
        %v1078 = vld [vmem:[%s886 + $0x5f8] sm:$0xff]
        %v1079 = vld [vmem:[%s886 + $0x600] sm:$0xff]
        %v1080 = vld [vmem:[%s886 + $0x608] sm:$0xff]
        %v1081 = vld [vmem:[%s886 + $0x610] sm:$0xff]
        %v1082 = vld [vmem:[%s886 + $0x618] sm:$0xff]
        %v1083 = vld [vmem:[%s886 + $0x620] sm:$0xff]
        %v1084 = vld [vmem:[%s886 + $0x628] sm:$0xff]
        %v1085 = vld [vmem:[%s886 + $0x630] sm:$0xff]
        %v1086 = vld [vmem:[%s886 + $0x638] sm:$0xff]
        %v1087 = vld [vmem:[%s886 + $0x640] sm:$0xff]
        %v1088 = vld [vmem:[%s886 + $0x648] sm:$0xff]
        %v1089 = vld [vmem:[%s886 + $0x650] sm:$0xff]
        %v1090 = vld [vmem:[%s886 + $0x658] sm:$0xff]
        %v1091 = vld [vmem:[%s886 + $0x660] sm:$0xff]
        %v1092 = vld [vmem:[%s886 + $0x668] sm:$0xff]
        %v1093 = vld [vmem:[%s886 + $0x670] sm:$0xff]
        %v1094 = vld [vmem:[%s886 + $0x678] sm:$0xff]
        %v1095 = vld [vmem:[%s886 + $0x680] sm:$0xff]
        %v1096 = vld [vmem:[%s886 + $0x688] sm:$0xff]
        %v1097 = vld [vmem:[%s886 + $0x690] sm:$0xff]
        %v1098 = vld [vmem:[%s886 + $0x698] sm:$0xff]
        %v1099 = vld [vmem:[%s886 + $0x6a0] sm:$0xff]
        %v1100 = vld [vmem:[%s886 + $0x6a8] sm:$0xff]
        %v1101 = vld [vmem:[%s886 + $0x6b0] sm:$0xff]
        %v1102 = vld [vmem:[%s886 + $0x6b8] sm:$0xff]
        %v1103 = vld [vmem:[%s886 + $0x6c0] sm:$0xff]
        %v1104 = vld [vmem:[%s886 + $0x6c8] sm:$0xff]
        %v1105 = vld [vmem:[%s886 + $0x6d0] sm:$0xff]
        %v1106 = vld [vmem:[%s886 + $0x6d8] sm:$0xff]
        %v1107 = vld [vmem:[%s886 + $0x6e0] sm:$0xff]
        %v1108 = vld [vmem:[%s886 + $0x6e8] sm:$0xff]
        %v1109 = vld [vmem:[%s886 + $0x6f0] sm:$0xff]
        %v1110 = vld [vmem:[%s886 + $0x6f8] sm:$0xff]
        %v1111 = vld [vmem:[%s886 + $0x700] sm:$0xff]
        %v1112 = vld [vmem:[%s886 + $0x708] sm:$0xff]
        %v1113 = vld [vmem:[%s886 + $0x710] sm:$0xff]
        %v1114 = vld [vmem:[%s886 + $0x718] sm:$0xff]
        %v1115 = vld [vmem:[%s886 + $0x720] sm:$0xff]
        %v1116 = vld [vmem:[%s886 + $0x728] sm:$0xff]
        %v1117 = vld [vmem:[%s886 + $0x730] sm:$0xff]
        %v1118 = vld [vmem:[%s886 + $0x738] sm:$0xff]
        %v1119 = vld [vmem:[%s886 + $0x740] sm:$0xff]
        %v1120 = vld [vmem:[%s886 + $0x748] sm:$0xff]
        %v1121 = vld [vmem:[%s886 + $0x750] sm:$0xff]
        %v1122 = vld [vmem:[%s886 + $0x758] sm:$0xff]
        %v1123 = vld [vmem:[%s886 + $0x760] sm:$0xff]
        %v1124 = vld [vmem:[%s886 + $0x768] sm:$0xff]
        %v1125 = vld [vmem:[%s886 + $0x770] sm:$0xff]
        %v1126 = vld [vmem:[%s886 + $0x778] sm:$0xff]
        %v1127 = vld [vmem:[%s886 + $0x780] sm:$0xff]
        %v1128 = vld [vmem:[%s886 + $0x788] sm:$0xff]
        %v1129 = vld [vmem:[%s886 + $0x790] sm:$0xff]
        %v1130 = vld [vmem:[%s886 + $0x798] sm:$0xff]
        %v1131 = vld [vmem:[%s886 + $0x7a0] sm:$0xff]
        %v1132 = vld [vmem:[%s886 + $0x7a8] sm:$0xff]
        %v1133 = vld [vmem:[%s886 + $0x7b0] sm:$0xff]
        %v1134 = vld [vmem:[%s886 + $0x7b8] sm:$0xff]
        %v1135 = vld [vmem:[%s886 + $0x7c0] sm:$0xff]
        %v1136 = vld [vmem:[%s886 + $0x7c8] sm:$0xff]
        %v1137 = vld [vmem:[%s886 + $0x7d0] sm:$0xff]
        %v1138 = vld [vmem:[%s886 + $0x7d8] sm:$0xff]
        %v1139 = vld [vmem:[%s886 + $0x7e0] sm:$0xff]
        %v1140 = vld [vmem:[%s886 + $0x7e8] sm:$0xff]
        %v1141 = vld [vmem:[%s886 + $0x7f0] sm:$0xff]
        %v1142 = vld [vmem:[%s886 + $0x7f8] sm:$0xff]
        %v1143 = vld [vmem:[%s886 + $0x800] sm:$0xff]
        %v1144 = vld [vmem:[%s886 + $0x808] sm:$0xff]
        %v1145 = vld [vmem:[%s886 + $0x810] sm:$0xff]
        %v1146 = vld [vmem:[%s886 + $0x818] sm:$0xff]
        %v1147 = vld [vmem:[%s886 + $0x820] sm:$0xff]
        %v1148 = vld [vmem:[%s886 + $0x828] sm:$0xff]
        %v1149 = vld [vmem:[%s886 + $0x830] sm:$0xff]
        %v1150 = vld [vmem:[%s886 + $0x838] sm:$0xff]
        %v1151 = vld [vmem:[%s886 + $0x840] sm:$0xff]
        %v1152 = vld [vmem:[%s886 + $0x848] sm:$0xff]
        %v1153 = vld [vmem:[%s886 + $0x850] sm:$0xff]
        %v1154 = vld [vmem:[%s886 + $0x858] sm:$0xff]
        %v1155 = vld [vmem:[%s886 + $0x860] sm:$0xff]
        %v1156 = vld [vmem:[%s886 + $0x868] sm:$0xff]
        %v1157 = vld [vmem:[%s886 + $0x870] sm:$0xff]
        %v1158 = vld [vmem:[%s886 + $0x878] sm:$0xff]
        %v1159 = vld [vmem:[%s886 + $0x880] sm:$0xff]
        %v1160 = vld [vmem:[%s886 + $0x888] sm:$0xff]
        %v1161 = vld [vmem:[%s886 + $0x890] sm:$0xff]
        %v1162 = vld [vmem:[%s886 + $0x898] sm:$0xff]
        %v1163 = vld [vmem:[%s886 + $0x8a0] sm:$0xff]
        %v1164 = vld [vmem:[%s886 + $0x8a8] sm:$0xff]
        %v1165 = vld [vmem:[%s886 + $0x8b0] sm:$0xff]
        %v1166 = vld [vmem:[%s886 + $0x8b8] sm:$0xff]
        %v1167 = vld [vmem:[%s886 + $0x8c0] sm:$0xff]
        %v1168 = vld [vmem:[%s886 + $0x8c8] sm:$0xff]
        %v1169 = vld [vmem:[%s886 + $0x8d0] sm:$0xff]
        %v1170 = vld [vmem:[%s886 + $0x8d8] sm:$0xff]
        %v1171 = vld [vmem:[%s886 + $0x8e0] sm:$0xff]
        %v1172 = vld [vmem:[%s886 + $0x8e8] sm:$0xff]
        %v1173 = vld [vmem:[%s886 + $0x8f0] sm:$0xff]
        %v1174 = vld [vmem:[%s886 + $0x8f8] sm:$0xff]
        %v1463 = vunpack.c.l.b16 %v887
        %v1464 = vunpack.c.h.b16 %v887
        %v1465 = vunpack.c.l.b16 %v888
        %v1466 = vunpack.c.h.b16 %v888
        %v1467 = vunpack.c.l.b16 %v889
        %v1468 = vunpack.c.h.b16 %v889
        %v1469 = vunpack.c.l.b16 %v890
        %v1470 = vunpack.c.h.b16 %v890
        %v1471 = vunpack.c.l.b16 %v891
        %v1472 = vunpack.c.h.b16 %v891
        %v1473 = vunpack.c.l.b16 %v892
        %v1474 = vunpack.c.h.b16 %v892
        %v1475 = vunpack.c.l.b16 %v893
        %v1476 = vunpack.c.h.b16 %v893
        %v1477 = vunpack.c.l.b16 %v894
        %v1478 = vunpack.c.h.b16 %v894
        %v1479 = vunpack.c.l.b16 %v895
        %v1480 = vunpack.c.h.b16 %v895
        %v1481 = vunpack.c.l.b16 %v896
        %v1482 = vunpack.c.h.b16 %v896
        %v1483 = vunpack.c.l.b16 %v897
        %v1484 = vunpack.c.h.b16 %v897
        %v1485 = vunpack.c.l.b16 %v898
        %v1486 = vunpack.c.h.b16 %v898
        %v1487 = vunpack.c.l.b16 %v899
        %v1488 = vunpack.c.h.b16 %v899
        %v1489 = vunpack.c.l.b16 %v900
        %v1490 = vunpack.c.h.b16 %v900
        %v1491 = vunpack.c.l.b16 %v901
        %v1492 = vunpack.c.h.b16 %v901
        %v1493 = vunpack.c.l.b16 %v902
        %v1494 = vunpack.c.h.b16 %v902
        %v1495 = vunpack.c.l.b16 %v903
        %v1496 = vunpack.c.h.b16 %v903
        %v1497 = vunpack.c.l.b16 %v904
        %v1498 = vunpack.c.h.b16 %v904
        %v1499 = vunpack.c.l.b16 %v905
        %v1500 = vunpack.c.h.b16 %v905
        %v1501 = vunpack.c.l.b16 %v906
        %v1502 = vunpack.c.h.b16 %v906
        %v1503 = vunpack.c.l.b16 %v907
        %v1504 = vunpack.c.h.b16 %v907
        %v1505 = vunpack.c.l.b16 %v908
        %v1506 = vunpack.c.h.b16 %v908
        %v1507 = vunpack.c.l.b16 %v909
        %v1508 = vunpack.c.h.b16 %v909
        %v1509 = vunpack.c.l.b16 %v910
        %v1510 = vunpack.c.h.b16 %v910
        %v1511 = vunpack.c.l.b16 %v911
        %v1512 = vunpack.c.h.b16 %v911
        %v1513 = vunpack.c.l.b16 %v912
        %v1514 = vunpack.c.h.b16 %v912
        %v1515 = vunpack.c.l.b16 %v913
        %v1516 = vunpack.c.h.b16 %v913
        %v1517 = vunpack.c.l.b16 %v914
        %v1518 = vunpack.c.h.b16 %v914
        %v1519 = vunpack.c.l.b16 %v915
        %v1520 = vunpack.c.h.b16 %v915
        %v1521 = vunpack.c.l.b16 %v916
        %v1522 = vunpack.c.h.b16 %v916
        %v1523 = vunpack.c.l.b16 %v917
        %v1524 = vunpack.c.h.b16 %v917
        %v1525 = vunpack.c.l.b16 %v918
        %v1526 = vunpack.c.h.b16 %v918
        %v1527 = vunpack.c.l.b16 %v919
        %v1528 = vunpack.c.h.b16 %v919
        %v1529 = vunpack.c.l.b16 %v920
        %v1530 = vunpack.c.h.b16 %v920
        %v1531 = vunpack.c.l.b16 %v921
        %v1532 = vunpack.c.h.b16 %v921
        %v1533 = vunpack.c.l.b16 %v922
        %v1534 = vunpack.c.h.b16 %v922
        %v1535 = vunpack.c.l.b16 %v923
        %v1536 = vunpack.c.h.b16 %v923
        %v1537 = vunpack.c.l.b16 %v924
        %v1538 = vunpack.c.h.b16 %v924
        %v1539 = vunpack.c.l.b16 %v925
        %v1540 = vunpack.c.h.b16 %v925
        %v1541 = vunpack.c.l.b16 %v926
        %v1542 = vunpack.c.h.b16 %v926
        %v1543 = vunpack.c.l.b16 %v927
        %v1544 = vunpack.c.h.b16 %v927
        %v1545 = vunpack.c.l.b16 %v928
        %v1546 = vunpack.c.h.b16 %v928
        %v1547 = vunpack.c.l.b16 %v929
        %v1548 = vunpack.c.h.b16 %v929
        %v1549 = vunpack.c.l.b16 %v930
        %v1550 = vunpack.c.h.b16 %v930
        %v1551 = vunpack.c.l.b16 %v931
        %v1552 = vunpack.c.h.b16 %v931
        %v1553 = vunpack.c.l.b16 %v932
        %v1554 = vunpack.c.h.b16 %v932
        %v1555 = vunpack.c.l.b16 %v933
        %v1556 = vunpack.c.h.b16 %v933
        %v1557 = vunpack.c.l.b16 %v934
        %v1558 = vunpack.c.h.b16 %v934
        %v1559 = vunpack.c.l.b16 %v935
        %v1560 = vunpack.c.h.b16 %v935
        %v1561 = vunpack.c.l.b16 %v936
        %v1562 = vunpack.c.h.b16 %v936
        %v1563 = vunpack.c.l.b16 %v937
        %v1564 = vunpack.c.h.b16 %v937
        %v1565 = vunpack.c.l.b16 %v938
        %v1566 = vunpack.c.h.b16 %v938
        %v1567 = vunpack.c.l.b16 %v939
        %v1568 = vunpack.c.h.b16 %v939
        %v1569 = vunpack.c.l.b16 %v940
        %v1570 = vunpack.c.h.b16 %v940
        %v1571 = vunpack.c.l.b16 %v941
        %v1572 = vunpack.c.h.b16 %v941
        %v1573 = vunpack.c.l.b16 %v942
        %v1574 = vunpack.c.h.b16 %v942
        %v1575 = vunpack.c.l.b16 %v943
        %v1576 = vunpack.c.h.b16 %v943
        %v1577 = vunpack.c.l.b16 %v944
        %v1578 = vunpack.c.h.b16 %v944
        %v1579 = vunpack.c.l.b16 %v945
        %v1580 = vunpack.c.h.b16 %v945
        %v1581 = vunpack.c.l.b16 %v946
        %v1582 = vunpack.c.h.b16 %v946
        %v1583 = vunpack.c.l.b16 %v947
        %v1584 = vunpack.c.h.b16 %v947
        %v1585 = vunpack.c.l.b16 %v948
        %v1586 = vunpack.c.h.b16 %v948
        %v1587 = vunpack.c.l.b16 %v949
        %v1588 = vunpack.c.h.b16 %v949
        %v1589 = vunpack.c.l.b16 %v950
        %v1590 = vunpack.c.h.b16 %v950
        %v1591 = vunpack.c.l.b16 %v951
        %v1592 = vunpack.c.h.b16 %v951
        %v1593 = vunpack.c.l.b16 %v952
        %v1594 = vunpack.c.h.b16 %v952
        %v1595 = vunpack.c.l.b16 %v953
        %v1596 = vunpack.c.h.b16 %v953
        %v1597 = vunpack.c.l.b16 %v954
        %v1598 = vunpack.c.h.b16 %v954
        %v1599 = vunpack.c.l.b16 %v955
        %v1600 = vunpack.c.h.b16 %v955
        %v1601 = vunpack.c.l.b16 %v956
        %v1602 = vunpack.c.h.b16 %v956
        %v1603 = vunpack.c.l.b16 %v957
        %v1604 = vunpack.c.h.b16 %v957
        %v1605 = vunpack.c.l.b16 %v958
        %v1606 = vunpack.c.h.b16 %v958
        %v1607 = vunpack.c.l.b16 %v959
        %v1608 = vunpack.c.h.b16 %v959
        %v1609 = vunpack.c.l.b16 %v960
        %v1610 = vunpack.c.h.b16 %v960
        %v1611 = vunpack.c.l.b16 %v961
        %v1612 = vunpack.c.h.b16 %v961
        %v1613 = vunpack.c.l.b16 %v962
        %v1614 = vunpack.c.h.b16 %v962
        %v1615 = vunpack.c.l.b16 %v963
        %v1616 = vunpack.c.h.b16 %v963
        %v1617 = vunpack.c.l.b16 %v964
        %v1618 = vunpack.c.h.b16 %v964
        %v1619 = vunpack.c.l.b16 %v965
        %v1620 = vunpack.c.h.b16 %v965
        %v1621 = vunpack.c.l.b16 %v966
        %v1622 = vunpack.c.h.b16 %v966
        %v1623 = vunpack.c.l.b16 %v967
        %v1624 = vunpack.c.h.b16 %v967
        %v1625 = vunpack.c.l.b16 %v968
        %v1626 = vunpack.c.h.b16 %v968
        %v1627 = vunpack.c.l.b16 %v969
        %v1628 = vunpack.c.h.b16 %v969
        %v1629 = vunpack.c.l.b16 %v970
        %v1630 = vunpack.c.h.b16 %v970
        %v1631 = vunpack.c.l.b16 %v971
        %v1632 = vunpack.c.h.b16 %v971
        %v1633 = vunpack.c.l.b16 %v972
        %v1634 = vunpack.c.h.b16 %v972
        %v1635 = vunpack.c.l.b16 %v973
        %v1636 = vunpack.c.h.b16 %v973
        %v1637 = vunpack.c.l.b16 %v974
        %v1638 = vunpack.c.h.b16 %v974
        %v1639 = vunpack.c.l.b16 %v975
        %v1640 = vunpack.c.h.b16 %v975
        %v1641 = vunpack.c.l.b16 %v976
        %v1642 = vunpack.c.h.b16 %v976
        %v1643 = vunpack.c.l.b16 %v977
        %v1644 = vunpack.c.h.b16 %v977
        %v1645 = vunpack.c.l.b16 %v978
        %v1646 = vunpack.c.h.b16 %v978
        %v1647 = vunpack.c.l.b16 %v979
        %v1648 = vunpack.c.h.b16 %v979
        %v1649 = vunpack.c.l.b16 %v980
        %v1650 = vunpack.c.h.b16 %v980
        %v1651 = vunpack.c.l.b16 %v981
        %v1652 = vunpack.c.h.b16 %v981
        %v1653 = vunpack.c.l.b16 %v982
        %v1654 = vunpack.c.h.b16 %v982
        %v1655 = vunpack.c.l.b16 %v983
        %v1656 = vunpack.c.h.b16 %v983
        %v1657 = vunpack.c.l.b16 %v984
        %v1658 = vunpack.c.h.b16 %v984
        %v1659 = vunpack.c.l.b16 %v985
        %v1660 = vunpack.c.h.b16 %v985
        %v1661 = vunpack.c.l.b16 %v986
        %v1662 = vunpack.c.h.b16 %v986
        %v1663 = vunpack.c.l.b16 %v987
        %v1664 = vunpack.c.h.b16 %v987
        %v1665 = vunpack.c.l.b16 %v988
        %v1666 = vunpack.c.h.b16 %v988
        %v1667 = vunpack.c.l.b16 %v989
        %v1668 = vunpack.c.h.b16 %v989
        %v1669 = vunpack.c.l.b16 %v990
        %v1670 = vunpack.c.h.b16 %v990
        %v1671 = vunpack.c.l.b16 %v991
        %v1672 = vunpack.c.h.b16 %v991
        %v1673 = vunpack.c.l.b16 %v992
        %v1674 = vunpack.c.h.b16 %v992
        %v1675 = vunpack.c.l.b16 %v993
        %v1676 = vunpack.c.h.b16 %v993
        %v1677 = vunpack.c.l.b16 %v994
        %v1678 = vunpack.c.h.b16 %v994
        %v1679 = vunpack.c.l.b16 %v995
        %v1680 = vunpack.c.h.b16 %v995
        %v1681 = vunpack.c.l.b16 %v996
        %v1682 = vunpack.c.h.b16 %v996
        %v1683 = vunpack.c.l.b16 %v997
        %v1684 = vunpack.c.h.b16 %v997
        %v1685 = vunpack.c.l.b16 %v998
        %v1686 = vunpack.c.h.b16 %v998
        %v1687 = vunpack.c.l.b16 %v999
        %v1688 = vunpack.c.h.b16 %v999
        %v1689 = vunpack.c.l.b16 %v1000
        %v1690 = vunpack.c.h.b16 %v1000
        %v1691 = vunpack.c.l.b16 %v1001
        %v1692 = vunpack.c.h.b16 %v1001
        %v1693 = vunpack.c.l.b16 %v1002
        %v1694 = vunpack.c.h.b16 %v1002
        %v1695 = vunpack.c.l.b16 %v1003
        %v1696 = vunpack.c.h.b16 %v1003
        %v1697 = vunpack.c.l.b16 %v1004
        %v1698 = vunpack.c.h.b16 %v1004
        %v1699 = vunpack.c.l.b16 %v1005
        %v1700 = vunpack.c.h.b16 %v1005
        %v1701 = vunpack.c.l.b16 %v1006
        %v1702 = vunpack.c.h.b16 %v1006
        %v1703 = vunpack.c.l.b16 %v1007
        %v1704 = vunpack.c.h.b16 %v1007
        %v1705 = vunpack.c.l.b16 %v1008
        %v1706 = vunpack.c.h.b16 %v1008
        %v1707 = vunpack.c.l.b16 %v1009
        %v1708 = vunpack.c.h.b16 %v1009
        %v1709 = vunpack.c.l.b16 %v1010
        %v1710 = vunpack.c.h.b16 %v1010
        %v1711 = vunpack.c.l.b16 %v1011
        %v1712 = vunpack.c.h.b16 %v1011
        %v1713 = vunpack.c.l.b16 %v1012
        %v1714 = vunpack.c.h.b16 %v1012
        %v1715 = vunpack.c.l.b16 %v1013
        %v1716 = vunpack.c.h.b16 %v1013
        %v1717 = vunpack.c.l.b16 %v1014
        %v1718 = vunpack.c.h.b16 %v1014
        %v1719 = vunpack.c.l.b16 %v1015
        %v1720 = vunpack.c.h.b16 %v1015
        %v1721 = vunpack.c.l.b16 %v1016
        %v1722 = vunpack.c.h.b16 %v1016
        %v1723 = vunpack.c.l.b16 %v1017
        %v1724 = vunpack.c.h.b16 %v1017
        %v1725 = vunpack.c.l.b16 %v1018
        %v1726 = vunpack.c.h.b16 %v1018
        %v1727 = vunpack.c.l.b16 %v1019
        %v1728 = vunpack.c.h.b16 %v1019
        %v1729 = vunpack.c.l.b16 %v1020
        %v1730 = vunpack.c.h.b16 %v1020
        %v1731 = vunpack.c.l.b16 %v1021
        %v1732 = vunpack.c.h.b16 %v1021
        %v1733 = vunpack.c.l.b16 %v1022
        %v1734 = vunpack.c.h.b16 %v1022
        %v1735 = vunpack.c.l.b16 %v1023
        %v1736 = vunpack.c.h.b16 %v1023
        %v1737 = vunpack.c.l.b16 %v1024
        %v1738 = vunpack.c.h.b16 %v1024
        %v1739 = vunpack.c.l.b16 %v1025
        %v1740 = vunpack.c.h.b16 %v1025
        %v1741 = vunpack.c.l.b16 %v1026
        %v1742 = vunpack.c.h.b16 %v1026
        %v1743 = vunpack.c.l.b16 %v1027
        %v1744 = vunpack.c.h.b16 %v1027
        %v1745 = vunpack.c.l.b16 %v1028
        %v1746 = vunpack.c.h.b16 %v1028
        %v1747 = vunpack.c.l.b16 %v1029
        %v1748 = vunpack.c.h.b16 %v1029
        %v1749 = vunpack.c.l.b16 %v1030
        %v1750 = vunpack.c.h.b16 %v1030
        %v1751 = vunpack.c.l.b16 %v1031
        %v1752 = vunpack.c.h.b16 %v1031
        %v1753 = vunpack.c.l.b16 %v1032
        %v1754 = vunpack.c.h.b16 %v1032
        %v1755 = vunpack.c.l.b16 %v1033
        %v1756 = vunpack.c.h.b16 %v1033
        %v1757 = vunpack.c.l.b16 %v1034
        %v1758 = vunpack.c.h.b16 %v1034
        %v1759 = vunpack.c.l.b16 %v1035
        %v1760 = vunpack.c.h.b16 %v1035
        %v1761 = vunpack.c.l.b16 %v1036
        %v1762 = vunpack.c.h.b16 %v1036
        %v1763 = vunpack.c.l.b16 %v1037
        %v1764 = vunpack.c.h.b16 %v1037
        %v1765 = vunpack.c.l.b16 %v1038
        %v1766 = vunpack.c.h.b16 %v1038
        %v1767 = vunpack.c.l.b16 %v1039
        %v1768 = vunpack.c.h.b16 %v1039
        %v1769 = vunpack.c.l.b16 %v1040
        %v1770 = vunpack.c.h.b16 %v1040
        %v1771 = vunpack.c.l.b16 %v1041
        %v1772 = vunpack.c.h.b16 %v1041
        %v1773 = vunpack.c.l.b16 %v1042
        %v1774 = vunpack.c.h.b16 %v1042
        %v1775 = vunpack.c.l.b16 %v1043
        %v1776 = vunpack.c.h.b16 %v1043
        %v1777 = vunpack.c.l.b16 %v1044
        %v1778 = vunpack.c.h.b16 %v1044
        %v1779 = vunpack.c.l.b16 %v1045
        %v1780 = vunpack.c.h.b16 %v1045
        %v1781 = vunpack.c.l.b16 %v1046
        %v1782 = vunpack.c.h.b16 %v1046
        %v1783 = vunpack.c.l.b16 %v1047
        %v1784 = vunpack.c.h.b16 %v1047
        %v1785 = vunpack.c.l.b16 %v1048
        %v1786 = vunpack.c.h.b16 %v1048
        %v1787 = vunpack.c.l.b16 %v1049
        %v1788 = vunpack.c.h.b16 %v1049
        %v1789 = vunpack.c.l.b16 %v1050
        %v1790 = vunpack.c.h.b16 %v1050
        %v1791 = vunpack.c.l.b16 %v1051
        %v1792 = vunpack.c.h.b16 %v1051
        %v1793 = vunpack.c.l.b16 %v1052
        %v1794 = vunpack.c.h.b16 %v1052
        %v1795 = vunpack.c.l.b16 %v1053
        %v1796 = vunpack.c.h.b16 %v1053
        %v1797 = vunpack.c.l.b16 %v1054
        %v1798 = vunpack.c.h.b16 %v1054
        %v1799 = vunpack.c.l.b16 %v1055
        %v1800 = vunpack.c.h.b16 %v1055
        %v1801 = vunpack.c.l.b16 %v1056
        %v1802 = vunpack.c.h.b16 %v1056
        %v1803 = vunpack.c.l.b16 %v1057
        %v1804 = vunpack.c.h.b16 %v1057
        %v1805 = vunpack.c.l.b16 %v1058
        %v1806 = vunpack.c.h.b16 %v1058
        %v1807 = vunpack.c.l.b16 %v1059
        %v1808 = vunpack.c.h.b16 %v1059
        %v1809 = vunpack.c.l.b16 %v1060
        %v1810 = vunpack.c.h.b16 %v1060
        %v1811 = vunpack.c.l.b16 %v1061
        %v1812 = vunpack.c.h.b16 %v1061
        %v1813 = vunpack.c.l.b16 %v1062
        %v1814 = vunpack.c.h.b16 %v1062
        %v1815 = vunpack.c.l.b16 %v1063
        %v1816 = vunpack.c.h.b16 %v1063
        %v1817 = vunpack.c.l.b16 %v1064
        %v1818 = vunpack.c.h.b16 %v1064
        %v1819 = vunpack.c.l.b16 %v1065
        %v1820 = vunpack.c.h.b16 %v1065
        %v1821 = vunpack.c.l.b16 %v1066
        %v1822 = vunpack.c.h.b16 %v1066
        %v1823 = vunpack.c.l.b16 %v1067
        %v1824 = vunpack.c.h.b16 %v1067
        %v1825 = vunpack.c.l.b16 %v1068
        %v1826 = vunpack.c.h.b16 %v1068
        %v1827 = vunpack.c.l.b16 %v1069
        %v1828 = vunpack.c.h.b16 %v1069
        %v1829 = vunpack.c.l.b16 %v1070
        %v1830 = vunpack.c.h.b16 %v1070
        %v1831 = vunpack.c.l.b16 %v1071
        %v1832 = vunpack.c.h.b16 %v1071
        %v1833 = vunpack.c.l.b16 %v1072
        %v1834 = vunpack.c.h.b16 %v1072
        %v1835 = vunpack.c.l.b16 %v1073
        %v1836 = vunpack.c.h.b16 %v1073
        %v1837 = vunpack.c.l.b16 %v1074
        %v1838 = vunpack.c.h.b16 %v1074
        %v1839 = vunpack.c.l.b16 %v1075
        %v1840 = vunpack.c.h.b16 %v1075
        %v1841 = vunpack.c.l.b16 %v1076
        %v1842 = vunpack.c.h.b16 %v1076
        %v1843 = vunpack.c.l.b16 %v1077
        %v1844 = vunpack.c.h.b16 %v1077
        %v1845 = vunpack.c.l.b16 %v1078
        %v1846 = vunpack.c.h.b16 %v1078
        %v1847 = vunpack.c.l.b16 %v1079
        %v1848 = vunpack.c.h.b16 %v1079
        %v1849 = vunpack.c.l.b16 %v1080
        %v1850 = vunpack.c.h.b16 %v1080
        %v1851 = vunpack.c.l.b16 %v1081
        %v1852 = vunpack.c.h.b16 %v1081
        %v1853 = vunpack.c.l.b16 %v1082
        %v1854 = vunpack.c.h.b16 %v1082
        %v1855 = vunpack.c.l.b16 %v1083
        %v1856 = vunpack.c.h.b16 %v1083
        %v1857 = vunpack.c.l.b16 %v1084
        %v1858 = vunpack.c.h.b16 %v1084
        %v1859 = vunpack.c.l.b16 %v1085
        %v1860 = vunpack.c.h.b16 %v1085
        %v1861 = vunpack.c.l.b16 %v1086
        %v1862 = vunpack.c.h.b16 %v1086
        %v1863 = vunpack.c.l.b16 %v1087
        %v1864 = vunpack.c.h.b16 %v1087
        %v1865 = vunpack.c.l.b16 %v1088
        %v1866 = vunpack.c.h.b16 %v1088
        %v1867 = vunpack.c.l.b16 %v1089
        %v1868 = vunpack.c.h.b16 %v1089
        %v1869 = vunpack.c.l.b16 %v1090
        %v1870 = vunpack.c.h.b16 %v1090
        %v1871 = vunpack.c.l.b16 %v1091
        %v1872 = vunpack.c.h.b16 %v1091
        %v1873 = vunpack.c.l.b16 %v1092
        %v1874 = vunpack.c.h.b16 %v1092
        %v1875 = vunpack.c.l.b16 %v1093
        %v1876 = vunpack.c.h.b16 %v1093
        %v1877 = vunpack.c.l.b16 %v1094
        %v1878 = vunpack.c.h.b16 %v1094
        %v1879 = vunpack.c.l.b16 %v1095
        %v1880 = vunpack.c.h.b16 %v1095
        %v1881 = vunpack.c.l.b16 %v1096
        %v1882 = vunpack.c.h.b16 %v1096
        %v1883 = vunpack.c.l.b16 %v1097
        %v1884 = vunpack.c.h.b16 %v1097
        %v1885 = vunpack.c.l.b16 %v1098
        %v1886 = vunpack.c.h.b16 %v1098
        %v1887 = vunpack.c.l.b16 %v1099
        %v1888 = vunpack.c.h.b16 %v1099
        %v1889 = vunpack.c.l.b16 %v1100
        %v1890 = vunpack.c.h.b16 %v1100
        %v1891 = vunpack.c.l.b16 %v1101
        %v1892 = vunpack.c.h.b16 %v1101
        %v1893 = vunpack.c.l.b16 %v1102
        %v1894 = vunpack.c.h.b16 %v1102
        %v1895 = vunpack.c.l.b16 %v1103
        %v1896 = vunpack.c.h.b16 %v1103
        %v1897 = vunpack.c.l.b16 %v1104
        %v1898 = vunpack.c.h.b16 %v1104
        %v1899 = vunpack.c.l.b16 %v1105
        %v1900 = vunpack.c.h.b16 %v1105
        %v1901 = vunpack.c.l.b16 %v1106
        %v1902 = vunpack.c.h.b16 %v1106
        %v1903 = vunpack.c.l.b16 %v1107
        %v1904 = vunpack.c.h.b16 %v1107
        %v1905 = vunpack.c.l.b16 %v1108
        %v1906 = vunpack.c.h.b16 %v1108
        %v1907 = vunpack.c.l.b16 %v1109
        %v1908 = vunpack.c.h.b16 %v1109
        %v1909 = vunpack.c.l.b16 %v1110
        %v1910 = vunpack.c.h.b16 %v1110
        %v1911 = vunpack.c.l.b16 %v1111
        %v1912 = vunpack.c.h.b16 %v1111
        %v1913 = vunpack.c.l.b16 %v1112
        %v1914 = vunpack.c.h.b16 %v1112
        %v1915 = vunpack.c.l.b16 %v1113
        %v1916 = vunpack.c.h.b16 %v1113
        %v1917 = vunpack.c.l.b16 %v1114
        %v1918 = vunpack.c.h.b16 %v1114
        %v1919 = vunpack.c.l.b16 %v1115
        %v1920 = vunpack.c.h.b16 %v1115
        %v1921 = vunpack.c.l.b16 %v1116
        %v1922 = vunpack.c.h.b16 %v1116
        %v1923 = vunpack.c.l.b16 %v1117
        %v1924 = vunpack.c.h.b16 %v1117
        %v1925 = vunpack.c.l.b16 %v1118
        %v1926 = vunpack.c.h.b16 %v1118
        %v1927 = vunpack.c.l.b16 %v1119
        %v1928 = vunpack.c.h.b16 %v1119
        %v1929 = vunpack.c.l.b16 %v1120
        %v1930 = vunpack.c.h.b16 %v1120
        %v1931 = vunpack.c.l.b16 %v1121
        %v1932 = vunpack.c.h.b16 %v1121
        %v1933 = vunpack.c.l.b16 %v1122
        %v1934 = vunpack.c.h.b16 %v1122
        %v1935 = vunpack.c.l.b16 %v1123
        %v1936 = vunpack.c.h.b16 %v1123
        %v1937 = vunpack.c.l.b16 %v1124
        %v1938 = vunpack.c.h.b16 %v1124
        %v1939 = vunpack.c.l.b16 %v1125
        %v1940 = vunpack.c.h.b16 %v1125
        %v1941 = vunpack.c.l.b16 %v1126
        %v1942 = vunpack.c.h.b16 %v1126
        %v1943 = vunpack.c.l.b16 %v1127
        %v1944 = vunpack.c.h.b16 %v1127
        %v1945 = vunpack.c.l.b16 %v1128
        %v1946 = vunpack.c.h.b16 %v1128
        %v1947 = vunpack.c.l.b16 %v1129
        %v1948 = vunpack.c.h.b16 %v1129
        %v1949 = vunpack.c.l.b16 %v1130
        %v1950 = vunpack.c.h.b16 %v1130
        %v1951 = vunpack.c.l.b16 %v1131
        %v1952 = vunpack.c.h.b16 %v1131
        %v1953 = vunpack.c.l.b16 %v1132
        %v1954 = vunpack.c.h.b16 %v1132
        %v1955 = vunpack.c.l.b16 %v1133
        %v1956 = vunpack.c.h.b16 %v1133
        %v1957 = vunpack.c.l.b16 %v1134
        %v1958 = vunpack.c.h.b16 %v1134
        %v1959 = vunpack.c.l.b16 %v1135
        %v1960 = vunpack.c.h.b16 %v1135
        %v1961 = vunpack.c.l.b16 %v1136
        %v1962 = vunpack.c.h.b16 %v1136
        %v1963 = vunpack.c.l.b16 %v1137
        %v1964 = vunpack.c.h.b16 %v1137
        %v1965 = vunpack.c.l.b16 %v1138
        %v1966 = vunpack.c.h.b16 %v1138
        %v1967 = vunpack.c.l.b16 %v1139
        %v1968 = vunpack.c.h.b16 %v1139
        %v1969 = vunpack.c.l.b16 %v1140
        %v1970 = vunpack.c.h.b16 %v1140
        %v1971 = vunpack.c.l.b16 %v1141
        %v1972 = vunpack.c.h.b16 %v1141
        %v1973 = vunpack.c.l.b16 %v1142
        %v1974 = vunpack.c.h.b16 %v1142
        %v1975 = vunpack.c.l.b16 %v1143
        %v1976 = vunpack.c.h.b16 %v1143
        %v1977 = vunpack.c.l.b16 %v1144
        %v1978 = vunpack.c.h.b16 %v1144
        %v1979 = vunpack.c.l.b16 %v1145
        %v1980 = vunpack.c.h.b16 %v1145
        %v1981 = vunpack.c.l.b16 %v1146
        %v1982 = vunpack.c.h.b16 %v1146
        %v1983 = vunpack.c.l.b16 %v1147
        %v1984 = vunpack.c.h.b16 %v1147
        %v1985 = vunpack.c.l.b16 %v1148
        %v1986 = vunpack.c.h.b16 %v1148
        %v1987 = vunpack.c.l.b16 %v1149
        %v1988 = vunpack.c.h.b16 %v1149
        %v1989 = vunpack.c.l.b16 %v1150
        %v1990 = vunpack.c.h.b16 %v1150
        %v1991 = vunpack.c.l.b16 %v1151
        %v1992 = vunpack.c.h.b16 %v1151
        %v1993 = vunpack.c.l.b16 %v1152
        %v1994 = vunpack.c.h.b16 %v1152
        %v1995 = vunpack.c.l.b16 %v1153
        %v1996 = vunpack.c.h.b16 %v1153
        %v1997 = vunpack.c.l.b16 %v1154
        %v1998 = vunpack.c.h.b16 %v1154
        %v1999 = vunpack.c.l.b16 %v1155
        %v2000 = vunpack.c.h.b16 %v1155
        %v2001 = vunpack.c.l.b16 %v1156
        %v2002 = vunpack.c.h.b16 %v1156
        %v2003 = vunpack.c.l.b16 %v1157
        %v2004 = vunpack.c.h.b16 %v1157
        %v2005 = vunpack.c.l.b16 %v1158
        %v2006 = vunpack.c.h.b16 %v1158
        %v2007 = vunpack.c.l.b16 %v1159
        %v2008 = vunpack.c.h.b16 %v1159
        %v2009 = vunpack.c.l.b16 %v1160
        %v2010 = vunpack.c.h.b16 %v1160
        %v2011 = vunpack.c.l.b16 %v1161
        %v2012 = vunpack.c.h.b16 %v1161
        %v2013 = vunpack.c.l.b16 %v1162
        %v2014 = vunpack.c.h.b16 %v1162
        %v2015 = vunpack.c.l.b16 %v1163
        %v2016 = vunpack.c.h.b16 %v1163
        %v2017 = vunpack.c.l.b16 %v1164
        %v2018 = vunpack.c.h.b16 %v1164
        %v2019 = vunpack.c.l.b16 %v1165
        %v2020 = vunpack.c.h.b16 %v1165
        %v2021 = vunpack.c.l.b16 %v1166
        %v2022 = vunpack.c.h.b16 %v1166
        %v2023 = vunpack.c.l.b16 %v1167
        %v2024 = vunpack.c.h.b16 %v1167
        %v2025 = vunpack.c.l.b16 %v1168
        %v2026 = vunpack.c.h.b16 %v1168
        %v2027 = vunpack.c.l.b16 %v1169
        %v2028 = vunpack.c.h.b16 %v1169
        %v2029 = vunpack.c.l.b16 %v1170
        %v2030 = vunpack.c.h.b16 %v1170
        %v2031 = vunpack.c.l.b16 %v1171
        %v2032 = vunpack.c.h.b16 %v1171
        %v2033 = vunpack.c.l.b16 %v1172
        %v2034 = vunpack.c.h.b16 %v1172
        %v2035 = vunpack.c.l.b16 %v1173
        %v2036 = vunpack.c.h.b16 %v1173
        %v2037 = vunpack.c.l.b16 %v1174
        %v2038 = vunpack.c.h.b16 %v1174
        %v2039 = vpack.c.b16 %v1475, %v1463
        %v2040 = vpack.c.b16 %v1476, %v1464
        %v2041 = vpack.c.b16 %v1477, %v1465
        %v2042 = vpack.c.b16 %v1478, %v1466
        %v2043 = vpack.c.b16 %v1479, %v1467
        %v2044 = vpack.c.b16 %v1480, %v1468
        %v2045 = vpack.c.b16 %v1481, %v1469
        %v2046 = vpack.c.b16 %v1482, %v1470
        %v2047 = vpack.c.b16 %v1483, %v1471
        %v2048 = vpack.c.b16 %v1484, %v1472
        %v2049 = vpack.c.b16 %v1485, %v1473
        %v2050 = vpack.c.b16 %v1486, %v1474
        %v2051 = vpack.c.b16 %v1499, %v1487
        %v2052 = vpack.c.b16 %v1500, %v1488
        %v2053 = vpack.c.b16 %v1501, %v1489
        %v2054 = vpack.c.b16 %v1502, %v1490
        %v2055 = vpack.c.b16 %v1503, %v1491
        %v2056 = vpack.c.b16 %v1504, %v1492
        %v2057 = vpack.c.b16 %v1505, %v1493
        %v2058 = vpack.c.b16 %v1506, %v1494
        %v2059 = vpack.c.b16 %v1507, %v1495
        %v2060 = vpack.c.b16 %v1508, %v1496
        %v2061 = vpack.c.b16 %v1509, %v1497
        %v2062 = vpack.c.b16 %v1510, %v1498
        %v2063 = vpack.c.b16 %v1523, %v1511
        %v2064 = vpack.c.b16 %v1524, %v1512
        %v2065 = vpack.c.b16 %v1525, %v1513
        %v2066 = vpack.c.b16 %v1526, %v1514
        %v2067 = vpack.c.b16 %v1527, %v1515
        %v2068 = vpack.c.b16 %v1528, %v1516
        %v2069 = vpack.c.b16 %v1529, %v1517
        %v2070 = vpack.c.b16 %v1530, %v1518
        %v2071 = vpack.c.b16 %v1531, %v1519
        %v2072 = vpack.c.b16 %v1532, %v1520
        %v2073 = vpack.c.b16 %v1533, %v1521
        %v2074 = vpack.c.b16 %v1534, %v1522
        %v2075 = vpack.c.b16 %v1547, %v1535
        %v2076 = vpack.c.b16 %v1548, %v1536
        %v2077 = vpack.c.b16 %v1549, %v1537
        %v2078 = vpack.c.b16 %v1550, %v1538
        %v2079 = vpack.c.b16 %v1551, %v1539
        %v2080 = vpack.c.b16 %v1552, %v1540
        %v2081 = vpack.c.b16 %v1553, %v1541
        %v2082 = vpack.c.b16 %v1554, %v1542
        %v2083 = vpack.c.b16 %v1555, %v1543
        %v2084 = vpack.c.b16 %v1556, %v1544
        %v2085 = vpack.c.b16 %v1557, %v1545
        %v2086 = vpack.c.b16 %v1558, %v1546
        %v2087 = vpack.c.b16 %v1571, %v1559
        %v2088 = vpack.c.b16 %v1572, %v1560
        %v2089 = vpack.c.b16 %v1573, %v1561
        %v2090 = vpack.c.b16 %v1574, %v1562
        %v2091 = vpack.c.b16 %v1575, %v1563
        %v2092 = vpack.c.b16 %v1576, %v1564
        %v2093 = vpack.c.b16 %v1577, %v1565
        %v2094 = vpack.c.b16 %v1578, %v1566
        %v2095 = vpack.c.b16 %v1579, %v1567
        %v2096 = vpack.c.b16 %v1580, %v1568
        %v2097 = vpack.c.b16 %v1581, %v1569
        %v2098 = vpack.c.b16 %v1582, %v1570
        %v2099 = vpack.c.b16 %v1595, %v1583
        %v2100 = vpack.c.b16 %v1596, %v1584
        %v2101 = vpack.c.b16 %v1597, %v1585
        %v2102 = vpack.c.b16 %v1598, %v1586
        %v2103 = vpack.c.b16 %v1599, %v1587
        %v2104 = vpack.c.b16 %v1600, %v1588
        %v2105 = vpack.c.b16 %v1601, %v1589
        %v2106 = vpack.c.b16 %v1602, %v1590
        %v2107 = vpack.c.b16 %v1603, %v1591
        %v2108 = vpack.c.b16 %v1604, %v1592
        %v2109 = vpack.c.b16 %v1605, %v1593
        %v2110 = vpack.c.b16 %v1606, %v1594
        %v2111 = vpack.c.b16 %v1619, %v1607
        %v2112 = vpack.c.b16 %v1620, %v1608
        %v2113 = vpack.c.b16 %v1621, %v1609
        %v2114 = vpack.c.b16 %v1622, %v1610
        %v2115 = vpack.c.b16 %v1623, %v1611
        %v2116 = vpack.c.b16 %v1624, %v1612
        %v2117 = vpack.c.b16 %v1625, %v1613
        %v2118 = vpack.c.b16 %v1626, %v1614
        %v2119 = vpack.c.b16 %v1627, %v1615
        %v2120 = vpack.c.b16 %v1628, %v1616
        %v2121 = vpack.c.b16 %v1629, %v1617
        %v2122 = vpack.c.b16 %v1630, %v1618
        %v2123 = vpack.c.b16 %v1643, %v1631
        %v2124 = vpack.c.b16 %v1644, %v1632
        %v2125 = vpack.c.b16 %v1645, %v1633
        %v2126 = vpack.c.b16 %v1646, %v1634
        %v2127 = vpack.c.b16 %v1647, %v1635
        %v2128 = vpack.c.b16 %v1648, %v1636
        %v2129 = vpack.c.b16 %v1649, %v1637
        %v2130 = vpack.c.b16 %v1650, %v1638
        %v2131 = vpack.c.b16 %v1651, %v1639
        %v2132 = vpack.c.b16 %v1652, %v1640
        %v2133 = vpack.c.b16 %v1653, %v1641
        %v2134 = vpack.c.b16 %v1654, %v1642
        %v2135 = vpack.c.b16 %v1667, %v1655
        %v2136 = vpack.c.b16 %v1668, %v1656
        %v2137 = vpack.c.b16 %v1669, %v1657
        %v2138 = vpack.c.b16 %v1670, %v1658
        %v2139 = vpack.c.b16 %v1671, %v1659
        %v2140 = vpack.c.b16 %v1672, %v1660
        %v2141 = vpack.c.b16 %v1673, %v1661
        %v2142 = vpack.c.b16 %v1674, %v1662
        %v2143 = vpack.c.b16 %v1675, %v1663
        %v2144 = vpack.c.b16 %v1676, %v1664
        %v2145 = vpack.c.b16 %v1677, %v1665
        %v2146 = vpack.c.b16 %v1678, %v1666
        %v2147 = vpack.c.b16 %v1691, %v1679
        %v2148 = vpack.c.b16 %v1692, %v1680
        %v2149 = vpack.c.b16 %v1693, %v1681
        %v2150 = vpack.c.b16 %v1694, %v1682
        %v2151 = vpack.c.b16 %v1695, %v1683
        %v2152 = vpack.c.b16 %v1696, %v1684
        %v2153 = vpack.c.b16 %v1697, %v1685
        %v2154 = vpack.c.b16 %v1698, %v1686
        %v2155 = vpack.c.b16 %v1699, %v1687
        %v2156 = vpack.c.b16 %v1700, %v1688
        %v2157 = vpack.c.b16 %v1701, %v1689
        %v2158 = vpack.c.b16 %v1702, %v1690
        %v2159 = vpack.c.b16 %v1715, %v1703
        %v2160 = vpack.c.b16 %v1716, %v1704
        %v2161 = vpack.c.b16 %v1717, %v1705
        %v2162 = vpack.c.b16 %v1718, %v1706
        %v2163 = vpack.c.b16 %v1719, %v1707
        %v2164 = vpack.c.b16 %v1720, %v1708
        %v2165 = vpack.c.b16 %v1721, %v1709
        %v2166 = vpack.c.b16 %v1722, %v1710
        %v2167 = vpack.c.b16 %v1723, %v1711
        %v2168 = vpack.c.b16 %v1724, %v1712
        %v2169 = vpack.c.b16 %v1725, %v1713
        %v2170 = vpack.c.b16 %v1726, %v1714
        %v2171 = vpack.c.b16 %v1739, %v1727
        %v2172 = vpack.c.b16 %v1740, %v1728
        %v2173 = vpack.c.b16 %v1741, %v1729
        %v2174 = vpack.c.b16 %v1742, %v1730
        %v2175 = vpack.c.b16 %v1743, %v1731
        %v2176 = vpack.c.b16 %v1744, %v1732
        %v2177 = vpack.c.b16 %v1745, %v1733
        %v2178 = vpack.c.b16 %v1746, %v1734
        %v2179 = vpack.c.b16 %v1747, %v1735
        %v2180 = vpack.c.b16 %v1748, %v1736
        %v2181 = vpack.c.b16 %v1749, %v1737
        %v2182 = vpack.c.b16 %v1750, %v1738
        %v2183 = vpack.c.b16 %v1763, %v1751
        %v2184 = vpack.c.b16 %v1764, %v1752
        %v2185 = vpack.c.b16 %v1765, %v1753
        %v2186 = vpack.c.b16 %v1766, %v1754
        %v2187 = vpack.c.b16 %v1767, %v1755
        %v2188 = vpack.c.b16 %v1768, %v1756
        %v2189 = vpack.c.b16 %v1769, %v1757
        %v2190 = vpack.c.b16 %v1770, %v1758
        %v2191 = vpack.c.b16 %v1771, %v1759
        %v2192 = vpack.c.b16 %v1772, %v1760
        %v2193 = vpack.c.b16 %v1773, %v1761
        %v2194 = vpack.c.b16 %v1774, %v1762
        %v2195 = vpack.c.b16 %v1787, %v1775
        %v2196 = vpack.c.b16 %v1788, %v1776
        %v2197 = vpack.c.b16 %v1789, %v1777
        %v2198 = vpack.c.b16 %v1790, %v1778
        %v2199 = vpack.c.b16 %v1791, %v1779
        %v2200 = vpack.c.b16 %v1792, %v1780
        %v2201 = vpack.c.b16 %v1793, %v1781
        %v2202 = vpack.c.b16 %v1794, %v1782
        %v2203 = vpack.c.b16 %v1795, %v1783
        %v2204 = vpack.c.b16 %v1796, %v1784
        %v2205 = vpack.c.b16 %v1797, %v1785
        %v2206 = vpack.c.b16 %v1798, %v1786
        %v2207 = vpack.c.b16 %v1811, %v1799
        %v2208 = vpack.c.b16 %v1812, %v1800
        %v2209 = vpack.c.b16 %v1813, %v1801
        %v2210 = vpack.c.b16 %v1814, %v1802
        %v2211 = vpack.c.b16 %v1815, %v1803
        %v2212 = vpack.c.b16 %v1816, %v1804
        %v2213 = vpack.c.b16 %v1817, %v1805
        %v2214 = vpack.c.b16 %v1818, %v1806
        %v2215 = vpack.c.b16 %v1819, %v1807
        %v2216 = vpack.c.b16 %v1820, %v1808
        %v2217 = vpack.c.b16 %v1821, %v1809
        %v2218 = vpack.c.b16 %v1822, %v1810
        %v2219 = vpack.c.b16 %v1835, %v1823
        %v2220 = vpack.c.b16 %v1836, %v1824
        %v2221 = vpack.c.b16 %v1837, %v1825
        %v2222 = vpack.c.b16 %v1838, %v1826
        %v2223 = vpack.c.b16 %v1839, %v1827
        %v2224 = vpack.c.b16 %v1840, %v1828
        %v2225 = vpack.c.b16 %v1841, %v1829
        %v2226 = vpack.c.b16 %v1842, %v1830
        %v2227 = vpack.c.b16 %v1843, %v1831
        %v2228 = vpack.c.b16 %v1844, %v1832
        %v2229 = vpack.c.b16 %v1845, %v1833
        %v2230 = vpack.c.b16 %v1846, %v1834
        %v2231 = vpack.c.b16 %v1859, %v1847
        %v2232 = vpack.c.b16 %v1860, %v1848
        %v2233 = vpack.c.b16 %v1861, %v1849
        %v2234 = vpack.c.b16 %v1862, %v1850
        %v2235 = vpack.c.b16 %v1863, %v1851
        %v2236 = vpack.c.b16 %v1864, %v1852
        %v2237 = vpack.c.b16 %v1865, %v1853
        %v2238 = vpack.c.b16 %v1866, %v1854
        %v2239 = vpack.c.b16 %v1867, %v1855
        %v2240 = vpack.c.b16 %v1868, %v1856
        %v2241 = vpack.c.b16 %v1869, %v1857
        %v2242 = vpack.c.b16 %v1870, %v1858
        %v2243 = vpack.c.b16 %v1883, %v1871
        %v2244 = vpack.c.b16 %v1884, %v1872
        %v2245 = vpack.c.b16 %v1885, %v1873
        %v2246 = vpack.c.b16 %v1886, %v1874
        %v2247 = vpack.c.b16 %v1887, %v1875
        %v2248 = vpack.c.b16 %v1888, %v1876
        %v2249 = vpack.c.b16 %v1889, %v1877
        %v2250 = vpack.c.b16 %v1890, %v1878
        %v2251 = vpack.c.b16 %v1891, %v1879
        %v2252 = vpack.c.b16 %v1892, %v1880
        %v2253 = vpack.c.b16 %v1893, %v1881
        %v2254 = vpack.c.b16 %v1894, %v1882
        %v2255 = vpack.c.b16 %v1907, %v1895
        %v2256 = vpack.c.b16 %v1908, %v1896
        %v2257 = vpack.c.b16 %v1909, %v1897
        %v2258 = vpack.c.b16 %v1910, %v1898
        %v2259 = vpack.c.b16 %v1911, %v1899
        %v2260 = vpack.c.b16 %v1912, %v1900
        %v2261 = vpack.c.b16 %v1913, %v1901
        %v2262 = vpack.c.b16 %v1914, %v1902
        %v2263 = vpack.c.b16 %v1915, %v1903
        %v2264 = vpack.c.b16 %v1916, %v1904
        %v2265 = vpack.c.b16 %v1917, %v1905
        %v2266 = vpack.c.b16 %v1918, %v1906
        %v2267 = vpack.c.b16 %v1931, %v1919
        %v2268 = vpack.c.b16 %v1932, %v1920
        %v2269 = vpack.c.b16 %v1933, %v1921
        %v2270 = vpack.c.b16 %v1934, %v1922
        %v2271 = vpack.c.b16 %v1935, %v1923
        %v2272 = vpack.c.b16 %v1936, %v1924
        %v2273 = vpack.c.b16 %v1937, %v1925
        %v2274 = vpack.c.b16 %v1938, %v1926
        %v2275 = vpack.c.b16 %v1939, %v1927
        %v2276 = vpack.c.b16 %v1940, %v1928
        %v2277 = vpack.c.b16 %v1941, %v1929
        %v2278 = vpack.c.b16 %v1942, %v1930
        %v2279 = vpack.c.b16 %v1955, %v1943
        %v2280 = vpack.c.b16 %v1956, %v1944
        %v2281 = vpack.c.b16 %v1957, %v1945
        %v2282 = vpack.c.b16 %v1958, %v1946
        %v2283 = vpack.c.b16 %v1959, %v1947
        %v2284 = vpack.c.b16 %v1960, %v1948
        %v2285 = vpack.c.b16 %v1961, %v1949
        %v2286 = vpack.c.b16 %v1962, %v1950
        %v2287 = vpack.c.b16 %v1963, %v1951
        %v2288 = vpack.c.b16 %v1964, %v1952
        %v2289 = vpack.c.b16 %v1965, %v1953
        %v2290 = vpack.c.b16 %v1966, %v1954
        %v2291 = vpack.c.b16 %v1979, %v1967
        %v2292 = vpack.c.b16 %v1980, %v1968
        %v2293 = vpack.c.b16 %v1981, %v1969
        %v2294 = vpack.c.b16 %v1982, %v1970
        %v2295 = vpack.c.b16 %v1983, %v1971
        %v2296 = vpack.c.b16 %v1984, %v1972
        %v2297 = vpack.c.b16 %v1985, %v1973
        %v2298 = vpack.c.b16 %v1986, %v1974
        %v2299 = vpack.c.b16 %v1987, %v1975
        %v2300 = vpack.c.b16 %v1988, %v1976
        %v2301 = vpack.c.b16 %v1989, %v1977
        %v2302 = vpack.c.b16 %v1990, %v1978
        %v2303 = vpack.c.b16 %v2003, %v1991
        %v2304 = vpack.c.b16 %v2004, %v1992
        %v2305 = vpack.c.b16 %v2005, %v1993
        %v2306 = vpack.c.b16 %v2006, %v1994
        %v2307 = vpack.c.b16 %v2007, %v1995
        %v2308 = vpack.c.b16 %v2008, %v1996
        %v2309 = vpack.c.b16 %v2009, %v1997
        %v2310 = vpack.c.b16 %v2010, %v1998
        %v2311 = vpack.c.b16 %v2011, %v1999
        %v2312 = vpack.c.b16 %v2012, %v2000
        %v2313 = vpack.c.b16 %v2013, %v2001
        %v2314 = vpack.c.b16 %v2014, %v2002
        %v2315 = vpack.c.b16 %v2027, %v2015
        %v2316 = vpack.c.b16 %v2028, %v2016
        %v2317 = vpack.c.b16 %v2029, %v2017
        %v2318 = vpack.c.b16 %v2030, %v2018
        %v2319 = vpack.c.b16 %v2031, %v2019
        %v2320 = vpack.c.b16 %v2032, %v2020
        %v2321 = vpack.c.b16 %v2033, %v2021
        %v2322 = vpack.c.b16 %v2034, %v2022
        %v2323 = vpack.c.b16 %v2035, %v2023
        %v2324 = vpack.c.b16 %v2036, %v2024
        %v2325 = vpack.c.b16 %v2037, %v2025
        %v2326 = vpack.c.b16 %v2038, %v2026
        %2615 = vmatprep.subr.bf16.mxu0 %v2124
        %2616 = vmatpush1.bf16.msra.mxu0 %v2123
        %2617 = vmatprep.subr.bf16.mxu0 %v2112
        %2618 = vmatpush1.bf16.msra.mxu0 %v2111
        %2619 = vmatprep.subr.bf16.mxu0 %v2100
        %2620 = vmatpush1.bf16.msra.mxu0 %v2099
        %2621 = vmatprep.subr.bf16.mxu0 %v2088
        %2622 = vmatpush1.bf16.msra.mxu0 %v2087
        %2623 = vmatprep.subr.bf16.mxu0 %v2076
        %2624 = vmatpush1.bf16.msra.mxu0 %v2075
        %2625 = vmatprep.subr.bf16.mxu0 %v2064
        %2626 = vmatpush1.bf16.msra.mxu0 %v2063
        %2627 = vmatprep.subr.bf16.mxu0 %v2052
        %2628 = vmatpush1.bf16.msra.mxu0 %v2051
        %2629 = vmatprep.subr.bf16.mxu0 %v2040
        %2630 = vmatpush1.bf16.msra.mxu0 %v2039
        %2631 = vmatprep.subr.bf16.mxu0 %v2220
        %2632 = vmatpush2.bf16.msra.mxu0 %v2219
        %2633 = vmatprep.subr.bf16.mxu0 %v2208
        %2634 = vmatpush2.bf16.msra.mxu0 %v2207
        %2635 = vmatprep.subr.bf16.mxu0 %v2196
        %2636 = vmatpush2.bf16.msra.mxu0 %v2195
        %2637 = vmatprep.subr.bf16.mxu0 %v2184
        %2638 = vmatpush2.bf16.msra.mxu0 %v2183
        %2639 = vmatprep.subr.bf16.mxu0 %v2172
        %2640 = vmatpush2.bf16.msra.mxu0 %v2171
        %2641 = vmatprep.subr.bf16.mxu0 %v2160
        %2642 = vmatpush2.bf16.msra.mxu0 %v2159
        %2643 = vmatprep.subr.bf16.mxu0 %v2148
        %2644 = vmatpush2.bf16.msra.mxu0 %v2147
        %2645 = vmatprep.subr.bf16.mxu0 %v2136
        %2646 = vmatpush2.bf16.msra.mxu0 %v2135
        %2647 = vmatprep.mubr.bf16.mxu0 %v882
        %2648 = vmatmul.mubr.bf16.gmra.mxu0 %v881
        %v2649 = vpop.f32.mrf.mxu0
        %v2650 = vadd.f32 0.0, %v2649
        %v2651 = vpop.f32.mrf.mxu0
        %v2652 = vadd.f32 0.0, %v2651
        %v2653 = vpop.f32.mrf.mxu0
        %v2654 = vpop.f32.mrf.mxu0
        %2655 = vdwg.mxu0
        %2656 = vmatprep.subr.bf16.mxu0 %v2316
        %2657 = vmatpush1.bf16.msra.mxu0 %v2315
        %2658 = vmatprep.subr.bf16.mxu0 %v2304
        %2659 = vmatpush1.bf16.msra.mxu0 %v2303
        %2660 = vmatprep.subr.bf16.mxu0 %v2292
        %2661 = vmatpush1.bf16.msra.mxu0 %v2291
        %2662 = vmatprep.subr.bf16.mxu0 %v2280
        %2663 = vmatpush1.bf16.msra.mxu0 %v2279
        %2664 = vmatprep.subr.bf16.mxu0 %v2268
        %2665 = vmatpush1.bf16.msra.mxu0 %v2267
        %2666 = vmatprep.subr.bf16.mxu0 %v2256
        %2667 = vmatpush1.bf16.msra.mxu0 %v2255
        %2668 = vmatprep.subr.bf16.mxu0 %v2244
        %2669 = vmatpush1.bf16.msra.mxu0 %v2243
        %2670 = vmatprep.subr.bf16.mxu0 %v2232
        %2671 = vmatpush1.bf16.msra.mxu0 %v2231
        %2672 = vmatprep.subr.bf16.mxu0 0
        %2673 = vmatpush2.bf16.msra.mxu0 0
        %2674 = vmatprep.subr.bf16.mxu0 0
        %2675 = vmatpush2.bf16.msra.mxu0 0
        %2676 = vmatprep.subr.bf16.mxu0 0
        %2677 = vmatpush2.bf16.msra.mxu0 0
        %2678 = vmatprep.subr.bf16.mxu0 0
        %2679 = vmatpush2.bf16.msra.mxu0 0
        %2680 = vmatprep.subr.bf16.mxu0 0
        %2681 = vmatpush2.bf16.msra.mxu0 0
        %2682 = vmatprep.subr.bf16.mxu0 0
        %2683 = vmatpush2.bf16.msra.mxu0 0
        %2684 = vmatprep.subr.bf16.mxu0 0
        %2685 = vmatpush2.bf16.msra.mxu0 0
        %2686 = vmatprep.subr.bf16.mxu0 0
        %2687 = vmatpush2.bf16.msra.mxu0 0
        %2688 = vmatprep.mubr.bf16.mxu0 0
        %2689 = vmatmul.mubr.bf16.gmra.mxu0 %v883
        %v2690 = vpop.f32.mrf.mxu0
        %v2691 = vadd.f32 %v2650, %v2690
        %v2692 = vpop.f32.mrf.mxu0
        %v2693 = vadd.f32 %v2652, %v2692
        %v2694 = vpop.f32.mrf.mxu0
        %v2695 = vpop.f32.mrf.mxu0
        %2696 = vdwg.mxu0
        %2697 = vmatprep.subr.bf16.mxu0 %v2126
        %2698 = vmatpush1.bf16.msra.mxu0 %v2125
        %2699 = vmatprep.subr.bf16.mxu0 %v2114
        %2700 = vmatpush1.bf16.msra.mxu0 %v2113
        %2701 = vmatprep.subr.bf16.mxu0 %v2102
        %2702 = vmatpush1.bf16.msra.mxu0 %v2101
        %2703 = vmatprep.subr.bf16.mxu0 %v2090
        %2704 = vmatpush1.bf16.msra.mxu0 %v2089
        %2705 = vmatprep.subr.bf16.mxu0 %v2078
        %2706 = vmatpush1.bf16.msra.mxu0 %v2077
        %2707 = vmatprep.subr.bf16.mxu0 %v2066
        %2708 = vmatpush1.bf16.msra.mxu0 %v2065
        %2709 = vmatprep.subr.bf16.mxu0 %v2054
        %2710 = vmatpush1.bf16.msra.mxu0 %v2053
        %2711 = vmatprep.subr.bf16.mxu0 %v2042
        %2712 = vmatpush1.bf16.msra.mxu0 %v2041
        %2713 = vmatprep.subr.bf16.mxu0 %v2222
        %2714 = vmatpush2.bf16.msra.mxu0 %v2221
        %2715 = vmatprep.subr.bf16.mxu0 %v2210
        %2716 = vmatpush2.bf16.msra.mxu0 %v2209
        %2717 = vmatprep.subr.bf16.mxu0 %v2198
        %2718 = vmatpush2.bf16.msra.mxu0 %v2197
        %2719 = vmatprep.subr.bf16.mxu0 %v2186
        %2720 = vmatpush2.bf16.msra.mxu0 %v2185
        %2721 = vmatprep.subr.bf16.mxu0 %v2174
        %2722 = vmatpush2.bf16.msra.mxu0 %v2173
        %2723 = vmatprep.subr.bf16.mxu0 %v2162
        %2724 = vmatpush2.bf16.msra.mxu0 %v2161
        %2725 = vmatprep.subr.bf16.mxu0 %v2150
        %2726 = vmatpush2.bf16.msra.mxu0 %v2149
        %2727 = vmatprep.subr.bf16.mxu0 %v2138
        %2728 = vmatpush2.bf16.msra.mxu0 %v2137
        %2729 = vmatprep.mubr.bf16.mxu0 %v882
        %2730 = vmatmul.mubr.bf16.gmra.mxu0 %v881
        %v2731 = vpop.f32.mrf.mxu0
        %v2732 = vadd.f32 0.0, %v2731
        %v2733 = vpop.f32.mrf.mxu0
        %v2734 = vadd.f32 0.0, %v2733
        %v2735 = vpop.f32.mrf.mxu0
        %v2736 = vpop.f32.mrf.mxu0
        %2737 = vdwg.mxu0
        %2738 = vmatprep.subr.bf16.mxu0 %v2318
        %2739 = vmatpush1.bf16.msra.mxu0 %v2317
        %2740 = vmatprep.subr.bf16.mxu0 %v2306
        %2741 = vmatpush1.bf16.msra.mxu0 %v2305
        %2742 = vmatprep.subr.bf16.mxu0 %v2294
        %2743 = vmatpush1.bf16.msra.mxu0 %v2293
        %2744 = vmatprep.subr.bf16.mxu0 %v2282
        %2745 = vmatpush1.bf16.msra.mxu0 %v2281
        %2746 = vmatprep.subr.bf16.mxu0 %v2270
        %2747 = vmatpush1.bf16.msra.mxu0 %v2269
        %2748 = vmatprep.subr.bf16.mxu0 %v2258
        %2749 = vmatpush1.bf16.msra.mxu0 %v2257
        %2750 = vmatprep.subr.bf16.mxu0 %v2246
        %2751 = vmatpush1.bf16.msra.mxu0 %v2245
        %2752 = vmatprep.subr.bf16.mxu0 %v2234
        %2753 = vmatpush1.bf16.msra.mxu0 %v2233
        %2754 = vmatprep.subr.bf16.mxu0 0
        %2755 = vmatpush2.bf16.msra.mxu0 0
        %2756 = vmatprep.subr.bf16.mxu0 0
        %2757 = vmatpush2.bf16.msra.mxu0 0
        %2758 = vmatprep.subr.bf16.mxu0 0
        %2759 = vmatpush2.bf16.msra.mxu0 0
        %2760 = vmatprep.subr.bf16.mxu0 0
        %2761 = vmatpush2.bf16.msra.mxu0 0
        %2762 = vmatprep.subr.bf16.mxu0 0
        %2763 = vmatpush2.bf16.msra.mxu0 0
        %2764 = vmatprep.subr.bf16.mxu0 0
        %2765 = vmatpush2.bf16.msra.mxu0 0
        %2766 = vmatprep.subr.bf16.mxu0 0
        %2767 = vmatpush2.bf16.msra.mxu0 0
        %2768 = vmatprep.subr.bf16.mxu0 0
        %2769 = vmatpush2.bf16.msra.mxu0 0
        %2770 = vmatprep.mubr.bf16.mxu0 0
        %2771 = vmatmul.mubr.bf16.gmra.mxu0 %v883
        %v2772 = vpop.f32.mrf.mxu0
        %v2773 = vadd.f32 %v2732, %v2772
        %v2774 = vpop.f32.mrf.mxu0
        %v2775 = vadd.f32 %v2734, %v2774
        %v2776 = vpop.f32.mrf.mxu0
        %v2777 = vpop.f32.mrf.mxu0
        %2778 = vdwg.mxu0
        %2779 = vmatprep.subr.bf16.mxu0 %v2128
        %2780 = vmatpush1.bf16.msra.mxu0 %v2127
        %2781 = vmatprep.subr.bf16.mxu0 %v2116
        %2782 = vmatpush1.bf16.msra.mxu0 %v2115
        %2783 = vmatprep.subr.bf16.mxu0 %v2104
        %2784 = vmatpush1.bf16.msra.mxu0 %v2103
        %2785 = vmatprep.subr.bf16.mxu0 %v2092
        %2786 = vmatpush1.bf16.msra.mxu0 %v2091
        %2787 = vmatprep.subr.bf16.mxu0 %v2080
        %2788 = vmatpush1.bf16.msra.mxu0 %v2079
        %2789 = vmatprep.subr.bf16.mxu0 %v2068
        %2790 = vmatpush1.bf16.msra.mxu0 %v2067
        %2791 = vmatprep.subr.bf16.mxu0 %v2056
        %2792 = vmatpush1.bf16.msra.mxu0 %v2055
        %2793 = vmatprep.subr.bf16.mxu0 %v2044
        %2794 = vmatpush1.bf16.msra.mxu0 %v2043
        %2795 = vmatprep.subr.bf16.mxu0 %v2224
        %2796 = vmatpush2.bf16.msra.mxu0 %v2223
        %2797 = vmatprep.subr.bf16.mxu0 %v2212
        %2798 = vmatpush2.bf16.msra.mxu0 %v2211
        %2799 = vmatprep.subr.bf16.mxu0 %v2200
        %2800 = vmatpush2.bf16.msra.mxu0 %v2199
        %2801 = vmatprep.subr.bf16.mxu0 %v2188
        %2802 = vmatpush2.bf16.msra.mxu0 %v2187
        %2803 = vmatprep.subr.bf16.mxu0 %v2176
        %2804 = vmatpush2.bf16.msra.mxu0 %v2175
        %2805 = vmatprep.subr.bf16.mxu0 %v2164
        %2806 = vmatpush2.bf16.msra.mxu0 %v2163
        %2807 = vmatprep.subr.bf16.mxu0 %v2152
        %2808 = vmatpush2.bf16.msra.mxu0 %v2151
        %2809 = vmatprep.subr.bf16.mxu0 %v2140
        %2810 = vmatpush2.bf16.msra.mxu0 %v2139
        %2811 = vmatprep.mubr.bf16.mxu0 %v882
        %2812 = vmatmul.mubr.bf16.gmra.mxu0 %v881
        %v2813 = vpop.f32.mrf.mxu0
        %v2814 = vadd.f32 0.0, %v2813
        %v2815 = vpop.f32.mrf.mxu0
        %v2816 = vadd.f32 0.0, %v2815
        %v2817 = vpop.f32.mrf.mxu0
        %v2818 = vpop.f32.mrf.mxu0
        %2819 = vdwg.mxu0
        %2820 = vmatprep.subr.bf16.mxu0 %v2320
        %2821 = vmatpush1.bf16.msra.mxu0 %v2319
        %2822 = vmatprep.subr.bf16.mxu0 %v2308
        %2823 = vmatpush1.bf16.msra.mxu0 %v2307
        %2824 = vmatprep.subr.bf16.mxu0 %v2296
        %2825 = vmatpush1.bf16.msra.mxu0 %v2295
        %2826 = vmatprep.subr.bf16.mxu0 %v2284
        %2827 = vmatpush1.bf16.msra.mxu0 %v2283
        %2828 = vmatprep.subr.bf16.mxu0 %v2272
        %2829 = vmatpush1.bf16.msra.mxu0 %v2271
        %2830 = vmatprep.subr.bf16.mxu0 %v2260
        %2831 = vmatpush1.bf16.msra.mxu0 %v2259
        %2832 = vmatprep.subr.bf16.mxu0 %v2248
        %2833 = vmatpush1.bf16.msra.mxu0 %v2247
        %2834 = vmatprep.subr.bf16.mxu0 %v2236
        %2835 = vmatpush1.bf16.msra.mxu0 %v2235
        %2836 = vmatprep.subr.bf16.mxu0 0
        %2837 = vmatpush2.bf16.msra.mxu0 0
        %2838 = vmatprep.subr.bf16.mxu0 0
        %2839 = vmatpush2.bf16.msra.mxu0 0
        %2840 = vmatprep.subr.bf16.mxu0 0
        %2841 = vmatpush2.bf16.msra.mxu0 0
        %2842 = vmatprep.subr.bf16.mxu0 0
        %2843 = vmatpush2.bf16.msra.mxu0 0
        %2844 = vmatprep.subr.bf16.mxu0 0
        %2845 = vmatpush2.bf16.msra.mxu0 0
        %2846 = vmatprep.subr.bf16.mxu0 0
        %2847 = vmatpush2.bf16.msra.mxu0 0
        %2848 = vmatprep.subr.bf16.mxu0 0
        %2849 = vmatpush2.bf16.msra.mxu0 0
        %2850 = vmatprep.subr.bf16.mxu0 0
        %2851 = vmatpush2.bf16.msra.mxu0 0
        %2852 = vmatprep.mubr.bf16.mxu0 0
        %2853 = vmatmul.mubr.bf16.gmra.mxu0 %v883
        %v2854 = vpop.f32.mrf.mxu0
        %v2855 = vadd.f32 %v2814, %v2854
        %v2856 = vpop.f32.mrf.mxu0
        %v2857 = vadd.f32 %v2816, %v2856
        %v2858 = vpop.f32.mrf.mxu0
        %v2859 = vpop.f32.mrf.mxu0
        %2860 = vdwg.mxu0
        %2861 = vmatprep.subr.bf16.mxu0 %v2130
        %2862 = vmatpush1.bf16.msra.mxu0 %v2129
        %2863 = vmatprep.subr.bf16.mxu0 %v2118
        %2864 = vmatpush1.bf16.msra.mxu0 %v2117
        %2865 = vmatprep.subr.bf16.mxu0 %v2106
        %2866 = vmatpush1.bf16.msra.mxu0 %v2105
        %2867 = vmatprep.subr.bf16.mxu0 %v2094
        %2868 = vmatpush1.bf16.msra.mxu0 %v2093
        %2869 = vmatprep.subr.bf16.mxu0 %v2082
        %2870 = vmatpush1.bf16.msra.mxu0 %v2081
        %2871 = vmatprep.subr.bf16.mxu0 %v2070
        %2872 = vmatpush1.bf16.msra.mxu0 %v2069
        %2873 = vmatprep.subr.bf16.mxu0 %v2058
        %2874 = vmatpush1.bf16.msra.mxu0 %v2057
        %2875 = vmatprep.subr.bf16.mxu0 %v2046
        %2876 = vmatpush1.bf16.msra.mxu0 %v2045
        %2877 = vmatprep.subr.bf16.mxu0 %v2226
        %2878 = vmatpush2.bf16.msra.mxu0 %v2225
        %2879 = vmatprep.subr.bf16.mxu0 %v2214
        %2880 = vmatpush2.bf16.msra.mxu0 %v2213
        %2881 = vmatprep.subr.bf16.mxu0 %v2202
        %2882 = vmatpush2.bf16.msra.mxu0 %v2201
        %2883 = vmatprep.subr.bf16.mxu0 %v2190
        %2884 = vmatpush2.bf16.msra.mxu0 %v2189
        %2885 = vmatprep.subr.bf16.mxu0 %v2178
        %2886 = vmatpush2.bf16.msra.mxu0 %v2177
        %2887 = vmatprep.subr.bf16.mxu0 %v2166
        %2888 = vmatpush2.bf16.msra.mxu0 %v2165
        %2889 = vmatprep.subr.bf16.mxu0 %v2154
        %2890 = vmatpush2.bf16.msra.mxu0 %v2153
        %2891 = vmatprep.subr.bf16.mxu0 %v2142
        %2892 = vmatpush2.bf16.msra.mxu0 %v2141
        %2893 = vmatprep.mubr.bf16.mxu0 %v882
        %2894 = vmatmul.mubr.bf16.gmra.mxu0 %v881
        %v2895 = vpop.f32.mrf.mxu0
        %v2896 = vadd.f32 0.0, %v2895
        %v2897 = vpop.f32.mrf.mxu0
        %v2898 = vadd.f32 0.0, %v2897
        %v2899 = vpop.f32.mrf.mxu0
        %v2900 = vpop.f32.mrf.mxu0
        %2901 = vdwg.mxu0
        %2902 = vmatprep.subr.bf16.mxu0 %v2322
        %2903 = vmatpush1.bf16.msra.mxu0 %v2321
        %2904 = vmatprep.subr.bf16.mxu0 %v2310
        %2905 = vmatpush1.bf16.msra.mxu0 %v2309
        %2906 = vmatprep.subr.bf16.mxu0 %v2298
        %2907 = vmatpush1.bf16.msra.mxu0 %v2297
        %2908 = vmatprep.subr.bf16.mxu0 %v2286
        %2909 = vmatpush1.bf16.msra.mxu0 %v2285
        %2910 = vmatprep.subr.bf16.mxu0 %v2274
        %2911 = vmatpush1.bf16.msra.mxu0 %v2273
        %2912 = vmatprep.subr.bf16.mxu0 %v2262
        %2913 = vmatpush1.bf16.msra.mxu0 %v2261
        %2914 = vmatprep.subr.bf16.mxu0 %v2250
        %2915 = vmatpush1.bf16.msra.mxu0 %v2249
        %2916 = vmatprep.subr.bf16.mxu0 %v2238
        %2917 = vmatpush1.bf16.msra.mxu0 %v2237
        %2918 = vmatprep.subr.bf16.mxu0 0
        %2919 = vmatpush2.bf16.msra.mxu0 0
        %2920 = vmatprep.subr.bf16.mxu0 0
        %2921 = vmatpush2.bf16.msra.mxu0 0
        %2922 = vmatprep.subr.bf16.mxu0 0
        %2923 = vmatpush2.bf16.msra.mxu0 0
        %2924 = vmatprep.subr.bf16.mxu0 0
        %2925 = vmatpush2.bf16.msra.mxu0 0
        %2926 = vmatprep.subr.bf16.mxu0 0
        %2927 = vmatpush2.bf16.msra.mxu0 0
        %2928 = vmatprep.subr.bf16.mxu0 0
        %2929 = vmatpush2.bf16.msra.mxu0 0
        %2930 = vmatprep.subr.bf16.mxu0 0
        %2931 = vmatpush2.bf16.msra.mxu0 0
        %2932 = vmatprep.subr.bf16.mxu0 0
        %2933 = vmatpush2.bf16.msra.mxu0 0
        %2934 = vmatprep.mubr.bf16.mxu0 0
        %2935 = vmatmul.mubr.bf16.gmra.mxu0 %v883
        %v2936 = vpop.f32.mrf.mxu0
        %v2937 = vadd.f32 %v2896, %v2936
        %v2938 = vpop.f32.mrf.mxu0
        %v2939 = vadd.f32 %v2898, %v2938
        %v2940 = vpop.f32.mrf.mxu0
        %v2941 = vpop.f32.mrf.mxu0
        %2942 = vdwg.mxu0
        %2943 = vmatprep.subr.bf16.mxu0 %v2132
        %2944 = vmatpush1.bf16.msra.mxu0 %v2131
        %2945 = vmatprep.subr.bf16.mxu0 %v2120
        %2946 = vmatpush1.bf16.msra.mxu0 %v2119
        %2947 = vmatprep.subr.bf16.mxu0 %v2108
        %2948 = vmatpush1.bf16.msra.mxu0 %v2107
        %2949 = vmatprep.subr.bf16.mxu0 %v2096
        %2950 = vmatpush1.bf16.msra.mxu0 %v2095
        %2951 = vmatprep.subr.bf16.mxu0 %v2084
        %2952 = vmatpush1.bf16.msra.mxu0 %v2083
        %2953 = vmatprep.subr.bf16.mxu0 %v2072
        %2954 = vmatpush1.bf16.msra.mxu0 %v2071
        %2955 = vmatprep.subr.bf16.mxu0 %v2060
        %2956 = vmatpush1.bf16.msra.mxu0 %v2059
        %2957 = vmatprep.subr.bf16.mxu0 %v2048
        %2958 = vmatpush1.bf16.msra.mxu0 %v2047
        %2959 = vmatprep.subr.bf16.mxu0 %v2228
        %2960 = vmatpush2.bf16.msra.mxu0 %v2227
        %2961 = vmatprep.subr.bf16.mxu0 %v2216
        %2962 = vmatpush2.bf16.msra.mxu0 %v2215
        %2963 = vmatprep.subr.bf16.mxu0 %v2204
        %2964 = vmatpush2.bf16.msra.mxu0 %v2203
        %2965 = vmatprep.subr.bf16.mxu0 %v2192
        %2966 = vmatpush2.bf16.msra.mxu0 %v2191
        %2967 = vmatprep.subr.bf16.mxu0 %v2180
        %2968 = vmatpush2.bf16.msra.mxu0 %v2179
        %2969 = vmatprep.subr.bf16.mxu0 %v2168
        %2970 = vmatpush2.bf16.msra.mxu0 %v2167
        %2971 = vmatprep.subr.bf16.mxu0 %v2156
        %2972 = vmatpush2.bf16.msra.mxu0 %v2155
        %2973 = vmatprep.subr.bf16.mxu0 %v2144
        %2974 = vmatpush2.bf16.msra.mxu0 %v2143
        %2975 = vmatprep.mubr.bf16.mxu0 %v882
        %2976 = vmatmul.mubr.bf16.gmra.mxu0 %v881
        %v2977 = vpop.f32.mrf.mxu0
        %v2978 = vadd.f32 0.0, %v2977
        %v2979 = vpop.f32.mrf.mxu0
        %v2980 = vadd.f32 0.0, %v2979
        %v2981 = vpop.f32.mrf.mxu0
        %v2982 = vpop.f32.mrf.mxu0
        %2983 = vdwg.mxu0
        %2984 = vmatprep.subr.bf16.mxu0 %v2324
        %2985 = vmatpush1.bf16.msra.mxu0 %v2323
        %2986 = vmatprep.subr.bf16.mxu0 %v2312
        %2987 = vmatpush1.bf16.msra.mxu0 %v2311
        %2988 = vmatprep.subr.bf16.mxu0 %v2300
        %2989 = vmatpush1.bf16.msra.mxu0 %v2299
        %2990 = vmatprep.subr.bf16.mxu0 %v2288
        %2991 = vmatpush1.bf16.msra.mxu0 %v2287
        %2992 = vmatprep.subr.bf16.mxu0 %v2276
        %2993 = vmatpush1.bf16.msra.mxu0 %v2275
        %2994 = vmatprep.subr.bf16.mxu0 %v2264
        %2995 = vmatpush1.bf16.msra.mxu0 %v2263
        %2996 = vmatprep.subr.bf16.mxu0 %v2252
        %2997 = vmatpush1.bf16.msra.mxu0 %v2251
        %2998 = vmatprep.subr.bf16.mxu0 %v2240
        %2999 = vmatpush1.bf16.msra.mxu0 %v2239
        %3000 = vmatprep.subr.bf16.mxu0 0
        %3001 = vmatpush2.bf16.msra.mxu0 0
        %3002 = vmatprep.subr.bf16.mxu0 0
        %3003 = vmatpush2.bf16.msra.mxu0 0
        %3004 = vmatprep.subr.bf16.mxu0 0
        %3005 = vmatpush2.bf16.msra.mxu0 0
        %3006 = vmatprep.subr.bf16.mxu0 0
        %3007 = vmatpush2.bf16.msra.mxu0 0
        %3008 = vmatprep.subr.bf16.mxu0 0
        %3009 = vmatpush2.bf16.msra.mxu0 0
        %3010 = vmatprep.subr.bf16.mxu0 0
        %3011 = vmatpush2.bf16.msra.mxu0 0
        %3012 = vmatprep.subr.bf16.mxu0 0
        %3013 = vmatpush2.bf16.msra.mxu0 0
        %3014 = vmatprep.subr.bf16.mxu0 0
        %3015 = vmatpush2.bf16.msra.mxu0 0
        %3016 = vmatprep.mubr.bf16.mxu0 0
        %3017 = vmatmul.mubr.bf16.gmra.mxu0 %v883
        %v3018 = vpop.f32.mrf.mxu0
        %v3019 = vadd.f32 %v2978, %v3018
        %v3020 = vpop.f32.mrf.mxu0
        %v3021 = vadd.f32 %v2980, %v3020
        %v3022 = vpop.f32.mrf.mxu0
        %v3023 = vpop.f32.mrf.mxu0
        %3024 = vdwg.mxu0
        %3025 = vmatprep.subr.bf16.mxu0 %v2134
        %3026 = vmatpush1.bf16.msra.mxu0 %v2133
        %3027 = vmatprep.subr.bf16.mxu0 %v2122
        %3028 = vmatpush1.bf16.msra.mxu0 %v2121
        %3029 = vmatprep.subr.bf16.mxu0 %v2110
        %3030 = vmatpush1.bf16.msra.mxu0 %v2109
        %3031 = vmatprep.subr.bf16.mxu0 %v2098
        %3032 = vmatpush1.bf16.msra.mxu0 %v2097
        %3033 = vmatprep.subr.bf16.mxu0 %v2086
        %3034 = vmatpush1.bf16.msra.mxu0 %v2085
        %3035 = vmatprep.subr.bf16.mxu0 %v2074
        %3036 = vmatpush1.bf16.msra.mxu0 %v2073
        %3037 = vmatprep.subr.bf16.mxu0 %v2062
        %3038 = vmatpush1.bf16.msra.mxu0 %v2061
        %3039 = vmatprep.subr.bf16.mxu0 %v2050
        %3040 = vmatpush1.bf16.msra.mxu0 %v2049
        %3041 = vmatprep.subr.bf16.mxu0 %v2230
        %3042 = vmatpush2.bf16.msra.mxu0 %v2229
        %3043 = vmatprep.subr.bf16.mxu0 %v2218
        %3044 = vmatpush2.bf16.msra.mxu0 %v2217
        %3045 = vmatprep.subr.bf16.mxu0 %v2206
        %3046 = vmatpush2.bf16.msra.mxu0 %v2205
        %3047 = vmatprep.subr.bf16.mxu0 %v2194
        %3048 = vmatpush2.bf16.msra.mxu0 %v2193
        %3049 = vmatprep.subr.bf16.mxu0 %v2182
        %3050 = vmatpush2.bf16.msra.mxu0 %v2181
        %3051 = vmatprep.subr.bf16.mxu0 %v2170
        %3052 = vmatpush2.bf16.msra.mxu0 %v2169
        %3053 = vmatprep.subr.bf16.mxu0 %v2158
        %3054 = vmatpush2.bf16.msra.mxu0 %v2157
        %3055 = vmatprep.subr.bf16.mxu0 %v2146
        %3056 = vmatpush2.bf16.msra.mxu0 %v2145
        %3057 = vmatprep.mubr.bf16.mxu0 %v882
        %3058 = vmatmul.mubr.bf16.gmra.mxu0 %v881
        %v3059 = vpop.f32.mrf.mxu0
        %v3060 = vadd.f32 0.0, %v3059
        %v3061 = vpop.f32.mrf.mxu0
        %v3062 = vadd.f32 0.0, %v3061
        %v3063 = vpop.f32.mrf.mxu0
        %v3064 = vpop.f32.mrf.mxu0
        %3065 = vdwg.mxu0
        %3066 = vmatprep.subr.bf16.mxu0 %v2326
        %3067 = vmatpush1.bf16.msra.mxu0 %v2325
        %3068 = vmatprep.subr.bf16.mxu0 %v2314
        %3069 = vmatpush1.bf16.msra.mxu0 %v2313
        %3070 = vmatprep.subr.bf16.mxu0 %v2302
        %3071 = vmatpush1.bf16.msra.mxu0 %v2301
        %3072 = vmatprep.subr.bf16.mxu0 %v2290
        %3073 = vmatpush1.bf16.msra.mxu0 %v2289
        %3074 = vmatprep.subr.bf16.mxu0 %v2278
        %3075 = vmatpush1.bf16.msra.mxu0 %v2277
        %3076 = vmatprep.subr.bf16.mxu0 %v2266
        %3077 = vmatpush1.bf16.msra.mxu0 %v2265
        %3078 = vmatprep.subr.bf16.mxu0 %v2254
        %3079 = vmatpush1.bf16.msra.mxu0 %v2253
        %3080 = vmatprep.subr.bf16.mxu0 %v2242
        %3081 = vmatpush1.bf16.msra.mxu0 %v2241
        %3082 = vmatprep.subr.bf16.mxu0 0
        %3083 = vmatpush2.bf16.msra.mxu0 0
        %3084 = vmatprep.subr.bf16.mxu0 0
        %3085 = vmatpush2.bf16.msra.mxu0 0
        %3086 = vmatprep.subr.bf16.mxu0 0
        %3087 = vmatpush2.bf16.msra.mxu0 0
        %3088 = vmatprep.subr.bf16.mxu0 0
        %3089 = vmatpush2.bf16.msra.mxu0 0
        %3090 = vmatprep.subr.bf16.mxu0 0
        %3091 = vmatpush2.bf16.msra.mxu0 0
        %3092 = vmatprep.subr.bf16.mxu0 0
        %3093 = vmatpush2.bf16.msra.mxu0 0
        %3094 = vmatprep.subr.bf16.mxu0 0
        %3095 = vmatpush2.bf16.msra.mxu0 0
        %3096 = vmatprep.subr.bf16.mxu0 0
        %3097 = vmatpush2.bf16.msra.mxu0 0
        %3098 = vmatprep.mubr.bf16.mxu0 0
        %3099 = vmatmul.mubr.bf16.gmra.mxu0 %v883
        %v3100 = vpop.f32.mrf.mxu0
        %v3101 = vadd.f32 %v3060, %v3100
        %v3102 = vpop.f32.mrf.mxu0
        %v3103 = vadd.f32 %v3062, %v3102
        %v3104 = vpop.f32.mrf.mxu0
        %v3105 = vpop.f32.mrf.mxu0
        %3106 = vdwg.mxu0
        %v3107 = vpack.c.bf16 %v2691, %v2691
        %v3108 = vpack.c.bf16 %v2693, %v2693
        %v3109 = vpack.c.bf16 %v2773, %v2773
        %v3110 = vpack.c.bf16 %v2775, %v2775
        %v3111 = vpack.c.bf16 %v2855, %v2855
        %v3112 = vpack.c.bf16 %v2857, %v2857
        %v3113 = vpack.c.bf16 %v2937, %v2937
        %v3114 = vpack.c.bf16 %v2939, %v2939
        %v3115 = vpack.c.bf16 %v3019, %v3019
        %v3116 = vpack.c.bf16 %v3021, %v3021
        %v3117 = vpack.c.bf16 %v3101, %v3101
        %v3118 = vpack.c.bf16 %v3103, %v3103
        %3119 = vmatprep.subr.bf16.mxu0 0
        %3120 = vmatpush1.bf16.xpose.msra.mxu0 0
        %3121 = vmatprep.subr.bf16.mxu0 0
        %3122 = vmatpush1.bf16.xpose.msra.mxu0 0
        %3123 = vmatprep.subr.bf16.mxu0 0
        %3124 = vmatpush1.bf16.xpose.msra.mxu0 0
        %3125 = vmatprep.subr.bf16.mxu0 0
        %3126 = vmatpush1.bf16.xpose.msra.mxu0 0
        %3127 = vmatprep.subr.bf16.mxu0 0
        %3128 = vmatpush1.bf16.xpose.msra.mxu0 0
        %3129 = vmatprep.subr.bf16.mxu0 0
        %3130 = vmatpush1.bf16.xpose.msra.mxu0 0
        %3131 = vmatprep.subr.bf16.mxu0 0
        %3132 = vmatpush1.bf16.xpose.msra.mxu0 0
        %3133 = vmatprep.subr.bf16.mxu0 0
        %3134 = vmatpush1.bf16.xpose.msra.mxu0 %v3111
        %3135 = vmatprep.subr.bf16.mxu0 0
        %3136 = vmatpush2.bf16.xpose.msra.mxu0 0
        %3137 = vmatprep.subr.bf16.mxu0 0
        %3138 = vmatpush2.bf16.xpose.msra.mxu0 0
        %3139 = vmatprep.subr.bf16.mxu0 0
        %3140 = vmatpush2.bf16.xpose.msra.mxu0 0
        %3141 = vmatprep.subr.bf16.mxu0 0
        %3142 = vmatpush2.bf16.xpose.msra.mxu0 0
        %3143 = vmatprep.subr.bf16.mxu0 0
        %3144 = vmatpush2.bf16.xpose.msra.mxu0 0
        %3145 = vmatprep.subr.bf16.mxu0 0
        %3146 = vmatpush2.bf16.xpose.msra.mxu0 0
        %3147 = vmatprep.subr.bf16.mxu0 0
        %3148 = vmatpush2.bf16.xpose.msra.mxu0 0
        %3149 = vmatprep.subr.bf16.mxu0 0
        %3150 = vmatpush2.bf16.xpose.msra.mxu0 0
        %3151 = vmatprep.mubr.bf16.mxu0 0
        %3152 = vmatmul.mubr.bf16.gmra.mxu0 %v3107
        %v3153 = vpop.f32.mrf.mxu0
        %v3154 = vadd.f32 %v815, %v3153
        %v3155 = vpop.f32.mrf.mxu0
        %v3156 = vpop.f32.mrf.mxu0
        %v3157 = vpop.f32.mrf.mxu0
        %3158 = vdwg.mxu0
        %vm3159 = vcmask 64512
        %v3160 = vsel %vm3159, %v3154, -inf
        %3161 = vmax.xlane.f32.xlu0 %v3160
        %v3162 = vpop.xlane.xlu0 %3161
        %v3163 = vsub.f32 %v3154, %v3162
        %v3164 = vmul.f32 %v3163, 1.442695
        %v3165 = vpow.pop %v3164
        %v3166 = vsel %vm3159, %v3165, 0.0
        %3167 = vadd.xlane.f32.xlu0 %v3166
        %v3168 = vpop.xlane.xlu0 %3167
        %v3169 = vrcp.pop %v3168
        %v3170 = vmul.f32 %v3165, %v3169
        %v3171 = vpack.c.bf16 %v3170, %v3170
        %v3173 = vsel %vm3159, %v3171, 0
        %vm3175 = vcmask 1043456
        %v3177 = vsel %vm3175, %v3115, 0
        %3179 = vmatprep.subr.bf16.mxu0 0
        %3180 = vmatpush1.bf16.msra.mxu0 0
        %3181 = vmatprep.subr.bf16.mxu0 0
        %3182 = vmatpush1.bf16.msra.mxu0 0
        %3183 = vmatprep.subr.bf16.mxu0 0
        %3184 = vmatpush1.bf16.msra.mxu0 0
        %3185 = vmatprep.subr.bf16.mxu0 0
        %3186 = vmatpush1.bf16.msra.mxu0 0
        %3187 = vmatprep.subr.bf16.mxu0 0
        %3188 = vmatpush1.bf16.msra.mxu0 0
        %3189 = vmatprep.subr.bf16.mxu0 0
        %3190 = vmatpush1.bf16.msra.mxu0 0
        %3191 = vmatprep.subr.bf16.mxu0 0
        %3192 = vmatpush1.bf16.msra.mxu0 0
        %3193 = vmatprep.subr.bf16.mxu0 0
        %3194 = vmatpush1.bf16.msra.mxu0 %v3177
        %3195 = vmatprep.subr.bf16.mxu0 0
        %3196 = vmatpush2.bf16.msra.mxu0 0
        %3197 = vmatprep.subr.bf16.mxu0 0
        %3198 = vmatpush2.bf16.msra.mxu0 0
        %3199 = vmatprep.subr.bf16.mxu0 0
        %3200 = vmatpush2.bf16.msra.mxu0 0
        %3201 = vmatprep.subr.bf16.mxu0 0
        %3202 = vmatpush2.bf16.msra.mxu0 0
        %3203 = vmatprep.subr.bf16.mxu0 0
        %3204 = vmatpush2.bf16.msra.mxu0 0
        %3205 = vmatprep.subr.bf16.mxu0 0
        %3206 = vmatpush2.bf16.msra.mxu0 0
        %3207 = vmatprep.subr.bf16.mxu0 0
        %3208 = vmatpush2.bf16.msra.mxu0 0
        %3209 = vmatprep.subr.bf16.mxu0 0
        %3210 = vmatpush2.bf16.msra.mxu0 0
        %3211 = vmatprep.mubr.bf16.mxu0 0
        %3212 = vmatmul.mubr.bf16.gmra.mxu0 %v3173
        %v3213 = vpop.f32.mrf.mxu0
        %v3214 = vadd.f32 0.0, %v3213
        %v3215 = vpop.f32.mrf.mxu0
        %v3216 = vpop.f32.mrf.mxu0
        %v3217 = vpop.f32.mrf.mxu0
        %3218 = vdwg.mxu0
        %v3219 = vpack.c.bf16 %v3214, %v3214
        %s3220 = smul.u32 %s47, 192
        %s3221 = smul.addr %s3220, 4
        %s3222 = scalar_lea.vmem [#allocation12], %s3221
        %v3223 = vld [vmem:[%s3222] sm:$0xff]
        %v3224 = vld [vmem:[%s3222 + $0x8] sm:$0xf]
        %v3225 = vld [vmem:[%s3222 + $0xc] sm:$0xff]
        %v3226 = vld [vmem:[%s3222 + $0x14] sm:$0xf]
        %v3227 = vld [vmem:[%s3222 + $0x18] sm:$0xff]
        %v3228 = vld [vmem:[%s3222 + $0x20] sm:$0xf]
        %v3229 = vld [vmem:[%s3222 + $0x24] sm:$0xff]
        %v3230 = vld [vmem:[%s3222 + $0x2c] sm:$0xf]
        %v3231 = vld [vmem:[%s3222 + $0x30] sm:$0xff]
        %v3232 = vld [vmem:[%s3222 + $0x38] sm:$0xf]
        %v3233 = vld [vmem:[%s3222 + $0x3c] sm:$0xff]
        %v3234 = vld [vmem:[%s3222 + $0x44] sm:$0xf]
        %v3235 = vld [vmem:[%s3222 + $0x48] sm:$0xff]
        %v3236 = vld [vmem:[%s3222 + $0x50] sm:$0xf]
        %v3237 = vld [vmem:[%s3222 + $0x54] sm:$0xff]
        %v3238 = vld [vmem:[%s3222 + $0x5c] sm:$0xf]
        %v3239 = vld [vmem:[%s3222 + $0x60] sm:$0xff]
        %v3240 = vld [vmem:[%s3222 + $0x68] sm:$0xf]
        %v3241 = vld [vmem:[%s3222 + $0x6c] sm:$0xff]
        %v3242 = vld [vmem:[%s3222 + $0x74] sm:$0xf]
        %v3243 = vld [vmem:[%s3222 + $0x78] sm:$0xff]
        %v3244 = vld [vmem:[%s3222 + $0x80] sm:$0xf]
        %v3245 = vld [vmem:[%s3222 + $0x84] sm:$0xff]
        %v3246 = vld [vmem:[%s3222 + $0x8c] sm:$0xf]
        %v3247 = vld [vmem:[%s3222 + $0x90] sm:$0xff]
        %v3248 = vld [vmem:[%s3222 + $0x98] sm:$0xf]
        %v3249 = vld [vmem:[%s3222 + $0x9c] sm:$0xff]
        %v3250 = vld [vmem:[%s3222 + $0xa4] sm:$0xf]
        %v3251 = vld [vmem:[%s3222 + $0xa8] sm:$0xff]
        %v3252 = vld [vmem:[%s3222 + $0xb0] sm:$0xf]
        %v3253 = vld [vmem:[%s3222 + $0xb4] sm:$0xff]
        %v3254 = vld [vmem:[%s3222 + $0xbc] sm:$0xf]
        %3255 = vmatprep.subr.bf16.mxu0 0
        %3256 = vmatpush1.bf16.xpose.msra.mxu0 0
        %3257 = vmatprep.subr.bf16.mxu0 0
        %3258 = vmatpush1.bf16.xpose.msra.mxu0 0
        %3259 = vmatprep.subr.bf16.mxu0 0
        %3260 = vmatpush1.bf16.xpose.msra.mxu0 0
        %3261 = vmatprep.subr.bf16.mxu0 0
        %3262 = vmatpush1.bf16.xpose.msra.mxu0 0
        %3263 = vmatprep.subr.bf16.mxu0 0
        %3264 = vmatpush1.bf16.xpose.msra.mxu0 0
        %3265 = vmatprep.subr.bf16.mxu0 0
        %3266 = vmatpush1.bf16.xpose.msra.mxu0 0
        %3267 = vmatprep.subr.bf16.mxu0 0
        %3268 = vmatpush1.bf16.xpose.msra.mxu0 0
        %3269 = vmatprep.subr.bf16.mxu0 0
        %3270 = vmatpush1.bf16.xpose.msra.mxu0 %v3112
        %3271 = vmatprep.subr.bf16.mxu0 0
        %3272 = vmatpush2.bf16.xpose.msra.mxu0 0
        %3273 = vmatprep.subr.bf16.mxu0 0
        %3274 = vmatpush2.bf16.xpose.msra.mxu0 0
        %3275 = vmatprep.subr.bf16.mxu0 0
        %3276 = vmatpush2.bf16.xpose.msra.mxu0 0
        %3277 = vmatprep.subr.bf16.mxu0 0
        %3278 = vmatpush2.bf16.xpose.msra.mxu0 0
        %3279 = vmatprep.subr.bf16.mxu0 0
        %3280 = vmatpush2.bf16.xpose.msra.mxu0 0
        %3281 = vmatprep.subr.bf16.mxu0 0
        %3282 = vmatpush2.bf16.xpose.msra.mxu0 0
        %3283 = vmatprep.subr.bf16.mxu0 0
        %3284 = vmatpush2.bf16.xpose.msra.mxu0 0
        %3285 = vmatprep.subr.bf16.mxu0 0
        %3286 = vmatpush2.bf16.xpose.msra.mxu0 0
        %3287 = vmatprep.mubr.bf16.mxu0 0
        %3288 = vmatmul.mubr.bf16.gmra.mxu0 %v3108
        %v3289 = vpop.f32.mrf.mxu0
        %v3290 = vadd.f32 %v815, %v3289
        %v3291 = vpop.f32.mrf.mxu0
        %v3292 = vpop.f32.mrf.mxu0
        %v3293 = vpop.f32.mrf.mxu0
        %3294 = vdwg.mxu0
        %v3295 = vsel %vm3159, %v3290, -inf
        %3296 = vmax.xlane.f32.xlu0 %v3295
        %v3297 = vpop.xlane.xlu0 %3296
        %v3298 = vsub.f32 %v3290, %v3297
        %v3299 = vmul.f32 %v3298, 1.442695
        %v3300 = vpow.pop %v3299
        %v3301 = vsel %vm3159, %v3300, 0.0
        %3302 = vadd.xlane.f32.xlu0 %v3301
        %v3303 = vpop.xlane.xlu0 %3302
        %v3304 = vrcp.pop %v3303
        %v3305 = vmul.f32 %v3300, %v3304
        %v3306 = vpack.c.bf16 %v3305, %v3305
        %v3308 = vsel %vm3159, %v3306, 0
        %v3311 = vsel %vm3175, %v3116, 0
        %3313 = vmatprep.subr.bf16.mxu0 0
        %3314 = vmatpush1.bf16.msra.mxu0 0
        %3315 = vmatprep.subr.bf16.mxu0 0
        %3316 = vmatpush1.bf16.msra.mxu0 0
        %3317 = vmatprep.subr.bf16.mxu0 0
        %3318 = vmatpush1.bf16.msra.mxu0 0
        %3319 = vmatprep.subr.bf16.mxu0 0
        %3320 = vmatpush1.bf16.msra.mxu0 0
        %3321 = vmatprep.subr.bf16.mxu0 0
        %3322 = vmatpush1.bf16.msra.mxu0 0
        %3323 = vmatprep.subr.bf16.mxu0 0
        %3324 = vmatpush1.bf16.msra.mxu0 0
        %3325 = vmatprep.subr.bf16.mxu0 0
        %3326 = vmatpush1.bf16.msra.mxu0 0
        %3327 = vmatprep.subr.bf16.mxu0 0
        %3328 = vmatpush1.bf16.msra.mxu0 %v3311
        %3329 = vmatprep.subr.bf16.mxu0 0
        %3330 = vmatpush2.bf16.msra.mxu0 0
        %3331 = vmatprep.subr.bf16.mxu0 0
        %3332 = vmatpush2.bf16.msra.mxu0 0
        %3333 = vmatprep.subr.bf16.mxu0 0
        %3334 = vmatpush2.bf16.msra.mxu0 0
        %3335 = vmatprep.subr.bf16.mxu0 0
        %3336 = vmatpush2.bf16.msra.mxu0 0
        %3337 = vmatprep.subr.bf16.mxu0 0
        %3338 = vmatpush2.bf16.msra.mxu0 0
        %3339 = vmatprep.subr.bf16.mxu0 0
        %3340 = vmatpush2.bf16.msra.mxu0 0
        %3341 = vmatprep.subr.bf16.mxu0 0
        %3342 = vmatpush2.bf16.msra.mxu0 0
        %3343 = vmatprep.subr.bf16.mxu0 0
        %3344 = vmatpush2.bf16.msra.mxu0 0
        %3345 = vmatprep.mubr.bf16.mxu0 0
        %3346 = vmatmul.mubr.bf16.gmra.mxu0 %v3308
        %v3347 = vpop.f32.mrf.mxu0
        %v3348 = vadd.f32 0.0, %v3347
        %v3349 = vpop.f32.mrf.mxu0
        %v3350 = vpop.f32.mrf.mxu0
        %v3351 = vpop.f32.mrf.mxu0
        %3352 = vdwg.mxu0
        %v3353 = vpack.c.bf16 %v3348, %v3348
        %v3354 = vld [vmem:[%s3222 + $0xc0] sm:$0xff]
        %v3355 = vld [vmem:[%s3222 + $0xc8] sm:$0xf]
        %v3356 = vld [vmem:[%s3222 + $0xcc] sm:$0xff]
        %v3357 = vld [vmem:[%s3222 + $0xd4] sm:$0xf]
        %v3358 = vld [vmem:[%s3222 + $0xd8] sm:$0xff]
        %v3359 = vld [vmem:[%s3222 + $0xe0] sm:$0xf]
        %v3360 = vld [vmem:[%s3222 + $0xe4] sm:$0xff]
        %v3361 = vld [vmem:[%s3222 + $0xec] sm:$0xf]
        %v3362 = vld [vmem:[%s3222 + $0xf0] sm:$0xff]
        %v3363 = vld [vmem:[%s3222 + $0xf8] sm:$0xf]
        %v3364 = vld [vmem:[%s3222 + $0xfc] sm:$0xff]
        %v3365 = vld [vmem:[%s3222 + $0x104] sm:$0xf]
        %v3366 = vld [vmem:[%s3222 + $0x108] sm:$0xff]
        %v3367 = vld [vmem:[%s3222 + $0x110] sm:$0xf]
        %v3368 = vld [vmem:[%s3222 + $0x114] sm:$0xff]
        %v3369 = vld [vmem:[%s3222 + $0x11c] sm:$0xf]
        %v3370 = vld [vmem:[%s3222 + $0x120] sm:$0xff]
        %v3371 = vld [vmem:[%s3222 + $0x128] sm:$0xf]
        %v3372 = vld [vmem:[%s3222 + $0x12c] sm:$0xff]
        %v3373 = vld [vmem:[%s3222 + $0x134] sm:$0xf]
        %v3374 = vld [vmem:[%s3222 + $0x138] sm:$0xff]
        %v3375 = vld [vmem:[%s3222 + $0x140] sm:$0xf]
        %v3376 = vld [vmem:[%s3222 + $0x144] sm:$0xff]
        %v3377 = vld [vmem:[%s3222 + $0x14c] sm:$0xf]
        %v3378 = vld [vmem:[%s3222 + $0x150] sm:$0xff]
        %v3379 = vld [vmem:[%s3222 + $0x158] sm:$0xf]
        %v3380 = vld [vmem:[%s3222 + $0x15c] sm:$0xff]
        %v3381 = vld [vmem:[%s3222 + $0x164] sm:$0xf]
        %v3382 = vld [vmem:[%s3222 + $0x168] sm:$0xff]
        %v3383 = vld [vmem:[%s3222 + $0x170] sm:$0xf]
        %v3384 = vld [vmem:[%s3222 + $0x174] sm:$0xff]
        %v3385 = vld [vmem:[%s3222 + $0x17c] sm:$0xf]
        %v3418 = vunpack.c.l.b16 %v3354
        %v3419 = vunpack.c.h.b16 %v3354
        %v3420 = vunpack.c.l.b16 %v3355
        %v3421 = vunpack.c.l.b16 %v3356
        %v3422 = vunpack.c.h.b16 %v3356
        %v3423 = vunpack.c.l.b16 %v3357
        %v3424 = vunpack.c.l.b16 %v3358
        %v3425 = vunpack.c.h.b16 %v3358
        %v3426 = vunpack.c.l.b16 %v3359
        %v3427 = vunpack.c.l.b16 %v3360
        %v3428 = vunpack.c.h.b16 %v3360
        %v3429 = vunpack.c.l.b16 %v3361
        %v3430 = vunpack.c.l.b16 %v3362
        %v3431 = vunpack.c.h.b16 %v3362
        %v3432 = vunpack.c.l.b16 %v3363
        %v3433 = vunpack.c.l.b16 %v3364
        %v3434 = vunpack.c.h.b16 %v3364
        %v3435 = vunpack.c.l.b16 %v3365
        %v3436 = vunpack.c.l.b16 %v3366
        %v3437 = vunpack.c.h.b16 %v3366
        %v3438 = vunpack.c.l.b16 %v3367
        %v3439 = vunpack.c.l.b16 %v3368
        %v3440 = vunpack.c.h.b16 %v3368
        %v3441 = vunpack.c.l.b16 %v3369
        %v3442 = vunpack.c.l.b16 %v3370
        %v3443 = vunpack.c.h.b16 %v3370
        %v3444 = vunpack.c.l.b16 %v3371
        %v3445 = vunpack.c.l.b16 %v3372
        %v3446 = vunpack.c.h.b16 %v3372
        %v3447 = vunpack.c.l.b16 %v3373
        %v3448 = vunpack.c.l.b16 %v3374
        %v3449 = vunpack.c.h.b16 %v3374
        %v3450 = vunpack.c.l.b16 %v3375
        %v3451 = vunpack.c.l.b16 %v3376
        %v3452 = vunpack.c.h.b16 %v3376
        %v3453 = vunpack.c.l.b16 %v3377
        %v3454 = vunpack.c.l.b16 %v3378
        %v3455 = vunpack.c.h.b16 %v3378
        %v3456 = vunpack.c.l.b16 %v3379
        %v3457 = vunpack.c.l.b16 %v3380
        %v3458 = vunpack.c.h.b16 %v3380
        %v3459 = vunpack.c.l.b16 %v3381
        %v3460 = vunpack.c.l.b16 %v3382
        %v3461 = vunpack.c.h.b16 %v3382
        %v3462 = vunpack.c.l.b16 %v3383
        %v3463 = vunpack.c.l.b16 %v3384
        %v3464 = vunpack.c.h.b16 %v3384
        %v3465 = vunpack.c.l.b16 %v3385
        %v3466 = vpack.c.b16 %v3421, %v3418
        %v3467 = vpack.c.b16 %v3422, %v3419
        %v3468 = vpack.c.b16 %v3423, %v3420
        %v3469 = vpack.c.b16 %v3427, %v3424
        %v3470 = vpack.c.b16 %v3428, %v3425
        %v3471 = vpack.c.b16 %v3429, %v3426
        %v3472 = vpack.c.b16 %v3433, %v3430
        %v3473 = vpack.c.b16 %v3434, %v3431
        %v3474 = vpack.c.b16 %v3435, %v3432
        %v3475 = vpack.c.b16 %v3439, %v3436
        %v3476 = vpack.c.b16 %v3440, %v3437
        %v3477 = vpack.c.b16 %v3441, %v3438
        %v3478 = vpack.c.b16 %v3445, %v3442
        %v3479 = vpack.c.b16 %v3446, %v3443
        %v3480 = vpack.c.b16 %v3447, %v3444
        %v3481 = vpack.c.b16 %v3451, %v3448
        %v3482 = vpack.c.b16 %v3452, %v3449
        %v3483 = vpack.c.b16 %v3453, %v3450
        %v3484 = vpack.c.b16 %v3457, %v3454
        %v3485 = vpack.c.b16 %v3458, %v3455
        %v3486 = vpack.c.b16 %v3459, %v3456
        %v3487 = vpack.c.b16 %v3463, %v3460
        %v3488 = vpack.c.b16 %v3464, %v3461
        %v3489 = vpack.c.b16 %v3465, %v3462
        %3514 = vmatprep.subr.bf16.mxu0 %v3488
        %3515 = vmatpush1.bf16.msra.mxu0 %v3487
        %3516 = vmatprep.subr.bf16.mxu0 %v3485
        %3517 = vmatpush1.bf16.msra.mxu0 %v3484
        %3518 = vmatprep.subr.bf16.mxu0 %v3482
        %3519 = vmatpush1.bf16.msra.mxu0 %v3481
        %3520 = vmatprep.subr.bf16.mxu0 %v3479
        %3521 = vmatpush1.bf16.msra.mxu0 %v3478
        %3522 = vmatprep.subr.bf16.mxu0 %v3476
        %3523 = vmatpush1.bf16.msra.mxu0 %v3475
        %3524 = vmatprep.subr.bf16.mxu0 %v3473
        %3525 = vmatpush1.bf16.msra.mxu0 %v3472
        %3526 = vmatprep.subr.bf16.mxu0 %v3470
        %3527 = vmatpush1.bf16.msra.mxu0 %v3469
        %3528 = vmatprep.subr.bf16.mxu0 %v3467
        %3529 = vmatpush1.bf16.msra.mxu0 %v3466
        %3530 = vmatprep.subr.bf16.mxu0 0
        %3531 = vmatpush2.bf16.msra.mxu0 0
        %3532 = vmatprep.subr.bf16.mxu0 0
        %3533 = vmatpush2.bf16.msra.mxu0 0
        %3534 = vmatprep.subr.bf16.mxu0 0
        %3535 = vmatpush2.bf16.msra.mxu0 0
        %3536 = vmatprep.subr.bf16.mxu0 0
        %3537 = vmatpush2.bf16.msra.mxu0 0
        %3538 = vmatprep.subr.bf16.mxu0 0
        %3539 = vmatpush2.bf16.msra.mxu0 0
        %3540 = vmatprep.subr.bf16.mxu0 0
        %3541 = vmatpush2.bf16.msra.mxu0 0
        %3542 = vmatprep.subr.bf16.mxu0 0
        %3543 = vmatpush2.bf16.msra.mxu0 0
        %3544 = vmatprep.subr.bf16.mxu0 0
        %3545 = vmatpush2.bf16.msra.mxu0 0
        %3546 = vmatprep.mubr.bf16.mxu0 0
        %3547 = vmatmul.mubr.bf16.gmra.mxu0 %v3353
        %v3548 = vpop.f32.mrf.mxu0
        %v3549 = vadd.f32 0.0, %v3548
        %v3550 = vpop.f32.mrf.mxu0
        %v3551 = vadd.f32 0.0, %v3550
        %v3552 = vpop.f32.mrf.mxu0
        %v3553 = vpop.f32.mrf.mxu0
        %3554 = vdwg.mxu0
        %3555 = vmatprep.subr.bf16.mxu0 0
        %3556 = vmatpush1.bf16.msra.mxu0 %v3489
        %3557 = vmatprep.subr.bf16.mxu0 0
        %3558 = vmatpush1.bf16.msra.mxu0 %v3486
        %3559 = vmatprep.subr.bf16.mxu0 0
        %3560 = vmatpush1.bf16.msra.mxu0 %v3483
        %3561 = vmatprep.subr.bf16.mxu0 0
        %3562 = vmatpush1.bf16.msra.mxu0 %v3480
        %3563 = vmatprep.subr.bf16.mxu0 0
        %3564 = vmatpush1.bf16.msra.mxu0 %v3477
        %3565 = vmatprep.subr.bf16.mxu0 0
        %3566 = vmatpush1.bf16.msra.mxu0 %v3474
        %3567 = vmatprep.subr.bf16.mxu0 0
        %3568 = vmatpush1.bf16.msra.mxu0 %v3471
        %3569 = vmatprep.subr.bf16.mxu0 0
        %3570 = vmatpush1.bf16.msra.mxu0 %v3468
        %3571 = vmatprep.subr.bf16.mxu0 0
        %3572 = vmatpush2.bf16.msra.mxu0 0
        %3573 = vmatprep.subr.bf16.mxu0 0
        %3574 = vmatpush2.bf16.msra.mxu0 0
        %3575 = vmatprep.subr.bf16.mxu0 0
        %3576 = vmatpush2.bf16.msra.mxu0 0
        %3577 = vmatprep.subr.bf16.mxu0 0
        %3578 = vmatpush2.bf16.msra.mxu0 0
        %3579 = vmatprep.subr.bf16.mxu0 0
        %3580 = vmatpush2.bf16.msra.mxu0 0
        %3581 = vmatprep.subr.bf16.mxu0 0
        %3582 = vmatpush2.bf16.msra.mxu0 0
        %3583 = vmatprep.subr.bf16.mxu0 0
        %3584 = vmatpush2.bf16.msra.mxu0 0
        %3585 = vmatprep.subr.bf16.mxu0 0
        %3586 = vmatpush2.bf16.msra.mxu0 0
        %3587 = vmatprep.mubr.bf16.mxu0 0
        %3588 = vmatmul.mubr.bf16.gmra.mxu0 %v3353
        %v3589 = vpop.f32.mrf.mxu0
        %v3590 = vadd.f32 0.0, %v3589
        %v3591 = vpop.f32.mrf.mxu0
        %v3592 = vpop.f32.mrf.mxu0
        %v3593 = vpop.f32.mrf.mxu0
        %3594 = vdwg.mxu0
        %v3627 = vunpack.c.l.b16 %v3223
        %v3628 = vunpack.c.h.b16 %v3223
        %v3629 = vunpack.c.l.b16 %v3224
        %v3630 = vunpack.c.l.b16 %v3225
        %v3631 = vunpack.c.h.b16 %v3225
        %v3632 = vunpack.c.l.b16 %v3226
        %v3633 = vunpack.c.l.b16 %v3227
        %v3634 = vunpack.c.h.b16 %v3227
        %v3635 = vunpack.c.l.b16 %v3228
        %v3636 = vunpack.c.l.b16 %v3229
        %v3637 = vunpack.c.h.b16 %v3229
        %v3638 = vunpack.c.l.b16 %v3230
        %v3639 = vunpack.c.l.b16 %v3231
        %v3640 = vunpack.c.h.b16 %v3231
        %v3641 = vunpack.c.l.b16 %v3232
        %v3642 = vunpack.c.l.b16 %v3233
        %v3643 = vunpack.c.h.b16 %v3233
        %v3644 = vunpack.c.l.b16 %v3234
        %v3645 = vunpack.c.l.b16 %v3235
        %v3646 = vunpack.c.h.b16 %v3235
        %v3647 = vunpack.c.l.b16 %v3236
        %v3648 = vunpack.c.l.b16 %v3237
        %v3649 = vunpack.c.h.b16 %v3237
        %v3650 = vunpack.c.l.b16 %v3238
        %v3651 = vunpack.c.l.b16 %v3239
        %v3652 = vunpack.c.h.b16 %v3239
        %v3653 = vunpack.c.l.b16 %v3240
        %v3654 = vunpack.c.l.b16 %v3241
        %v3655 = vunpack.c.h.b16 %v3241
        %v3656 = vunpack.c.l.b16 %v3242
        %v3657 = vunpack.c.l.b16 %v3243
        %v3658 = vunpack.c.h.b16 %v3243
        %v3659 = vunpack.c.l.b16 %v3244
        %v3660 = vunpack.c.l.b16 %v3245
        %v3661 = vunpack.c.h.b16 %v3245
        %v3662 = vunpack.c.l.b16 %v3246
        %v3663 = vunpack.c.l.b16 %v3247
        %v3664 = vunpack.c.h.b16 %v3247
        %v3665 = vunpack.c.l.b16 %v3248
        %v3666 = vunpack.c.l.b16 %v3249
        %v3667 = vunpack.c.h.b16 %v3249
        %v3668 = vunpack.c.l.b16 %v3250
        %v3669 = vunpack.c.l.b16 %v3251
        %v3670 = vunpack.c.h.b16 %v3251
        %v3671 = vunpack.c.l.b16 %v3252
        %v3672 = vunpack.c.l.b16 %v3253
        %v3673 = vunpack.c.h.b16 %v3253
        %v3674 = vunpack.c.l.b16 %v3254
        %v3675 = vpack.c.b16 %v3630, %v3627
        %v3676 = vpack.c.b16 %v3631, %v3628
        %v3677 = vpack.c.b16 %v3632, %v3629
        %v3678 = vpack.c.b16 %v3636, %v3633
        %v3679 = vpack.c.b16 %v3637, %v3634
        %v3680 = vpack.c.b16 %v3638, %v3635
        %v3681 = vpack.c.b16 %v3642, %v3639
        %v3682 = vpack.c.b16 %v3643, %v3640
        %v3683 = vpack.c.b16 %v3644, %v3641
        %v3684 = vpack.c.b16 %v3648, %v3645
        %v3685 = vpack.c.b16 %v3649, %v3646
        %v3686 = vpack.c.b16 %v3650, %v3647
        %v3687 = vpack.c.b16 %v3654, %v3651
        %v3688 = vpack.c.b16 %v3655, %v3652
        %v3689 = vpack.c.b16 %v3656, %v3653
        %v3690 = vpack.c.b16 %v3660, %v3657
        %v3691 = vpack.c.b16 %v3661, %v3658
        %v3692 = vpack.c.b16 %v3662, %v3659
        %v3693 = vpack.c.b16 %v3666, %v3663
        %v3694 = vpack.c.b16 %v3667, %v3664
        %v3695 = vpack.c.b16 %v3668, %v3665
        %v3696 = vpack.c.b16 %v3672, %v3669
        %v3697 = vpack.c.b16 %v3673, %v3670
        %v3698 = vpack.c.b16 %v3674, %v3671
        %3723 = vmatprep.subr.bf16.mxu0 %v3697
        %3724 = vmatpush1.bf16.msra.mxu0 %v3696
        %3725 = vmatprep.subr.bf16.mxu0 %v3694
        %3726 = vmatpush1.bf16.msra.mxu0 %v3693
        %3727 = vmatprep.subr.bf16.mxu0 %v3691
        %3728 = vmatpush1.bf16.msra.mxu0 %v3690
        %3729 = vmatprep.subr.bf16.mxu0 %v3688
        %3730 = vmatpush1.bf16.msra.mxu0 %v3687
        %3731 = vmatprep.subr.bf16.mxu0 %v3685
        %3732 = vmatpush1.bf16.msra.mxu0 %v3684
        %3733 = vmatprep.subr.bf16.mxu0 %v3682
        %3734 = vmatpush1.bf16.msra.mxu0 %v3681
        %3735 = vmatprep.subr.bf16.mxu0 %v3679
        %3736 = vmatpush1.bf16.msra.mxu0 %v3678
        %3737 = vmatprep.subr.bf16.mxu0 %v3676
        %3738 = vmatpush1.bf16.msra.mxu0 %v3675
        %3739 = vmatprep.subr.bf16.mxu0 0
        %3740 = vmatpush2.bf16.msra.mxu0 0
        %3741 = vmatprep.subr.bf16.mxu0 0
        %3742 = vmatpush2.bf16.msra.mxu0 0
        %3743 = vmatprep.subr.bf16.mxu0 0
        %3744 = vmatpush2.bf16.msra.mxu0 0
        %3745 = vmatprep.subr.bf16.mxu0 0
        %3746 = vmatpush2.bf16.msra.mxu0 0
        %3747 = vmatprep.subr.bf16.mxu0 0
        %3748 = vmatpush2.bf16.msra.mxu0 0
        %3749 = vmatprep.subr.bf16.mxu0 0
        %3750 = vmatpush2.bf16.msra.mxu0 0
        %3751 = vmatprep.subr.bf16.mxu0 0
        %3752 = vmatpush2.bf16.msra.mxu0 0
        %3753 = vmatprep.subr.bf16.mxu0 0
        %3754 = vmatpush2.bf16.msra.mxu0 0
        %3755 = vmatprep.mubr.bf16.mxu0 0
        %3756 = vmatmul.mubr.bf16.gmra.mxu0 %v3219
        %v3757 = vpop.f32.mrf.mxu0
        %v3758 = vadd.f32 %v3549, %v3757
        %v3759 = vpop.f32.mrf.mxu0
        %v3760 = vadd.f32 %v3551, %v3759
        %v3761 = vpop.f32.mrf.mxu0
        %v3762 = vpop.f32.mrf.mxu0
        %3763 = vdwg.mxu0
        %3764 = vmatprep.subr.bf16.mxu0 0
        %3765 = vmatpush1.bf16.msra.mxu0 %v3698
        %3766 = vmatprep.subr.bf16.mxu0 0
        %3767 = vmatpush1.bf16.msra.mxu0 %v3695
        %3768 = vmatprep.subr.bf16.mxu0 0
        %3769 = vmatpush1.bf16.msra.mxu0 %v3692
        %3770 = vmatprep.subr.bf16.mxu0 0
        %3771 = vmatpush1.bf16.msra.mxu0 %v3689
        %3772 = vmatprep.subr.bf16.mxu0 0
        %3773 = vmatpush1.bf16.msra.mxu0 %v3686
        %3774 = vmatprep.subr.bf16.mxu0 0
        %3775 = vmatpush1.bf16.msra.mxu0 %v3683
        %3776 = vmatprep.subr.bf16.mxu0 0
        %3777 = vmatpush1.bf16.msra.mxu0 %v3680
        %3778 = vmatprep.subr.bf16.mxu0 0
        %3779 = vmatpush1.bf16.msra.mxu0 %v3677
        %3780 = vmatprep.subr.bf16.mxu0 0
        %3781 = vmatpush2.bf16.msra.mxu0 0
        %3782 = vmatprep.subr.bf16.mxu0 0
        %3783 = vmatpush2.bf16.msra.mxu0 0
        %3784 = vmatprep.subr.bf16.mxu0 0
        %3785 = vmatpush2.bf16.msra.mxu0 0
        %3786 = vmatprep.subr.bf16.mxu0 0
        %3787 = vmatpush2.bf16.msra.mxu0 0
        %3788 = vmatprep.subr.bf16.mxu0 0
        %3789 = vmatpush2.bf16.msra.mxu0 0
        %3790 = vmatprep.subr.bf16.mxu0 0
        %3791 = vmatpush2.bf16.msra.mxu0 0
        %3792 = vmatprep.subr.bf16.mxu0 0
        %3793 = vmatpush2.bf16.msra.mxu0 0
        %3794 = vmatprep.subr.bf16.mxu0 0
        %3795 = vmatpush2.bf16.msra.mxu0 0
        %3796 = vmatprep.mubr.bf16.mxu0 0
        %3797 = vmatmul.mubr.bf16.gmra.mxu0 %v3219
        %v3798 = vpop.f32.mrf.mxu0
        %v3799 = vadd.f32 %v3590, %v3798
        %v3800 = vpop.f32.mrf.mxu0
        %v3801 = vpop.f32.mrf.mxu0
        %v3802 = vpop.f32.mrf.mxu0
        %3803 = vdwg.mxu0
        %3804 = vmatprep.subr.bf16.mxu0 0
        %3805 = vmatpush1.bf16.xpose.msra.mxu0 0
        %3806 = vmatprep.subr.bf16.mxu0 0
        %3807 = vmatpush1.bf16.xpose.msra.mxu0 0
        %3808 = vmatprep.subr.bf16.mxu0 0
        %3809 = vmatpush1.bf16.xpose.msra.mxu0 0
        %3810 = vmatprep.subr.bf16.mxu0 0
        %3811 = vmatpush1.bf16.xpose.msra.mxu0 0
        %3812 = vmatprep.subr.bf16.mxu0 0
        %3813 = vmatpush1.bf16.xpose.msra.mxu0 0
        %3814 = vmatprep.subr.bf16.mxu0 0
        %3815 = vmatpush1.bf16.xpose.msra.mxu0 0
        %3816 = vmatprep.subr.bf16.mxu0 0
        %3817 = vmatpush1.bf16.xpose.msra.mxu0 0
        %3818 = vmatprep.subr.bf16.mxu0 0
        %3819 = vmatpush1.bf16.xpose.msra.mxu0 %v3113
        %3820 = vmatprep.subr.bf16.mxu0 0
        %3821 = vmatpush2.bf16.xpose.msra.mxu0 0
        %3822 = vmatprep.subr.bf16.mxu0 0
        %3823 = vmatpush2.bf16.xpose.msra.mxu0 0
        %3824 = vmatprep.subr.bf16.mxu0 0
        %3825 = vmatpush2.bf16.xpose.msra.mxu0 0
        %3826 = vmatprep.subr.bf16.mxu0 0
        %3827 = vmatpush2.bf16.xpose.msra.mxu0 0
        %3828 = vmatprep.subr.bf16.mxu0 0
        %3829 = vmatpush2.bf16.xpose.msra.mxu0 0
        %3830 = vmatprep.subr.bf16.mxu0 0
        %3831 = vmatpush2.bf16.xpose.msra.mxu0 0
        %3832 = vmatprep.subr.bf16.mxu0 0
        %3833 = vmatpush2.bf16.xpose.msra.mxu0 0
        %3834 = vmatprep.subr.bf16.mxu0 0
        %3835 = vmatpush2.bf16.xpose.msra.mxu0 0
        %3836 = vmatprep.mubr.bf16.mxu0 0
        %3837 = vmatmul.mubr.bf16.gmra.mxu0 %v3109
        %v3838 = vpop.f32.mrf.mxu0
        %v3839 = vadd.f32 %v815, %v3838
        %v3840 = vpop.f32.mrf.mxu0
        %v3841 = vpop.f32.mrf.mxu0
        %v3842 = vpop.f32.mrf.mxu0
        %3843 = vdwg.mxu0
        %v3844 = vsel %vm3159, %v3839, -inf
        %3845 = vmax.xlane.f32.xlu0 %v3844
        %v3846 = vpop.xlane.xlu0 %3845
        %v3847 = vsub.f32 %v3839, %v3846
        %v3848 = vmul.f32 %v3847, 1.442695
        %v3849 = vpow.pop %v3848
        %v3850 = vsel %vm3159, %v3849, 0.0
        %3851 = vadd.xlane.f32.xlu0 %v3850
        %v3852 = vpop.xlane.xlu0 %3851
        %v3853 = vrcp.pop %v3852
        %v3854 = vmul.f32 %v3849, %v3853
        %v3855 = vpack.c.bf16 %v3854, %v3854
        %v3857 = vsel %vm3159, %v3855, 0
        %v3860 = vsel %vm3175, %v3117, 0
        %3862 = vmatprep.subr.bf16.mxu0 0
        %3863 = vmatpush1.bf16.msra.mxu0 0
        %3864 = vmatprep.subr.bf16.mxu0 0
        %3865 = vmatpush1.bf16.msra.mxu0 0
        %3866 = vmatprep.subr.bf16.mxu0 0
        %3867 = vmatpush1.bf16.msra.mxu0 0
        %3868 = vmatprep.subr.bf16.mxu0 0
        %3869 = vmatpush1.bf16.msra.mxu0 0
        %3870 = vmatprep.subr.bf16.mxu0 0
        %3871 = vmatpush1.bf16.msra.mxu0 0
        %3872 = vmatprep.subr.bf16.mxu0 0
        %3873 = vmatpush1.bf16.msra.mxu0 0
        %3874 = vmatprep.subr.bf16.mxu0 0
        %3875 = vmatpush1.bf16.msra.mxu0 0
        %3876 = vmatprep.subr.bf16.mxu0 0
        %3877 = vmatpush1.bf16.msra.mxu0 %v3860
        %3878 = vmatprep.subr.bf16.mxu0 0
        %3879 = vmatpush2.bf16.msra.mxu0 0
        %3880 = vmatprep.subr.bf16.mxu0 0
        %3881 = vmatpush2.bf16.msra.mxu0 0
        %3882 = vmatprep.subr.bf16.mxu0 0
        %3883 = vmatpush2.bf16.msra.mxu0 0
        %3884 = vmatprep.subr.bf16.mxu0 0
        %3885 = vmatpush2.bf16.msra.mxu0 0
        %3886 = vmatprep.subr.bf16.mxu0 0
        %3887 = vmatpush2.bf16.msra.mxu0 0
        %3888 = vmatprep.subr.bf16.mxu0 0
        %3889 = vmatpush2.bf16.msra.mxu0 0
        %3890 = vmatprep.subr.bf16.mxu0 0
        %3891 = vmatpush2.bf16.msra.mxu0 0
        %3892 = vmatprep.subr.bf16.mxu0 0
        %3893 = vmatpush2.bf16.msra.mxu0 0
        %3894 = vmatprep.mubr.bf16.mxu0 0
        %3895 = vmatmul.mubr.bf16.gmra.mxu0 %v3857
        %v3896 = vpop.f32.mrf.mxu0
        %v3897 = vadd.f32 0.0, %v3896
        %v3898 = vpop.f32.mrf.mxu0
        %v3899 = vpop.f32.mrf.mxu0
        %v3900 = vpop.f32.mrf.mxu0
        %3901 = vdwg.mxu0
        %v3902 = vpack.c.bf16 %v3897, %v3897
        %v3903 = vld [vmem:[%s3222 + $0x180] sm:$0xff]
        %v3904 = vld [vmem:[%s3222 + $0x188] sm:$0xf]
        %v3905 = vld [vmem:[%s3222 + $0x18c] sm:$0xff]
        %v3906 = vld [vmem:[%s3222 + $0x194] sm:$0xf]
        %v3907 = vld [vmem:[%s3222 + $0x198] sm:$0xff]
        %v3908 = vld [vmem:[%s3222 + $0x1a0] sm:$0xf]
        %v3909 = vld [vmem:[%s3222 + $0x1a4] sm:$0xff]
        %v3910 = vld [vmem:[%s3222 + $0x1ac] sm:$0xf]
        %v3911 = vld [vmem:[%s3222 + $0x1b0] sm:$0xff]
        %v3912 = vld [vmem:[%s3222 + $0x1b8] sm:$0xf]
        %v3913 = vld [vmem:[%s3222 + $0x1bc] sm:$0xff]
        %v3914 = vld [vmem:[%s3222 + $0x1c4] sm:$0xf]
        %v3915 = vld [vmem:[%s3222 + $0x1c8] sm:$0xff]
        %v3916 = vld [vmem:[%s3222 + $0x1d0] sm:$0xf]
        %v3917 = vld [vmem:[%s3222 + $0x1d4] sm:$0xff]
        %v3918 = vld [vmem:[%s3222 + $0x1dc] sm:$0xf]
        %v3919 = vld [vmem:[%s3222 + $0x1e0] sm:$0xff]
        %v3920 = vld [vmem:[%s3222 + $0x1e8] sm:$0xf]
        %v3921 = vld [vmem:[%s3222 + $0x1ec] sm:$0xff]
        %v3922 = vld [vmem:[%s3222 + $0x1f4] sm:$0xf]
        %v3923 = vld [vmem:[%s3222 + $0x1f8] sm:$0xff]
        %v3924 = vld [vmem:[%s3222 + $0x200] sm:$0xf]
        %v3925 = vld [vmem:[%s3222 + $0x204] sm:$0xff]
        %v3926 = vld [vmem:[%s3222 + $0x20c] sm:$0xf]
        %v3927 = vld [vmem:[%s3222 + $0x210] sm:$0xff]
        %v3928 = vld [vmem:[%s3222 + $0x218] sm:$0xf]
        %v3929 = vld [vmem:[%s3222 + $0x21c] sm:$0xff]
        %v3930 = vld [vmem:[%s3222 + $0x224] sm:$0xf]
        %v3931 = vld [vmem:[%s3222 + $0x228] sm:$0xff]
        %v3932 = vld [vmem:[%s3222 + $0x230] sm:$0xf]
        %v3933 = vld [vmem:[%s3222 + $0x234] sm:$0xff]
        %v3934 = vld [vmem:[%s3222 + $0x23c] sm:$0xf]
        %v3967 = vunpack.c.l.b16 %v3903
        %v3968 = vunpack.c.h.b16 %v3903
        %v3969 = vunpack.c.l.b16 %v3904
        %v3970 = vunpack.c.l.b16 %v3905
        %v3971 = vunpack.c.h.b16 %v3905
        %v3972 = vunpack.c.l.b16 %v3906
        %v3973 = vunpack.c.l.b16 %v3907
        %v3974 = vunpack.c.h.b16 %v3907
        %v3975 = vunpack.c.l.b16 %v3908
        %v3976 = vunpack.c.l.b16 %v3909
        %v3977 = vunpack.c.h.b16 %v3909
        %v3978 = vunpack.c.l.b16 %v3910
        %v3979 = vunpack.c.l.b16 %v3911
        %v3980 = vunpack.c.h.b16 %v3911
        %v3981 = vunpack.c.l.b16 %v3912
        %v3982 = vunpack.c.l.b16 %v3913
        %v3983 = vunpack.c.h.b16 %v3913
        %v3984 = vunpack.c.l.b16 %v3914
        %v3985 = vunpack.c.l.b16 %v3915
        %v3986 = vunpack.c.h.b16 %v3915
        %v3987 = vunpack.c.l.b16 %v3916
        %v3988 = vunpack.c.l.b16 %v3917
        %v3989 = vunpack.c.h.b16 %v3917
        %v3990 = vunpack.c.l.b16 %v3918
        %v3991 = vunpack.c.l.b16 %v3919
        %v3992 = vunpack.c.h.b16 %v3919
        %v3993 = vunpack.c.l.b16 %v3920
        %v3994 = vunpack.c.l.b16 %v3921
        %v3995 = vunpack.c.h.b16 %v3921
        %v3996 = vunpack.c.l.b16 %v3922
        %v3997 = vunpack.c.l.b16 %v3923
        %v3998 = vunpack.c.h.b16 %v3923
        %v3999 = vunpack.c.l.b16 %v3924
        %v4000 = vunpack.c.l.b16 %v3925
        %v4001 = vunpack.c.h.b16 %v3925
        %v4002 = vunpack.c.l.b16 %v3926
        %v4003 = vunpack.c.l.b16 %v3927
        %v4004 = vunpack.c.h.b16 %v3927
        %v4005 = vunpack.c.l.b16 %v3928
        %v4006 = vunpack.c.l.b16 %v3929
        %v4007 = vunpack.c.h.b16 %v3929
        %v4008 = vunpack.c.l.b16 %v3930
        %v4009 = vunpack.c.l.b16 %v3931
        %v4010 = vunpack.c.h.b16 %v3931
        %v4011 = vunpack.c.l.b16 %v3932
        %v4012 = vunpack.c.l.b16 %v3933
        %v4013 = vunpack.c.h.b16 %v3933
        %v4014 = vunpack.c.l.b16 %v3934
        %v4015 = vpack.c.b16 %v3970, %v3967
        %v4016 = vpack.c.b16 %v3971, %v3968
        %v4017 = vpack.c.b16 %v3972, %v3969
        %v4018 = vpack.c.b16 %v3976, %v3973
        %v4019 = vpack.c.b16 %v3977, %v3974
        %v4020 = vpack.c.b16 %v3978, %v3975
        %v4021 = vpack.c.b16 %v3982, %v3979
        %v4022 = vpack.c.b16 %v3983, %v3980
        %v4023 = vpack.c.b16 %v3984, %v3981
        %v4024 = vpack.c.b16 %v3988, %v3985
        %v4025 = vpack.c.b16 %v3989, %v3986
        %v4026 = vpack.c.b16 %v3990, %v3987
        %v4027 = vpack.c.b16 %v3994, %v3991
        %v4028 = vpack.c.b16 %v3995, %v3992
        %v4029 = vpack.c.b16 %v3996, %v3993
        %v4030 = vpack.c.b16 %v4000, %v3997
        %v4031 = vpack.c.b16 %v4001, %v3998
        %v4032 = vpack.c.b16 %v4002, %v3999
        %v4033 = vpack.c.b16 %v4006, %v4003
        %v4034 = vpack.c.b16 %v4007, %v4004
        %v4035 = vpack.c.b16 %v4008, %v4005
        %v4036 = vpack.c.b16 %v4012, %v4009
        %v4037 = vpack.c.b16 %v4013, %v4010
        %v4038 = vpack.c.b16 %v4014, %v4011
        %4063 = vmatprep.subr.bf16.mxu0 %v4037
        %4064 = vmatpush1.bf16.msra.mxu0 %v4036
        %4065 = vmatprep.subr.bf16.mxu0 %v4034
        %4066 = vmatpush1.bf16.msra.mxu0 %v4033
        %4067 = vmatprep.subr.bf16.mxu0 %v4031
        %4068 = vmatpush1.bf16.msra.mxu0 %v4030
        %4069 = vmatprep.subr.bf16.mxu0 %v4028
        %4070 = vmatpush1.bf16.msra.mxu0 %v4027
        %4071 = vmatprep.subr.bf16.mxu0 %v4025
        %4072 = vmatpush1.bf16.msra.mxu0 %v4024
        %4073 = vmatprep.subr.bf16.mxu0 %v4022
        %4074 = vmatpush1.bf16.msra.mxu0 %v4021
        %4075 = vmatprep.subr.bf16.mxu0 %v4019
        %4076 = vmatpush1.bf16.msra.mxu0 %v4018
        %4077 = vmatprep.subr.bf16.mxu0 %v4016
        %4078 = vmatpush1.bf16.msra.mxu0 %v4015
        %4079 = vmatprep.subr.bf16.mxu0 0
        %4080 = vmatpush2.bf16.msra.mxu0 0
        %4081 = vmatprep.subr.bf16.mxu0 0
        %4082 = vmatpush2.bf16.msra.mxu0 0
        %4083 = vmatprep.subr.bf16.mxu0 0
        %4084 = vmatpush2.bf16.msra.mxu0 0
        %4085 = vmatprep.subr.bf16.mxu0 0
        %4086 = vmatpush2.bf16.msra.mxu0 0
        %4087 = vmatprep.subr.bf16.mxu0 0
        %4088 = vmatpush2.bf16.msra.mxu0 0
        %4089 = vmatprep.subr.bf16.mxu0 0
        %4090 = vmatpush2.bf16.msra.mxu0 0
        %4091 = vmatprep.subr.bf16.mxu0 0
        %4092 = vmatpush2.bf16.msra.mxu0 0
        %4093 = vmatprep.subr.bf16.mxu0 0
        %4094 = vmatpush2.bf16.msra.mxu0 0
        %4095 = vmatprep.mubr.bf16.mxu0 0
        %4096 = vmatmul.mubr.bf16.gmra.mxu0 %v3902
        %v4097 = vpop.f32.mrf.mxu0
        %v4098 = vadd.f32 0.0, %v4097
        %v4099 = vpop.f32.mrf.mxu0
        %v4100 = vadd.f32 0.0, %v4099
        %v4101 = vpop.f32.mrf.mxu0
        %v4102 = vpop.f32.mrf.mxu0
        %4103 = vdwg.mxu0
        %4104 = vmatprep.subr.bf16.mxu0 0
        %4105 = vmatpush1.bf16.msra.mxu0 %v4038
        %4106 = vmatprep.subr.bf16.mxu0 0
        %4107 = vmatpush1.bf16.msra.mxu0 %v4035
        %4108 = vmatprep.subr.bf16.mxu0 0
        %4109 = vmatpush1.bf16.msra.mxu0 %v4032
        %4110 = vmatprep.subr.bf16.mxu0 0
        %4111 = vmatpush1.bf16.msra.mxu0 %v4029
        %4112 = vmatprep.subr.bf16.mxu0 0
        %4113 = vmatpush1.bf16.msra.mxu0 %v4026
        %4114 = vmatprep.subr.bf16.mxu0 0
        %4115 = vmatpush1.bf16.msra.mxu0 %v4023
        %4116 = vmatprep.subr.bf16.mxu0 0
        %4117 = vmatpush1.bf16.msra.mxu0 %v4020
        %4118 = vmatprep.subr.bf16.mxu0 0
        %4119 = vmatpush1.bf16.msra.mxu0 %v4017
        %4120 = vmatprep.subr.bf16.mxu0 0
        %4121 = vmatpush2.bf16.msra.mxu0 0
        %4122 = vmatprep.subr.bf16.mxu0 0
        %4123 = vmatpush2.bf16.msra.mxu0 0
        %4124 = vmatprep.subr.bf16.mxu0 0
        %4125 = vmatpush2.bf16.msra.mxu0 0
        %4126 = vmatprep.subr.bf16.mxu0 0
        %4127 = vmatpush2.bf16.msra.mxu0 0
        %4128 = vmatprep.subr.bf16.mxu0 0
        %4129 = vmatpush2.bf16.msra.mxu0 0
        %4130 = vmatprep.subr.bf16.mxu0 0
        %4131 = vmatpush2.bf16.msra.mxu0 0
        %4132 = vmatprep.subr.bf16.mxu0 0
        %4133 = vmatpush2.bf16.msra.mxu0 0
        %4134 = vmatprep.subr.bf16.mxu0 0
        %4135 = vmatpush2.bf16.msra.mxu0 0
        %4136 = vmatprep.mubr.bf16.mxu0 0
        %4137 = vmatmul.mubr.bf16.gmra.mxu0 %v3902
        %v4138 = vpop.f32.mrf.mxu0
        %v4139 = vadd.f32 0.0, %v4138
        %v4140 = vpop.f32.mrf.mxu0
        %v4141 = vpop.f32.mrf.mxu0
        %v4142 = vpop.f32.mrf.mxu0
        %4143 = vdwg.mxu0
        %v4144 = vadd.f32 %v3758, %v4098
        %v4145 = vadd.f32 %v3760, %v4100
        %v4146 = vadd.f32 %v3799, %v4139
        %4147 = vmatprep.subr.bf16.mxu0 0
        %4148 = vmatpush1.bf16.xpose.msra.mxu0 0
        %4149 = vmatprep.subr.bf16.mxu0 0
        %4150 = vmatpush1.bf16.xpose.msra.mxu0 0
        %4151 = vmatprep.subr.bf16.mxu0 0
        %4152 = vmatpush1.bf16.xpose.msra.mxu0 0
        %4153 = vmatprep.subr.bf16.mxu0 0
        %4154 = vmatpush1.bf16.xpose.msra.mxu0 0
        %4155 = vmatprep.subr.bf16.mxu0 0
        %4156 = vmatpush1.bf16.xpose.msra.mxu0 0
        %4157 = vmatprep.subr.bf16.mxu0 0
        %4158 = vmatpush1.bf16.xpose.msra.mxu0 0
        %4159 = vmatprep.subr.bf16.mxu0 0
        %4160 = vmatpush1.bf16.xpose.msra.mxu0 0
        %4161 = vmatprep.subr.bf16.mxu0 0
        %4162 = vmatpush1.bf16.xpose.msra.mxu0 %v3114
        %4163 = vmatprep.subr.bf16.mxu0 0
        %4164 = vmatpush2.bf16.xpose.msra.mxu0 0
        %4165 = vmatprep.subr.bf16.mxu0 0
        %4166 = vmatpush2.bf16.xpose.msra.mxu0 0
        %4167 = vmatprep.subr.bf16.mxu0 0
        %4168 = vmatpush2.bf16.xpose.msra.mxu0 0
        %4169 = vmatprep.subr.bf16.mxu0 0
        %4170 = vmatpush2.bf16.xpose.msra.mxu0 0
        %4171 = vmatprep.subr.bf16.mxu0 0
        %4172 = vmatpush2.bf16.xpose.msra.mxu0 0
        %4173 = vmatprep.subr.bf16.mxu0 0
        %4174 = vmatpush2.bf16.xpose.msra.mxu0 0
        %4175 = vmatprep.subr.bf16.mxu0 0
        %4176 = vmatpush2.bf16.xpose.msra.mxu0 0
        %4177 = vmatprep.subr.bf16.mxu0 0
        %4178 = vmatpush2.bf16.xpose.msra.mxu0 0
        %4179 = vmatprep.mubr.bf16.mxu0 0
        %4180 = vmatmul.mubr.bf16.gmra.mxu0 %v3110
        %v4181 = vpop.f32.mrf.mxu0
        %v4182 = vadd.f32 %v815, %v4181
        %v4183 = vpop.f32.mrf.mxu0
        %v4184 = vpop.f32.mrf.mxu0
        %v4185 = vpop.f32.mrf.mxu0
        %4186 = vdwg.mxu0
        %v4187 = vsel %vm3159, %v4182, -inf
        %4188 = vmax.xlane.f32.xlu0 %v4187
        %v4189 = vpop.xlane.xlu0 %4188
        %v4190 = vsub.f32 %v4182, %v4189
        %v4191 = vmul.f32 %v4190, 1.442695
        %v4192 = vpow.pop %v4191
        %v4193 = vsel %vm3159, %v4192, 0.0
        %4194 = vadd.xlane.f32.xlu0 %v4193
        %v4195 = vpop.xlane.xlu0 %4194
        %v4196 = vrcp.pop %v4195
        %v4197 = vmul.f32 %v4192, %v4196
        %v4198 = vpack.c.bf16 %v4197, %v4197
        %v4200 = vsel %vm3159, %v4198, 0
        %v4203 = vsel %vm3175, %v3118, 0
        %4205 = vmatprep.subr.bf16.mxu0 0
        %4206 = vmatpush1.bf16.msra.mxu0 0
        %4207 = vmatprep.subr.bf16.mxu0 0
        %4208 = vmatpush1.bf16.msra.mxu0 0
        %4209 = vmatprep.subr.bf16.mxu0 0
        %4210 = vmatpush1.bf16.msra.mxu0 0
        %4211 = vmatprep.subr.bf16.mxu0 0
        %4212 = vmatpush1.bf16.msra.mxu0 0
        %4213 = vmatprep.subr.bf16.mxu0 0
        %4214 = vmatpush1.bf16.msra.mxu0 0
        %4215 = vmatprep.subr.bf16.mxu0 0
        %4216 = vmatpush1.bf16.msra.mxu0 0
        %4217 = vmatprep.subr.bf16.mxu0 0
        %4218 = vmatpush1.bf16.msra.mxu0 0
        %4219 = vmatprep.subr.bf16.mxu0 0
        %4220 = vmatpush1.bf16.msra.mxu0 %v4203
        %4221 = vmatprep.subr.bf16.mxu0 0
        %4222 = vmatpush2.bf16.msra.mxu0 0
        %4223 = vmatprep.subr.bf16.mxu0 0
        %4224 = vmatpush2.bf16.msra.mxu0 0
        %4225 = vmatprep.subr.bf16.mxu0 0
        %4226 = vmatpush2.bf16.msra.mxu0 0
        %4227 = vmatprep.subr.bf16.mxu0 0
        %4228 = vmatpush2.bf16.msra.mxu0 0
        %4229 = vmatprep.subr.bf16.mxu0 0
        %4230 = vmatpush2.bf16.msra.mxu0 0
        %4231 = vmatprep.subr.bf16.mxu0 0
        %4232 = vmatpush2.bf16.msra.mxu0 0
        %4233 = vmatprep.subr.bf16.mxu0 0
        %4234 = vmatpush2.bf16.msra.mxu0 0
        %4235 = vmatprep.subr.bf16.mxu0 0
        %4236 = vmatpush2.bf16.msra.mxu0 0
        %4237 = vmatprep.mubr.bf16.mxu0 0
        %4238 = vmatmul.mubr.bf16.gmra.mxu0 %v4200
        %v4239 = vpop.f32.mrf.mxu0
        %v4240 = vadd.f32 0.0, %v4239
        %v4241 = vpop.f32.mrf.mxu0
        %v4242 = vpop.f32.mrf.mxu0
        %v4243 = vpop.f32.mrf.mxu0
        %4244 = vdwg.mxu0
        %v4245 = vpack.c.bf16 %v4240, %v4240
        %v4246 = vld [vmem:[%s3222 + $0x240] sm:$0xff]
        %v4247 = vld [vmem:[%s3222 + $0x248] sm:$0xf]
        %v4248 = vld [vmem:[%s3222 + $0x24c] sm:$0xff]
        %v4249 = vld [vmem:[%s3222 + $0x254] sm:$0xf]
        %v4250 = vld [vmem:[%s3222 + $0x258] sm:$0xff]
        %v4251 = vld [vmem:[%s3222 + $0x260] sm:$0xf]
        %v4252 = vld [vmem:[%s3222 + $0x264] sm:$0xff]
        %v4253 = vld [vmem:[%s3222 + $0x26c] sm:$0xf]
        %v4254 = vld [vmem:[%s3222 + $0x270] sm:$0xff]
        %v4255 = vld [vmem:[%s3222 + $0x278] sm:$0xf]
        %v4256 = vld [vmem:[%s3222 + $0x27c] sm:$0xff]
        %v4257 = vld [vmem:[%s3222 + $0x284] sm:$0xf]
        %v4258 = vld [vmem:[%s3222 + $0x288] sm:$0xff]
        %v4259 = vld [vmem:[%s3222 + $0x290] sm:$0xf]
        %v4260 = vld [vmem:[%s3222 + $0x294] sm:$0xff]
        %v4261 = vld [vmem:[%s3222 + $0x29c] sm:$0xf]
        %v4262 = vld [vmem:[%s3222 + $0x2a0] sm:$0xff]
        %v4263 = vld [vmem:[%s3222 + $0x2a8] sm:$0xf]
        %v4264 = vld [vmem:[%s3222 + $0x2ac] sm:$0xff]
        %v4265 = vld [vmem:[%s3222 + $0x2b4] sm:$0xf]
        %v4266 = vld [vmem:[%s3222 + $0x2b8] sm:$0xff]
        %v4267 = vld [vmem:[%s3222 + $0x2c0] sm:$0xf]
        %v4268 = vld [vmem:[%s3222 + $0x2c4] sm:$0xff]
        %v4269 = vld [vmem:[%s3222 + $0x2cc] sm:$0xf]
        %v4270 = vld [vmem:[%s3222 + $0x2d0] sm:$0xff]
        %v4271 = vld [vmem:[%s3222 + $0x2d8] sm:$0xf]
        %v4272 = vld [vmem:[%s3222 + $0x2dc] sm:$0xff]
        %v4273 = vld [vmem:[%s3222 + $0x2e4] sm:$0xf]
        %v4274 = vld [vmem:[%s3222 + $0x2e8] sm:$0xff]
        %v4275 = vld [vmem:[%s3222 + $0x2f0] sm:$0xf]
        %v4276 = vld [vmem:[%s3222 + $0x2f4] sm:$0xff]
        %v4277 = vld [vmem:[%s3222 + $0x2fc] sm:$0xf]
        %v4310 = vunpack.c.l.b16 %v4246
        %v4311 = vunpack.c.h.b16 %v4246
        %v4312 = vunpack.c.l.b16 %v4247
        %v4313 = vunpack.c.l.b16 %v4248
        %v4314 = vunpack.c.h.b16 %v4248
        %v4315 = vunpack.c.l.b16 %v4249
        %v4316 = vunpack.c.l.b16 %v4250
        %v4317 = vunpack.c.h.b16 %v4250
        %v4318 = vunpack.c.l.b16 %v4251
        %v4319 = vunpack.c.l.b16 %v4252
        %v4320 = vunpack.c.h.b16 %v4252
        %v4321 = vunpack.c.l.b16 %v4253
        %v4322 = vunpack.c.l.b16 %v4254
        %v4323 = vunpack.c.h.b16 %v4254
        %v4324 = vunpack.c.l.b16 %v4255
        %v4325 = vunpack.c.l.b16 %v4256
        %v4326 = vunpack.c.h.b16 %v4256
        %v4327 = vunpack.c.l.b16 %v4257
        %v4328 = vunpack.c.l.b16 %v4258
        %v4329 = vunpack.c.h.b16 %v4258
        %v4330 = vunpack.c.l.b16 %v4259
        %v4331 = vunpack.c.l.b16 %v4260
        %v4332 = vunpack.c.h.b16 %v4260
        %v4333 = vunpack.c.l.b16 %v4261
        %v4334 = vunpack.c.l.b16 %v4262
        %v4335 = vunpack.c.h.b16 %v4262
        %v4336 = vunpack.c.l.b16 %v4263
        %v4337 = vunpack.c.l.b16 %v4264
        %v4338 = vunpack.c.h.b16 %v4264
        %v4339 = vunpack.c.l.b16 %v4265
        %v4340 = vunpack.c.l.b16 %v4266
        %v4341 = vunpack.c.h.b16 %v4266
        %v4342 = vunpack.c.l.b16 %v4267
        %v4343 = vunpack.c.l.b16 %v4268
        %v4344 = vunpack.c.h.b16 %v4268
        %v4345 = vunpack.c.l.b16 %v4269
        %v4346 = vunpack.c.l.b16 %v4270
        %v4347 = vunpack.c.h.b16 %v4270
        %v4348 = vunpack.c.l.b16 %v4271
        %v4349 = vunpack.c.l.b16 %v4272
        %v4350 = vunpack.c.h.b16 %v4272
        %v4351 = vunpack.c.l.b16 %v4273
        %v4352 = vunpack.c.l.b16 %v4274
        %v4353 = vunpack.c.h.b16 %v4274
        %v4354 = vunpack.c.l.b16 %v4275
        %v4355 = vunpack.c.l.b16 %v4276
        %v4356 = vunpack.c.h.b16 %v4276
        %v4357 = vunpack.c.l.b16 %v4277
        %v4358 = vpack.c.b16 %v4313, %v4310
        %v4359 = vpack.c.b16 %v4314, %v4311
        %v4360 = vpack.c.b16 %v4315, %v4312
        %v4361 = vpack.c.b16 %v4319, %v4316
        %v4362 = vpack.c.b16 %v4320, %v4317
        %v4363 = vpack.c.b16 %v4321, %v4318
        %v4364 = vpack.c.b16 %v4325, %v4322
        %v4365 = vpack.c.b16 %v4326, %v4323
        %v4366 = vpack.c.b16 %v4327, %v4324
        %v4367 = vpack.c.b16 %v4331, %v4328
        %v4368 = vpack.c.b16 %v4332, %v4329
        %v4369 = vpack.c.b16 %v4333, %v4330
        %v4370 = vpack.c.b16 %v4337, %v4334
        %v4371 = vpack.c.b16 %v4338, %v4335
        %v4372 = vpack.c.b16 %v4339, %v4336
        %v4373 = vpack.c.b16 %v4343, %v4340
        %v4374 = vpack.c.b16 %v4344, %v4341
        %v4375 = vpack.c.b16 %v4345, %v4342
        %v4376 = vpack.c.b16 %v4349, %v4346
        %v4377 = vpack.c.b16 %v4350, %v4347
        %v4378 = vpack.c.b16 %v4351, %v4348
        %v4379 = vpack.c.b16 %v4355, %v4352
        %v4380 = vpack.c.b16 %v4356, %v4353
        %v4381 = vpack.c.b16 %v4357, %v4354
        %4406 = vmatprep.subr.bf16.mxu0 %v4380
        %4407 = vmatpush1.bf16.msra.mxu0 %v4379
        %4408 = vmatprep.subr.bf16.mxu0 %v4377
        %4409 = vmatpush1.bf16.msra.mxu0 %v4376
        %4410 = vmatprep.subr.bf16.mxu0 %v4374
        %4411 = vmatpush1.bf16.msra.mxu0 %v4373
        %4412 = vmatprep.subr.bf16.mxu0 %v4371
        %4413 = vmatpush1.bf16.msra.mxu0 %v4370
        %4414 = vmatprep.subr.bf16.mxu0 %v4368
        %4415 = vmatpush1.bf16.msra.mxu0 %v4367
        %4416 = vmatprep.subr.bf16.mxu0 %v4365
        %4417 = vmatpush1.bf16.msra.mxu0 %v4364
        %4418 = vmatprep.subr.bf16.mxu0 %v4362
        %4419 = vmatpush1.bf16.msra.mxu0 %v4361
        %4420 = vmatprep.subr.bf16.mxu0 %v4359
        %4421 = vmatpush1.bf16.msra.mxu0 %v4358
        %4422 = vmatprep.subr.bf16.mxu0 0
        %4423 = vmatpush2.bf16.msra.mxu0 0
        %4424 = vmatprep.subr.bf16.mxu0 0
        %4425 = vmatpush2.bf16.msra.mxu0 0
        %4426 = vmatprep.subr.bf16.mxu0 0
        %4427 = vmatpush2.bf16.msra.mxu0 0
        %4428 = vmatprep.subr.bf16.mxu0 0
        %4429 = vmatpush2.bf16.msra.mxu0 0
        %4430 = vmatprep.subr.bf16.mxu0 0
        %4431 = vmatpush2.bf16.msra.mxu0 0
        %4432 = vmatprep.subr.bf16.mxu0 0
        %4433 = vmatpush2.bf16.msra.mxu0 0
        %4434 = vmatprep.subr.bf16.mxu0 0
        %4435 = vmatpush2.bf16.msra.mxu0 0
        %4436 = vmatprep.subr.bf16.mxu0 0
        %4437 = vmatpush2.bf16.msra.mxu0 0
        %4438 = vmatprep.mubr.bf16.mxu0 0
        %4439 = vmatmul.mubr.bf16.gmra.mxu0 %v4245
        %v4440 = vpop.f32.mrf.mxu0
        %v4441 = vadd.f32 0.0, %v4440
        %v4442 = vpop.f32.mrf.mxu0
        %v4443 = vadd.f32 0.0, %v4442
        %v4444 = vpop.f32.mrf.mxu0
        %v4445 = vpop.f32.mrf.mxu0
        %4446 = vdwg.mxu0
        %4447 = vmatprep.subr.bf16.mxu0 0
        %4448 = vmatpush1.bf16.msra.mxu0 %v4381
        %4449 = vmatprep.subr.bf16.mxu0 0
        %4450 = vmatpush1.bf16.msra.mxu0 %v4378
        %4451 = vmatprep.subr.bf16.mxu0 0
        %4452 = vmatpush1.bf16.msra.mxu0 %v4375
        %4453 = vmatprep.subr.bf16.mxu0 0
        %4454 = vmatpush1.bf16.msra.mxu0 %v4372
        %4455 = vmatprep.subr.bf16.mxu0 0
        %4456 = vmatpush1.bf16.msra.mxu0 %v4369
        %4457 = vmatprep.subr.bf16.mxu0 0
        %4458 = vmatpush1.bf16.msra.mxu0 %v4366
        %4459 = vmatprep.subr.bf16.mxu0 0
        %4460 = vmatpush1.bf16.msra.mxu0 %v4363
        %4461 = vmatprep.subr.bf16.mxu0 0
        %4462 = vmatpush1.bf16.msra.mxu0 %v4360
        %4463 = vmatprep.subr.bf16.mxu0 0
        %4464 = vmatpush2.bf16.msra.mxu0 0
        %4465 = vmatprep.subr.bf16.mxu0 0
        %4466 = vmatpush2.bf16.msra.mxu0 0
        %4467 = vmatprep.subr.bf16.mxu0 0
        %4468 = vmatpush2.bf16.msra.mxu0 0
        %4469 = vmatprep.subr.bf16.mxu0 0
        %4470 = vmatpush2.bf16.msra.mxu0 0
        %4471 = vmatprep.subr.bf16.mxu0 0
        %4472 = vmatpush2.bf16.msra.mxu0 0
        %4473 = vmatprep.subr.bf16.mxu0 0
        %4474 = vmatpush2.bf16.msra.mxu0 0
        %4475 = vmatprep.subr.bf16.mxu0 0
        %4476 = vmatpush2.bf16.msra.mxu0 0
        %4477 = vmatprep.subr.bf16.mxu0 0
        %4478 = vmatpush2.bf16.msra.mxu0 0
        %4479 = vmatprep.mubr.bf16.mxu0 0
        %4480 = vmatmul.mubr.bf16.gmra.mxu0 %v4245
        %v4481 = vpop.f32.mrf.mxu0
        %v4482 = vadd.f32 0.0, %v4481
        %v4483 = vpop.f32.mrf.mxu0
        %v4484 = vpop.f32.mrf.mxu0
        %v4485 = vpop.f32.mrf.mxu0
        %4486 = vdwg.mxu0
        %v4487 = vadd.f32 %v4144, %v4441
        %v4488 = vadd.f32 %v4145, %v4443
        %v4489 = vadd.f32 %v4146, %v4482
        %v4490 = vadd.f32 %v812, %v4487
        %v4491 = vadd.f32 %v813, %v4488
        %v4492 = vadd.f32 %v814, %v4489
        %s4493 = scalar_lea.vmem [#allocation14], %s816
        %v4494 = vld [vmem:[%s4493] sm:$0x7]
        %v4496 = vlaneseq
        %v4497 = vshrl.u32 %v4496, 7
        %v4498 = vsub.s32 0, %v4497
        %v4499 = vrot.slane %v4494, %v4498
        %v4500 = vlaneseq
        %v4501 = vshrl.u32 %v4500, 7
        %v4502 = vsub.s32 1, %v4501
        %v4503 = vrot.slane %v4494, %v4502
        %v4504 = vlaneseq
        %v4505 = vshrl.u32 %v4504, 7
        %v4506 = vsub.s32 2, %v4505
        %v4507 = vrot.slane %v4494, %v4506
        %v4511 = vadd.f32 %v4490, %v4499
        %v4512 = vadd.f32 %v4491, %v4503
        %v4513 = vadd.f32 %v4492, %v4507
        %s4514 = scalar_lea.vmem [#allocation15], %s816
        %v4515 = vld [vmem:[%s4514] sm:$0x7]
        %s4516 = scalar_lea.vmem [#allocation17], %s816
        %v4517 = vld [vmem:[%s4516] sm:$0x7]
        %v4518 = vadd.f32 %v4511, %v4512
        %v4519 = vadd.f32 %v4518, %v4513
        %4520 = vadd.xlane.f32.xlu0 %v4519
        %v4521 = vpop.xlane.xlu0 %4520
        %v4522 = vmul.f32 %v4521, %v825
        %v4523 = vsub.f32 %v4511, %v4522
        %v4524 = vsub.f32 %v4512, %v4522
        %v4525 = vsub.f32 %v4513, %v4522
        %v4526 = vmul.f32 %v4523, %v4523
        %v4527 = vmul.f32 %v4524, %v4524
        %v4528 = vmul.f32 %v4525, %v4525
        %v4529 = vadd.f32 %v4526, %v4527
        %v4530 = vadd.f32 %v4529, %v4528
        %4531 = vadd.xlane.f32.xlu0 %v4530
        %v4532 = vpop.xlane.xlu0 %4531
        %v4533 = vmul.f32 %v4532, %v825
        %v4534 = vadd.f32 %v4533, 1e-05
        %v4535 = vrsqrt.pop %v4534
        %v4536 = vmul.f32 %v4523, %v4535
        %v4537 = vmul.f32 %v4524, %v4535
        %v4538 = vmul.f32 %v4525, %v4535
        %v4540 = vlaneseq
        %v4541 = vshrl.u32 %v4540, 7
        %v4542 = vsub.s32 0, %v4541
        %v4543 = vrot.slane %v4515, %v4542
        %v4544 = vlaneseq
        %v4545 = vshrl.u32 %v4544, 7
        %v4546 = vsub.s32 1, %v4545
        %v4547 = vrot.slane %v4515, %v4546
        %v4548 = vlaneseq
        %v4549 = vshrl.u32 %v4548, 7
        %v4550 = vsub.s32 2, %v4549
        %v4551 = vrot.slane %v4515, %v4550
        %v4555 = vmul.f32 %v4536, %v4543
        %v4556 = vmul.f32 %v4537, %v4547
        %v4557 = vmul.f32 %v4538, %v4551
        %v4559 = vlaneseq
        %v4560 = vshrl.u32 %v4559, 7
        %v4561 = vsub.s32 0, %v4560
        %v4562 = vrot.slane %v4517, %v4561
        %v4563 = vlaneseq
        %v4564 = vshrl.u32 %v4563, 7
        %v4565 = vsub.s32 1, %v4564
        %v4566 = vrot.slane %v4517, %v4565
        %v4567 = vlaneseq
        %v4568 = vshrl.u32 %v4567, 7
        %v4569 = vsub.s32 2, %v4568
        %v4570 = vrot.slane %v4517, %v4569
        %v4574 = vadd.f32 %v4555, %v4562
        %v4575 = vadd.f32 %v4556, %v4566
        %v4576 = vadd.f32 %v4557, %v4570
        %v4577 = vpack.c.bf16 %v4574, %v4574
        %v4578 = vpack.c.bf16 %v4575, %v4575
        %v4579 = vpack.c.bf16 %v4576, %v4576
        %s4580 = smul.addr %s884, 4
        %s4581 = scalar_lea.vmem [#allocation18], %s4580
        %v4582 = vld [vmem:[%s4581] sm:$0xff]
        %v4583 = vld [vmem:[%s4581 + $0x8] sm:$0xff]
        %v4584 = vld [vmem:[%s4581 + $0x10] sm:$0xff]
        %v4585 = vld [vmem:[%s4581 + $0x18] sm:$0xff]
        %v4586 = vld [vmem:[%s4581 + $0x20] sm:$0xff]
        %v4587 = vld [vmem:[%s4581 + $0x28] sm:$0xff]
        %v4588 = vld [vmem:[%s4581 + $0x30] sm:$0xff]
        %v4589 = vld [vmem:[%s4581 + $0x38] sm:$0xff]
        %v4590 = vld [vmem:[%s4581 + $0x40] sm:$0xff]
        %v4591 = vld [vmem:[%s4581 + $0x48] sm:$0xff]
        %v4592 = vld [vmem:[%s4581 + $0x50] sm:$0xff]
        %v4593 = vld [vmem:[%s4581 + $0x58] sm:$0xff]
        %v4594 = vld [vmem:[%s4581 + $0x60] sm:$0xff]
        %v4595 = vld [vmem:[%s4581 + $0x68] sm:$0xff]
        %v4596 = vld [vmem:[%s4581 + $0x70] sm:$0xff]
        %v4597 = vld [vmem:[%s4581 + $0x78] sm:$0xff]
        %v4598 = vld [vmem:[%s4581 + $0x80] sm:$0xff]
        %v4599 = vld [vmem:[%s4581 + $0x88] sm:$0xff]
        %v4600 = vld [vmem:[%s4581 + $0x90] sm:$0xff]
        %v4601 = vld [vmem:[%s4581 + $0x98] sm:$0xff]
        %v4602 = vld [vmem:[%s4581 + $0xa0] sm:$0xff]
        %v4603 = vld [vmem:[%s4581 + $0xa8] sm:$0xff]
        %v4604 = vld [vmem:[%s4581 + $0xb0] sm:$0xff]
        %v4605 = vld [vmem:[%s4581 + $0xb8] sm:$0xff]
        %v4606 = vld [vmem:[%s4581 + $0xc0] sm:$0xff]
        %v4607 = vld [vmem:[%s4581 + $0xc8] sm:$0xff]
        %v4608 = vld [vmem:[%s4581 + $0xd0] sm:$0xff]
        %v4609 = vld [vmem:[%s4581 + $0xd8] sm:$0xff]
        %v4610 = vld [vmem:[%s4581 + $0xe0] sm:$0xff]
        %v4611 = vld [vmem:[%s4581 + $0xe8] sm:$0xff]
        %v4612 = vld [vmem:[%s4581 + $0xf0] sm:$0xff]
        %v4613 = vld [vmem:[%s4581 + $0xf8] sm:$0xff]
        %v4614 = vld [vmem:[%s4581 + $0x100] sm:$0xff]
        %v4615 = vld [vmem:[%s4581 + $0x108] sm:$0xff]
        %v4616 = vld [vmem:[%s4581 + $0x110] sm:$0xff]
        %v4617 = vld [vmem:[%s4581 + $0x118] sm:$0xff]
        %v4618 = vld [vmem:[%s4581 + $0x120] sm:$0xff]
        %v4619 = vld [vmem:[%s4581 + $0x128] sm:$0xff]
        %v4620 = vld [vmem:[%s4581 + $0x130] sm:$0xff]
        %v4621 = vld [vmem:[%s4581 + $0x138] sm:$0xff]
        %v4622 = vld [vmem:[%s4581 + $0x140] sm:$0xff]
        %v4623 = vld [vmem:[%s4581 + $0x148] sm:$0xff]
        %v4624 = vld [vmem:[%s4581 + $0x150] sm:$0xff]
        %v4625 = vld [vmem:[%s4581 + $0x158] sm:$0xff]
        %v4626 = vld [vmem:[%s4581 + $0x160] sm:$0xff]
        %v4627 = vld [vmem:[%s4581 + $0x168] sm:$0xff]
        %v4628 = vld [vmem:[%s4581 + $0x170] sm:$0xff]
        %v4629 = vld [vmem:[%s4581 + $0x178] sm:$0xff]
        %v4630 = vld [vmem:[%s4581 + $0x180] sm:$0xff]
        %v4631 = vld [vmem:[%s4581 + $0x188] sm:$0xff]
        %v4632 = vld [vmem:[%s4581 + $0x190] sm:$0xff]
        %v4633 = vld [vmem:[%s4581 + $0x198] sm:$0xff]
        %v4634 = vld [vmem:[%s4581 + $0x1a0] sm:$0xff]
        %v4635 = vld [vmem:[%s4581 + $0x1a8] sm:$0xff]
        %v4636 = vld [vmem:[%s4581 + $0x1b0] sm:$0xff]
        %v4637 = vld [vmem:[%s4581 + $0x1b8] sm:$0xff]
        %v4638 = vld [vmem:[%s4581 + $0x1c0] sm:$0xff]
        %v4639 = vld [vmem:[%s4581 + $0x1c8] sm:$0xff]
        %v4640 = vld [vmem:[%s4581 + $0x1d0] sm:$0xff]
        %v4641 = vld [vmem:[%s4581 + $0x1d8] sm:$0xff]
        %v4642 = vld [vmem:[%s4581 + $0x1e0] sm:$0xff]
        %v4643 = vld [vmem:[%s4581 + $0x1e8] sm:$0xff]
        %v4644 = vld [vmem:[%s4581 + $0x1f0] sm:$0xff]
        %v4645 = vld [vmem:[%s4581 + $0x1f8] sm:$0xff]
        %v4646 = vld [vmem:[%s4581 + $0x200] sm:$0xff]
        %v4647 = vld [vmem:[%s4581 + $0x208] sm:$0xff]
        %v4648 = vld [vmem:[%s4581 + $0x210] sm:$0xff]
        %v4649 = vld [vmem:[%s4581 + $0x218] sm:$0xff]
        %v4650 = vld [vmem:[%s4581 + $0x220] sm:$0xff]
        %v4651 = vld [vmem:[%s4581 + $0x228] sm:$0xff]
        %v4652 = vld [vmem:[%s4581 + $0x230] sm:$0xff]
        %v4653 = vld [vmem:[%s4581 + $0x238] sm:$0xff]
        %v4654 = vld [vmem:[%s4581 + $0x240] sm:$0xff]
        %v4655 = vld [vmem:[%s4581 + $0x248] sm:$0xff]
        %v4656 = vld [vmem:[%s4581 + $0x250] sm:$0xff]
        %v4657 = vld [vmem:[%s4581 + $0x258] sm:$0xff]
        %v4658 = vld [vmem:[%s4581 + $0x260] sm:$0xff]
        %v4659 = vld [vmem:[%s4581 + $0x268] sm:$0xff]
        %v4660 = vld [vmem:[%s4581 + $0x270] sm:$0xff]
        %v4661 = vld [vmem:[%s4581 + $0x278] sm:$0xff]
        %v4662 = vld [vmem:[%s4581 + $0x280] sm:$0xff]
        %v4663 = vld [vmem:[%s4581 + $0x288] sm:$0xff]
        %v4664 = vld [vmem:[%s4581 + $0x290] sm:$0xff]
        %v4665 = vld [vmem:[%s4581 + $0x298] sm:$0xff]
        %v4666 = vld [vmem:[%s4581 + $0x2a0] sm:$0xff]
        %v4667 = vld [vmem:[%s4581 + $0x2a8] sm:$0xff]
        %v4668 = vld [vmem:[%s4581 + $0x2b0] sm:$0xff]
        %v4669 = vld [vmem:[%s4581 + $0x2b8] sm:$0xff]
        %v4670 = vld [vmem:[%s4581 + $0x2c0] sm:$0xff]
        %v4671 = vld [vmem:[%s4581 + $0x2c8] sm:$0xff]
        %v4672 = vld [vmem:[%s4581 + $0x2d0] sm:$0xff]
        %v4673 = vld [vmem:[%s4581 + $0x2d8] sm:$0xff]
        %v4674 = vld [vmem:[%s4581 + $0x2e0] sm:$0xff]
        %v4675 = vld [vmem:[%s4581 + $0x2e8] sm:$0xff]
        %v4676 = vld [vmem:[%s4581 + $0x2f0] sm:$0xff]
        %v4677 = vld [vmem:[%s4581 + $0x2f8] sm:$0xff]
        %v4678 = vld [vmem:[%s4581 + $0x300] sm:$0xff]
        %v4679 = vld [vmem:[%s4581 + $0x308] sm:$0xff]
        %v4680 = vld [vmem:[%s4581 + $0x310] sm:$0xff]
        %v4681 = vld [vmem:[%s4581 + $0x318] sm:$0xff]
        %v4682 = vld [vmem:[%s4581 + $0x320] sm:$0xff]
        %v4683 = vld [vmem:[%s4581 + $0x328] sm:$0xff]
        %v4684 = vld [vmem:[%s4581 + $0x330] sm:$0xff]
        %v4685 = vld [vmem:[%s4581 + $0x338] sm:$0xff]
        %v4686 = vld [vmem:[%s4581 + $0x340] sm:$0xff]
        %v4687 = vld [vmem:[%s4581 + $0x348] sm:$0xff]
        %v4688 = vld [vmem:[%s4581 + $0x350] sm:$0xff]
        %v4689 = vld [vmem:[%s4581 + $0x358] sm:$0xff]
        %v4690 = vld [vmem:[%s4581 + $0x360] sm:$0xff]
        %v4691 = vld [vmem:[%s4581 + $0x368] sm:$0xff]
        %v4692 = vld [vmem:[%s4581 + $0x370] sm:$0xff]
        %v4693 = vld [vmem:[%s4581 + $0x378] sm:$0xff]
        %v4694 = vld [vmem:[%s4581 + $0x380] sm:$0xff]
        %v4695 = vld [vmem:[%s4581 + $0x388] sm:$0xff]
        %v4696 = vld [vmem:[%s4581 + $0x390] sm:$0xff]
        %v4697 = vld [vmem:[%s4581 + $0x398] sm:$0xff]
        %v4698 = vld [vmem:[%s4581 + $0x3a0] sm:$0xff]
        %v4699 = vld [vmem:[%s4581 + $0x3a8] sm:$0xff]
        %v4700 = vld [vmem:[%s4581 + $0x3b0] sm:$0xff]
        %v4701 = vld [vmem:[%s4581 + $0x3b8] sm:$0xff]
        %v4702 = vld [vmem:[%s4581 + $0x3c0] sm:$0xff]
        %v4703 = vld [vmem:[%s4581 + $0x3c8] sm:$0xff]
        %v4704 = vld [vmem:[%s4581 + $0x3d0] sm:$0xff]
        %v4705 = vld [vmem:[%s4581 + $0x3d8] sm:$0xff]
        %v4706 = vld [vmem:[%s4581 + $0x3e0] sm:$0xff]
        %v4707 = vld [vmem:[%s4581 + $0x3e8] sm:$0xff]
        %v4708 = vld [vmem:[%s4581 + $0x3f0] sm:$0xff]
        %v4709 = vld [vmem:[%s4581 + $0x3f8] sm:$0xff]
        %v4710 = vld [vmem:[%s4581 + $0x400] sm:$0xff]
        %v4711 = vld [vmem:[%s4581 + $0x408] sm:$0xff]
        %v4712 = vld [vmem:[%s4581 + $0x410] sm:$0xff]
        %v4713 = vld [vmem:[%s4581 + $0x418] sm:$0xff]
        %v4714 = vld [vmem:[%s4581 + $0x420] sm:$0xff]
        %v4715 = vld [vmem:[%s4581 + $0x428] sm:$0xff]
        %v4716 = vld [vmem:[%s4581 + $0x430] sm:$0xff]
        %v4717 = vld [vmem:[%s4581 + $0x438] sm:$0xff]
        %v4718 = vld [vmem:[%s4581 + $0x440] sm:$0xff]
        %v4719 = vld [vmem:[%s4581 + $0x448] sm:$0xff]
        %v4720 = vld [vmem:[%s4581 + $0x450] sm:$0xff]
        %v4721 = vld [vmem:[%s4581 + $0x458] sm:$0xff]
        %v4722 = vld [vmem:[%s4581 + $0x460] sm:$0xff]
        %v4723 = vld [vmem:[%s4581 + $0x468] sm:$0xff]
        %v4724 = vld [vmem:[%s4581 + $0x470] sm:$0xff]
        %v4725 = vld [vmem:[%s4581 + $0x478] sm:$0xff]
        %v4726 = vld [vmem:[%s4581 + $0x480] sm:$0xff]
        %v4727 = vld [vmem:[%s4581 + $0x488] sm:$0xff]
        %v4728 = vld [vmem:[%s4581 + $0x490] sm:$0xff]
        %v4729 = vld [vmem:[%s4581 + $0x498] sm:$0xff]
        %v4730 = vld [vmem:[%s4581 + $0x4a0] sm:$0xff]
        %v4731 = vld [vmem:[%s4581 + $0x4a8] sm:$0xff]
        %v4732 = vld [vmem:[%s4581 + $0x4b0] sm:$0xff]
        %v4733 = vld [vmem:[%s4581 + $0x4b8] sm:$0xff]
        %v4734 = vld [vmem:[%s4581 + $0x4c0] sm:$0xff]
        %v4735 = vld [vmem:[%s4581 + $0x4c8] sm:$0xff]
        %v4736 = vld [vmem:[%s4581 + $0x4d0] sm:$0xff]
        %v4737 = vld [vmem:[%s4581 + $0x4d8] sm:$0xff]
        %v4738 = vld [vmem:[%s4581 + $0x4e0] sm:$0xff]
        %v4739 = vld [vmem:[%s4581 + $0x4e8] sm:$0xff]
        %v4740 = vld [vmem:[%s4581 + $0x4f0] sm:$0xff]
        %v4741 = vld [vmem:[%s4581 + $0x4f8] sm:$0xff]
        %v4742 = vld [vmem:[%s4581 + $0x500] sm:$0xff]
        %v4743 = vld [vmem:[%s4581 + $0x508] sm:$0xff]
        %v4744 = vld [vmem:[%s4581 + $0x510] sm:$0xff]
        %v4745 = vld [vmem:[%s4581 + $0x518] sm:$0xff]
        %v4746 = vld [vmem:[%s4581 + $0x520] sm:$0xff]
        %v4747 = vld [vmem:[%s4581 + $0x528] sm:$0xff]
        %v4748 = vld [vmem:[%s4581 + $0x530] sm:$0xff]
        %v4749 = vld [vmem:[%s4581 + $0x538] sm:$0xff]
        %v4750 = vld [vmem:[%s4581 + $0x540] sm:$0xff]
        %v4751 = vld [vmem:[%s4581 + $0x548] sm:$0xff]
        %v4752 = vld [vmem:[%s4581 + $0x550] sm:$0xff]
        %v4753 = vld [vmem:[%s4581 + $0x558] sm:$0xff]
        %v4754 = vld [vmem:[%s4581 + $0x560] sm:$0xff]
        %v4755 = vld [vmem:[%s4581 + $0x568] sm:$0xff]
        %v4756 = vld [vmem:[%s4581 + $0x570] sm:$0xff]
        %v4757 = vld [vmem:[%s4581 + $0x578] sm:$0xff]
        %v4758 = vld [vmem:[%s4581 + $0x580] sm:$0xff]
        %v4759 = vld [vmem:[%s4581 + $0x588] sm:$0xff]
        %v4760 = vld [vmem:[%s4581 + $0x590] sm:$0xff]
        %v4761 = vld [vmem:[%s4581 + $0x598] sm:$0xff]
        %v4762 = vld [vmem:[%s4581 + $0x5a0] sm:$0xff]
        %v4763 = vld [vmem:[%s4581 + $0x5a8] sm:$0xff]
        %v4764 = vld [vmem:[%s4581 + $0x5b0] sm:$0xff]
        %v4765 = vld [vmem:[%s4581 + $0x5b8] sm:$0xff]
        %v4766 = vld [vmem:[%s4581 + $0x5c0] sm:$0xff]
        %v4767 = vld [vmem:[%s4581 + $0x5c8] sm:$0xff]
        %v4768 = vld [vmem:[%s4581 + $0x5d0] sm:$0xff]
        %v4769 = vld [vmem:[%s4581 + $0x5d8] sm:$0xff]
        %v4770 = vld [vmem:[%s4581 + $0x5e0] sm:$0xff]
        %v4771 = vld [vmem:[%s4581 + $0x5e8] sm:$0xff]
        %v4772 = vld [vmem:[%s4581 + $0x5f0] sm:$0xff]
        %v4773 = vld [vmem:[%s4581 + $0x5f8] sm:$0xff]
        %v4774 = vld [vmem:[%s4581 + $0x600] sm:$0xff]
        %v4775 = vld [vmem:[%s4581 + $0x608] sm:$0xff]
        %v4776 = vld [vmem:[%s4581 + $0x610] sm:$0xff]
        %v4777 = vld [vmem:[%s4581 + $0x618] sm:$0xff]
        %v4778 = vld [vmem:[%s4581 + $0x620] sm:$0xff]
        %v4779 = vld [vmem:[%s4581 + $0x628] sm:$0xff]
        %v4780 = vld [vmem:[%s4581 + $0x630] sm:$0xff]
        %v4781 = vld [vmem:[%s4581 + $0x638] sm:$0xff]
        %v4782 = vld [vmem:[%s4581 + $0x640] sm:$0xff]
        %v4783 = vld [vmem:[%s4581 + $0x648] sm:$0xff]
        %v4784 = vld [vmem:[%s4581 + $0x650] sm:$0xff]
        %v4785 = vld [vmem:[%s4581 + $0x658] sm:$0xff]
        %v4786 = vld [vmem:[%s4581 + $0x660] sm:$0xff]
        %v4787 = vld [vmem:[%s4581 + $0x668] sm:$0xff]
        %v4788 = vld [vmem:[%s4581 + $0x670] sm:$0xff]
        %v4789 = vld [vmem:[%s4581 + $0x678] sm:$0xff]
        %v4790 = vld [vmem:[%s4581 + $0x680] sm:$0xff]
        %v4791 = vld [vmem:[%s4581 + $0x688] sm:$0xff]
        %v4792 = vld [vmem:[%s4581 + $0x690] sm:$0xff]
        %v4793 = vld [vmem:[%s4581 + $0x698] sm:$0xff]
        %v4794 = vld [vmem:[%s4581 + $0x6a0] sm:$0xff]
        %v4795 = vld [vmem:[%s4581 + $0x6a8] sm:$0xff]
        %v4796 = vld [vmem:[%s4581 + $0x6b0] sm:$0xff]
        %v4797 = vld [vmem:[%s4581 + $0x6b8] sm:$0xff]
        %v4798 = vld [vmem:[%s4581 + $0x6c0] sm:$0xff]
        %v4799 = vld [vmem:[%s4581 + $0x6c8] sm:$0xff]
        %v4800 = vld [vmem:[%s4581 + $0x6d0] sm:$0xff]
        %v4801 = vld [vmem:[%s4581 + $0x6d8] sm:$0xff]
        %v4802 = vld [vmem:[%s4581 + $0x6e0] sm:$0xff]
        %v4803 = vld [vmem:[%s4581 + $0x6e8] sm:$0xff]
        %v4804 = vld [vmem:[%s4581 + $0x6f0] sm:$0xff]
        %v4805 = vld [vmem:[%s4581 + $0x6f8] sm:$0xff]
        %v4806 = vld [vmem:[%s4581 + $0x700] sm:$0xff]
        %v4807 = vld [vmem:[%s4581 + $0x708] sm:$0xff]
        %v4808 = vld [vmem:[%s4581 + $0x710] sm:$0xff]
        %v4809 = vld [vmem:[%s4581 + $0x718] sm:$0xff]
        %v4810 = vld [vmem:[%s4581 + $0x720] sm:$0xff]
        %v4811 = vld [vmem:[%s4581 + $0x728] sm:$0xff]
        %v4812 = vld [vmem:[%s4581 + $0x730] sm:$0xff]
        %v4813 = vld [vmem:[%s4581 + $0x738] sm:$0xff]
        %v4814 = vld [vmem:[%s4581 + $0x740] sm:$0xff]
        %v4815 = vld [vmem:[%s4581 + $0x748] sm:$0xff]
        %v4816 = vld [vmem:[%s4581 + $0x750] sm:$0xff]
        %v4817 = vld [vmem:[%s4581 + $0x758] sm:$0xff]
        %v4818 = vld [vmem:[%s4581 + $0x760] sm:$0xff]
        %v4819 = vld [vmem:[%s4581 + $0x768] sm:$0xff]
        %v4820 = vld [vmem:[%s4581 + $0x770] sm:$0xff]
        %v4821 = vld [vmem:[%s4581 + $0x778] sm:$0xff]
        %v4822 = vld [vmem:[%s4581 + $0x780] sm:$0xff]
        %v4823 = vld [vmem:[%s4581 + $0x788] sm:$0xff]
        %v4824 = vld [vmem:[%s4581 + $0x790] sm:$0xff]
        %v4825 = vld [vmem:[%s4581 + $0x798] sm:$0xff]
        %v4826 = vld [vmem:[%s4581 + $0x7a0] sm:$0xff]
        %v4827 = vld [vmem:[%s4581 + $0x7a8] sm:$0xff]
        %v4828 = vld [vmem:[%s4581 + $0x7b0] sm:$0xff]
        %v4829 = vld [vmem:[%s4581 + $0x7b8] sm:$0xff]
        %v4830 = vld [vmem:[%s4581 + $0x7c0] sm:$0xff]
        %v4831 = vld [vmem:[%s4581 + $0x7c8] sm:$0xff]
        %v4832 = vld [vmem:[%s4581 + $0x7d0] sm:$0xff]
        %v4833 = vld [vmem:[%s4581 + $0x7d8] sm:$0xff]
        %v4834 = vld [vmem:[%s4581 + $0x7e0] sm:$0xff]
        %v4835 = vld [vmem:[%s4581 + $0x7e8] sm:$0xff]
        %v4836 = vld [vmem:[%s4581 + $0x7f0] sm:$0xff]
        %v4837 = vld [vmem:[%s4581 + $0x7f8] sm:$0xff]
        %v4838 = vld [vmem:[%s4581 + $0x800] sm:$0xff]
        %v4839 = vld [vmem:[%s4581 + $0x808] sm:$0xff]
        %v4840 = vld [vmem:[%s4581 + $0x810] sm:$0xff]
        %v4841 = vld [vmem:[%s4581 + $0x818] sm:$0xff]
        %v4842 = vld [vmem:[%s4581 + $0x820] sm:$0xff]
        %v4843 = vld [vmem:[%s4581 + $0x828] sm:$0xff]
        %v4844 = vld [vmem:[%s4581 + $0x830] sm:$0xff]
        %v4845 = vld [vmem:[%s4581 + $0x838] sm:$0xff]
        %v4846 = vld [vmem:[%s4581 + $0x840] sm:$0xff]
        %v4847 = vld [vmem:[%s4581 + $0x848] sm:$0xff]
        %v4848 = vld [vmem:[%s4581 + $0x850] sm:$0xff]
        %v4849 = vld [vmem:[%s4581 + $0x858] sm:$0xff]
        %v4850 = vld [vmem:[%s4581 + $0x860] sm:$0xff]
        %v4851 = vld [vmem:[%s4581 + $0x868] sm:$0xff]
        %v4852 = vld [vmem:[%s4581 + $0x870] sm:$0xff]
        %v4853 = vld [vmem:[%s4581 + $0x878] sm:$0xff]
        %v4854 = vld [vmem:[%s4581 + $0x880] sm:$0xff]
        %v4855 = vld [vmem:[%s4581 + $0x888] sm:$0xff]
        %v4856 = vld [vmem:[%s4581 + $0x890] sm:$0xff]
        %v4857 = vld [vmem:[%s4581 + $0x898] sm:$0xff]
        %v4858 = vld [vmem:[%s4581 + $0x8a0] sm:$0xff]
        %v4859 = vld [vmem:[%s4581 + $0x8a8] sm:$0xff]
        %v4860 = vld [vmem:[%s4581 + $0x8b0] sm:$0xff]
        %v4861 = vld [vmem:[%s4581 + $0x8b8] sm:$0xff]
        %v4862 = vld [vmem:[%s4581 + $0x8c0] sm:$0xff]
        %v4863 = vld [vmem:[%s4581 + $0x8c8] sm:$0xff]
        %v4864 = vld [vmem:[%s4581 + $0x8d0] sm:$0xff]
        %v4865 = vld [vmem:[%s4581 + $0x8d8] sm:$0xff]
        %v4866 = vld [vmem:[%s4581 + $0x8e0] sm:$0xff]
        %v4867 = vld [vmem:[%s4581 + $0x8e8] sm:$0xff]
        %v4868 = vld [vmem:[%s4581 + $0x8f0] sm:$0xff]
        %v4869 = vld [vmem:[%s4581 + $0x8f8] sm:$0xff]
        %s4870 = smul.u32 %s47, 12
        %s4871 = scalar_lea.vmem [#allocation20], %s4870
        %v4872 = vld [vmem:[%s4871] sm:$0xff]
        %v4873 = vld [vmem:[%s4871 + $0x8] sm:$0xf]
        %v4876 = vlaneseq
        %v4877 = vshrl.u32 %v4876, 7
        %v4878 = vsub.s32 0, %v4877
        %v4879 = vrot.slane %v4872, %v4878
        %v4880 = vlaneseq
        %v4881 = vshrl.u32 %v4880, 7
        %v4882 = vsub.s32 1, %v4881
        %v4883 = vrot.slane %v4872, %v4882
        %v4884 = vlaneseq
        %v4885 = vshrl.u32 %v4884, 7
        %v4886 = vsub.s32 2, %v4885
        %v4887 = vrot.slane %v4872, %v4886
        %v4888 = vlaneseq
        %v4889 = vshrl.u32 %v4888, 7
        %v4890 = vsub.s32 3, %v4889
        %v4891 = vrot.slane %v4872, %v4890
        %v4892 = vlaneseq
        %v4893 = vshrl.u32 %v4892, 7
        %v4894 = vsub.s32 4, %v4893
        %v4895 = vrot.slane %v4872, %v4894
        %v4896 = vlaneseq
        %v4897 = vshrl.u32 %v4896, 7
        %v4898 = vsub.s32 5, %v4897
        %v4899 = vrot.slane %v4872, %v4898
        %v4900 = vlaneseq
        %v4901 = vshrl.u32 %v4900, 7
        %v4902 = vsub.s32 6, %v4901
        %v4903 = vrot.slane %v4872, %v4902
        %v4904 = vlaneseq
        %v4905 = vshrl.u32 %v4904, 7
        %v4906 = vsub.s32 7, %v4905
        %v4907 = vrot.slane %v4872, %v4906
        %v4908 = vlaneseq
        %v4909 = vshrl.u32 %v4908, 7
        %v4910 = vsub.s32 0, %v4909
        %v4911 = vrot.slane %v4873, %v4910
        %v4912 = vlaneseq
        %v4913 = vshrl.u32 %v4912, 7
        %v4914 = vsub.s32 1, %v4913
        %v4915 = vrot.slane %v4873, %v4914
        %v4916 = vlaneseq
        %v4917 = vshrl.u32 %v4916, 7
        %v4918 = vsub.s32 2, %v4917
        %v4919 = vrot.slane %v4873, %v4918
        %v4920 = vlaneseq
        %v4921 = vshrl.u32 %v4920, 7
        %v4922 = vsub.s32 3, %v4921
        %v4923 = vrot.slane %v4873, %v4922
        %v5224 = vunpack.c.l.b16 %v4582
        %v5225 = vunpack.c.h.b16 %v4582
        %v5226 = vunpack.c.l.b16 %v4583
        %v5227 = vunpack.c.h.b16 %v4583
        %v5228 = vunpack.c.l.b16 %v4584
        %v5229 = vunpack.c.h.b16 %v4584
        %v5230 = vunpack.c.l.b16 %v4585
        %v5231 = vunpack.c.h.b16 %v4585
        %v5232 = vunpack.c.l.b16 %v4586
        %v5233 = vunpack.c.h.b16 %v4586
        %v5234 = vunpack.c.l.b16 %v4587
        %v5235 = vunpack.c.h.b16 %v4587
        %v5236 = vunpack.c.l.b16 %v4588
        %v5237 = vunpack.c.h.b16 %v4588
        %v5238 = vunpack.c.l.b16 %v4589
        %v5239 = vunpack.c.h.b16 %v4589
        %v5240 = vunpack.c.l.b16 %v4590
        %v5241 = vunpack.c.h.b16 %v4590
        %v5242 = vunpack.c.l.b16 %v4591
        %v5243 = vunpack.c.h.b16 %v4591
        %v5244 = vunpack.c.l.b16 %v4592
        %v5245 = vunpack.c.h.b16 %v4592
        %v5246 = vunpack.c.l.b16 %v4593
        %v5247 = vunpack.c.h.b16 %v4593
        %v5248 = vunpack.c.l.b16 %v4594
        %v5249 = vunpack.c.h.b16 %v4594
        %v5250 = vunpack.c.l.b16 %v4595
        %v5251 = vunpack.c.h.b16 %v4595
        %v5252 = vunpack.c.l.b16 %v4596
        %v5253 = vunpack.c.h.b16 %v4596
        %v5254 = vunpack.c.l.b16 %v4597
        %v5255 = vunpack.c.h.b16 %v4597
        %v5256 = vunpack.c.l.b16 %v4598
        %v5257 = vunpack.c.h.b16 %v4598
        %v5258 = vunpack.c.l.b16 %v4599
        %v5259 = vunpack.c.h.b16 %v4599
        %v5260 = vunpack.c.l.b16 %v4600
        %v5261 = vunpack.c.h.b16 %v4600
        %v5262 = vunpack.c.l.b16 %v4601
        %v5263 = vunpack.c.h.b16 %v4601
        %v5264 = vunpack.c.l.b16 %v4602
        %v5265 = vunpack.c.h.b16 %v4602
        %v5266 = vunpack.c.l.b16 %v4603
        %v5267 = vunpack.c.h.b16 %v4603
        %v5268 = vunpack.c.l.b16 %v4604
        %v5269 = vunpack.c.h.b16 %v4604
        %v5270 = vunpack.c.l.b16 %v4605
        %v5271 = vunpack.c.h.b16 %v4605
        %v5272 = vunpack.c.l.b16 %v4606
        %v5273 = vunpack.c.h.b16 %v4606
        %v5274 = vunpack.c.l.b16 %v4607
        %v5275 = vunpack.c.h.b16 %v4607
        %v5276 = vunpack.c.l.b16 %v4608
        %v5277 = vunpack.c.h.b16 %v4608
        %v5278 = vunpack.c.l.b16 %v4609
        %v5279 = vunpack.c.h.b16 %v4609
        %v5280 = vunpack.c.l.b16 %v4610
        %v5281 = vunpack.c.h.b16 %v4610
        %v5282 = vunpack.c.l.b16 %v4611
        %v5283 = vunpack.c.h.b16 %v4611
        %v5284 = vunpack.c.l.b16 %v4612
        %v5285 = vunpack.c.h.b16 %v4612
        %v5286 = vunpack.c.l.b16 %v4613
        %v5287 = vunpack.c.h.b16 %v4613
        %v5288 = vunpack.c.l.b16 %v4614
        %v5289 = vunpack.c.h.b16 %v4614
        %v5290 = vunpack.c.l.b16 %v4615
        %v5291 = vunpack.c.h.b16 %v4615
        %v5292 = vunpack.c.l.b16 %v4616
        %v5293 = vunpack.c.h.b16 %v4616
        %v5294 = vunpack.c.l.b16 %v4617
        %v5295 = vunpack.c.h.b16 %v4617
        %v5296 = vunpack.c.l.b16 %v4618
        %v5297 = vunpack.c.h.b16 %v4618
        %v5298 = vunpack.c.l.b16 %v4619
        %v5299 = vunpack.c.h.b16 %v4619
        %v5300 = vunpack.c.l.b16 %v4620
        %v5301 = vunpack.c.h.b16 %v4620
        %v5302 = vunpack.c.l.b16 %v4621
        %v5303 = vunpack.c.h.b16 %v4621
        %v5304 = vunpack.c.l.b16 %v4622
        %v5305 = vunpack.c.h.b16 %v4622
        %v5306 = vunpack.c.l.b16 %v4623
        %v5307 = vunpack.c.h.b16 %v4623
        %v5308 = vunpack.c.l.b16 %v4624
        %v5309 = vunpack.c.h.b16 %v4624
        %v5310 = vunpack.c.l.b16 %v4625
        %v5311 = vunpack.c.h.b16 %v4625
        %v5312 = vunpack.c.l.b16 %v4626
        %v5313 = vunpack.c.h.b16 %v4626
        %v5314 = vunpack.c.l.b16 %v4627
        %v5315 = vunpack.c.h.b16 %v4627
        %v5316 = vunpack.c.l.b16 %v4628
        %v5317 = vunpack.c.h.b16 %v4628
        %v5318 = vunpack.c.l.b16 %v4629
        %v5319 = vunpack.c.h.b16 %v4629
        %v5320 = vunpack.c.l.b16 %v4630
        %v5321 = vunpack.c.h.b16 %v4630
        %v5322 = vunpack.c.l.b16 %v4631
        %v5323 = vunpack.c.h.b16 %v4631
        %v5324 = vunpack.c.l.b16 %v4632
        %v5325 = vunpack.c.h.b16 %v4632
        %v5326 = vunpack.c.l.b16 %v4633
        %v5327 = vunpack.c.h.b16 %v4633
        %v5328 = vunpack.c.l.b16 %v4634
        %v5329 = vunpack.c.h.b16 %v4634
        %v5330 = vunpack.c.l.b16 %v4635
        %v5331 = vunpack.c.h.b16 %v4635
        %v5332 = vunpack.c.l.b16 %v4636
        %v5333 = vunpack.c.h.b16 %v4636
        %v5334 = vunpack.c.l.b16 %v4637
        %v5335 = vunpack.c.h.b16 %v4637
        %v5336 = vunpack.c.l.b16 %v4638
        %v5337 = vunpack.c.h.b16 %v4638
        %v5338 = vunpack.c.l.b16 %v4639
        %v5339 = vunpack.c.h.b16 %v4639
        %v5340 = vunpack.c.l.b16 %v4640
        %v5341 = vunpack.c.h.b16 %v4640
        %v5342 = vunpack.c.l.b16 %v4641
        %v5343 = vunpack.c.h.b16 %v4641
        %v5344 = vunpack.c.l.b16 %v4642
        %v5345 = vunpack.c.h.b16 %v4642
        %v5346 = vunpack.c.l.b16 %v4643
        %v5347 = vunpack.c.h.b16 %v4643
        %v5348 = vunpack.c.l.b16 %v4644
        %v5349 = vunpack.c.h.b16 %v4644
        %v5350 = vunpack.c.l.b16 %v4645
        %v5351 = vunpack.c.h.b16 %v4645
        %v5352 = vunpack.c.l.b16 %v4646
        %v5353 = vunpack.c.h.b16 %v4646
        %v5354 = vunpack.c.l.b16 %v4647
        %v5355 = vunpack.c.h.b16 %v4647
        %v5356 = vunpack.c.l.b16 %v4648
        %v5357 = vunpack.c.h.b16 %v4648
        %v5358 = vunpack.c.l.b16 %v4649
        %v5359 = vunpack.c.h.b16 %v4649
        %v5360 = vunpack.c.l.b16 %v4650
        %v5361 = vunpack.c.h.b16 %v4650
        %v5362 = vunpack.c.l.b16 %v4651
        %v5363 = vunpack.c.h.b16 %v4651
        %v5364 = vunpack.c.l.b16 %v4652
        %v5365 = vunpack.c.h.b16 %v4652
        %v5366 = vunpack.c.l.b16 %v4653
        %v5367 = vunpack.c.h.b16 %v4653
        %v5368 = vunpack.c.l.b16 %v4654
        %v5369 = vunpack.c.h.b16 %v4654
        %v5370 = vunpack.c.l.b16 %v4655
        %v5371 = vunpack.c.h.b16 %v4655
        %v5372 = vunpack.c.l.b16 %v4656
        %v5373 = vunpack.c.h.b16 %v4656
        %v5374 = vunpack.c.l.b16 %v4657
        %v5375 = vunpack.c.h.b16 %v4657
        %v5376 = vunpack.c.l.b16 %v4658
        %v5377 = vunpack.c.h.b16 %v4658
        %v5378 = vunpack.c.l.b16 %v4659
        %v5379 = vunpack.c.h.b16 %v4659
        %v5380 = vunpack.c.l.b16 %v4660
        %v5381 = vunpack.c.h.b16 %v4660
        %v5382 = vunpack.c.l.b16 %v4661
        %v5383 = vunpack.c.h.b16 %v4661
        %v5384 = vunpack.c.l.b16 %v4662
        %v5385 = vunpack.c.h.b16 %v4662
        %v5386 = vunpack.c.l.b16 %v4663
        %v5387 = vunpack.c.h.b16 %v4663
        %v5388 = vunpack.c.l.b16 %v4664
        %v5389 = vunpack.c.h.b16 %v4664
        %v5390 = vunpack.c.l.b16 %v4665
        %v5391 = vunpack.c.h.b16 %v4665
        %v5392 = vunpack.c.l.b16 %v4666
        %v5393 = vunpack.c.h.b16 %v4666
        %v5394 = vunpack.c.l.b16 %v4667
        %v5395 = vunpack.c.h.b16 %v4667
        %v5396 = vunpack.c.l.b16 %v4668
        %v5397 = vunpack.c.h.b16 %v4668
        %v5398 = vunpack.c.l.b16 %v4669
        %v5399 = vunpack.c.h.b16 %v4669
        %v5400 = vunpack.c.l.b16 %v4670
        %v5401 = vunpack.c.h.b16 %v4670
        %v5402 = vunpack.c.l.b16 %v4671
        %v5403 = vunpack.c.h.b16 %v4671
        %v5404 = vunpack.c.l.b16 %v4672
        %v5405 = vunpack.c.h.b16 %v4672
        %v5406 = vunpack.c.l.b16 %v4673
        %v5407 = vunpack.c.h.b16 %v4673
        %v5408 = vunpack.c.l.b16 %v4674
        %v5409 = vunpack.c.h.b16 %v4674
        %v5410 = vunpack.c.l.b16 %v4675
        %v5411 = vunpack.c.h.b16 %v4675
        %v5412 = vunpack.c.l.b16 %v4676
        %v5413 = vunpack.c.h.b16 %v4676
        %v5414 = vunpack.c.l.b16 %v4677
        %v5415 = vunpack.c.h.b16 %v4677
        %v5416 = vunpack.c.l.b16 %v4678
        %v5417 = vunpack.c.h.b16 %v4678
        %v5418 = vunpack.c.l.b16 %v4679
        %v5419 = vunpack.c.h.b16 %v4679
        %v5420 = vunpack.c.l.b16 %v4680
        %v5421 = vunpack.c.h.b16 %v4680
        %v5422 = vunpack.c.l.b16 %v4681
        %v5423 = vunpack.c.h.b16 %v4681
        %v5424 = vunpack.c.l.b16 %v4682
        %v5425 = vunpack.c.h.b16 %v4682
        %v5426 = vunpack.c.l.b16 %v4683
        %v5427 = vunpack.c.h.b16 %v4683
        %v5428 = vunpack.c.l.b16 %v4684
        %v5429 = vunpack.c.h.b16 %v4684
        %v5430 = vunpack.c.l.b16 %v4685
        %v5431 = vunpack.c.h.b16 %v4685
        %v5432 = vunpack.c.l.b16 %v4686
        %v5433 = vunpack.c.h.b16 %v4686
        %v5434 = vunpack.c.l.b16 %v4687
        %v5435 = vunpack.c.h.b16 %v4687
        %v5436 = vunpack.c.l.b16 %v4688
        %v5437 = vunpack.c.h.b16 %v4688
        %v5438 = vunpack.c.l.b16 %v4689
        %v5439 = vunpack.c.h.b16 %v4689
        %v5440 = vunpack.c.l.b16 %v4690
        %v5441 = vunpack.c.h.b16 %v4690
        %v5442 = vunpack.c.l.b16 %v4691
        %v5443 = vunpack.c.h.b16 %v4691
        %v5444 = vunpack.c.l.b16 %v4692
        %v5445 = vunpack.c.h.b16 %v4692
        %v5446 = vunpack.c.l.b16 %v4693
        %v5447 = vunpack.c.h.b16 %v4693
        %v5448 = vunpack.c.l.b16 %v4694
        %v5449 = vunpack.c.h.b16 %v4694
        %v5450 = vunpack.c.l.b16 %v4695
        %v5451 = vunpack.c.h.b16 %v4695
        %v5452 = vunpack.c.l.b16 %v4696
        %v5453 = vunpack.c.h.b16 %v4696
        %v5454 = vunpack.c.l.b16 %v4697
        %v5455 = vunpack.c.h.b16 %v4697
        %v5456 = vunpack.c.l.b16 %v4698
        %v5457 = vunpack.c.h.b16 %v4698
        %v5458 = vunpack.c.l.b16 %v4699
        %v5459 = vunpack.c.h.b16 %v4699
        %v5460 = vunpack.c.l.b16 %v4700
        %v5461 = vunpack.c.h.b16 %v4700
        %v5462 = vunpack.c.l.b16 %v4701
        %v5463 = vunpack.c.h.b16 %v4701
        %v5464 = vunpack.c.l.b16 %v4702
        %v5465 = vunpack.c.h.b16 %v4702
        %v5466 = vunpack.c.l.b16 %v4703
        %v5467 = vunpack.c.h.b16 %v4703
        %v5468 = vunpack.c.l.b16 %v4704
        %v5469 = vunpack.c.h.b16 %v4704
        %v5470 = vunpack.c.l.b16 %v4705
        %v5471 = vunpack.c.h.b16 %v4705
        %v5472 = vunpack.c.l.b16 %v4706
        %v5473 = vunpack.c.h.b16 %v4706
        %v5474 = vunpack.c.l.b16 %v4707
        %v5475 = vunpack.c.h.b16 %v4707
        %v5476 = vunpack.c.l.b16 %v4708
        %v5477 = vunpack.c.h.b16 %v4708
        %v5478 = vunpack.c.l.b16 %v4709
        %v5479 = vunpack.c.h.b16 %v4709
        %v5480 = vunpack.c.l.b16 %v4710
        %v5481 = vunpack.c.h.b16 %v4710
        %v5482 = vunpack.c.l.b16 %v4711
        %v5483 = vunpack.c.h.b16 %v4711
        %v5484 = vunpack.c.l.b16 %v4712
        %v5485 = vunpack.c.h.b16 %v4712
        %v5486 = vunpack.c.l.b16 %v4713
        %v5487 = vunpack.c.h.b16 %v4713
        %v5488 = vunpack.c.l.b16 %v4714
        %v5489 = vunpack.c.h.b16 %v4714
        %v5490 = vunpack.c.l.b16 %v4715
        %v5491 = vunpack.c.h.b16 %v4715
        %v5492 = vunpack.c.l.b16 %v4716
        %v5493 = vunpack.c.h.b16 %v4716
        %v5494 = vunpack.c.l.b16 %v4717
        %v5495 = vunpack.c.h.b16 %v4717
        %v5496 = vunpack.c.l.b16 %v4718
        %v5497 = vunpack.c.h.b16 %v4718
        %v5498 = vunpack.c.l.b16 %v4719
        %v5499 = vunpack.c.h.b16 %v4719
        %v5500 = vunpack.c.l.b16 %v4720
        %v5501 = vunpack.c.h.b16 %v4720
        %v5502 = vunpack.c.l.b16 %v4721
        %v5503 = vunpack.c.h.b16 %v4721
        %v5504 = vunpack.c.l.b16 %v4722
        %v5505 = vunpack.c.h.b16 %v4722
        %v5506 = vunpack.c.l.b16 %v4723
        %v5507 = vunpack.c.h.b16 %v4723
        %v5508 = vunpack.c.l.b16 %v4724
        %v5509 = vunpack.c.h.b16 %v4724
        %v5510 = vunpack.c.l.b16 %v4725
        %v5511 = vunpack.c.h.b16 %v4725
        %v5512 = vunpack.c.l.b16 %v4726
        %v5513 = vunpack.c.h.b16 %v4726
        %v5514 = vunpack.c.l.b16 %v4727
        %v5515 = vunpack.c.h.b16 %v4727
        %v5516 = vunpack.c.l.b16 %v4728
        %v5517 = vunpack.c.h.b16 %v4728
        %v5518 = vunpack.c.l.b16 %v4729
        %v5519 = vunpack.c.h.b16 %v4729
        %v5520 = vunpack.c.l.b16 %v4730
        %v5521 = vunpack.c.h.b16 %v4730
        %v5522 = vunpack.c.l.b16 %v4731
        %v5523 = vunpack.c.h.b16 %v4731
        %v5524 = vunpack.c.l.b16 %v4732
        %v5525 = vunpack.c.h.b16 %v4732
        %v5526 = vunpack.c.l.b16 %v4733
        %v5527 = vunpack.c.h.b16 %v4733
        %v5528 = vunpack.c.l.b16 %v4734
        %v5529 = vunpack.c.h.b16 %v4734
        %v5530 = vunpack.c.l.b16 %v4735
        %v5531 = vunpack.c.h.b16 %v4735
        %v5532 = vunpack.c.l.b16 %v4736
        %v5533 = vunpack.c.h.b16 %v4736
        %v5534 = vunpack.c.l.b16 %v4737
        %v5535 = vunpack.c.h.b16 %v4737
        %v5536 = vunpack.c.l.b16 %v4738
        %v5537 = vunpack.c.h.b16 %v4738
        %v5538 = vunpack.c.l.b16 %v4739
        %v5539 = vunpack.c.h.b16 %v4739
        %v5540 = vunpack.c.l.b16 %v4740
        %v5541 = vunpack.c.h.b16 %v4740
        %v5542 = vunpack.c.l.b16 %v4741
        %v5543 = vunpack.c.h.b16 %v4741
        %v5544 = vunpack.c.l.b16 %v4742
        %v5545 = vunpack.c.h.b16 %v4742
        %v5546 = vunpack.c.l.b16 %v4743
        %v5547 = vunpack.c.h.b16 %v4743
        %v5548 = vunpack.c.l.b16 %v4744
        %v5549 = vunpack.c.h.b16 %v4744
        %v5550 = vunpack.c.l.b16 %v4745
        %v5551 = vunpack.c.h.b16 %v4745
        %v5552 = vunpack.c.l.b16 %v4746
        %v5553 = vunpack.c.h.b16 %v4746
        %v5554 = vunpack.c.l.b16 %v4747
        %v5555 = vunpack.c.h.b16 %v4747
        %v5556 = vunpack.c.l.b16 %v4748
        %v5557 = vunpack.c.h.b16 %v4748
        %v5558 = vunpack.c.l.b16 %v4749
        %v5559 = vunpack.c.h.b16 %v4749
        %v5560 = vunpack.c.l.b16 %v4750
        %v5561 = vunpack.c.h.b16 %v4750
        %v5562 = vunpack.c.l.b16 %v4751
        %v5563 = vunpack.c.h.b16 %v4751
        %v5564 = vunpack.c.l.b16 %v4752
        %v5565 = vunpack.c.h.b16 %v4752
        %v5566 = vunpack.c.l.b16 %v4753
        %v5567 = vunpack.c.h.b16 %v4753
        %v5568 = vunpack.c.l.b16 %v4754
        %v5569 = vunpack.c.h.b16 %v4754
        %v5570 = vunpack.c.l.b16 %v4755
        %v5571 = vunpack.c.h.b16 %v4755
        %v5572 = vunpack.c.l.b16 %v4756
        %v5573 = vunpack.c.h.b16 %v4756
        %v5574 = vunpack.c.l.b16 %v4757
        %v5575 = vunpack.c.h.b16 %v4757
        %v5576 = vunpack.c.l.b16 %v4758
        %v5577 = vunpack.c.h.b16 %v4758
        %v5578 = vunpack.c.l.b16 %v4759
        %v5579 = vunpack.c.h.b16 %v4759
        %v5580 = vunpack.c.l.b16 %v4760
        %v5581 = vunpack.c.h.b16 %v4760
        %v5582 = vunpack.c.l.b16 %v4761
        %v5583 = vunpack.c.h.b16 %v4761
        %v5584 = vunpack.c.l.b16 %v4762
        %v5585 = vunpack.c.h.b16 %v4762
        %v5586 = vunpack.c.l.b16 %v4763
        %v5587 = vunpack.c.h.b16 %v4763
        %v5588 = vunpack.c.l.b16 %v4764
        %v5589 = vunpack.c.h.b16 %v4764
        %v5590 = vunpack.c.l.b16 %v4765
        %v5591 = vunpack.c.h.b16 %v4765
        %v5592 = vunpack.c.l.b16 %v4766
        %v5593 = vunpack.c.h.b16 %v4766
        %v5594 = vunpack.c.l.b16 %v4767
        %v5595 = vunpack.c.h.b16 %v4767
        %v5596 = vunpack.c.l.b16 %v4768
        %v5597 = vunpack.c.h.b16 %v4768
        %v5598 = vunpack.c.l.b16 %v4769
        %v5599 = vunpack.c.h.b16 %v4769
        %v5600 = vunpack.c.l.b16 %v4770
        %v5601 = vunpack.c.h.b16 %v4770
        %v5602 = vunpack.c.l.b16 %v4771
        %v5603 = vunpack.c.h.b16 %v4771
        %v5604 = vunpack.c.l.b16 %v4772
        %v5605 = vunpack.c.h.b16 %v4772
        %v5606 = vunpack.c.l.b16 %v4773
        %v5607 = vunpack.c.h.b16 %v4773
        %v5608 = vunpack.c.l.b16 %v4774
        %v5609 = vunpack.c.h.b16 %v4774
        %v5610 = vunpack.c.l.b16 %v4775
        %v5611 = vunpack.c.h.b16 %v4775
        %v5612 = vunpack.c.l.b16 %v4776
        %v5613 = vunpack.c.h.b16 %v4776
        %v5614 = vunpack.c.l.b16 %v4777
        %v5615 = vunpack.c.h.b16 %v4777
        %v5616 = vunpack.c.l.b16 %v4778
        %v5617 = vunpack.c.h.b16 %v4778
        %v5618 = vunpack.c.l.b16 %v4779
        %v5619 = vunpack.c.h.b16 %v4779
        %v5620 = vunpack.c.l.b16 %v4780
        %v5621 = vunpack.c.h.b16 %v4780
        %v5622 = vunpack.c.l.b16 %v4781
        %v5623 = vunpack.c.h.b16 %v4781
        %v5624 = vunpack.c.l.b16 %v4782
        %v5625 = vunpack.c.h.b16 %v4782
        %v5626 = vunpack.c.l.b16 %v4783
        %v5627 = vunpack.c.h.b16 %v4783
        %v5628 = vunpack.c.l.b16 %v4784
        %v5629 = vunpack.c.h.b16 %v4784
        %v5630 = vunpack.c.l.b16 %v4785
        %v5631 = vunpack.c.h.b16 %v4785
        %v5632 = vunpack.c.l.b16 %v4786
        %v5633 = vunpack.c.h.b16 %v4786
        %v5634 = vunpack.c.l.b16 %v4787
        %v5635 = vunpack.c.h.b16 %v4787
        %v5636 = vunpack.c.l.b16 %v4788
        %v5637 = vunpack.c.h.b16 %v4788
        %v5638 = vunpack.c.l.b16 %v4789
        %v5639 = vunpack.c.h.b16 %v4789
        %v5640 = vunpack.c.l.b16 %v4790
        %v5641 = vunpack.c.h.b16 %v4790
        %v5642 = vunpack.c.l.b16 %v4791
        %v5643 = vunpack.c.h.b16 %v4791
        %v5644 = vunpack.c.l.b16 %v4792
        %v5645 = vunpack.c.h.b16 %v4792
        %v5646 = vunpack.c.l.b16 %v4793
        %v5647 = vunpack.c.h.b16 %v4793
        %v5648 = vunpack.c.l.b16 %v4794
        %v5649 = vunpack.c.h.b16 %v4794
        %v5650 = vunpack.c.l.b16 %v4795
        %v5651 = vunpack.c.h.b16 %v4795
        %v5652 = vunpack.c.l.b16 %v4796
        %v5653 = vunpack.c.h.b16 %v4796
        %v5654 = vunpack.c.l.b16 %v4797
        %v5655 = vunpack.c.h.b16 %v4797
        %v5656 = vunpack.c.l.b16 %v4798
        %v5657 = vunpack.c.h.b16 %v4798
        %v5658 = vunpack.c.l.b16 %v4799
        %v5659 = vunpack.c.h.b16 %v4799
        %v5660 = vunpack.c.l.b16 %v4800
        %v5661 = vunpack.c.h.b16 %v4800
        %v5662 = vunpack.c.l.b16 %v4801
        %v5663 = vunpack.c.h.b16 %v4801
        %v5664 = vunpack.c.l.b16 %v4802
        %v5665 = vunpack.c.h.b16 %v4802
        %v5666 = vunpack.c.l.b16 %v4803
        %v5667 = vunpack.c.h.b16 %v4803
        %v5668 = vunpack.c.l.b16 %v4804
        %v5669 = vunpack.c.h.b16 %v4804
        %v5670 = vunpack.c.l.b16 %v4805
        %v5671 = vunpack.c.h.b16 %v4805
        %v5672 = vunpack.c.l.b16 %v4806
        %v5673 = vunpack.c.h.b16 %v4806
        %v5674 = vunpack.c.l.b16 %v4807
        %v5675 = vunpack.c.h.b16 %v4807
        %v5676 = vunpack.c.l.b16 %v4808
        %v5677 = vunpack.c.h.b16 %v4808
        %v5678 = vunpack.c.l.b16 %v4809
        %v5679 = vunpack.c.h.b16 %v4809
        %v5680 = vunpack.c.l.b16 %v4810
        %v5681 = vunpack.c.h.b16 %v4810
        %v5682 = vunpack.c.l.b16 %v4811
        %v5683 = vunpack.c.h.b16 %v4811
        %v5684 = vunpack.c.l.b16 %v4812
        %v5685 = vunpack.c.h.b16 %v4812
        %v5686 = vunpack.c.l.b16 %v4813
        %v5687 = vunpack.c.h.b16 %v4813
        %v5688 = vunpack.c.l.b16 %v4814
        %v5689 = vunpack.c.h.b16 %v4814
        %v5690 = vunpack.c.l.b16 %v4815
        %v5691 = vunpack.c.h.b16 %v4815
        %v5692 = vunpack.c.l.b16 %v4816
        %v5693 = vunpack.c.h.b16 %v4816
        %v5694 = vunpack.c.l.b16 %v4817
        %v5695 = vunpack.c.h.b16 %v4817
        %v5696 = vunpack.c.l.b16 %v4818
        %v5697 = vunpack.c.h.b16 %v4818
        %v5698 = vunpack.c.l.b16 %v4819
        %v5699 = vunpack.c.h.b16 %v4819
        %v5700 = vunpack.c.l.b16 %v4820
        %v5701 = vunpack.c.h.b16 %v4820
        %v5702 = vunpack.c.l.b16 %v4821
        %v5703 = vunpack.c.h.b16 %v4821
        %v5704 = vunpack.c.l.b16 %v4822
        %v5705 = vunpack.c.h.b16 %v4822
        %v5706 = vunpack.c.l.b16 %v4823
        %v5707 = vunpack.c.h.b16 %v4823
        %v5708 = vunpack.c.l.b16 %v4824
        %v5709 = vunpack.c.h.b16 %v4824
        %v5710 = vunpack.c.l.b16 %v4825
        %v5711 = vunpack.c.h.b16 %v4825
        %v5712 = vunpack.c.l.b16 %v4826
        %v5713 = vunpack.c.h.b16 %v4826
        %v5714 = vunpack.c.l.b16 %v4827
        %v5715 = vunpack.c.h.b16 %v4827
        %v5716 = vunpack.c.l.b16 %v4828
        %v5717 = vunpack.c.h.b16 %v4828
        %v5718 = vunpack.c.l.b16 %v4829
        %v5719 = vunpack.c.h.b16 %v4829
        %v5720 = vunpack.c.l.b16 %v4830
        %v5721 = vunpack.c.h.b16 %v4830
        %v5722 = vunpack.c.l.b16 %v4831
        %v5723 = vunpack.c.h.b16 %v4831
        %v5724 = vunpack.c.l.b16 %v4832
        %v5725 = vunpack.c.h.b16 %v4832
        %v5726 = vunpack.c.l.b16 %v4833
        %v5727 = vunpack.c.h.b16 %v4833
        %v5728 = vunpack.c.l.b16 %v4834
        %v5729 = vunpack.c.h.b16 %v4834
        %v5730 = vunpack.c.l.b16 %v4835
        %v5731 = vunpack.c.h.b16 %v4835
        %v5732 = vunpack.c.l.b16 %v4836
        %v5733 = vunpack.c.h.b16 %v4836
        %v5734 = vunpack.c.l.b16 %v4837
        %v5735 = vunpack.c.h.b16 %v4837
        %v5736 = vunpack.c.l.b16 %v4838
        %v5737 = vunpack.c.h.b16 %v4838
        %v5738 = vunpack.c.l.b16 %v4839
        %v5739 = vunpack.c.h.b16 %v4839
        %v5740 = vunpack.c.l.b16 %v4840
        %v5741 = vunpack.c.h.b16 %v4840
        %v5742 = vunpack.c.l.b16 %v4841
        %v5743 = vunpack.c.h.b16 %v4841
        %v5744 = vunpack.c.l.b16 %v4842
        %v5745 = vunpack.c.h.b16 %v4842
        %v5746 = vunpack.c.l.b16 %v4843
        %v5747 = vunpack.c.h.b16 %v4843
        %v5748 = vunpack.c.l.b16 %v4844
        %v5749 = vunpack.c.h.b16 %v4844
        %v5750 = vunpack.c.l.b16 %v4845
        %v5751 = vunpack.c.h.b16 %v4845
        %v5752 = vunpack.c.l.b16 %v4846
        %v5753 = vunpack.c.h.b16 %v4846
        %v5754 = vunpack.c.l.b16 %v4847
        %v5755 = vunpack.c.h.b16 %v4847
        %v5756 = vunpack.c.l.b16 %v4848
        %v5757 = vunpack.c.h.b16 %v4848
        %v5758 = vunpack.c.l.b16 %v4849
        %v5759 = vunpack.c.h.b16 %v4849
        %v5760 = vunpack.c.l.b16 %v4850
        %v5761 = vunpack.c.h.b16 %v4850
        %v5762 = vunpack.c.l.b16 %v4851
        %v5763 = vunpack.c.h.b16 %v4851
        %v5764 = vunpack.c.l.b16 %v4852
        %v5765 = vunpack.c.h.b16 %v4852
        %v5766 = vunpack.c.l.b16 %v4853
        %v5767 = vunpack.c.h.b16 %v4853
        %v5768 = vunpack.c.l.b16 %v4854
        %v5769 = vunpack.c.h.b16 %v4854
        %v5770 = vunpack.c.l.b16 %v4855
        %v5771 = vunpack.c.h.b16 %v4855
        %v5772 = vunpack.c.l.b16 %v4856
        %v5773 = vunpack.c.h.b16 %v4856
        %v5774 = vunpack.c.l.b16 %v4857
        %v5775 = vunpack.c.h.b16 %v4857
        %v5776 = vunpack.c.l.b16 %v4858
        %v5777 = vunpack.c.h.b16 %v4858
        %v5778 = vunpack.c.l.b16 %v4859
        %v5779 = vunpack.c.h.b16 %v4859
        %v5780 = vunpack.c.l.b16 %v4860
        %v5781 = vunpack.c.h.b16 %v4860
        %v5782 = vunpack.c.l.b16 %v4861
        %v5783 = vunpack.c.h.b16 %v4861
        %v5784 = vunpack.c.l.b16 %v4862
        %v5785 = vunpack.c.h.b16 %v4862
        %v5786 = vunpack.c.l.b16 %v4863
        %v5787 = vunpack.c.h.b16 %v4863
        %v5788 = vunpack.c.l.b16 %v4864
        %v5789 = vunpack.c.h.b16 %v4864
        %v5790 = vunpack.c.l.b16 %v4865
        %v5791 = vunpack.c.h.b16 %v4865
        %v5792 = vunpack.c.l.b16 %v4866
        %v5793 = vunpack.c.h.b16 %v4866
        %v5794 = vunpack.c.l.b16 %v4867
        %v5795 = vunpack.c.h.b16 %v4867
        %v5796 = vunpack.c.l.b16 %v4868
        %v5797 = vunpack.c.h.b16 %v4868
        %v5798 = vunpack.c.l.b16 %v4869
        %v5799 = vunpack.c.h.b16 %v4869
        %v5800 = vpack.c.b16 %v5236, %v5224
        %v5801 = vpack.c.b16 %v5237, %v5225
        %v5802 = vpack.c.b16 %v5238, %v5226
        %v5803 = vpack.c.b16 %v5239, %v5227
        %v5804 = vpack.c.b16 %v5240, %v5228
        %v5805 = vpack.c.b16 %v5241, %v5229
        %v5806 = vpack.c.b16 %v5242, %v5230
        %v5807 = vpack.c.b16 %v5243, %v5231
        %v5808 = vpack.c.b16 %v5244, %v5232
        %v5809 = vpack.c.b16 %v5245, %v5233
        %v5810 = vpack.c.b16 %v5246, %v5234
        %v5811 = vpack.c.b16 %v5247, %v5235
        %v5812 = vpack.c.b16 %v5260, %v5248
        %v5813 = vpack.c.b16 %v5261, %v5249
        %v5814 = vpack.c.b16 %v5262, %v5250
        %v5815 = vpack.c.b16 %v5263, %v5251
        %v5816 = vpack.c.b16 %v5264, %v5252
        %v5817 = vpack.c.b16 %v5265, %v5253
        %v5818 = vpack.c.b16 %v5266, %v5254
        %v5819 = vpack.c.b16 %v5267, %v5255
        %v5820 = vpack.c.b16 %v5268, %v5256
        %v5821 = vpack.c.b16 %v5269, %v5257
        %v5822 = vpack.c.b16 %v5270, %v5258
        %v5823 = vpack.c.b16 %v5271, %v5259
        %v5824 = vpack.c.b16 %v5284, %v5272
        %v5825 = vpack.c.b16 %v5285, %v5273
        %v5826 = vpack.c.b16 %v5286, %v5274
        %v5827 = vpack.c.b16 %v5287, %v5275
        %v5828 = vpack.c.b16 %v5288, %v5276
        %v5829 = vpack.c.b16 %v5289, %v5277
        %v5830 = vpack.c.b16 %v5290, %v5278
        %v5831 = vpack.c.b16 %v5291, %v5279
        %v5832 = vpack.c.b16 %v5292, %v5280
        %v5833 = vpack.c.b16 %v5293, %v5281
        %v5834 = vpack.c.b16 %v5294, %v5282
        %v5835 = vpack.c.b16 %v5295, %v5283
        %v5836 = vpack.c.b16 %v5308, %v5296
        %v5837 = vpack.c.b16 %v5309, %v5297
        %v5838 = vpack.c.b16 %v5310, %v5298
        %v5839 = vpack.c.b16 %v5311, %v5299
        %v5840 = vpack.c.b16 %v5312, %v5300
        %v5841 = vpack.c.b16 %v5313, %v5301
        %v5842 = vpack.c.b16 %v5314, %v5302
        %v5843 = vpack.c.b16 %v5315, %v5303
        %v5844 = vpack.c.b16 %v5316, %v5304
        %v5845 = vpack.c.b16 %v5317, %v5305
        %v5846 = vpack.c.b16 %v5318, %v5306
        %v5847 = vpack.c.b16 %v5319, %v5307
        %v5848 = vpack.c.b16 %v5332, %v5320
        %v5849 = vpack.c.b16 %v5333, %v5321
        %v5850 = vpack.c.b16 %v5334, %v5322
        %v5851 = vpack.c.b16 %v5335, %v5323
        %v5852 = vpack.c.b16 %v5336, %v5324
        %v5853 = vpack.c.b16 %v5337, %v5325
        %v5854 = vpack.c.b16 %v5338, %v5326
        %v5855 = vpack.c.b16 %v5339, %v5327
        %v5856 = vpack.c.b16 %v5340, %v5328
        %v5857 = vpack.c.b16 %v5341, %v5329
        %v5858 = vpack.c.b16 %v5342, %v5330
        %v5859 = vpack.c.b16 %v5343, %v5331
        %v5860 = vpack.c.b16 %v5356, %v5344
        %v5861 = vpack.c.b16 %v5357, %v5345
        %v5862 = vpack.c.b16 %v5358, %v5346
        %v5863 = vpack.c.b16 %v5359, %v5347
        %v5864 = vpack.c.b16 %v5360, %v5348
        %v5865 = vpack.c.b16 %v5361, %v5349
        %v5866 = vpack.c.b16 %v5362, %v5350
        %v5867 = vpack.c.b16 %v5363, %v5351
        %v5868 = vpack.c.b16 %v5364, %v5352
        %v5869 = vpack.c.b16 %v5365, %v5353
        %v5870 = vpack.c.b16 %v5366, %v5354
        %v5871 = vpack.c.b16 %v5367, %v5355
        %v5872 = vpack.c.b16 %v5380, %v5368
        %v5873 = vpack.c.b16 %v5381, %v5369
        %v5874 = vpack.c.b16 %v5382, %v5370
        %v5875 = vpack.c.b16 %v5383, %v5371
        %v5876 = vpack.c.b16 %v5384, %v5372
        %v5877 = vpack.c.b16 %v5385, %v5373
        %v5878 = vpack.c.b16 %v5386, %v5374
        %v5879 = vpack.c.b16 %v5387, %v5375
        %v5880 = vpack.c.b16 %v5388, %v5376
        %v5881 = vpack.c.b16 %v5389, %v5377
        %v5882 = vpack.c.b16 %v5390, %v5378
        %v5883 = vpack.c.b16 %v5391, %v5379
        %v5884 = vpack.c.b16 %v5404, %v5392
        %v5885 = vpack.c.b16 %v5405, %v5393
        %v5886 = vpack.c.b16 %v5406, %v5394
        %v5887 = vpack.c.b16 %v5407, %v5395
        %v5888 = vpack.c.b16 %v5408, %v5396
        %v5889 = vpack.c.b16 %v5409, %v5397
        %v5890 = vpack.c.b16 %v5410, %v5398
        %v5891 = vpack.c.b16 %v5411, %v5399
        %v5892 = vpack.c.b16 %v5412, %v5400
        %v5893 = vpack.c.b16 %v5413, %v5401
        %v5894 = vpack.c.b16 %v5414, %v5402
        %v5895 = vpack.c.b16 %v5415, %v5403
        %v5896 = vpack.c.b16 %v5428, %v5416
        %v5897 = vpack.c.b16 %v5429, %v5417
        %v5898 = vpack.c.b16 %v5430, %v5418
        %v5899 = vpack.c.b16 %v5431, %v5419
        %v5900 = vpack.c.b16 %v5432, %v5420
        %v5901 = vpack.c.b16 %v5433, %v5421
        %v5902 = vpack.c.b16 %v5434, %v5422
        %v5903 = vpack.c.b16 %v5435, %v5423
        %v5904 = vpack.c.b16 %v5436, %v5424
        %v5905 = vpack.c.b16 %v5437, %v5425
        %v5906 = vpack.c.b16 %v5438, %v5426
        %v5907 = vpack.c.b16 %v5439, %v5427
        %v5908 = vpack.c.b16 %v5452, %v5440
        %v5909 = vpack.c.b16 %v5453, %v5441
        %v5910 = vpack.c.b16 %v5454, %v5442
        %v5911 = vpack.c.b16 %v5455, %v5443
        %v5912 = vpack.c.b16 %v5456, %v5444
        %v5913 = vpack.c.b16 %v5457, %v5445
        %v5914 = vpack.c.b16 %v5458, %v5446
        %v5915 = vpack.c.b16 %v5459, %v5447
        %v5916 = vpack.c.b16 %v5460, %v5448
        %v5917 = vpack.c.b16 %v5461, %v5449
        %v5918 = vpack.c.b16 %v5462, %v5450
        %v5919 = vpack.c.b16 %v5463, %v5451
        %v5920 = vpack.c.b16 %v5476, %v5464
        %v5921 = vpack.c.b16 %v5477, %v5465
        %v5922 = vpack.c.b16 %v5478, %v5466
        %v5923 = vpack.c.b16 %v5479, %v5467
        %v5924 = vpack.c.b16 %v5480, %v5468
        %v5925 = vpack.c.b16 %v5481, %v5469
        %v5926 = vpack.c.b16 %v5482, %v5470
        %v5927 = vpack.c.b16 %v5483, %v5471
        %v5928 = vpack.c.b16 %v5484, %v5472
        %v5929 = vpack.c.b16 %v5485, %v5473
        %v5930 = vpack.c.b16 %v5486, %v5474
        %v5931 = vpack.c.b16 %v5487, %v5475
        %v5932 = vpack.c.b16 %v5500, %v5488
        %v5933 = vpack.c.b16 %v5501, %v5489
        %v5934 = vpack.c.b16 %v5502, %v5490
        %v5935 = vpack.c.b16 %v5503, %v5491
        %v5936 = vpack.c.b16 %v5504, %v5492
        %v5937 = vpack.c.b16 %v5505, %v5493
        %v5938 = vpack.c.b16 %v5506, %v5494
        %v5939 = vpack.c.b16 %v5507, %v5495
        %v5940 = vpack.c.b16 %v5508, %v5496
        %v5941 = vpack.c.b16 %v5509, %v5497
        %v5942 = vpack.c.b16 %v5510, %v5498
        %v5943 = vpack.c.b16 %v5511, %v5499
        %v5944 = vpack.c.b16 %v5524, %v5512
        %v5945 = vpack.c.b16 %v5525, %v5513
        %v5946 = vpack.c.b16 %v5526, %v5514
        %v5947 = vpack.c.b16 %v5527, %v5515
        %v5948 = vpack.c.b16 %v5528, %v5516
        %v5949 = vpack.c.b16 %v5529, %v5517
        %v5950 = vpack.c.b16 %v5530, %v5518
        %v5951 = vpack.c.b16 %v5531, %v5519
        %v5952 = vpack.c.b16 %v5532, %v5520
        %v5953 = vpack.c.b16 %v5533, %v5521
        %v5954 = vpack.c.b16 %v5534, %v5522
        %v5955 = vpack.c.b16 %v5535, %v5523
        %v5956 = vpack.c.b16 %v5548, %v5536
        %v5957 = vpack.c.b16 %v5549, %v5537
        %v5958 = vpack.c.b16 %v5550, %v5538
        %v5959 = vpack.c.b16 %v5551, %v5539
        %v5960 = vpack.c.b16 %v5552, %v5540
        %v5961 = vpack.c.b16 %v5553, %v5541
        %v5962 = vpack.c.b16 %v5554, %v5542
        %v5963 = vpack.c.b16 %v5555, %v5543
        %v5964 = vpack.c.b16 %v5556, %v5544
        %v5965 = vpack.c.b16 %v5557, %v5545
        %v5966 = vpack.c.b16 %v5558, %v5546
        %v5967 = vpack.c.b16 %v5559, %v5547
        %v5968 = vpack.c.b16 %v5572, %v5560
        %v5969 = vpack.c.b16 %v5573, %v5561
        %v5970 = vpack.c.b16 %v5574, %v5562
        %v5971 = vpack.c.b16 %v5575, %v5563
        %v5972 = vpack.c.b16 %v5576, %v5564
        %v5973 = vpack.c.b16 %v5577, %v5565
        %v5974 = vpack.c.b16 %v5578, %v5566
        %v5975 = vpack.c.b16 %v5579, %v5567
        %v5976 = vpack.c.b16 %v5580, %v5568
        %v5977 = vpack.c.b16 %v5581, %v5569
        %v5978 = vpack.c.b16 %v5582, %v5570
        %v5979 = vpack.c.b16 %v5583, %v5571
        %v5980 = vpack.c.b16 %v5596, %v5584
        %v5981 = vpack.c.b16 %v5597, %v5585
        %v5982 = vpack.c.b16 %v5598, %v5586
        %v5983 = vpack.c.b16 %v5599, %v5587
        %v5984 = vpack.c.b16 %v5600, %v5588
        %v5985 = vpack.c.b16 %v5601, %v5589
        %v5986 = vpack.c.b16 %v5602, %v5590
        %v5987 = vpack.c.b16 %v5603, %v5591
        %v5988 = vpack.c.b16 %v5604, %v5592
        %v5989 = vpack.c.b16 %v5605, %v5593
        %v5990 = vpack.c.b16 %v5606, %v5594
        %v5991 = vpack.c.b16 %v5607, %v5595
        %v5992 = vpack.c.b16 %v5620, %v5608
        %v5993 = vpack.c.b16 %v5621, %v5609
        %v5994 = vpack.c.b16 %v5622, %v5610
        %v5995 = vpack.c.b16 %v5623, %v5611
        %v5996 = vpack.c.b16 %v5624, %v5612
        %v5997 = vpack.c.b16 %v5625, %v5613
        %v5998 = vpack.c.b16 %v5626, %v5614
        %v5999 = vpack.c.b16 %v5627, %v5615
        %v6000 = vpack.c.b16 %v5628, %v5616
        %v6001 = vpack.c.b16 %v5629, %v5617
        %v6002 = vpack.c.b16 %v5630, %v5618
        %v6003 = vpack.c.b16 %v5631, %v5619
        %v6004 = vpack.c.b16 %v5644, %v5632
        %v6005 = vpack.c.b16 %v5645, %v5633
        %v6006 = vpack.c.b16 %v5646, %v5634
        %v6007 = vpack.c.b16 %v5647, %v5635
        %v6008 = vpack.c.b16 %v5648, %v5636
        %v6009 = vpack.c.b16 %v5649, %v5637
        %v6010 = vpack.c.b16 %v5650, %v5638
        %v6011 = vpack.c.b16 %v5651, %v5639
        %v6012 = vpack.c.b16 %v5652, %v5640
        %v6013 = vpack.c.b16 %v5653, %v5641
        %v6014 = vpack.c.b16 %v5654, %v5642
        %v6015 = vpack.c.b16 %v5655, %v5643
        %v6016 = vpack.c.b16 %v5668, %v5656
        %v6017 = vpack.c.b16 %v5669, %v5657
        %v6018 = vpack.c.b16 %v5670, %v5658
        %v6019 = vpack.c.b16 %v5671, %v5659
        %v6020 = vpack.c.b16 %v5672, %v5660
        %v6021 = vpack.c.b16 %v5673, %v5661
        %v6022 = vpack.c.b16 %v5674, %v5662
        %v6023 = vpack.c.b16 %v5675, %v5663
        %v6024 = vpack.c.b16 %v5676, %v5664
        %v6025 = vpack.c.b16 %v5677, %v5665
        %v6026 = vpack.c.b16 %v5678, %v5666
        %v6027 = vpack.c.b16 %v5679, %v5667
        %v6028 = vpack.c.b16 %v5692, %v5680
        %v6029 = vpack.c.b16 %v5693, %v5681
        %v6030 = vpack.c.b16 %v5694, %v5682
        %v6031 = vpack.c.b16 %v5695, %v5683
        %v6032 = vpack.c.b16 %v5696, %v5684
        %v6033 = vpack.c.b16 %v5697, %v5685
        %v6034 = vpack.c.b16 %v5698, %v5686
        %v6035 = vpack.c.b16 %v5699, %v5687
        %v6036 = vpack.c.b16 %v5700, %v5688
        %v6037 = vpack.c.b16 %v5701, %v5689
        %v6038 = vpack.c.b16 %v5702, %v5690
        %v6039 = vpack.c.b16 %v5703, %v5691
        %v6040 = vpack.c.b16 %v5716, %v5704
        %v6041 = vpack.c.b16 %v5717, %v5705
        %v6042 = vpack.c.b16 %v5718, %v5706
        %v6043 = vpack.c.b16 %v5719, %v5707
        %v6044 = vpack.c.b16 %v5720, %v5708
        %v6045 = vpack.c.b16 %v5721, %v5709
        %v6046 = vpack.c.b16 %v5722, %v5710
        %v6047 = vpack.c.b16 %v5723, %v5711
        %v6048 = vpack.c.b16 %v5724, %v5712
        %v6049 = vpack.c.b16 %v5725, %v5713
        %v6050 = vpack.c.b16 %v5726, %v5714
        %v6051 = vpack.c.b16 %v5727, %v5715
        %v6052 = vpack.c.b16 %v5740, %v5728
        %v6053 = vpack.c.b16 %v5741, %v5729
        %v6054 = vpack.c.b16 %v5742, %v5730
        %v6055 = vpack.c.b16 %v5743, %v5731
        %v6056 = vpack.c.b16 %v5744, %v5732
        %v6057 = vpack.c.b16 %v5745, %v5733
        %v6058 = vpack.c.b16 %v5746, %v5734
        %v6059 = vpack.c.b16 %v5747, %v5735
        %v6060 = vpack.c.b16 %v5748, %v5736
        %v6061 = vpack.c.b16 %v5749, %v5737
        %v6062 = vpack.c.b16 %v5750, %v5738
        %v6063 = vpack.c.b16 %v5751, %v5739
        %v6064 = vpack.c.b16 %v5764, %v5752
        %v6065 = vpack.c.b16 %v5765, %v5753
        %v6066 = vpack.c.b16 %v5766, %v5754
        %v6067 = vpack.c.b16 %v5767, %v5755
        %v6068 = vpack.c.b16 %v5768, %v5756
        %v6069 = vpack.c.b16 %v5769, %v5757
        %v6070 = vpack.c.b16 %v5770, %v5758
        %v6071 = vpack.c.b16 %v5771, %v5759
        %v6072 = vpack.c.b16 %v5772, %v5760
        %v6073 = vpack.c.b16 %v5773, %v5761
        %v6074 = vpack.c.b16 %v5774, %v5762
        %v6075 = vpack.c.b16 %v5775, %v5763
        %v6076 = vpack.c.b16 %v5788, %v5776
        %v6077 = vpack.c.b16 %v5789, %v5777
        %v6078 = vpack.c.b16 %v5790, %v5778
        %v6079 = vpack.c.b16 %v5791, %v5779
        %v6080 = vpack.c.b16 %v5792, %v5780
        %v6081 = vpack.c.b16 %v5793, %v5781
        %v6082 = vpack.c.b16 %v5794, %v5782
        %v6083 = vpack.c.b16 %v5795, %v5783
        %v6084 = vpack.c.b16 %v5796, %v5784
        %v6085 = vpack.c.b16 %v5797, %v5785
        %v6086 = vpack.c.b16 %v5798, %v5786
        %v6087 = vpack.c.b16 %v5799, %v5787
        %6376 = vmatprep.subr.bf16.mxu0 %v5885
        %6377 = vmatpush1.bf16.msra.mxu0 %v5884
        %6378 = vmatprep.subr.bf16.mxu0 %v5873
        %6379 = vmatpush1.bf16.msra.mxu0 %v5872
        %6380 = vmatprep.subr.bf16.mxu0 %v5861
        %6381 = vmatpush1.bf16.msra.mxu0 %v5860
        %6382 = vmatprep.subr.bf16.mxu0 %v5849
        %6383 = vmatpush1.bf16.msra.mxu0 %v5848
        %6384 = vmatprep.subr.bf16.mxu0 %v5837
        %6385 = vmatpush1.bf16.msra.mxu0 %v5836
        %6386 = vmatprep.subr.bf16.mxu0 %v5825
        %6387 = vmatpush1.bf16.msra.mxu0 %v5824
        %6388 = vmatprep.subr.bf16.mxu0 %v5813
        %6389 = vmatpush1.bf16.msra.mxu0 %v5812
        %6390 = vmatprep.subr.bf16.mxu0 %v5801
        %6391 = vmatpush1.bf16.msra.mxu0 %v5800
        %6392 = vmatprep.subr.bf16.mxu0 %v5981
        %6393 = vmatpush2.bf16.msra.mxu0 %v5980
        %6394 = vmatprep.subr.bf16.mxu0 %v5969
        %6395 = vmatpush2.bf16.msra.mxu0 %v5968
        %6396 = vmatprep.subr.bf16.mxu0 %v5957
        %6397 = vmatpush2.bf16.msra.mxu0 %v5956
        %6398 = vmatprep.subr.bf16.mxu0 %v5945
        %6399 = vmatpush2.bf16.msra.mxu0 %v5944
        %6400 = vmatprep.subr.bf16.mxu0 %v5933
        %6401 = vmatpush2.bf16.msra.mxu0 %v5932
        %6402 = vmatprep.subr.bf16.mxu0 %v5921
        %6403 = vmatpush2.bf16.msra.mxu0 %v5920
        %6404 = vmatprep.subr.bf16.mxu0 %v5909
        %6405 = vmatpush2.bf16.msra.mxu0 %v5908
        %6406 = vmatprep.subr.bf16.mxu0 %v5897
        %6407 = vmatpush2.bf16.msra.mxu0 %v5896
        %6408 = vmatprep.mubr.bf16.mxu0 %v4578
        %6409 = vmatmul.mubr.bf16.gmra.mxu0 %v4577
        %v6410 = vpop.f32.mrf.mxu0
        %v6411 = vadd.f32 %v4879, %v6410
        %v6412 = vpop.f32.mrf.mxu0
        %v6413 = vadd.f32 %v4883, %v6412
        %v6414 = vpop.f32.mrf.mxu0
        %v6415 = vpop.f32.mrf.mxu0
        %6416 = vdwg.mxu0
        %6417 = vmatprep.subr.bf16.mxu0 %v6077
        %6418 = vmatpush1.bf16.msra.mxu0 %v6076
        %6419 = vmatprep.subr.bf16.mxu0 %v6065
        %6420 = vmatpush1.bf16.msra.mxu0 %v6064
        %6421 = vmatprep.subr.bf16.mxu0 %v6053
        %6422 = vmatpush1.bf16.msra.mxu0 %v6052
        %6423 = vmatprep.subr.bf16.mxu0 %v6041
        %6424 = vmatpush1.bf16.msra.mxu0 %v6040
        %6425 = vmatprep.subr.bf16.mxu0 %v6029
        %6426 = vmatpush1.bf16.msra.mxu0 %v6028
        %6427 = vmatprep.subr.bf16.mxu0 %v6017
        %6428 = vmatpush1.bf16.msra.mxu0 %v6016
        %6429 = vmatprep.subr.bf16.mxu0 %v6005
        %6430 = vmatpush1.bf16.msra.mxu0 %v6004
        %6431 = vmatprep.subr.bf16.mxu0 %v5993
        %6432 = vmatpush1.bf16.msra.mxu0 %v5992
        %6433 = vmatprep.subr.bf16.mxu0 0
        %6434 = vmatpush2.bf16.msra.mxu0 0
        %6435 = vmatprep.subr.bf16.mxu0 0
        %6436 = vmatpush2.bf16.msra.mxu0 0
        %6437 = vmatprep.subr.bf16.mxu0 0
        %6438 = vmatpush2.bf16.msra.mxu0 0
        %6439 = vmatprep.subr.bf16.mxu0 0
        %6440 = vmatpush2.bf16.msra.mxu0 0
        %6441 = vmatprep.subr.bf16.mxu0 0
        %6442 = vmatpush2.bf16.msra.mxu0 0
        %6443 = vmatprep.subr.bf16.mxu0 0
        %6444 = vmatpush2.bf16.msra.mxu0 0
        %6445 = vmatprep.subr.bf16.mxu0 0
        %6446 = vmatpush2.bf16.msra.mxu0 0
        %6447 = vmatprep.subr.bf16.mxu0 0
        %6448 = vmatpush2.bf16.msra.mxu0 0
        %6449 = vmatprep.mubr.bf16.mxu0 0
        %6450 = vmatmul.mubr.bf16.gmra.mxu0 %v4579
        %v6451 = vpop.f32.mrf.mxu0
        %v6452 = vadd.f32 %v6411, %v6451
        %v6453 = vpop.f32.mrf.mxu0
        %v6454 = vadd.f32 %v6413, %v6453
        %v6455 = vpop.f32.mrf.mxu0
        %v6456 = vpop.f32.mrf.mxu0
        %6457 = vdwg.mxu0
        %6458 = vmatprep.subr.bf16.mxu0 %v5887
        %6459 = vmatpush1.bf16.msra.mxu0 %v5886
        %6460 = vmatprep.subr.bf16.mxu0 %v5875
        %6461 = vmatpush1.bf16.msra.mxu0 %v5874
        %6462 = vmatprep.subr.bf16.mxu0 %v5863
        %6463 = vmatpush1.bf16.msra.mxu0 %v5862
        %6464 = vmatprep.subr.bf16.mxu0 %v5851
        %6465 = vmatpush1.bf16.msra.mxu0 %v5850
        %6466 = vmatprep.subr.bf16.mxu0 %v5839
        %6467 = vmatpush1.bf16.msra.mxu0 %v5838
        %6468 = vmatprep.subr.bf16.mxu0 %v5827
        %6469 = vmatpush1.bf16.msra.mxu0 %v5826
        %6470 = vmatprep.subr.bf16.mxu0 %v5815
        %6471 = vmatpush1.bf16.msra.mxu0 %v5814
        %6472 = vmatprep.subr.bf16.mxu0 %v5803
        %6473 = vmatpush1.bf16.msra.mxu0 %v5802
        %6474 = vmatprep.subr.bf16.mxu0 %v5983
        %6475 = vmatpush2.bf16.msra.mxu0 %v5982
        %6476 = vmatprep.subr.bf16.mxu0 %v5971
        %6477 = vmatpush2.bf16.msra.mxu0 %v5970
        %6478 = vmatprep.subr.bf16.mxu0 %v5959
        %6479 = vmatpush2.bf16.msra.mxu0 %v5958
        %6480 = vmatprep.subr.bf16.mxu0 %v5947
        %6481 = vmatpush2.bf16.msra.mxu0 %v5946
        %6482 = vmatprep.subr.bf16.mxu0 %v5935
        %6483 = vmatpush2.bf16.msra.mxu0 %v5934
        %6484 = vmatprep.subr.bf16.mxu0 %v5923
        %6485 = vmatpush2.bf16.msra.mxu0 %v5922
        %6486 = vmatprep.subr.bf16.mxu0 %v5911
        %6487 = vmatpush2.bf16.msra.mxu0 %v5910
        %6488 = vmatprep.subr.bf16.mxu0 %v5899
        %6489 = vmatpush2.bf16.msra.mxu0 %v5898
        %6490 = vmatprep.mubr.bf16.mxu0 %v4578
        %6491 = vmatmul.mubr.bf16.gmra.mxu0 %v4577
        %v6492 = vpop.f32.mrf.mxu0
        %v6493 = vadd.f32 %v4887, %v6492
        %v6494 = vpop.f32.mrf.mxu0
        %v6495 = vadd.f32 %v4891, %v6494
        %v6496 = vpop.f32.mrf.mxu0
        %v6497 = vpop.f32.mrf.mxu0
        %6498 = vdwg.mxu0
        %6499 = vmatprep.subr.bf16.mxu0 %v6079
        %6500 = vmatpush1.bf16.msra.mxu0 %v6078
        %6501 = vmatprep.subr.bf16.mxu0 %v6067
        %6502 = vmatpush1.bf16.msra.mxu0 %v6066
        %6503 = vmatprep.subr.bf16.mxu0 %v6055
        %6504 = vmatpush1.bf16.msra.mxu0 %v6054
        %6505 = vmatprep.subr.bf16.mxu0 %v6043
        %6506 = vmatpush1.bf16.msra.mxu0 %v6042
        %6507 = vmatprep.subr.bf16.mxu0 %v6031
        %6508 = vmatpush1.bf16.msra.mxu0 %v6030
        %6509 = vmatprep.subr.bf16.mxu0 %v6019
        %6510 = vmatpush1.bf16.msra.mxu0 %v6018
        %6511 = vmatprep.subr.bf16.mxu0 %v6007
        %6512 = vmatpush1.bf16.msra.mxu0 %v6006
        %6513 = vmatprep.subr.bf16.mxu0 %v5995
        %6514 = vmatpush1.bf16.msra.mxu0 %v5994
        %6515 = vmatprep.subr.bf16.mxu0 0
        %6516 = vmatpush2.bf16.msra.mxu0 0
        %6517 = vmatprep.subr.bf16.mxu0 0
        %6518 = vmatpush2.bf16.msra.mxu0 0
        %6519 = vmatprep.subr.bf16.mxu0 0
        %6520 = vmatpush2.bf16.msra.mxu0 0
        %6521 = vmatprep.subr.bf16.mxu0 0
        %6522 = vmatpush2.bf16.msra.mxu0 0
        %6523 = vmatprep.subr.bf16.mxu0 0
        %6524 = vmatpush2.bf16.msra.mxu0 0
        %6525 = vmatprep.subr.bf16.mxu0 0
        %6526 = vmatpush2.bf16.msra.mxu0 0
        %6527 = vmatprep.subr.bf16.mxu0 0
        %6528 = vmatpush2.bf16.msra.mxu0 0
        %6529 = vmatprep.subr.bf16.mxu0 0
        %6530 = vmatpush2.bf16.msra.mxu0 0
        %6531 = vmatprep.mubr.bf16.mxu0 0
        %6532 = vmatmul.mubr.bf16.gmra.mxu0 %v4579
        %v6533 = vpop.f32.mrf.mxu0
        %v6534 = vadd.f32 %v6493, %v6533
        %v6535 = vpop.f32.mrf.mxu0
        %v6536 = vadd.f32 %v6495, %v6535
        %v6537 = vpop.f32.mrf.mxu0
        %v6538 = vpop.f32.mrf.mxu0
        %6539 = vdwg.mxu0
        %6540 = vmatprep.subr.bf16.mxu0 %v5889
        %6541 = vmatpush1.bf16.msra.mxu0 %v5888
        %6542 = vmatprep.subr.bf16.mxu0 %v5877
        %6543 = vmatpush1.bf16.msra.mxu0 %v5876
        %6544 = vmatprep.subr.bf16.mxu0 %v5865
        %6545 = vmatpush1.bf16.msra.mxu0 %v5864
        %6546 = vmatprep.subr.bf16.mxu0 %v5853
        %6547 = vmatpush1.bf16.msra.mxu0 %v5852
        %6548 = vmatprep.subr.bf16.mxu0 %v5841
        %6549 = vmatpush1.bf16.msra.mxu0 %v5840
        %6550 = vmatprep.subr.bf16.mxu0 %v5829
        %6551 = vmatpush1.bf16.msra.mxu0 %v5828
        %6552 = vmatprep.subr.bf16.mxu0 %v5817
        %6553 = vmatpush1.bf16.msra.mxu0 %v5816
        %6554 = vmatprep.subr.bf16.mxu0 %v5805
        %6555 = vmatpush1.bf16.msra.mxu0 %v5804
        %6556 = vmatprep.subr.bf16.mxu0 %v5985
        %6557 = vmatpush2.bf16.msra.mxu0 %v5984
        %6558 = vmatprep.subr.bf16.mxu0 %v5973
        %6559 = vmatpush2.bf16.msra.mxu0 %v5972
        %6560 = vmatprep.subr.bf16.mxu0 %v5961
        %6561 = vmatpush2.bf16.msra.mxu0 %v5960
        %6562 = vmatprep.subr.bf16.mxu0 %v5949
        %6563 = vmatpush2.bf16.msra.mxu0 %v5948
        %6564 = vmatprep.subr.bf16.mxu0 %v5937
        %6565 = vmatpush2.bf16.msra.mxu0 %v5936
        %6566 = vmatprep.subr.bf16.mxu0 %v5925
        %6567 = vmatpush2.bf16.msra.mxu0 %v5924
        %6568 = vmatprep.subr.bf16.mxu0 %v5913
        %6569 = vmatpush2.bf16.msra.mxu0 %v5912
        %6570 = vmatprep.subr.bf16.mxu0 %v5901
        %6571 = vmatpush2.bf16.msra.mxu0 %v5900
        %6572 = vmatprep.mubr.bf16.mxu0 %v4578
        %6573 = vmatmul.mubr.bf16.gmra.mxu0 %v4577
        %v6574 = vpop.f32.mrf.mxu0
        %v6575 = vadd.f32 %v4895, %v6574
        %v6576 = vpop.f32.mrf.mxu0
        %v6577 = vadd.f32 %v4899, %v6576
        %v6578 = vpop.f32.mrf.mxu0
        %v6579 = vpop.f32.mrf.mxu0
        %6580 = vdwg.mxu0
        %6581 = vmatprep.subr.bf16.mxu0 %v6081
        %6582 = vmatpush1.bf16.msra.mxu0 %v6080
        %6583 = vmatprep.subr.bf16.mxu0 %v6069
        %6584 = vmatpush1.bf16.msra.mxu0 %v6068
        %6585 = vmatprep.subr.bf16.mxu0 %v6057
        %6586 = vmatpush1.bf16.msra.mxu0 %v6056
        %6587 = vmatprep.subr.bf16.mxu0 %v6045
        %6588 = vmatpush1.bf16.msra.mxu0 %v6044
        %6589 = vmatprep.subr.bf16.mxu0 %v6033
        %6590 = vmatpush1.bf16.msra.mxu0 %v6032
        %6591 = vmatprep.subr.bf16.mxu0 %v6021
        %6592 = vmatpush1.bf16.msra.mxu0 %v6020
        %6593 = vmatprep.subr.bf16.mxu0 %v6009
        %6594 = vmatpush1.bf16.msra.mxu0 %v6008
        %6595 = vmatprep.subr.bf16.mxu0 %v5997
        %6596 = vmatpush1.bf16.msra.mxu0 %v5996
        %6597 = vmatprep.subr.bf16.mxu0 0
        %6598 = vmatpush2.bf16.msra.mxu0 0
        %6599 = vmatprep.subr.bf16.mxu0 0
        %6600 = vmatpush2.bf16.msra.mxu0 0
        %6601 = vmatprep.subr.bf16.mxu0 0
        %6602 = vmatpush2.bf16.msra.mxu0 0
        %6603 = vmatprep.subr.bf16.mxu0 0
        %6604 = vmatpush2.bf16.msra.mxu0 0
        %6605 = vmatprep.subr.bf16.mxu0 0
        %6606 = vmatpush2.bf16.msra.mxu0 0
        %6607 = vmatprep.subr.bf16.mxu0 0
        %6608 = vmatpush2.bf16.msra.mxu0 0
        %6609 = vmatprep.subr.bf16.mxu0 0
        %6610 = vmatpush2.bf16.msra.mxu0 0
        %6611 = vmatprep.subr.bf16.mxu0 0
        %6612 = vmatpush2.bf16.msra.mxu0 0
        %6613 = vmatprep.mubr.bf16.mxu0 0
        %6614 = vmatmul.mubr.bf16.gmra.mxu0 %v4579
        %v6615 = vpop.f32.mrf.mxu0
        %v6616 = vadd.f32 %v6575, %v6615
        %v6617 = vpop.f32.mrf.mxu0
        %v6618 = vadd.f32 %v6577, %v6617
        %v6619 = vpop.f32.mrf.mxu0
        %v6620 = vpop.f32.mrf.mxu0
        %6621 = vdwg.mxu0
        %6622 = vmatprep.subr.bf16.mxu0 %v5891
        %6623 = vmatpush1.bf16.msra.mxu0 %v5890
        %6624 = vmatprep.subr.bf16.mxu0 %v5879
        %6625 = vmatpush1.bf16.msra.mxu0 %v5878
        %6626 = vmatprep.subr.bf16.mxu0 %v5867
        %6627 = vmatpush1.bf16.msra.mxu0 %v5866
        %6628 = vmatprep.subr.bf16.mxu0 %v5855
        %6629 = vmatpush1.bf16.msra.mxu0 %v5854
        %6630 = vmatprep.subr.bf16.mxu0 %v5843
        %6631 = vmatpush1.bf16.msra.mxu0 %v5842
        %6632 = vmatprep.subr.bf16.mxu0 %v5831
        %6633 = vmatpush1.bf16.msra.mxu0 %v5830
        %6634 = vmatprep.subr.bf16.mxu0 %v5819
        %6635 = vmatpush1.bf16.msra.mxu0 %v5818
        %6636 = vmatprep.subr.bf16.mxu0 %v5807
        %6637 = vmatpush1.bf16.msra.mxu0 %v5806
        %6638 = vmatprep.subr.bf16.mxu0 %v5987
        %6639 = vmatpush2.bf16.msra.mxu0 %v5986
        %6640 = vmatprep.subr.bf16.mxu0 %v5975
        %6641 = vmatpush2.bf16.msra.mxu0 %v5974
        %6642 = vmatprep.subr.bf16.mxu0 %v5963
        %6643 = vmatpush2.bf16.msra.mxu0 %v5962
        %6644 = vmatprep.subr.bf16.mxu0 %v5951
        %6645 = vmatpush2.bf16.msra.mxu0 %v5950
        %6646 = vmatprep.subr.bf16.mxu0 %v5939
        %6647 = vmatpush2.bf16.msra.mxu0 %v5938
        %6648 = vmatprep.subr.bf16.mxu0 %v5927
        %6649 = vmatpush2.bf16.msra.mxu0 %v5926
        %6650 = vmatprep.subr.bf16.mxu0 %v5915
        %6651 = vmatpush2.bf16.msra.mxu0 %v5914
        %6652 = vmatprep.subr.bf16.mxu0 %v5903
        %6653 = vmatpush2.bf16.msra.mxu0 %v5902
        %6654 = vmatprep.mubr.bf16.mxu0 %v4578
        %6655 = vmatmul.mubr.bf16.gmra.mxu0 %v4577
        %v6656 = vpop.f32.mrf.mxu0
        %v6657 = vadd.f32 %v4903, %v6656
        %v6658 = vpop.f32.mrf.mxu0
        %v6659 = vadd.f32 %v4907, %v6658
        %v6660 = vpop.f32.mrf.mxu0
        %v6661 = vpop.f32.mrf.mxu0
        %6662 = vdwg.mxu0
        %6663 = vmatprep.subr.bf16.mxu0 %v6083
        %6664 = vmatpush1.bf16.msra.mxu0 %v6082
        %6665 = vmatprep.subr.bf16.mxu0 %v6071
        %6666 = vmatpush1.bf16.msra.mxu0 %v6070
        %6667 = vmatprep.subr.bf16.mxu0 %v6059
        %6668 = vmatpush1.bf16.msra.mxu0 %v6058
        %6669 = vmatprep.subr.bf16.mxu0 %v6047
        %6670 = vmatpush1.bf16.msra.mxu0 %v6046
        %6671 = vmatprep.subr.bf16.mxu0 %v6035
        %6672 = vmatpush1.bf16.msra.mxu0 %v6034
        %6673 = vmatprep.subr.bf16.mxu0 %v6023
        %6674 = vmatpush1.bf16.msra.mxu0 %v6022
        %6675 = vmatprep.subr.bf16.mxu0 %v6011
        %6676 = vmatpush1.bf16.msra.mxu0 %v6010
        %6677 = vmatprep.subr.bf16.mxu0 %v5999
        %6678 = vmatpush1.bf16.msra.mxu0 %v5998
        %6679 = vmatprep.subr.bf16.mxu0 0
        %6680 = vmatpush2.bf16.msra.mxu0 0
        %6681 = vmatprep.subr.bf16.mxu0 0
        %6682 = vmatpush2.bf16.msra.mxu0 0
        %6683 = vmatprep.subr.bf16.mxu0 0
        %6684 = vmatpush2.bf16.msra.mxu0 0
        %6685 = vmatprep.subr.bf16.mxu0 0
        %6686 = vmatpush2.bf16.msra.mxu0 0
        %6687 = vmatprep.subr.bf16.mxu0 0
        %6688 = vmatpush2.bf16.msra.mxu0 0
        %6689 = vmatprep.subr.bf16.mxu0 0
        %6690 = vmatpush2.bf16.msra.mxu0 0
        %6691 = vmatprep.subr.bf16.mxu0 0
        %6692 = vmatpush2.bf16.msra.mxu0 0
        %6693 = vmatprep.subr.bf16.mxu0 0
        %6694 = vmatpush2.bf16.msra.mxu0 0
        %6695 = vmatprep.mubr.bf16.mxu0 0
        %6696 = vmatmul.mubr.bf16.gmra.mxu0 %v4579
        %v6697 = vpop.f32.mrf.mxu0
        %v6698 = vadd.f32 %v6657, %v6697
        %v6699 = vpop.f32.mrf.mxu0
        %v6700 = vadd.f32 %v6659, %v6699
        %v6701 = vpop.f32.mrf.mxu0
        %v6702 = vpop.f32.mrf.mxu0
        %6703 = vdwg.mxu0
        %6704 = vmatprep.subr.bf16.mxu0 %v5893
        %6705 = vmatpush1.bf16.msra.mxu0 %v5892
        %6706 = vmatprep.subr.bf16.mxu0 %v5881
        %6707 = vmatpush1.bf16.msra.mxu0 %v5880
        %6708 = vmatprep.subr.bf16.mxu0 %v5869
        %6709 = vmatpush1.bf16.msra.mxu0 %v5868
        %6710 = vmatprep.subr.bf16.mxu0 %v5857
        %6711 = vmatpush1.bf16.msra.mxu0 %v5856
        %6712 = vmatprep.subr.bf16.mxu0 %v5845
        %6713 = vmatpush1.bf16.msra.mxu0 %v5844
        %6714 = vmatprep.subr.bf16.mxu0 %v5833
        %6715 = vmatpush1.bf16.msra.mxu0 %v5832
        %6716 = vmatprep.subr.bf16.mxu0 %v5821
        %6717 = vmatpush1.bf16.msra.mxu0 %v5820
        %6718 = vmatprep.subr.bf16.mxu0 %v5809
        %6719 = vmatpush1.bf16.msra.mxu0 %v5808
        %6720 = vmatprep.subr.bf16.mxu0 %v5989
        %6721 = vmatpush2.bf16.msra.mxu0 %v5988
        %6722 = vmatprep.subr.bf16.mxu0 %v5977
        %6723 = vmatpush2.bf16.msra.mxu0 %v5976
        %6724 = vmatprep.subr.bf16.mxu0 %v5965
        %6725 = vmatpush2.bf16.msra.mxu0 %v5964
        %6726 = vmatprep.subr.bf16.mxu0 %v5953
        %6727 = vmatpush2.bf16.msra.mxu0 %v5952
        %6728 = vmatprep.subr.bf16.mxu0 %v5941
        %6729 = vmatpush2.bf16.msra.mxu0 %v5940
        %6730 = vmatprep.subr.bf16.mxu0 %v5929
        %6731 = vmatpush2.bf16.msra.mxu0 %v5928
        %6732 = vmatprep.subr.bf16.mxu0 %v5917
        %6733 = vmatpush2.bf16.msra.mxu0 %v5916
        %6734 = vmatprep.subr.bf16.mxu0 %v5905
        %6735 = vmatpush2.bf16.msra.mxu0 %v5904
        %6736 = vmatprep.mubr.bf16.mxu0 %v4578
        %6737 = vmatmul.mubr.bf16.gmra.mxu0 %v4577
        %v6738 = vpop.f32.mrf.mxu0
        %v6739 = vadd.f32 %v4911, %v6738
        %v6740 = vpop.f32.mrf.mxu0
        %v6741 = vadd.f32 %v4915, %v6740
        %v6742 = vpop.f32.mrf.mxu0
        %v6743 = vpop.f32.mrf.mxu0
        %6744 = vdwg.mxu0
        %6745 = vmatprep.subr.bf16.mxu0 %v6085
        %6746 = vmatpush1.bf16.msra.mxu0 %v6084
        %6747 = vmatprep.subr.bf16.mxu0 %v6073
        %6748 = vmatpush1.bf16.msra.mxu0 %v6072
        %6749 = vmatprep.subr.bf16.mxu0 %v6061
        %6750 = vmatpush1.bf16.msra.mxu0 %v6060
        %6751 = vmatprep.subr.bf16.mxu0 %v6049
        %6752 = vmatpush1.bf16.msra.mxu0 %v6048
        %6753 = vmatprep.subr.bf16.mxu0 %v6037
        %6754 = vmatpush1.bf16.msra.mxu0 %v6036
        %6755 = vmatprep.subr.bf16.mxu0 %v6025
        %6756 = vmatpush1.bf16.msra.mxu0 %v6024
        %6757 = vmatprep.subr.bf16.mxu0 %v6013
        %6758 = vmatpush1.bf16.msra.mxu0 %v6012
        %6759 = vmatprep.subr.bf16.mxu0 %v6001
        %6760 = vmatpush1.bf16.msra.mxu0 %v6000
        %6761 = vmatprep.subr.bf16.mxu0 0
        %6762 = vmatpush2.bf16.msra.mxu0 0
        %6763 = vmatprep.subr.bf16.mxu0 0
        %6764 = vmatpush2.bf16.msra.mxu0 0
        %6765 = vmatprep.subr.bf16.mxu0 0
        %6766 = vmatpush2.bf16.msra.mxu0 0
        %6767 = vmatprep.subr.bf16.mxu0 0
        %6768 = vmatpush2.bf16.msra.mxu0 0
        %6769 = vmatprep.subr.bf16.mxu0 0
        %6770 = vmatpush2.bf16.msra.mxu0 0
        %6771 = vmatprep.subr.bf16.mxu0 0
        %6772 = vmatpush2.bf16.msra.mxu0 0
        %6773 = vmatprep.subr.bf16.mxu0 0
        %6774 = vmatpush2.bf16.msra.mxu0 0
        %6775 = vmatprep.subr.bf16.mxu0 0
        %6776 = vmatpush2.bf16.msra.mxu0 0
        %6777 = vmatprep.mubr.bf16.mxu0 0
        %6778 = vmatmul.mubr.bf16.gmra.mxu0 %v4579
        %v6779 = vpop.f32.mrf.mxu0
        %v6780 = vadd.f32 %v6739, %v6779
        %v6781 = vpop.f32.mrf.mxu0
        %v6782 = vadd.f32 %v6741, %v6781
        %v6783 = vpop.f32.mrf.mxu0
        %v6784 = vpop.f32.mrf.mxu0
        %6785 = vdwg.mxu0
        %6786 = vmatprep.subr.bf16.mxu0 %v5895
        %6787 = vmatpush1.bf16.msra.mxu0 %v5894
        %6788 = vmatprep.subr.bf16.mxu0 %v5883
        %6789 = vmatpush1.bf16.msra.mxu0 %v5882
        %6790 = vmatprep.subr.bf16.mxu0 %v5871
        %6791 = vmatpush1.bf16.msra.mxu0 %v5870
        %6792 = vmatprep.subr.bf16.mxu0 %v5859
        %6793 = vmatpush1.bf16.msra.mxu0 %v5858
        %6794 = vmatprep.subr.bf16.mxu0 %v5847
        %6795 = vmatpush1.bf16.msra.mxu0 %v5846
        %6796 = vmatprep.subr.bf16.mxu0 %v5835
        %6797 = vmatpush1.bf16.msra.mxu0 %v5834
        %6798 = vmatprep.subr.bf16.mxu0 %v5823
        %6799 = vmatpush1.bf16.msra.mxu0 %v5822
        %6800 = vmatprep.subr.bf16.mxu0 %v5811
        %6801 = vmatpush1.bf16.msra.mxu0 %v5810
        %6802 = vmatprep.subr.bf16.mxu0 %v5991
        %6803 = vmatpush2.bf16.msra.mxu0 %v5990
        %6804 = vmatprep.subr.bf16.mxu0 %v5979
        %6805 = vmatpush2.bf16.msra.mxu0 %v5978
        %6806 = vmatprep.subr.bf16.mxu0 %v5967
        %6807 = vmatpush2.bf16.msra.mxu0 %v5966
        %6808 = vmatprep.subr.bf16.mxu0 %v5955
        %6809 = vmatpush2.bf16.msra.mxu0 %v5954
        %6810 = vmatprep.subr.bf16.mxu0 %v5943
        %6811 = vmatpush2.bf16.msra.mxu0 %v5942
        %6812 = vmatprep.subr.bf16.mxu0 %v5931
        %6813 = vmatpush2.bf16.msra.mxu0 %v5930
        %6814 = vmatprep.subr.bf16.mxu0 %v5919
        %6815 = vmatpush2.bf16.msra.mxu0 %v5918
        %6816 = vmatprep.subr.bf16.mxu0 %v5907
        %6817 = vmatpush2.bf16.msra.mxu0 %v5906
        %6818 = vmatprep.mubr.bf16.mxu0 %v4578
        %6819 = vmatmul.mubr.bf16.gmra.mxu0 %v4577
        %v6820 = vpop.f32.mrf.mxu0
        %v6821 = vadd.f32 %v4919, %v6820
        %v6822 = vpop.f32.mrf.mxu0
        %v6823 = vadd.f32 %v4923, %v6822
        %v6824 = vpop.f32.mrf.mxu0
        %v6825 = vpop.f32.mrf.mxu0
        %6826 = vdwg.mxu0
        %6827 = vmatprep.subr.bf16.mxu0 %v6087
        %6828 = vmatpush1.bf16.msra.mxu0 %v6086
        %6829 = vmatprep.subr.bf16.mxu0 %v6075
        %6830 = vmatpush1.bf16.msra.mxu0 %v6074
        %6831 = vmatprep.subr.bf16.mxu0 %v6063
        %6832 = vmatpush1.bf16.msra.mxu0 %v6062
        %6833 = vmatprep.subr.bf16.mxu0 %v6051
        %6834 = vmatpush1.bf16.msra.mxu0 %v6050
        %6835 = vmatprep.subr.bf16.mxu0 %v6039
        %6836 = vmatpush1.bf16.msra.mxu0 %v6038
        %6837 = vmatprep.subr.bf16.mxu0 %v6027
        %6838 = vmatpush1.bf16.msra.mxu0 %v6026
        %6839 = vmatprep.subr.bf16.mxu0 %v6015
        %6840 = vmatpush1.bf16.msra.mxu0 %v6014
        %6841 = vmatprep.subr.bf16.mxu0 %v6003
        %6842 = vmatpush1.bf16.msra.mxu0 %v6002
        %6843 = vmatprep.subr.bf16.mxu0 0
        %6844 = vmatpush2.bf16.msra.mxu0 0
        %6845 = vmatprep.subr.bf16.mxu0 0
        %6846 = vmatpush2.bf16.msra.mxu0 0
        %6847 = vmatprep.subr.bf16.mxu0 0
        %6848 = vmatpush2.bf16.msra.mxu0 0
        %6849 = vmatprep.subr.bf16.mxu0 0
        %6850 = vmatpush2.bf16.msra.mxu0 0
        %6851 = vmatprep.subr.bf16.mxu0 0
        %6852 = vmatpush2.bf16.msra.mxu0 0
        %6853 = vmatprep.subr.bf16.mxu0 0
        %6854 = vmatpush2.bf16.msra.mxu0 0
        %6855 = vmatprep.subr.bf16.mxu0 0
        %6856 = vmatpush2.bf16.msra.mxu0 0
        %6857 = vmatprep.subr.bf16.mxu0 0
        %6858 = vmatpush2.bf16.msra.mxu0 0
        %6859 = vmatprep.mubr.bf16.mxu0 0
        %6860 = vmatmul.mubr.bf16.gmra.mxu0 %v4579
        %v6861 = vpop.f32.mrf.mxu0
        %v6862 = vadd.f32 %v6821, %v6861
        %v6863 = vpop.f32.mrf.mxu0
        %v6864 = vadd.f32 %v6823, %v6863
        %v6865 = vpop.f32.mrf.mxu0
        %v6866 = vpop.f32.mrf.mxu0
        %6867 = vdwg.mxu0
        %v6868 = vmax.f32 %v6452, 0.0
        %v6869 = vmax.f32 %v6454, 0.0
        %v6870 = vmax.f32 %v6534, 0.0
        %v6871 = vmax.f32 %v6536, 0.0
        %v6872 = vmax.f32 %v6616, 0.0
        %v6873 = vmax.f32 %v6618, 0.0
        %v6874 = vmax.f32 %v6698, 0.0
        %v6875 = vmax.f32 %v6700, 0.0
        %v6876 = vmax.f32 %v6780, 0.0
        %v6877 = vmax.f32 %v6782, 0.0
        %v6878 = vmax.f32 %v6862, 0.0
        %v6879 = vmax.f32 %v6864, 0.0
        %v6880 = vpack.c.bf16 %v6868, %v6868
        %v6881 = vpack.c.bf16 %v6869, %v6869
        %v6882 = vpack.c.bf16 %v6870, %v6870
        %v6883 = vpack.c.bf16 %v6871, %v6871
        %v6884 = vpack.c.bf16 %v6872, %v6872
        %v6885 = vpack.c.bf16 %v6873, %v6873
        %v6886 = vpack.c.bf16 %v6874, %v6874
        %v6887 = vpack.c.bf16 %v6875, %v6875
        %v6888 = vpack.c.bf16 %v6876, %v6876
        %v6889 = vpack.c.bf16 %v6877, %v6877
        %v6890 = vpack.c.bf16 %v6878, %v6878
        %v6891 = vpack.c.bf16 %v6879, %v6879
        %s6892 = smul.addr %s884, 4
        %s6893 = scalar_lea.vmem [#allocation21], %s6892
        %v6894 = vld [vmem:[%s6893] sm:$0xff]
        %v6895 = vld [vmem:[%s6893 + $0x8] sm:$0xf]
        %v6896 = vld [vmem:[%s6893 + $0xc] sm:$0xff]
        %v6897 = vld [vmem:[%s6893 + $0x14] sm:$0xf]
        %v6898 = vld [vmem:[%s6893 + $0x18] sm:$0xff]
        %v6899 = vld [vmem:[%s6893 + $0x20] sm:$0xf]
        %v6900 = vld [vmem:[%s6893 + $0x24] sm:$0xff]
        %v6901 = vld [vmem:[%s6893 + $0x2c] sm:$0xf]
        %v6902 = vld [vmem:[%s6893 + $0x30] sm:$0xff]
        %v6903 = vld [vmem:[%s6893 + $0x38] sm:$0xf]
        %v6904 = vld [vmem:[%s6893 + $0x3c] sm:$0xff]
        %v6905 = vld [vmem:[%s6893 + $0x44] sm:$0xf]
        %v6906 = vld [vmem:[%s6893 + $0x48] sm:$0xff]
        %v6907 = vld [vmem:[%s6893 + $0x50] sm:$0xf]
        %v6908 = vld [vmem:[%s6893 + $0x54] sm:$0xff]
        %v6909 = vld [vmem:[%s6893 + $0x5c] sm:$0xf]
        %v6910 = vld [vmem:[%s6893 + $0x60] sm:$0xff]
        %v6911 = vld [vmem:[%s6893 + $0x68] sm:$0xf]
        %v6912 = vld [vmem:[%s6893 + $0x6c] sm:$0xff]
        %v6913 = vld [vmem:[%s6893 + $0x74] sm:$0xf]
        %v6914 = vld [vmem:[%s6893 + $0x78] sm:$0xff]
        %v6915 = vld [vmem:[%s6893 + $0x80] sm:$0xf]
        %v6916 = vld [vmem:[%s6893 + $0x84] sm:$0xff]
        %v6917 = vld [vmem:[%s6893 + $0x8c] sm:$0xf]
        %v6918 = vld [vmem:[%s6893 + $0x90] sm:$0xff]
        %v6919 = vld [vmem:[%s6893 + $0x98] sm:$0xf]
        %v6920 = vld [vmem:[%s6893 + $0x9c] sm:$0xff]
        %v6921 = vld [vmem:[%s6893 + $0xa4] sm:$0xf]
        %v6922 = vld [vmem:[%s6893 + $0xa8] sm:$0xff]
        %v6923 = vld [vmem:[%s6893 + $0xb0] sm:$0xf]
        %v6924 = vld [vmem:[%s6893 + $0xb4] sm:$0xff]
        %v6925 = vld [vmem:[%s6893 + $0xbc] sm:$0xf]
        %v6926 = vld [vmem:[%s6893 + $0xc0] sm:$0xff]
        %v6927 = vld [vmem:[%s6893 + $0xc8] sm:$0xf]
        %v6928 = vld [vmem:[%s6893 + $0xcc] sm:$0xff]
        %v6929 = vld [vmem:[%s6893 + $0xd4] sm:$0xf]
        %v6930 = vld [vmem:[%s6893 + $0xd8] sm:$0xff]
        %v6931 = vld [vmem:[%s6893 + $0xe0] sm:$0xf]
        %v6932 = vld [vmem:[%s6893 + $0xe4] sm:$0xff]
        %v6933 = vld [vmem:[%s6893 + $0xec] sm:$0xf]
        %v6934 = vld [vmem:[%s6893 + $0xf0] sm:$0xff]
        %v6935 = vld [vmem:[%s6893 + $0xf8] sm:$0xf]
        %v6936 = vld [vmem:[%s6893 + $0xfc] sm:$0xff]
        %v6937 = vld [vmem:[%s6893 + $0x104] sm:$0xf]
        %v6938 = vld [vmem:[%s6893 + $0x108] sm:$0xff]
        %v6939 = vld [vmem:[%s6893 + $0x110] sm:$0xf]
        %v6940 = vld [vmem:[%s6893 + $0x114] sm:$0xff]
        %v6941 = vld [vmem:[%s6893 + $0x11c] sm:$0xf]
        %v6942 = vld [vmem:[%s6893 + $0x120] sm:$0xff]
        %v6943 = vld [vmem:[%s6893 + $0x128] sm:$0xf]
        %v6944 = vld [vmem:[%s6893 + $0x12c] sm:$0xff]
        %v6945 = vld [vmem:[%s6893 + $0x134] sm:$0xf]
        %v6946 = vld [vmem:[%s6893 + $0x138] sm:$0xff]
        %v6947 = vld [vmem:[%s6893 + $0x140] sm:$0xf]
        %v6948 = vld [vmem:[%s6893 + $0x144] sm:$0xff]
        %v6949 = vld [vmem:[%s6893 + $0x14c] sm:$0xf]
        %v6950 = vld [vmem:[%s6893 + $0x150] sm:$0xff]
        %v6951 = vld [vmem:[%s6893 + $0x158] sm:$0xf]
        %v6952 = vld [vmem:[%s6893 + $0x15c] sm:$0xff]
        %v6953 = vld [vmem:[%s6893 + $0x164] sm:$0xf]
        %v6954 = vld [vmem:[%s6893 + $0x168] sm:$0xff]
        %v6955 = vld [vmem:[%s6893 + $0x170] sm:$0xf]
        %v6956 = vld [vmem:[%s6893 + $0x174] sm:$0xff]
        %v6957 = vld [vmem:[%s6893 + $0x17c] sm:$0xf]
        %v6958 = vld [vmem:[%s6893 + $0x180] sm:$0xff]
        %v6959 = vld [vmem:[%s6893 + $0x188] sm:$0xf]
        %v6960 = vld [vmem:[%s6893 + $0x18c] sm:$0xff]
        %v6961 = vld [vmem:[%s6893 + $0x194] sm:$0xf]
        %v6962 = vld [vmem:[%s6893 + $0x198] sm:$0xff]
        %v6963 = vld [vmem:[%s6893 + $0x1a0] sm:$0xf]
        %v6964 = vld [vmem:[%s6893 + $0x1a4] sm:$0xff]
        %v6965 = vld [vmem:[%s6893 + $0x1ac] sm:$0xf]
        %v6966 = vld [vmem:[%s6893 + $0x1b0] sm:$0xff]
        %v6967 = vld [vmem:[%s6893 + $0x1b8] sm:$0xf]
        %v6968 = vld [vmem:[%s6893 + $0x1bc] sm:$0xff]
        %v6969 = vld [vmem:[%s6893 + $0x1c4] sm:$0xf]
        %v6970 = vld [vmem:[%s6893 + $0x1c8] sm:$0xff]
        %v6971 = vld [vmem:[%s6893 + $0x1d0] sm:$0xf]
        %v6972 = vld [vmem:[%s6893 + $0x1d4] sm:$0xff]
        %v6973 = vld [vmem:[%s6893 + $0x1dc] sm:$0xf]
        %v6974 = vld [vmem:[%s6893 + $0x1e0] sm:$0xff]
        %v6975 = vld [vmem:[%s6893 + $0x1e8] sm:$0xf]
        %v6976 = vld [vmem:[%s6893 + $0x1ec] sm:$0xff]
        %v6977 = vld [vmem:[%s6893 + $0x1f4] sm:$0xf]
        %v6978 = vld [vmem:[%s6893 + $0x1f8] sm:$0xff]
        %v6979 = vld [vmem:[%s6893 + $0x200] sm:$0xf]
        %v6980 = vld [vmem:[%s6893 + $0x204] sm:$0xff]
        %v6981 = vld [vmem:[%s6893 + $0x20c] sm:$0xf]
        %v6982 = vld [vmem:[%s6893 + $0x210] sm:$0xff]
        %v6983 = vld [vmem:[%s6893 + $0x218] sm:$0xf]
        %v6984 = vld [vmem:[%s6893 + $0x21c] sm:$0xff]
        %v6985 = vld [vmem:[%s6893 + $0x224] sm:$0xf]
        %v6986 = vld [vmem:[%s6893 + $0x228] sm:$0xff]
        %v6987 = vld [vmem:[%s6893 + $0x230] sm:$0xf]
        %v6988 = vld [vmem:[%s6893 + $0x234] sm:$0xff]
        %v6989 = vld [vmem:[%s6893 + $0x23c] sm:$0xf]
        %v6990 = vld [vmem:[%s6893 + $0x240] sm:$0xff]
        %v6991 = vld [vmem:[%s6893 + $0x248] sm:$0xf]
        %v6992 = vld [vmem:[%s6893 + $0x24c] sm:$0xff]
        %v6993 = vld [vmem:[%s6893 + $0x254] sm:$0xf]
        %v6994 = vld [vmem:[%s6893 + $0x258] sm:$0xff]
        %v6995 = vld [vmem:[%s6893 + $0x260] sm:$0xf]
        %v6996 = vld [vmem:[%s6893 + $0x264] sm:$0xff]
        %v6997 = vld [vmem:[%s6893 + $0x26c] sm:$0xf]
        %v6998 = vld [vmem:[%s6893 + $0x270] sm:$0xff]
        %v6999 = vld [vmem:[%s6893 + $0x278] sm:$0xf]
        %v7000 = vld [vmem:[%s6893 + $0x27c] sm:$0xff]
        %v7001 = vld [vmem:[%s6893 + $0x284] sm:$0xf]
        %v7002 = vld [vmem:[%s6893 + $0x288] sm:$0xff]
        %v7003 = vld [vmem:[%s6893 + $0x290] sm:$0xf]
        %v7004 = vld [vmem:[%s6893 + $0x294] sm:$0xff]
        %v7005 = vld [vmem:[%s6893 + $0x29c] sm:$0xf]
        %v7006 = vld [vmem:[%s6893 + $0x2a0] sm:$0xff]
        %v7007 = vld [vmem:[%s6893 + $0x2a8] sm:$0xf]
        %v7008 = vld [vmem:[%s6893 + $0x2ac] sm:$0xff]
        %v7009 = vld [vmem:[%s6893 + $0x2b4] sm:$0xf]
        %v7010 = vld [vmem:[%s6893 + $0x2b8] sm:$0xff]
        %v7011 = vld [vmem:[%s6893 + $0x2c0] sm:$0xf]
        %v7012 = vld [vmem:[%s6893 + $0x2c4] sm:$0xff]
        %v7013 = vld [vmem:[%s6893 + $0x2cc] sm:$0xf]
        %v7014 = vld [vmem:[%s6893 + $0x2d0] sm:$0xff]
        %v7015 = vld [vmem:[%s6893 + $0x2d8] sm:$0xf]
        %v7016 = vld [vmem:[%s6893 + $0x2dc] sm:$0xff]
        %v7017 = vld [vmem:[%s6893 + $0x2e4] sm:$0xf]
        %v7018 = vld [vmem:[%s6893 + $0x2e8] sm:$0xff]
        %v7019 = vld [vmem:[%s6893 + $0x2f0] sm:$0xf]
        %v7020 = vld [vmem:[%s6893 + $0x2f4] sm:$0xff]
        %v7021 = vld [vmem:[%s6893 + $0x2fc] sm:$0xf]
        %v7022 = vld [vmem:[%s6893 + $0x300] sm:$0xff]
        %v7023 = vld [vmem:[%s6893 + $0x308] sm:$0xf]
        %v7024 = vld [vmem:[%s6893 + $0x30c] sm:$0xff]
        %v7025 = vld [vmem:[%s6893 + $0x314] sm:$0xf]
        %v7026 = vld [vmem:[%s6893 + $0x318] sm:$0xff]
        %v7027 = vld [vmem:[%s6893 + $0x320] sm:$0xf]
        %v7028 = vld [vmem:[%s6893 + $0x324] sm:$0xff]
        %v7029 = vld [vmem:[%s6893 + $0x32c] sm:$0xf]
        %v7030 = vld [vmem:[%s6893 + $0x330] sm:$0xff]
        %v7031 = vld [vmem:[%s6893 + $0x338] sm:$0xf]
        %v7032 = vld [vmem:[%s6893 + $0x33c] sm:$0xff]
        %v7033 = vld [vmem:[%s6893 + $0x344] sm:$0xf]
        %v7034 = vld [vmem:[%s6893 + $0x348] sm:$0xff]
        %v7035 = vld [vmem:[%s6893 + $0x350] sm:$0xf]
        %v7036 = vld [vmem:[%s6893 + $0x354] sm:$0xff]
        %v7037 = vld [vmem:[%s6893 + $0x35c] sm:$0xf]
        %v7038 = vld [vmem:[%s6893 + $0x360] sm:$0xff]
        %v7039 = vld [vmem:[%s6893 + $0x368] sm:$0xf]
        %v7040 = vld [vmem:[%s6893 + $0x36c] sm:$0xff]
        %v7041 = vld [vmem:[%s6893 + $0x374] sm:$0xf]
        %v7042 = vld [vmem:[%s6893 + $0x378] sm:$0xff]
        %v7043 = vld [vmem:[%s6893 + $0x380] sm:$0xf]
        %v7044 = vld [vmem:[%s6893 + $0x384] sm:$0xff]
        %v7045 = vld [vmem:[%s6893 + $0x38c] sm:$0xf]
        %v7046 = vld [vmem:[%s6893 + $0x390] sm:$0xff]
        %v7047 = vld [vmem:[%s6893 + $0x398] sm:$0xf]
        %v7048 = vld [vmem:[%s6893 + $0x39c] sm:$0xff]
        %v7049 = vld [vmem:[%s6893 + $0x3a4] sm:$0xf]
        %v7050 = vld [vmem:[%s6893 + $0x3a8] sm:$0xff]
        %v7051 = vld [vmem:[%s6893 + $0x3b0] sm:$0xf]
        %v7052 = vld [vmem:[%s6893 + $0x3b4] sm:$0xff]
        %v7053 = vld [vmem:[%s6893 + $0x3bc] sm:$0xf]
        %v7054 = vld [vmem:[%s6893 + $0x3c0] sm:$0xff]
        %v7055 = vld [vmem:[%s6893 + $0x3c8] sm:$0xf]
        %v7056 = vld [vmem:[%s6893 + $0x3cc] sm:$0xff]
        %v7057 = vld [vmem:[%s6893 + $0x3d4] sm:$0xf]
        %v7058 = vld [vmem:[%s6893 + $0x3d8] sm:$0xff]
        %v7059 = vld [vmem:[%s6893 + $0x3e0] sm:$0xf]
        %v7060 = vld [vmem:[%s6893 + $0x3e4] sm:$0xff]
        %v7061 = vld [vmem:[%s6893 + $0x3ec] sm:$0xf]
        %v7062 = vld [vmem:[%s6893 + $0x3f0] sm:$0xff]
        %v7063 = vld [vmem:[%s6893 + $0x3f8] sm:$0xf]
        %v7064 = vld [vmem:[%s6893 + $0x3fc] sm:$0xff]
        %v7065 = vld [vmem:[%s6893 + $0x404] sm:$0xf]
        %v7066 = vld [vmem:[%s6893 + $0x408] sm:$0xff]
        %v7067 = vld [vmem:[%s6893 + $0x410] sm:$0xf]
        %v7068 = vld [vmem:[%s6893 + $0x414] sm:$0xff]
        %v7069 = vld [vmem:[%s6893 + $0x41c] sm:$0xf]
        %v7070 = vld [vmem:[%s6893 + $0x420] sm:$0xff]
        %v7071 = vld [vmem:[%s6893 + $0x428] sm:$0xf]
        %v7072 = vld [vmem:[%s6893 + $0x42c] sm:$0xff]
        %v7073 = vld [vmem:[%s6893 + $0x434] sm:$0xf]
        %v7074 = vld [vmem:[%s6893 + $0x438] sm:$0xff]
        %v7075 = vld [vmem:[%s6893 + $0x440] sm:$0xf]
        %v7076 = vld [vmem:[%s6893 + $0x444] sm:$0xff]
        %v7077 = vld [vmem:[%s6893 + $0x44c] sm:$0xf]
        %v7078 = vld [vmem:[%s6893 + $0x450] sm:$0xff]
        %v7079 = vld [vmem:[%s6893 + $0x458] sm:$0xf]
        %v7080 = vld [vmem:[%s6893 + $0x45c] sm:$0xff]
        %v7081 = vld [vmem:[%s6893 + $0x464] sm:$0xf]
        %v7082 = vld [vmem:[%s6893 + $0x468] sm:$0xff]
        %v7083 = vld [vmem:[%s6893 + $0x470] sm:$0xf]
        %v7084 = vld [vmem:[%s6893 + $0x474] sm:$0xff]
        %v7085 = vld [vmem:[%s6893 + $0x47c] sm:$0xf]
        %v7086 = vld [vmem:[%s6893 + $0x480] sm:$0xff]
        %v7087 = vld [vmem:[%s6893 + $0x488] sm:$0xf]
        %v7088 = vld [vmem:[%s6893 + $0x48c] sm:$0xff]
        %v7089 = vld [vmem:[%s6893 + $0x494] sm:$0xf]
        %v7090 = vld [vmem:[%s6893 + $0x498] sm:$0xff]
        %v7091 = vld [vmem:[%s6893 + $0x4a0] sm:$0xf]
        %v7092 = vld [vmem:[%s6893 + $0x4a4] sm:$0xff]
        %v7093 = vld [vmem:[%s6893 + $0x4ac] sm:$0xf]
        %v7094 = vld [vmem:[%s6893 + $0x4b0] sm:$0xff]
        %v7095 = vld [vmem:[%s6893 + $0x4b8] sm:$0xf]
        %v7096 = vld [vmem:[%s6893 + $0x4bc] sm:$0xff]
        %v7097 = vld [vmem:[%s6893 + $0x4c4] sm:$0xf]
        %v7098 = vld [vmem:[%s6893 + $0x4c8] sm:$0xff]
        %v7099 = vld [vmem:[%s6893 + $0x4d0] sm:$0xf]
        %v7100 = vld [vmem:[%s6893 + $0x4d4] sm:$0xff]
        %v7101 = vld [vmem:[%s6893 + $0x4dc] sm:$0xf]
        %v7102 = vld [vmem:[%s6893 + $0x4e0] sm:$0xff]
        %v7103 = vld [vmem:[%s6893 + $0x4e8] sm:$0xf]
        %v7104 = vld [vmem:[%s6893 + $0x4ec] sm:$0xff]
        %v7105 = vld [vmem:[%s6893 + $0x4f4] sm:$0xf]
        %v7106 = vld [vmem:[%s6893 + $0x4f8] sm:$0xff]
        %v7107 = vld [vmem:[%s6893 + $0x500] sm:$0xf]
        %v7108 = vld [vmem:[%s6893 + $0x504] sm:$0xff]
        %v7109 = vld [vmem:[%s6893 + $0x50c] sm:$0xf]
        %v7110 = vld [vmem:[%s6893 + $0x510] sm:$0xff]
        %v7111 = vld [vmem:[%s6893 + $0x518] sm:$0xf]
        %v7112 = vld [vmem:[%s6893 + $0x51c] sm:$0xff]
        %v7113 = vld [vmem:[%s6893 + $0x524] sm:$0xf]
        %v7114 = vld [vmem:[%s6893 + $0x528] sm:$0xff]
        %v7115 = vld [vmem:[%s6893 + $0x530] sm:$0xf]
        %v7116 = vld [vmem:[%s6893 + $0x534] sm:$0xff]
        %v7117 = vld [vmem:[%s6893 + $0x53c] sm:$0xf]
        %v7118 = vld [vmem:[%s6893 + $0x540] sm:$0xff]
        %v7119 = vld [vmem:[%s6893 + $0x548] sm:$0xf]
        %v7120 = vld [vmem:[%s6893 + $0x54c] sm:$0xff]
        %v7121 = vld [vmem:[%s6893 + $0x554] sm:$0xf]
        %v7122 = vld [vmem:[%s6893 + $0x558] sm:$0xff]
        %v7123 = vld [vmem:[%s6893 + $0x560] sm:$0xf]
        %v7124 = vld [vmem:[%s6893 + $0x564] sm:$0xff]
        %v7125 = vld [vmem:[%s6893 + $0x56c] sm:$0xf]
        %v7126 = vld [vmem:[%s6893 + $0x570] sm:$0xff]
        %v7127 = vld [vmem:[%s6893 + $0x578] sm:$0xf]
        %v7128 = vld [vmem:[%s6893 + $0x57c] sm:$0xff]
        %v7129 = vld [vmem:[%s6893 + $0x584] sm:$0xf]
        %v7130 = vld [vmem:[%s6893 + $0x588] sm:$0xff]
        %v7131 = vld [vmem:[%s6893 + $0x590] sm:$0xf]
        %v7132 = vld [vmem:[%s6893 + $0x594] sm:$0xff]
        %v7133 = vld [vmem:[%s6893 + $0x59c] sm:$0xf]
        %v7134 = vld [vmem:[%s6893 + $0x5a0] sm:$0xff]
        %v7135 = vld [vmem:[%s6893 + $0x5a8] sm:$0xf]
        %v7136 = vld [vmem:[%s6893 + $0x5ac] sm:$0xff]
        %v7137 = vld [vmem:[%s6893 + $0x5b4] sm:$0xf]
        %v7138 = vld [vmem:[%s6893 + $0x5b8] sm:$0xff]
        %v7139 = vld [vmem:[%s6893 + $0x5c0] sm:$0xf]
        %v7140 = vld [vmem:[%s6893 + $0x5c4] sm:$0xff]
        %v7141 = vld [vmem:[%s6893 + $0x5cc] sm:$0xf]
        %v7142 = vld [vmem:[%s6893 + $0x5d0] sm:$0xff]
        %v7143 = vld [vmem:[%s6893 + $0x5d8] sm:$0xf]
        %v7144 = vld [vmem:[%s6893 + $0x5dc] sm:$0xff]
        %v7145 = vld [vmem:[%s6893 + $0x5e4] sm:$0xf]
        %v7146 = vld [vmem:[%s6893 + $0x5e8] sm:$0xff]
        %v7147 = vld [vmem:[%s6893 + $0x5f0] sm:$0xf]
        %v7148 = vld [vmem:[%s6893 + $0x5f4] sm:$0xff]
        %v7149 = vld [vmem:[%s6893 + $0x5fc] sm:$0xf]
        %v7150 = vld [vmem:[%s6893 + $0x600] sm:$0xff]
        %v7151 = vld [vmem:[%s6893 + $0x608] sm:$0xf]
        %v7152 = vld [vmem:[%s6893 + $0x60c] sm:$0xff]
        %v7153 = vld [vmem:[%s6893 + $0x614] sm:$0xf]
        %v7154 = vld [vmem:[%s6893 + $0x618] sm:$0xff]
        %v7155 = vld [vmem:[%s6893 + $0x620] sm:$0xf]
        %v7156 = vld [vmem:[%s6893 + $0x624] sm:$0xff]
        %v7157 = vld [vmem:[%s6893 + $0x62c] sm:$0xf]
        %v7158 = vld [vmem:[%s6893 + $0x630] sm:$0xff]
        %v7159 = vld [vmem:[%s6893 + $0x638] sm:$0xf]
        %v7160 = vld [vmem:[%s6893 + $0x63c] sm:$0xff]
        %v7161 = vld [vmem:[%s6893 + $0x644] sm:$0xf]
        %v7162 = vld [vmem:[%s6893 + $0x648] sm:$0xff]
        %v7163 = vld [vmem:[%s6893 + $0x650] sm:$0xf]
        %v7164 = vld [vmem:[%s6893 + $0x654] sm:$0xff]
        %v7165 = vld [vmem:[%s6893 + $0x65c] sm:$0xf]
        %v7166 = vld [vmem:[%s6893 + $0x660] sm:$0xff]
        %v7167 = vld [vmem:[%s6893 + $0x668] sm:$0xf]
        %v7168 = vld [vmem:[%s6893 + $0x66c] sm:$0xff]
        %v7169 = vld [vmem:[%s6893 + $0x674] sm:$0xf]
        %v7170 = vld [vmem:[%s6893 + $0x678] sm:$0xff]
        %v7171 = vld [vmem:[%s6893 + $0x680] sm:$0xf]
        %v7172 = vld [vmem:[%s6893 + $0x684] sm:$0xff]
        %v7173 = vld [vmem:[%s6893 + $0x68c] sm:$0xf]
        %v7174 = vld [vmem:[%s6893 + $0x690] sm:$0xff]
        %v7175 = vld [vmem:[%s6893 + $0x698] sm:$0xf]
        %v7176 = vld [vmem:[%s6893 + $0x69c] sm:$0xff]
        %v7177 = vld [vmem:[%s6893 + $0x6a4] sm:$0xf]
        %v7178 = vld [vmem:[%s6893 + $0x6a8] sm:$0xff]
        %v7179 = vld [vmem:[%s6893 + $0x6b0] sm:$0xf]
        %v7180 = vld [vmem:[%s6893 + $0x6b4] sm:$0xff]
        %v7181 = vld [vmem:[%s6893 + $0x6bc] sm:$0xf]
        %v7182 = vld [vmem:[%s6893 + $0x6c0] sm:$0xff]
        %v7183 = vld [vmem:[%s6893 + $0x6c8] sm:$0xf]
        %v7184 = vld [vmem:[%s6893 + $0x6cc] sm:$0xff]
        %v7185 = vld [vmem:[%s6893 + $0x6d4] sm:$0xf]
        %v7186 = vld [vmem:[%s6893 + $0x6d8] sm:$0xff]
        %v7187 = vld [vmem:[%s6893 + $0x6e0] sm:$0xf]
        %v7188 = vld [vmem:[%s6893 + $0x6e4] sm:$0xff]
        %v7189 = vld [vmem:[%s6893 + $0x6ec] sm:$0xf]
        %v7190 = vld [vmem:[%s6893 + $0x6f0] sm:$0xff]
        %v7191 = vld [vmem:[%s6893 + $0x6f8] sm:$0xf]
        %v7192 = vld [vmem:[%s6893 + $0x6fc] sm:$0xff]
        %v7193 = vld [vmem:[%s6893 + $0x704] sm:$0xf]
        %v7194 = vld [vmem:[%s6893 + $0x708] sm:$0xff]
        %v7195 = vld [vmem:[%s6893 + $0x710] sm:$0xf]
        %v7196 = vld [vmem:[%s6893 + $0x714] sm:$0xff]
        %v7197 = vld [vmem:[%s6893 + $0x71c] sm:$0xf]
        %v7198 = vld [vmem:[%s6893 + $0x720] sm:$0xff]
        %v7199 = vld [vmem:[%s6893 + $0x728] sm:$0xf]
        %v7200 = vld [vmem:[%s6893 + $0x72c] sm:$0xff]
        %v7201 = vld [vmem:[%s6893 + $0x734] sm:$0xf]
        %v7202 = vld [vmem:[%s6893 + $0x738] sm:$0xff]
        %v7203 = vld [vmem:[%s6893 + $0x740] sm:$0xf]
        %v7204 = vld [vmem:[%s6893 + $0x744] sm:$0xff]
        %v7205 = vld [vmem:[%s6893 + $0x74c] sm:$0xf]
        %v7206 = vld [vmem:[%s6893 + $0x750] sm:$0xff]
        %v7207 = vld [vmem:[%s6893 + $0x758] sm:$0xf]
        %v7208 = vld [vmem:[%s6893 + $0x75c] sm:$0xff]
        %v7209 = vld [vmem:[%s6893 + $0x764] sm:$0xf]
        %v7210 = vld [vmem:[%s6893 + $0x768] sm:$0xff]
        %v7211 = vld [vmem:[%s6893 + $0x770] sm:$0xf]
        %v7212 = vld [vmem:[%s6893 + $0x774] sm:$0xff]
        %v7213 = vld [vmem:[%s6893 + $0x77c] sm:$0xf]
        %v7214 = vld [vmem:[%s6893 + $0x780] sm:$0xff]
        %v7215 = vld [vmem:[%s6893 + $0x788] sm:$0xf]
        %v7216 = vld [vmem:[%s6893 + $0x78c] sm:$0xff]
        %v7217 = vld [vmem:[%s6893 + $0x794] sm:$0xf]
        %v7218 = vld [vmem:[%s6893 + $0x798] sm:$0xff]
        %v7219 = vld [vmem:[%s6893 + $0x7a0] sm:$0xf]
        %v7220 = vld [vmem:[%s6893 + $0x7a4] sm:$0xff]
        %v7221 = vld [vmem:[%s6893 + $0x7ac] sm:$0xf]
        %v7222 = vld [vmem:[%s6893 + $0x7b0] sm:$0xff]
        %v7223 = vld [vmem:[%s6893 + $0x7b8] sm:$0xf]
        %v7224 = vld [vmem:[%s6893 + $0x7bc] sm:$0xff]
        %v7225 = vld [vmem:[%s6893 + $0x7c4] sm:$0xf]
        %v7226 = vld [vmem:[%s6893 + $0x7c8] sm:$0xff]
        %v7227 = vld [vmem:[%s6893 + $0x7d0] sm:$0xf]
        %v7228 = vld [vmem:[%s6893 + $0x7d4] sm:$0xff]
        %v7229 = vld [vmem:[%s6893 + $0x7dc] sm:$0xf]
        %v7230 = vld [vmem:[%s6893 + $0x7e0] sm:$0xff]
        %v7231 = vld [vmem:[%s6893 + $0x7e8] sm:$0xf]
        %v7232 = vld [vmem:[%s6893 + $0x7ec] sm:$0xff]
        %v7233 = vld [vmem:[%s6893 + $0x7f4] sm:$0xf]
        %v7234 = vld [vmem:[%s6893 + $0x7f8] sm:$0xff]
        %v7235 = vld [vmem:[%s6893 + $0x800] sm:$0xf]
        %v7236 = vld [vmem:[%s6893 + $0x804] sm:$0xff]
        %v7237 = vld [vmem:[%s6893 + $0x80c] sm:$0xf]
        %v7238 = vld [vmem:[%s6893 + $0x810] sm:$0xff]
        %v7239 = vld [vmem:[%s6893 + $0x818] sm:$0xf]
        %v7240 = vld [vmem:[%s6893 + $0x81c] sm:$0xff]
        %v7241 = vld [vmem:[%s6893 + $0x824] sm:$0xf]
        %v7242 = vld [vmem:[%s6893 + $0x828] sm:$0xff]
        %v7243 = vld [vmem:[%s6893 + $0x830] sm:$0xf]
        %v7244 = vld [vmem:[%s6893 + $0x834] sm:$0xff]
        %v7245 = vld [vmem:[%s6893 + $0x83c] sm:$0xf]
        %v7246 = vld [vmem:[%s6893 + $0x840] sm:$0xff]
        %v7247 = vld [vmem:[%s6893 + $0x848] sm:$0xf]
        %v7248 = vld [vmem:[%s6893 + $0x84c] sm:$0xff]
        %v7249 = vld [vmem:[%s6893 + $0x854] sm:$0xf]
        %v7250 = vld [vmem:[%s6893 + $0x858] sm:$0xff]
        %v7251 = vld [vmem:[%s6893 + $0x860] sm:$0xf]
        %v7252 = vld [vmem:[%s6893 + $0x864] sm:$0xff]
        %v7253 = vld [vmem:[%s6893 + $0x86c] sm:$0xf]
        %v7254 = vld [vmem:[%s6893 + $0x870] sm:$0xff]
        %v7255 = vld [vmem:[%s6893 + $0x878] sm:$0xf]
        %v7256 = vld [vmem:[%s6893 + $0x87c] sm:$0xff]
        %v7257 = vld [vmem:[%s6893 + $0x884] sm:$0xf]
        %v7258 = vld [vmem:[%s6893 + $0x888] sm:$0xff]
        %v7259 = vld [vmem:[%s6893 + $0x890] sm:$0xf]
        %v7260 = vld [vmem:[%s6893 + $0x894] sm:$0xff]
        %v7261 = vld [vmem:[%s6893 + $0x89c] sm:$0xf]
        %v7262 = vld [vmem:[%s6893 + $0x8a0] sm:$0xff]
        %v7263 = vld [vmem:[%s6893 + $0x8a8] sm:$0xf]
        %v7264 = vld [vmem:[%s6893 + $0x8ac] sm:$0xff]
        %v7265 = vld [vmem:[%s6893 + $0x8b4] sm:$0xf]
        %v7266 = vld [vmem:[%s6893 + $0x8b8] sm:$0xff]
        %v7267 = vld [vmem:[%s6893 + $0x8c0] sm:$0xf]
        %v7268 = vld [vmem:[%s6893 + $0x8c4] sm:$0xff]
        %v7269 = vld [vmem:[%s6893 + $0x8cc] sm:$0xf]
        %v7270 = vld [vmem:[%s6893 + $0x8d0] sm:$0xff]
        %v7271 = vld [vmem:[%s6893 + $0x8d8] sm:$0xf]
        %v7272 = vld [vmem:[%s6893 + $0x8dc] sm:$0xff]
        %v7273 = vld [vmem:[%s6893 + $0x8e4] sm:$0xf]
        %v7274 = vld [vmem:[%s6893 + $0x8e8] sm:$0xff]
        %v7275 = vld [vmem:[%s6893 + $0x8f0] sm:$0xf]
        %v7276 = vld [vmem:[%s6893 + $0x8f4] sm:$0xff]
        %v7277 = vld [vmem:[%s6893 + $0x8fc] sm:$0xf]
        %s7278 = scalar_lea.vmem [#allocation23], %s816
        %v7279 = vld [vmem:[%s7278] sm:$0x7]
        %v7281 = vlaneseq
        %v7282 = vshrl.u32 %v7281, 7
        %v7283 = vsub.s32 0, %v7282
        %v7284 = vrot.slane %v7279, %v7283
        %v7285 = vlaneseq
        %v7286 = vshrl.u32 %v7285, 7
        %v7287 = vsub.s32 1, %v7286
        %v7288 = vrot.slane %v7279, %v7287
        %v7289 = vlaneseq
        %v7290 = vshrl.u32 %v7289, 7
        %v7291 = vsub.s32 2, %v7290
        %v7292 = vrot.slane %v7279, %v7291
        %v7680 = vunpack.c.l.b16 %v6894
        %v7681 = vunpack.c.h.b16 %v6894
        %v7682 = vunpack.c.l.b16 %v6895
        %v7683 = vunpack.c.l.b16 %v6896
        %v7684 = vunpack.c.h.b16 %v6896
        %v7685 = vunpack.c.l.b16 %v6897
        %v7686 = vunpack.c.l.b16 %v6898
        %v7687 = vunpack.c.h.b16 %v6898
        %v7688 = vunpack.c.l.b16 %v6899
        %v7689 = vunpack.c.l.b16 %v6900
        %v7690 = vunpack.c.h.b16 %v6900
        %v7691 = vunpack.c.l.b16 %v6901
        %v7692 = vunpack.c.l.b16 %v6902
        %v7693 = vunpack.c.h.b16 %v6902
        %v7694 = vunpack.c.l.b16 %v6903
        %v7695 = vunpack.c.l.b16 %v6904
        %v7696 = vunpack.c.h.b16 %v6904
        %v7697 = vunpack.c.l.b16 %v6905
        %v7698 = vunpack.c.l.b16 %v6906
        %v7699 = vunpack.c.h.b16 %v6906
        %v7700 = vunpack.c.l.b16 %v6907
        %v7701 = vunpack.c.l.b16 %v6908
        %v7702 = vunpack.c.h.b16 %v6908
        %v7703 = vunpack.c.l.b16 %v6909
        %v7704 = vunpack.c.l.b16 %v6910
        %v7705 = vunpack.c.h.b16 %v6910
        %v7706 = vunpack.c.l.b16 %v6911
        %v7707 = vunpack.c.l.b16 %v6912
        %v7708 = vunpack.c.h.b16 %v6912
        %v7709 = vunpack.c.l.b16 %v6913
        %v7710 = vunpack.c.l.b16 %v6914
        %v7711 = vunpack.c.h.b16 %v6914
        %v7712 = vunpack.c.l.b16 %v6915
        %v7713 = vunpack.c.l.b16 %v6916
        %v7714 = vunpack.c.h.b16 %v6916
        %v7715 = vunpack.c.l.b16 %v6917
        %v7716 = vunpack.c.l.b16 %v6918
        %v7717 = vunpack.c.h.b16 %v6918
        %v7718 = vunpack.c.l.b16 %v6919
        %v7719 = vunpack.c.l.b16 %v6920
        %v7720 = vunpack.c.h.b16 %v6920
        %v7721 = vunpack.c.l.b16 %v6921
        %v7722 = vunpack.c.l.b16 %v6922
        %v7723 = vunpack.c.h.b16 %v6922
        %v7724 = vunpack.c.l.b16 %v6923
        %v7725 = vunpack.c.l.b16 %v6924
        %v7726 = vunpack.c.h.b16 %v6924
        %v7727 = vunpack.c.l.b16 %v6925
        %v7728 = vunpack.c.l.b16 %v6926
        %v7729 = vunpack.c.h.b16 %v6926
        %v7730 = vunpack.c.l.b16 %v6927
        %v7731 = vunpack.c.l.b16 %v6928
        %v7732 = vunpack.c.h.b16 %v6928
        %v7733 = vunpack.c.l.b16 %v6929
        %v7734 = vunpack.c.l.b16 %v6930
        %v7735 = vunpack.c.h.b16 %v6930
        %v7736 = vunpack.c.l.b16 %v6931
        %v7737 = vunpack.c.l.b16 %v6932
        %v7738 = vunpack.c.h.b16 %v6932
        %v7739 = vunpack.c.l.b16 %v6933
        %v7740 = vunpack.c.l.b16 %v6934
        %v7741 = vunpack.c.h.b16 %v6934
        %v7742 = vunpack.c.l.b16 %v6935
        %v7743 = vunpack.c.l.b16 %v6936
        %v7744 = vunpack.c.h.b16 %v6936
        %v7745 = vunpack.c.l.b16 %v6937
        %v7746 = vunpack.c.l.b16 %v6938
        %v7747 = vunpack.c.h.b16 %v6938
        %v7748 = vunpack.c.l.b16 %v6939
        %v7749 = vunpack.c.l.b16 %v6940
        %v7750 = vunpack.c.h.b16 %v6940
        %v7751 = vunpack.c.l.b16 %v6941
        %v7752 = vunpack.c.l.b16 %v6942
        %v7753 = vunpack.c.h.b16 %v6942
        %v7754 = vunpack.c.l.b16 %v6943
        %v7755 = vunpack.c.l.b16 %v6944
        %v7756 = vunpack.c.h.b16 %v6944
        %v7757 = vunpack.c.l.b16 %v6945
        %v7758 = vunpack.c.l.b16 %v6946
        %v7759 = vunpack.c.h.b16 %v6946
        %v7760 = vunpack.c.l.b16 %v6947
        %v7761 = vunpack.c.l.b16 %v6948
        %v7762 = vunpack.c.h.b16 %v6948
        %v7763 = vunpack.c.l.b16 %v6949
        %v7764 = vunpack.c.l.b16 %v6950
        %v7765 = vunpack.c.h.b16 %v6950
        %v7766 = vunpack.c.l.b16 %v6951
        %v7767 = vunpack.c.l.b16 %v6952
        %v7768 = vunpack.c.h.b16 %v6952
        %v7769 = vunpack.c.l.b16 %v6953
        %v7770 = vunpack.c.l.b16 %v6954
        %v7771 = vunpack.c.h.b16 %v6954
        %v7772 = vunpack.c.l.b16 %v6955
        %v7773 = vunpack.c.l.b16 %v6956
        %v7774 = vunpack.c.h.b16 %v6956
        %v7775 = vunpack.c.l.b16 %v6957
        %v7776 = vunpack.c.l.b16 %v6958
        %v7777 = vunpack.c.h.b16 %v6958
        %v7778 = vunpack.c.l.b16 %v6959
        %v7779 = vunpack.c.l.b16 %v6960
        %v7780 = vunpack.c.h.b16 %v6960
        %v7781 = vunpack.c.l.b16 %v6961
        %v7782 = vunpack.c.l.b16 %v6962
        %v7783 = vunpack.c.h.b16 %v6962
        %v7784 = vunpack.c.l.b16 %v6963
        %v7785 = vunpack.c.l.b16 %v6964
        %v7786 = vunpack.c.h.b16 %v6964
        %v7787 = vunpack.c.l.b16 %v6965
        %v7788 = vunpack.c.l.b16 %v6966
        %v7789 = vunpack.c.h.b16 %v6966
        %v7790 = vunpack.c.l.b16 %v6967
        %v7791 = vunpack.c.l.b16 %v6968
        %v7792 = vunpack.c.h.b16 %v6968
        %v7793 = vunpack.c.l.b16 %v6969
        %v7794 = vunpack.c.l.b16 %v6970
        %v7795 = vunpack.c.h.b16 %v6970
        %v7796 = vunpack.c.l.b16 %v6971
        %v7797 = vunpack.c.l.b16 %v6972
        %v7798 = vunpack.c.h.b16 %v6972
        %v7799 = vunpack.c.l.b16 %v6973
        %v7800 = vunpack.c.l.b16 %v6974
        %v7801 = vunpack.c.h.b16 %v6974
        %v7802 = vunpack.c.l.b16 %v6975
        %v7803 = vunpack.c.l.b16 %v6976
        %v7804 = vunpack.c.h.b16 %v6976
        %v7805 = vunpack.c.l.b16 %v6977
        %v7806 = vunpack.c.l.b16 %v6978
        %v7807 = vunpack.c.h.b16 %v6978
        %v7808 = vunpack.c.l.b16 %v6979
        %v7809 = vunpack.c.l.b16 %v6980
        %v7810 = vunpack.c.h.b16 %v6980
        %v7811 = vunpack.c.l.b16 %v6981
        %v7812 = vunpack.c.l.b16 %v6982
        %v7813 = vunpack.c.h.b16 %v6982
        %v7814 = vunpack.c.l.b16 %v6983
        %v7815 = vunpack.c.l.b16 %v6984
        %v7816 = vunpack.c.h.b16 %v6984
        %v7817 = vunpack.c.l.b16 %v6985
        %v7818 = vunpack.c.l.b16 %v6986
        %v7819 = vunpack.c.h.b16 %v6986
        %v7820 = vunpack.c.l.b16 %v6987
        %v7821 = vunpack.c.l.b16 %v6988
        %v7822 = vunpack.c.h.b16 %v6988
        %v7823 = vunpack.c.l.b16 %v6989
        %v7824 = vunpack.c.l.b16 %v6990
        %v7825 = vunpack.c.h.b16 %v6990
        %v7826 = vunpack.c.l.b16 %v6991
        %v7827 = vunpack.c.l.b16 %v6992
        %v7828 = vunpack.c.h.b16 %v6992
        %v7829 = vunpack.c.l.b16 %v6993
        %v7830 = vunpack.c.l.b16 %v6994
        %v7831 = vunpack.c.h.b16 %v6994
        %v7832 = vunpack.c.l.b16 %v6995
        %v7833 = vunpack.c.l.b16 %v6996
        %v7834 = vunpack.c.h.b16 %v6996
        %v7835 = vunpack.c.l.b16 %v6997
        %v7836 = vunpack.c.l.b16 %v6998
        %v7837 = vunpack.c.h.b16 %v6998
        %v7838 = vunpack.c.l.b16 %v6999
        %v7839 = vunpack.c.l.b16 %v7000
        %v7840 = vunpack.c.h.b16 %v7000
        %v7841 = vunpack.c.l.b16 %v7001
        %v7842 = vunpack.c.l.b16 %v7002
        %v7843 = vunpack.c.h.b16 %v7002
        %v7844 = vunpack.c.l.b16 %v7003
        %v7845 = vunpack.c.l.b16 %v7004
        %v7846 = vunpack.c.h.b16 %v7004
        %v7847 = vunpack.c.l.b16 %v7005
        %v7848 = vunpack.c.l.b16 %v7006
        %v7849 = vunpack.c.h.b16 %v7006
        %v7850 = vunpack.c.l.b16 %v7007
        %v7851 = vunpack.c.l.b16 %v7008
        %v7852 = vunpack.c.h.b16 %v7008
        %v7853 = vunpack.c.l.b16 %v7009
        %v7854 = vunpack.c.l.b16 %v7010
        %v7855 = vunpack.c.h.b16 %v7010
        %v7856 = vunpack.c.l.b16 %v7011
        %v7857 = vunpack.c.l.b16 %v7012
        %v7858 = vunpack.c.h.b16 %v7012
        %v7859 = vunpack.c.l.b16 %v7013
        %v7860 = vunpack.c.l.b16 %v7014
        %v7861 = vunpack.c.h.b16 %v7014
        %v7862 = vunpack.c.l.b16 %v7015
        %v7863 = vunpack.c.l.b16 %v7016
        %v7864 = vunpack.c.h.b16 %v7016
        %v7865 = vunpack.c.l.b16 %v7017
        %v7866 = vunpack.c.l.b16 %v7018
        %v7867 = vunpack.c.h.b16 %v7018
        %v7868 = vunpack.c.l.b16 %v7019
        %v7869 = vunpack.c.l.b16 %v7020
        %v7870 = vunpack.c.h.b16 %v7020
        %v7871 = vunpack.c.l.b16 %v7021
        %v7872 = vunpack.c.l.b16 %v7022
        %v7873 = vunpack.c.h.b16 %v7022
        %v7874 = vunpack.c.l.b16 %v7023
        %v7875 = vunpack.c.l.b16 %v7024
        %v7876 = vunpack.c.h.b16 %v7024
        %v7877 = vunpack.c.l.b16 %v7025
        %v7878 = vunpack.c.l.b16 %v7026
        %v7879 = vunpack.c.h.b16 %v7026
        %v7880 = vunpack.c.l.b16 %v7027
        %v7881 = vunpack.c.l.b16 %v7028
        %v7882 = vunpack.c.h.b16 %v7028
        %v7883 = vunpack.c.l.b16 %v7029
        %v7884 = vunpack.c.l.b16 %v7030
        %v7885 = vunpack.c.h.b16 %v7030
        %v7886 = vunpack.c.l.b16 %v7031
        %v7887 = vunpack.c.l.b16 %v7032
        %v7888 = vunpack.c.h.b16 %v7032
        %v7889 = vunpack.c.l.b16 %v7033
        %v7890 = vunpack.c.l.b16 %v7034
        %v7891 = vunpack.c.h.b16 %v7034
        %v7892 = vunpack.c.l.b16 %v7035
        %v7893 = vunpack.c.l.b16 %v7036
        %v7894 = vunpack.c.h.b16 %v7036
        %v7895 = vunpack.c.l.b16 %v7037
        %v7896 = vunpack.c.l.b16 %v7038
        %v7897 = vunpack.c.h.b16 %v7038
        %v7898 = vunpack.c.l.b16 %v7039
        %v7899 = vunpack.c.l.b16 %v7040
        %v7900 = vunpack.c.h.b16 %v7040
        %v7901 = vunpack.c.l.b16 %v7041
        %v7902 = vunpack.c.l.b16 %v7042
        %v7903 = vunpack.c.h.b16 %v7042
        %v7904 = vunpack.c.l.b16 %v7043
        %v7905 = vunpack.c.l.b16 %v7044
        %v7906 = vunpack.c.h.b16 %v7044
        %v7907 = vunpack.c.l.b16 %v7045
        %v7908 = vunpack.c.l.b16 %v7046
        %v7909 = vunpack.c.h.b16 %v7046
        %v7910 = vunpack.c.l.b16 %v7047
        %v7911 = vunpack.c.l.b16 %v7048
        %v7912 = vunpack.c.h.b16 %v7048
        %v7913 = vunpack.c.l.b16 %v7049
        %v7914 = vunpack.c.l.b16 %v7050
        %v7915 = vunpack.c.h.b16 %v7050
        %v7916 = vunpack.c.l.b16 %v7051
        %v7917 = vunpack.c.l.b16 %v7052
        %v7918 = vunpack.c.h.b16 %v7052
        %v7919 = vunpack.c.l.b16 %v7053
        %v7920 = vunpack.c.l.b16 %v7054
        %v7921 = vunpack.c.h.b16 %v7054
        %v7922 = vunpack.c.l.b16 %v7055
        %v7923 = vunpack.c.l.b16 %v7056
        %v7924 = vunpack.c.h.b16 %v7056
        %v7925 = vunpack.c.l.b16 %v7057
        %v7926 = vunpack.c.l.b16 %v7058
        %v7927 = vunpack.c.h.b16 %v7058
        %v7928 = vunpack.c.l.b16 %v7059
        %v7929 = vunpack.c.l.b16 %v7060
        %v7930 = vunpack.c.h.b16 %v7060
        %v7931 = vunpack.c.l.b16 %v7061
        %v7932 = vunpack.c.l.b16 %v7062
        %v7933 = vunpack.c.h.b16 %v7062
        %v7934 = vunpack.c.l.b16 %v7063
        %v7935 = vunpack.c.l.b16 %v7064
        %v7936 = vunpack.c.h.b16 %v7064
        %v7937 = vunpack.c.l.b16 %v7065
        %v7938 = vunpack.c.l.b16 %v7066
        %v7939 = vunpack.c.h.b16 %v7066
        %v7940 = vunpack.c.l.b16 %v7067
        %v7941 = vunpack.c.l.b16 %v7068
        %v7942 = vunpack.c.h.b16 %v7068
        %v7943 = vunpack.c.l.b16 %v7069
        %v7944 = vunpack.c.l.b16 %v7070
        %v7945 = vunpack.c.h.b16 %v7070
        %v7946 = vunpack.c.l.b16 %v7071
        %v7947 = vunpack.c.l.b16 %v7072
        %v7948 = vunpack.c.h.b16 %v7072
        %v7949 = vunpack.c.l.b16 %v7073
        %v7950 = vunpack.c.l.b16 %v7074
        %v7951 = vunpack.c.h.b16 %v7074
        %v7952 = vunpack.c.l.b16 %v7075
        %v7953 = vunpack.c.l.b16 %v7076
        %v7954 = vunpack.c.h.b16 %v7076
        %v7955 = vunpack.c.l.b16 %v7077
        %v7956 = vunpack.c.l.b16 %v7078
        %v7957 = vunpack.c.h.b16 %v7078
        %v7958 = vunpack.c.l.b16 %v7079
        %v7959 = vunpack.c.l.b16 %v7080
        %v7960 = vunpack.c.h.b16 %v7080
        %v7961 = vunpack.c.l.b16 %v7081
        %v7962 = vunpack.c.l.b16 %v7082
        %v7963 = vunpack.c.h.b16 %v7082
        %v7964 = vunpack.c.l.b16 %v7083
        %v7965 = vunpack.c.l.b16 %v7084
        %v7966 = vunpack.c.h.b16 %v7084
        %v7967 = vunpack.c.l.b16 %v7085
        %v7968 = vunpack.c.l.b16 %v7086
        %v7969 = vunpack.c.h.b16 %v7086
        %v7970 = vunpack.c.l.b16 %v7087
        %v7971 = vunpack.c.l.b16 %v7088
        %v7972 = vunpack.c.h.b16 %v7088
        %v7973 = vunpack.c.l.b16 %v7089
        %v7974 = vunpack.c.l.b16 %v7090
        %v7975 = vunpack.c.h.b16 %v7090
        %v7976 = vunpack.c.l.b16 %v7091
        %v7977 = vunpack.c.l.b16 %v7092
        %v7978 = vunpack.c.h.b16 %v7092
        %v7979 = vunpack.c.l.b16 %v7093
        %v7980 = vunpack.c.l.b16 %v7094
        %v7981 = vunpack.c.h.b16 %v7094
        %v7982 = vunpack.c.l.b16 %v7095
        %v7983 = vunpack.c.l.b16 %v7096
        %v7984 = vunpack.c.h.b16 %v7096
        %v7985 = vunpack.c.l.b16 %v7097
        %v7986 = vunpack.c.l.b16 %v7098
        %v7987 = vunpack.c.h.b16 %v7098
        %v7988 = vunpack.c.l.b16 %v7099
        %v7989 = vunpack.c.l.b16 %v7100
        %v7990 = vunpack.c.h.b16 %v7100
        %v7991 = vunpack.c.l.b16 %v7101
        %v7992 = vunpack.c.l.b16 %v7102
        %v7993 = vunpack.c.h.b16 %v7102
        %v7994 = vunpack.c.l.b16 %v7103
        %v7995 = vunpack.c.l.b16 %v7104
        %v7996 = vunpack.c.h.b16 %v7104
        %v7997 = vunpack.c.l.b16 %v7105
        %v7998 = vunpack.c.l.b16 %v7106
        %v7999 = vunpack.c.h.b16 %v7106
        %v8000 = vunpack.c.l.b16 %v7107
        %v8001 = vunpack.c.l.b16 %v7108
        %v8002 = vunpack.c.h.b16 %v7108
        %v8003 = vunpack.c.l.b16 %v7109
        %v8004 = vunpack.c.l.b16 %v7110
        %v8005 = vunpack.c.h.b16 %v7110
        %v8006 = vunpack.c.l.b16 %v7111
        %v8007 = vunpack.c.l.b16 %v7112
        %v8008 = vunpack.c.h.b16 %v7112
        %v8009 = vunpack.c.l.b16 %v7113
        %v8010 = vunpack.c.l.b16 %v7114
        %v8011 = vunpack.c.h.b16 %v7114
        %v8012 = vunpack.c.l.b16 %v7115
        %v8013 = vunpack.c.l.b16 %v7116
        %v8014 = vunpack.c.h.b16 %v7116
        %v8015 = vunpack.c.l.b16 %v7117
        %v8016 = vunpack.c.l.b16 %v7118
        %v8017 = vunpack.c.h.b16 %v7118
        %v8018 = vunpack.c.l.b16 %v7119
        %v8019 = vunpack.c.l.b16 %v7120
        %v8020 = vunpack.c.h.b16 %v7120
        %v8021 = vunpack.c.l.b16 %v7121
        %v8022 = vunpack.c.l.b16 %v7122
        %v8023 = vunpack.c.h.b16 %v7122
        %v8024 = vunpack.c.l.b16 %v7123
        %v8025 = vunpack.c.l.b16 %v7124
        %v8026 = vunpack.c.h.b16 %v7124
        %v8027 = vunpack.c.l.b16 %v7125
        %v8028 = vunpack.c.l.b16 %v7126
        %v8029 = vunpack.c.h.b16 %v7126
        %v8030 = vunpack.c.l.b16 %v7127
        %v8031 = vunpack.c.l.b16 %v7128
        %v8032 = vunpack.c.h.b16 %v7128
        %v8033 = vunpack.c.l.b16 %v7129
        %v8034 = vunpack.c.l.b16 %v7130
        %v8035 = vunpack.c.h.b16 %v7130
        %v8036 = vunpack.c.l.b16 %v7131
        %v8037 = vunpack.c.l.b16 %v7132
        %v8038 = vunpack.c.h.b16 %v7132
        %v8039 = vunpack.c.l.b16 %v7133
        %v8040 = vunpack.c.l.b16 %v7134
        %v8041 = vunpack.c.h.b16 %v7134
        %v8042 = vunpack.c.l.b16 %v7135
        %v8043 = vunpack.c.l.b16 %v7136
        %v8044 = vunpack.c.h.b16 %v7136
        %v8045 = vunpack.c.l.b16 %v7137
        %v8046 = vunpack.c.l.b16 %v7138
        %v8047 = vunpack.c.h.b16 %v7138
        %v8048 = vunpack.c.l.b16 %v7139
        %v8049 = vunpack.c.l.b16 %v7140
        %v8050 = vunpack.c.h.b16 %v7140
        %v8051 = vunpack.c.l.b16 %v7141
        %v8052 = vunpack.c.l.b16 %v7142
        %v8053 = vunpack.c.h.b16 %v7142
        %v8054 = vunpack.c.l.b16 %v7143
        %v8055 = vunpack.c.l.b16 %v7144
        %v8056 = vunpack.c.h.b16 %v7144
        %v8057 = vunpack.c.l.b16 %v7145
        %v8058 = vunpack.c.l.b16 %v7146
        %v8059 = vunpack.c.h.b16 %v7146
        %v8060 = vunpack.c.l.b16 %v7147
        %v8061 = vunpack.c.l.b16 %v7148
        %v8062 = vunpack.c.h.b16 %v7148
        %v8063 = vunpack.c.l.b16 %v7149
        %v8064 = vunpack.c.l.b16 %v7150
        %v8065 = vunpack.c.h.b16 %v7150
        %v8066 = vunpack.c.l.b16 %v7151
        %v8067 = vunpack.c.l.b16 %v7152
        %v8068 = vunpack.c.h.b16 %v7152
        %v8069 = vunpack.c.l.b16 %v7153
        %v8070 = vunpack.c.l.b16 %v7154
        %v8071 = vunpack.c.h.b16 %v7154
        %v8072 = vunpack.c.l.b16 %v7155
        %v8073 = vunpack.c.l.b16 %v7156
        %v8074 = vunpack.c.h.b16 %v7156
        %v8075 = vunpack.c.l.b16 %v7157
        %v8076 = vunpack.c.l.b16 %v7158
        %v8077 = vunpack.c.h.b16 %v7158
        %v8078 = vunpack.c.l.b16 %v7159
        %v8079 = vunpack.c.l.b16 %v7160
        %v8080 = vunpack.c.h.b16 %v7160
        %v8081 = vunpack.c.l.b16 %v7161
        %v8082 = vunpack.c.l.b16 %v7162
        %v8083 = vunpack.c.h.b16 %v7162
        %v8084 = vunpack.c.l.b16 %v7163
        %v8085 = vunpack.c.l.b16 %v7164
        %v8086 = vunpack.c.h.b16 %v7164
        %v8087 = vunpack.c.l.b16 %v7165
        %v8088 = vunpack.c.l.b16 %v7166
        %v8089 = vunpack.c.h.b16 %v7166
        %v8090 = vunpack.c.l.b16 %v7167
        %v8091 = vunpack.c.l.b16 %v7168
        %v8092 = vunpack.c.h.b16 %v7168
        %v8093 = vunpack.c.l.b16 %v7169
        %v8094 = vunpack.c.l.b16 %v7170
        %v8095 = vunpack.c.h.b16 %v7170
        %v8096 = vunpack.c.l.b16 %v7171
        %v8097 = vunpack.c.l.b16 %v7172
        %v8098 = vunpack.c.h.b16 %v7172
        %v8099 = vunpack.c.l.b16 %v7173
        %v8100 = vunpack.c.l.b16 %v7174
        %v8101 = vunpack.c.h.b16 %v7174
        %v8102 = vunpack.c.l.b16 %v7175
        %v8103 = vunpack.c.l.b16 %v7176
        %v8104 = vunpack.c.h.b16 %v7176
        %v8105 = vunpack.c.l.b16 %v7177
        %v8106 = vunpack.c.l.b16 %v7178
        %v8107 = vunpack.c.h.b16 %v7178
        %v8108 = vunpack.c.l.b16 %v7179
        %v8109 = vunpack.c.l.b16 %v7180
        %v8110 = vunpack.c.h.b16 %v7180
        %v8111 = vunpack.c.l.b16 %v7181
        %v8112 = vunpack.c.l.b16 %v7182
        %v8113 = vunpack.c.h.b16 %v7182
        %v8114 = vunpack.c.l.b16 %v7183
        %v8115 = vunpack.c.l.b16 %v7184
        %v8116 = vunpack.c.h.b16 %v7184
        %v8117 = vunpack.c.l.b16 %v7185
        %v8118 = vunpack.c.l.b16 %v7186
        %v8119 = vunpack.c.h.b16 %v7186
        %v8120 = vunpack.c.l.b16 %v7187
        %v8121 = vunpack.c.l.b16 %v7188
        %v8122 = vunpack.c.h.b16 %v7188
        %v8123 = vunpack.c.l.b16 %v7189
        %v8124 = vunpack.c.l.b16 %v7190
        %v8125 = vunpack.c.h.b16 %v7190
        %v8126 = vunpack.c.l.b16 %v7191
        %v8127 = vunpack.c.l.b16 %v7192
        %v8128 = vunpack.c.h.b16 %v7192
        %v8129 = vunpack.c.l.b16 %v7193
        %v8130 = vunpack.c.l.b16 %v7194
        %v8131 = vunpack.c.h.b16 %v7194
        %v8132 = vunpack.c.l.b16 %v7195
        %v8133 = vunpack.c.l.b16 %v7196
        %v8134 = vunpack.c.h.b16 %v7196
        %v8135 = vunpack.c.l.b16 %v7197
        %v8136 = vunpack.c.l.b16 %v7198
        %v8137 = vunpack.c.h.b16 %v7198
        %v8138 = vunpack.c.l.b16 %v7199
        %v8139 = vunpack.c.l.b16 %v7200
        %v8140 = vunpack.c.h.b16 %v7200
        %v8141 = vunpack.c.l.b16 %v7201
        %v8142 = vunpack.c.l.b16 %v7202
        %v8143 = vunpack.c.h.b16 %v7202
        %v8144 = vunpack.c.l.b16 %v7203
        %v8145 = vunpack.c.l.b16 %v7204
        %v8146 = vunpack.c.h.b16 %v7204
        %v8147 = vunpack.c.l.b16 %v7205
        %v8148 = vunpack.c.l.b16 %v7206
        %v8149 = vunpack.c.h.b16 %v7206
        %v8150 = vunpack.c.l.b16 %v7207
        %v8151 = vunpack.c.l.b16 %v7208
        %v8152 = vunpack.c.h.b16 %v7208
        %v8153 = vunpack.c.l.b16 %v7209
        %v8154 = vunpack.c.l.b16 %v7210
        %v8155 = vunpack.c.h.b16 %v7210
        %v8156 = vunpack.c.l.b16 %v7211
        %v8157 = vunpack.c.l.b16 %v7212
        %v8158 = vunpack.c.h.b16 %v7212
        %v8159 = vunpack.c.l.b16 %v7213
        %v8160 = vunpack.c.l.b16 %v7214
        %v8161 = vunpack.c.h.b16 %v7214
        %v8162 = vunpack.c.l.b16 %v7215
        %v8163 = vunpack.c.l.b16 %v7216
        %v8164 = vunpack.c.h.b16 %v7216
        %v8165 = vunpack.c.l.b16 %v7217
        %v8166 = vunpack.c.l.b16 %v7218
        %v8167 = vunpack.c.h.b16 %v7218
        %v8168 = vunpack.c.l.b16 %v7219
        %v8169 = vunpack.c.l.b16 %v7220
        %v8170 = vunpack.c.h.b16 %v7220
        %v8171 = vunpack.c.l.b16 %v7221
        %v8172 = vunpack.c.l.b16 %v7222
        %v8173 = vunpack.c.h.b16 %v7222
        %v8174 = vunpack.c.l.b16 %v7223
        %v8175 = vunpack.c.l.b16 %v7224
        %v8176 = vunpack.c.h.b16 %v7224
        %v8177 = vunpack.c.l.b16 %v7225
        %v8178 = vunpack.c.l.b16 %v7226
        %v8179 = vunpack.c.h.b16 %v7226
        %v8180 = vunpack.c.l.b16 %v7227
        %v8181 = vunpack.c.l.b16 %v7228
        %v8182 = vunpack.c.h.b16 %v7228
        %v8183 = vunpack.c.l.b16 %v7229
        %v8184 = vunpack.c.l.b16 %v7230
        %v8185 = vunpack.c.h.b16 %v7230
        %v8186 = vunpack.c.l.b16 %v7231
        %v8187 = vunpack.c.l.b16 %v7232
        %v8188 = vunpack.c.h.b16 %v7232
        %v8189 = vunpack.c.l.b16 %v7233
        %v8190 = vunpack.c.l.b16 %v7234
        %v8191 = vunpack.c.h.b16 %v7234
        %v8192 = vunpack.c.l.b16 %v7235
        %v8193 = vunpack.c.l.b16 %v7236
        %v8194 = vunpack.c.h.b16 %v7236
        %v8195 = vunpack.c.l.b16 %v7237
        %v8196 = vunpack.c.l.b16 %v7238
        %v8197 = vunpack.c.h.b16 %v7238
        %v8198 = vunpack.c.l.b16 %v7239
        %v8199 = vunpack.c.l.b16 %v7240
        %v8200 = vunpack.c.h.b16 %v7240
        %v8201 = vunpack.c.l.b16 %v7241
        %v8202 = vunpack.c.l.b16 %v7242
        %v8203 = vunpack.c.h.b16 %v7242
        %v8204 = vunpack.c.l.b16 %v7243
        %v8205 = vunpack.c.l.b16 %v7244
        %v8206 = vunpack.c.h.b16 %v7244
        %v8207 = vunpack.c.l.b16 %v7245
        %v8208 = vunpack.c.l.b16 %v7246
        %v8209 = vunpack.c.h.b16 %v7246
        %v8210 = vunpack.c.l.b16 %v7247
        %v8211 = vunpack.c.l.b16 %v7248
        %v8212 = vunpack.c.h.b16 %v7248
        %v8213 = vunpack.c.l.b16 %v7249
        %v8214 = vunpack.c.l.b16 %v7250
        %v8215 = vunpack.c.h.b16 %v7250
        %v8216 = vunpack.c.l.b16 %v7251
        %v8217 = vunpack.c.l.b16 %v7252
        %v8218 = vunpack.c.h.b16 %v7252
        %v8219 = vunpack.c.l.b16 %v7253
        %v8220 = vunpack.c.l.b16 %v7254
        %v8221 = vunpack.c.h.b16 %v7254
        %v8222 = vunpack.c.l.b16 %v7255
        %v8223 = vunpack.c.l.b16 %v7256
        %v8224 = vunpack.c.h.b16 %v7256
        %v8225 = vunpack.c.l.b16 %v7257
        %v8226 = vunpack.c.l.b16 %v7258
        %v8227 = vunpack.c.h.b16 %v7258
        %v8228 = vunpack.c.l.b16 %v7259
        %v8229 = vunpack.c.l.b16 %v7260
        %v8230 = vunpack.c.h.b16 %v7260
        %v8231 = vunpack.c.l.b16 %v7261
        %v8232 = vunpack.c.l.b16 %v7262
        %v8233 = vunpack.c.h.b16 %v7262
        %v8234 = vunpack.c.l.b16 %v7263
        %v8235 = vunpack.c.l.b16 %v7264
        %v8236 = vunpack.c.h.b16 %v7264
        %v8237 = vunpack.c.l.b16 %v7265
        %v8238 = vunpack.c.l.b16 %v7266
        %v8239 = vunpack.c.h.b16 %v7266
        %v8240 = vunpack.c.l.b16 %v7267
        %v8241 = vunpack.c.l.b16 %v7268
        %v8242 = vunpack.c.h.b16 %v7268
        %v8243 = vunpack.c.l.b16 %v7269
        %v8244 = vunpack.c.l.b16 %v7270
        %v8245 = vunpack.c.h.b16 %v7270
        %v8246 = vunpack.c.l.b16 %v7271
        %v8247 = vunpack.c.l.b16 %v7272
        %v8248 = vunpack.c.h.b16 %v7272
        %v8249 = vunpack.c.l.b16 %v7273
        %v8250 = vunpack.c.l.b16 %v7274
        %v8251 = vunpack.c.h.b16 %v7274
        %v8252 = vunpack.c.l.b16 %v7275
        %v8253 = vunpack.c.l.b16 %v7276
        %v8254 = vunpack.c.h.b16 %v7276
        %v8255 = vunpack.c.l.b16 %v7277
        %v8256 = vpack.c.b16 %v7683, %v7680
        %v8257 = vpack.c.b16 %v7684, %v7681
        %v8258 = vpack.c.b16 %v7685, %v7682
        %v8259 = vpack.c.b16 %v7689, %v7686
        %v8260 = vpack.c.b16 %v7690, %v7687
        %v8261 = vpack.c.b16 %v7691, %v7688
        %v8262 = vpack.c.b16 %v7695, %v7692
        %v8263 = vpack.c.b16 %v7696, %v7693
        %v8264 = vpack.c.b16 %v7697, %v7694
        %v8265 = vpack.c.b16 %v7701, %v7698
        %v8266 = vpack.c.b16 %v7702, %v7699
        %v8267 = vpack.c.b16 %v7703, %v7700
        %v8268 = vpack.c.b16 %v7707, %v7704
        %v8269 = vpack.c.b16 %v7708, %v7705
        %v8270 = vpack.c.b16 %v7709, %v7706
        %v8271 = vpack.c.b16 %v7713, %v7710
        %v8272 = vpack.c.b16 %v7714, %v7711
        %v8273 = vpack.c.b16 %v7715, %v7712
        %v8274 = vpack.c.b16 %v7719, %v7716
        %v8275 = vpack.c.b16 %v7720, %v7717
        %v8276 = vpack.c.b16 %v7721, %v7718
        %v8277 = vpack.c.b16 %v7725, %v7722
        %v8278 = vpack.c.b16 %v7726, %v7723
        %v8279 = vpack.c.b16 %v7727, %v7724
        %v8280 = vpack.c.b16 %v7731, %v7728
        %v8281 = vpack.c.b16 %v7732, %v7729
        %v8282 = vpack.c.b16 %v7733, %v7730
        %v8283 = vpack.c.b16 %v7737, %v7734
        %v8284 = vpack.c.b16 %v7738, %v7735
        %v8285 = vpack.c.b16 %v7739, %v7736
        %v8286 = vpack.c.b16 %v7743, %v7740
        %v8287 = vpack.c.b16 %v7744, %v7741
        %v8288 = vpack.c.b16 %v7745, %v7742
        %v8289 = vpack.c.b16 %v7749, %v7746
        %v8290 = vpack.c.b16 %v7750, %v7747
        %v8291 = vpack.c.b16 %v7751, %v7748
        %v8292 = vpack.c.b16 %v7755, %v7752
        %v8293 = vpack.c.b16 %v7756, %v7753
        %v8294 = vpack.c.b16 %v7757, %v7754
        %v8295 = vpack.c.b16 %v7761, %v7758
        %v8296 = vpack.c.b16 %v7762, %v7759
        %v8297 = vpack.c.b16 %v7763, %v7760
        %v8298 = vpack.c.b16 %v7767, %v7764
        %v8299 = vpack.c.b16 %v7768, %v7765
        %v8300 = vpack.c.b16 %v7769, %v7766
        %v8301 = vpack.c.b16 %v7773, %v7770
        %v8302 = vpack.c.b16 %v7774, %v7771
        %v8303 = vpack.c.b16 %v7775, %v7772
        %v8304 = vpack.c.b16 %v7779, %v7776
        %v8305 = vpack.c.b16 %v7780, %v7777
        %v8306 = vpack.c.b16 %v7781, %v7778
        %v8307 = vpack.c.b16 %v7785, %v7782
        %v8308 = vpack.c.b16 %v7786, %v7783
        %v8309 = vpack.c.b16 %v7787, %v7784
        %v8310 = vpack.c.b16 %v7791, %v7788
        %v8311 = vpack.c.b16 %v7792, %v7789
        %v8312 = vpack.c.b16 %v7793, %v7790
        %v8313 = vpack.c.b16 %v7797, %v7794
        %v8314 = vpack.c.b16 %v7798, %v7795
        %v8315 = vpack.c.b16 %v7799, %v7796
        %v8316 = vpack.c.b16 %v7803, %v7800
        %v8317 = vpack.c.b16 %v7804, %v7801
        %v8318 = vpack.c.b16 %v7805, %v7802
        %v8319 = vpack.c.b16 %v7809, %v7806
        %v8320 = vpack.c.b16 %v7810, %v7807
        %v8321 = vpack.c.b16 %v7811, %v7808
        %v8322 = vpack.c.b16 %v7815, %v7812
        %v8323 = vpack.c.b16 %v7816, %v7813
        %v8324 = vpack.c.b16 %v7817, %v7814
        %v8325 = vpack.c.b16 %v7821, %v7818
        %v8326 = vpack.c.b16 %v7822, %v7819
        %v8327 = vpack.c.b16 %v7823, %v7820
        %v8328 = vpack.c.b16 %v7827, %v7824
        %v8329 = vpack.c.b16 %v7828, %v7825
        %v8330 = vpack.c.b16 %v7829, %v7826
        %v8331 = vpack.c.b16 %v7833, %v7830
        %v8332 = vpack.c.b16 %v7834, %v7831
        %v8333 = vpack.c.b16 %v7835, %v7832
        %v8334 = vpack.c.b16 %v7839, %v7836
        %v8335 = vpack.c.b16 %v7840, %v7837
        %v8336 = vpack.c.b16 %v7841, %v7838
        %v8337 = vpack.c.b16 %v7845, %v7842
        %v8338 = vpack.c.b16 %v7846, %v7843
        %v8339 = vpack.c.b16 %v7847, %v7844
        %v8340 = vpack.c.b16 %v7851, %v7848
        %v8341 = vpack.c.b16 %v7852, %v7849
        %v8342 = vpack.c.b16 %v7853, %v7850
        %v8343 = vpack.c.b16 %v7857, %v7854
        %v8344 = vpack.c.b16 %v7858, %v7855
        %v8345 = vpack.c.b16 %v7859, %v7856
        %v8346 = vpack.c.b16 %v7863, %v7860
        %v8347 = vpack.c.b16 %v7864, %v7861
        %v8348 = vpack.c.b16 %v7865, %v7862
        %v8349 = vpack.c.b16 %v7869, %v7866
        %v8350 = vpack.c.b16 %v7870, %v7867
        %v8351 = vpack.c.b16 %v7871, %v7868
        %v8352 = vpack.c.b16 %v7875, %v7872
        %v8353 = vpack.c.b16 %v7876, %v7873
        %v8354 = vpack.c.b16 %v7877, %v7874
        %v8355 = vpack.c.b16 %v7881, %v7878
        %v8356 = vpack.c.b16 %v7882, %v7879
        %v8357 = vpack.c.b16 %v7883, %v7880
        %v8358 = vpack.c.b16 %v7887, %v7884
        %v8359 = vpack.c.b16 %v7888, %v7885
        %v8360 = vpack.c.b16 %v7889, %v7886
        %v8361 = vpack.c.b16 %v7893, %v7890
        %v8362 = vpack.c.b16 %v7894, %v7891
        %v8363 = vpack.c.b16 %v7895, %v7892
        %v8364 = vpack.c.b16 %v7899, %v7896
        %v8365 = vpack.c.b16 %v7900, %v7897
        %v8366 = vpack.c.b16 %v7901, %v7898
        %v8367 = vpack.c.b16 %v7905, %v7902
        %v8368 = vpack.c.b16 %v7906, %v7903
        %v8369 = vpack.c.b16 %v7907, %v7904
        %v8370 = vpack.c.b16 %v7911, %v7908
        %v8371 = vpack.c.b16 %v7912, %v7909
        %v8372 = vpack.c.b16 %v7913, %v7910
        %v8373 = vpack.c.b16 %v7917, %v7914
        %v8374 = vpack.c.b16 %v7918, %v7915
        %v8375 = vpack.c.b16 %v7919, %v7916
        %v8376 = vpack.c.b16 %v7923, %v7920
        %v8377 = vpack.c.b16 %v7924, %v7921
        %v8378 = vpack.c.b16 %v7925, %v7922
        %v8379 = vpack.c.b16 %v7929, %v7926
        %v8380 = vpack.c.b16 %v7930, %v7927
        %v8381 = vpack.c.b16 %v7931, %v7928
        %v8382 = vpack.c.b16 %v7935, %v7932
        %v8383 = vpack.c.b16 %v7936, %v7933
        %v8384 = vpack.c.b16 %v7937, %v7934
        %v8385 = vpack.c.b16 %v7941, %v7938
        %v8386 = vpack.c.b16 %v7942, %v7939
        %v8387 = vpack.c.b16 %v7943, %v7940
        %v8388 = vpack.c.b16 %v7947, %v7944
        %v8389 = vpack.c.b16 %v7948, %v7945
        %v8390 = vpack.c.b16 %v7949, %v7946
        %v8391 = vpack.c.b16 %v7953, %v7950
        %v8392 = vpack.c.b16 %v7954, %v7951
        %v8393 = vpack.c.b16 %v7955, %v7952
        %v8394 = vpack.c.b16 %v7959, %v7956
        %v8395 = vpack.c.b16 %v7960, %v7957
        %v8396 = vpack.c.b16 %v7961, %v7958
        %v8397 = vpack.c.b16 %v7965, %v7962
        %v8398 = vpack.c.b16 %v7966, %v7963
        %v8399 = vpack.c.b16 %v7967, %v7964
        %v8400 = vpack.c.b16 %v7971, %v7968
        %v8401 = vpack.c.b16 %v7972, %v7969
        %v8402 = vpack.c.b16 %v7973, %v7970
        %v8403 = vpack.c.b16 %v7977, %v7974
        %v8404 = vpack.c.b16 %v7978, %v7975
        %v8405 = vpack.c.b16 %v7979, %v7976
        %v8406 = vpack.c.b16 %v7983, %v7980
        %v8407 = vpack.c.b16 %v7984, %v7981
        %v8408 = vpack.c.b16 %v7985, %v7982
        %v8409 = vpack.c.b16 %v7989, %v7986
        %v8410 = vpack.c.b16 %v7990, %v7987
        %v8411 = vpack.c.b16 %v7991, %v7988
        %v8412 = vpack.c.b16 %v7995, %v7992
        %v8413 = vpack.c.b16 %v7996, %v7993
        %v8414 = vpack.c.b16 %v7997, %v7994
        %v8415 = vpack.c.b16 %v8001, %v7998
        %v8416 = vpack.c.b16 %v8002, %v7999
        %v8417 = vpack.c.b16 %v8003, %v8000
        %v8418 = vpack.c.b16 %v8007, %v8004
        %v8419 = vpack.c.b16 %v8008, %v8005
        %v8420 = vpack.c.b16 %v8009, %v8006
        %v8421 = vpack.c.b16 %v8013, %v8010
        %v8422 = vpack.c.b16 %v8014, %v8011
        %v8423 = vpack.c.b16 %v8015, %v8012
        %v8424 = vpack.c.b16 %v8019, %v8016
        %v8425 = vpack.c.b16 %v8020, %v8017
        %v8426 = vpack.c.b16 %v8021, %v8018
        %v8427 = vpack.c.b16 %v8025, %v8022
        %v8428 = vpack.c.b16 %v8026, %v8023
        %v8429 = vpack.c.b16 %v8027, %v8024
        %v8430 = vpack.c.b16 %v8031, %v8028
        %v8431 = vpack.c.b16 %v8032, %v8029
        %v8432 = vpack.c.b16 %v8033, %v8030
        %v8433 = vpack.c.b16 %v8037, %v8034
        %v8434 = vpack.c.b16 %v8038, %v8035
        %v8435 = vpack.c.b16 %v8039, %v8036
        %v8436 = vpack.c.b16 %v8043, %v8040
        %v8437 = vpack.c.b16 %v8044, %v8041
        %v8438 = vpack.c.b16 %v8045, %v8042
        %v8439 = vpack.c.b16 %v8049, %v8046
        %v8440 = vpack.c.b16 %v8050, %v8047
        %v8441 = vpack.c.b16 %v8051, %v8048
        %v8442 = vpack.c.b16 %v8055, %v8052
        %v8443 = vpack.c.b16 %v8056, %v8053
        %v8444 = vpack.c.b16 %v8057, %v8054
        %v8445 = vpack.c.b16 %v8061, %v8058
        %v8446 = vpack.c.b16 %v8062, %v8059
        %v8447 = vpack.c.b16 %v8063, %v8060
        %v8448 = vpack.c.b16 %v8067, %v8064
        %v8449 = vpack.c.b16 %v8068, %v8065
        %v8450 = vpack.c.b16 %v8069, %v8066
        %v8451 = vpack.c.b16 %v8073, %v8070
        %v8452 = vpack.c.b16 %v8074, %v8071
        %v8453 = vpack.c.b16 %v8075, %v8072
        %v8454 = vpack.c.b16 %v8079, %v8076
        %v8455 = vpack.c.b16 %v8080, %v8077
        %v8456 = vpack.c.b16 %v8081, %v8078
        %v8457 = vpack.c.b16 %v8085, %v8082
        %v8458 = vpack.c.b16 %v8086, %v8083
        %v8459 = vpack.c.b16 %v8087, %v8084
        %v8460 = vpack.c.b16 %v8091, %v8088
        %v8461 = vpack.c.b16 %v8092, %v8089
        %v8462 = vpack.c.b16 %v8093, %v8090
        %v8463 = vpack.c.b16 %v8097, %v8094
        %v8464 = vpack.c.b16 %v8098, %v8095
        %v8465 = vpack.c.b16 %v8099, %v8096
        %v8466 = vpack.c.b16 %v8103, %v8100
        %v8467 = vpack.c.b16 %v8104, %v8101
        %v8468 = vpack.c.b16 %v8105, %v8102
        %v8469 = vpack.c.b16 %v8109, %v8106
        %v8470 = vpack.c.b16 %v8110, %v8107
        %v8471 = vpack.c.b16 %v8111, %v8108
        %v8472 = vpack.c.b16 %v8115, %v8112
        %v8473 = vpack.c.b16 %v8116, %v8113
        %v8474 = vpack.c.b16 %v8117, %v8114
        %v8475 = vpack.c.b16 %v8121, %v8118
        %v8476 = vpack.c.b16 %v8122, %v8119
        %v8477 = vpack.c.b16 %v8123, %v8120
        %v8478 = vpack.c.b16 %v8127, %v8124
        %v8479 = vpack.c.b16 %v8128, %v8125
        %v8480 = vpack.c.b16 %v8129, %v8126
        %v8481 = vpack.c.b16 %v8133, %v8130
        %v8482 = vpack.c.b16 %v8134, %v8131
        %v8483 = vpack.c.b16 %v8135, %v8132
        %v8484 = vpack.c.b16 %v8139, %v8136
        %v8485 = vpack.c.b16 %v8140, %v8137
        %v8486 = vpack.c.b16 %v8141, %v8138
        %v8487 = vpack.c.b16 %v8145, %v8142
        %v8488 = vpack.c.b16 %v8146, %v8143
        %v8489 = vpack.c.b16 %v8147, %v8144
        %v8490 = vpack.c.b16 %v8151, %v8148
        %v8491 = vpack.c.b16 %v8152, %v8149
        %v8492 = vpack.c.b16 %v8153, %v8150
        %v8493 = vpack.c.b16 %v8157, %v8154
        %v8494 = vpack.c.b16 %v8158, %v8155
        %v8495 = vpack.c.b16 %v8159, %v8156
        %v8496 = vpack.c.b16 %v8163, %v8160
        %v8497 = vpack.c.b16 %v8164, %v8161
        %v8498 = vpack.c.b16 %v8165, %v8162
        %v8499 = vpack.c.b16 %v8169, %v8166
        %v8500 = vpack.c.b16 %v8170, %v8167
        %v8501 = vpack.c.b16 %v8171, %v8168
        %v8502 = vpack.c.b16 %v8175, %v8172
        %v8503 = vpack.c.b16 %v8176, %v8173
        %v8504 = vpack.c.b16 %v8177, %v8174
        %v8505 = vpack.c.b16 %v8181, %v8178
        %v8506 = vpack.c.b16 %v8182, %v8179
        %v8507 = vpack.c.b16 %v8183, %v8180
        %v8508 = vpack.c.b16 %v8187, %v8184
        %v8509 = vpack.c.b16 %v8188, %v8185
        %v8510 = vpack.c.b16 %v8189, %v8186
        %v8511 = vpack.c.b16 %v8193, %v8190
        %v8512 = vpack.c.b16 %v8194, %v8191
        %v8513 = vpack.c.b16 %v8195, %v8192
        %v8514 = vpack.c.b16 %v8199, %v8196
        %v8515 = vpack.c.b16 %v8200, %v8197
        %v8516 = vpack.c.b16 %v8201, %v8198
        %v8517 = vpack.c.b16 %v8205, %v8202
        %v8518 = vpack.c.b16 %v8206, %v8203
        %v8519 = vpack.c.b16 %v8207, %v8204
        %v8520 = vpack.c.b16 %v8211, %v8208
        %v8521 = vpack.c.b16 %v8212, %v8209
        %v8522 = vpack.c.b16 %v8213, %v8210
        %v8523 = vpack.c.b16 %v8217, %v8214
        %v8524 = vpack.c.b16 %v8218, %v8215
        %v8525 = vpack.c.b16 %v8219, %v8216
        %v8526 = vpack.c.b16 %v8223, %v8220
        %v8527 = vpack.c.b16 %v8224, %v8221
        %v8528 = vpack.c.b16 %v8225, %v8222
        %v8529 = vpack.c.b16 %v8229, %v8226
        %v8530 = vpack.c.b16 %v8230, %v8227
        %v8531 = vpack.c.b16 %v8231, %v8228
        %v8532 = vpack.c.b16 %v8235, %v8232
        %v8533 = vpack.c.b16 %v8236, %v8233
        %v8534 = vpack.c.b16 %v8237, %v8234
        %v8535 = vpack.c.b16 %v8241, %v8238
        %v8536 = vpack.c.b16 %v8242, %v8239
        %v8537 = vpack.c.b16 %v8243, %v8240
        %v8538 = vpack.c.b16 %v8247, %v8244
        %v8539 = vpack.c.b16 %v8248, %v8245
        %v8540 = vpack.c.b16 %v8249, %v8246
        %v8541 = vpack.c.b16 %v8253, %v8250
        %v8542 = vpack.c.b16 %v8254, %v8251
        %v8543 = vpack.c.b16 %v8255, %v8252
        %8832 = vmatprep.subr.bf16.mxu0 %v8278
        %8833 = vmatpush1.bf16.msra.mxu0 %v8277
        %8834 = vmatprep.subr.bf16.mxu0 %v8275
        %8835 = vmatpush1.bf16.msra.mxu0 %v8274
        %8836 = vmatprep.subr.bf16.mxu0 %v8272
        %8837 = vmatpush1.bf16.msra.mxu0 %v8271
        %8838 = vmatprep.subr.bf16.mxu0 %v8269
        %8839 = vmatpush1.bf16.msra.mxu0 %v8268
        %8840 = vmatprep.subr.bf16.mxu0 %v8266
        %8841 = vmatpush1.bf16.msra.mxu0 %v8265
        %8842 = vmatprep.subr.bf16.mxu0 %v8263
        %8843 = vmatpush1.bf16.msra.mxu0 %v8262
        %8844 = vmatprep.subr.bf16.mxu0 %v8260
        %8845 = vmatpush1.bf16.msra.mxu0 %v8259
        %8846 = vmatprep.subr.bf16.mxu0 %v8257
        %8847 = vmatpush1.bf16.msra.mxu0 %v8256
        %8848 = vmatprep.subr.bf16.mxu0 %v8302
        %8849 = vmatpush2.bf16.msra.mxu0 %v8301
        %8850 = vmatprep.subr.bf16.mxu0 %v8299
        %8851 = vmatpush2.bf16.msra.mxu0 %v8298
        %8852 = vmatprep.subr.bf16.mxu0 %v8296
        %8853 = vmatpush2.bf16.msra.mxu0 %v8295
        %8854 = vmatprep.subr.bf16.mxu0 %v8293
        %8855 = vmatpush2.bf16.msra.mxu0 %v8292
        %8856 = vmatprep.subr.bf16.mxu0 %v8290
        %8857 = vmatpush2.bf16.msra.mxu0 %v8289
        %8858 = vmatprep.subr.bf16.mxu0 %v8287
        %8859 = vmatpush2.bf16.msra.mxu0 %v8286
        %8860 = vmatprep.subr.bf16.mxu0 %v8284
        %8861 = vmatpush2.bf16.msra.mxu0 %v8283
        %8862 = vmatprep.subr.bf16.mxu0 %v8281
        %8863 = vmatpush2.bf16.msra.mxu0 %v8280
        %8864 = vmatprep.mubr.bf16.mxu0 %v6881
        %8865 = vmatmul.mubr.bf16.gmra.mxu0 %v6880
        %v8866 = vpop.f32.mrf.mxu0
        %v8867 = vadd.f32 %v7284, %v8866
        %v8868 = vpop.f32.mrf.mxu0
        %v8869 = vadd.f32 %v7288, %v8868
        %v8870 = vpop.f32.mrf.mxu0
        %v8871 = vpop.f32.mrf.mxu0
        %8872 = vdwg.mxu0
        %8873 = vmatprep.subr.bf16.mxu0 %v8326
        %8874 = vmatpush1.bf16.msra.mxu0 %v8325
        %8875 = vmatprep.subr.bf16.mxu0 %v8323
        %8876 = vmatpush1.bf16.msra.mxu0 %v8322
        %8877 = vmatprep.subr.bf16.mxu0 %v8320
        %8878 = vmatpush1.bf16.msra.mxu0 %v8319
        %8879 = vmatprep.subr.bf16.mxu0 %v8317
        %8880 = vmatpush1.bf16.msra.mxu0 %v8316
        %8881 = vmatprep.subr.bf16.mxu0 %v8314
        %8882 = vmatpush1.bf16.msra.mxu0 %v8313
        %8883 = vmatprep.subr.bf16.mxu0 %v8311
        %8884 = vmatpush1.bf16.msra.mxu0 %v8310
        %8885 = vmatprep.subr.bf16.mxu0 %v8308
        %8886 = vmatpush1.bf16.msra.mxu0 %v8307
        %8887 = vmatprep.subr.bf16.mxu0 %v8305
        %8888 = vmatpush1.bf16.msra.mxu0 %v8304
        %8889 = vmatprep.subr.bf16.mxu0 %v8350
        %8890 = vmatpush2.bf16.msra.mxu0 %v8349
        %8891 = vmatprep.subr.bf16.mxu0 %v8347
        %8892 = vmatpush2.bf16.msra.mxu0 %v8346
        %8893 = vmatprep.subr.bf16.mxu0 %v8344
        %8894 = vmatpush2.bf16.msra.mxu0 %v8343
        %8895 = vmatprep.subr.bf16.mxu0 %v8341
        %8896 = vmatpush2.bf16.msra.mxu0 %v8340
        %8897 = vmatprep.subr.bf16.mxu0 %v8338
        %8898 = vmatpush2.bf16.msra.mxu0 %v8337
        %8899 = vmatprep.subr.bf16.mxu0 %v8335
        %8900 = vmatpush2.bf16.msra.mxu0 %v8334
        %8901 = vmatprep.subr.bf16.mxu0 %v8332
        %8902 = vmatpush2.bf16.msra.mxu0 %v8331
        %8903 = vmatprep.subr.bf16.mxu0 %v8329
        %8904 = vmatpush2.bf16.msra.mxu0 %v8328
        %8905 = vmatprep.mubr.bf16.mxu0 %v6883
        %8906 = vmatmul.mubr.bf16.gmra.mxu0 %v6882
        %v8907 = vpop.f32.mrf.mxu0
        %v8908 = vadd.f32 %v8867, %v8907
        %v8909 = vpop.f32.mrf.mxu0
        %v8910 = vadd.f32 %v8869, %v8909
        %v8911 = vpop.f32.mrf.mxu0
        %v8912 = vpop.f32.mrf.mxu0
        %8913 = vdwg.mxu0
        %8914 = vmatprep.subr.bf16.mxu0 %v8374
        %8915 = vmatpush1.bf16.msra.mxu0 %v8373
        %8916 = vmatprep.subr.bf16.mxu0 %v8371
        %8917 = vmatpush1.bf16.msra.mxu0 %v8370
        %8918 = vmatprep.subr.bf16.mxu0 %v8368
        %8919 = vmatpush1.bf16.msra.mxu0 %v8367
        %8920 = vmatprep.subr.bf16.mxu0 %v8365
        %8921 = vmatpush1.bf16.msra.mxu0 %v8364
        %8922 = vmatprep.subr.bf16.mxu0 %v8362
        %8923 = vmatpush1.bf16.msra.mxu0 %v8361
        %8924 = vmatprep.subr.bf16.mxu0 %v8359
        %8925 = vmatpush1.bf16.msra.mxu0 %v8358
        %8926 = vmatprep.subr.bf16.mxu0 %v8356
        %8927 = vmatpush1.bf16.msra.mxu0 %v8355
        %8928 = vmatprep.subr.bf16.mxu0 %v8353
        %8929 = vmatpush1.bf16.msra.mxu0 %v8352
        %8930 = vmatprep.subr.bf16.mxu0 %v8398
        %8931 = vmatpush2.bf16.msra.mxu0 %v8397
        %8932 = vmatprep.subr.bf16.mxu0 %v8395
        %8933 = vmatpush2.bf16.msra.mxu0 %v8394
        %8934 = vmatprep.subr.bf16.mxu0 %v8392
        %8935 = vmatpush2.bf16.msra.mxu0 %v8391
        %8936 = vmatprep.subr.bf16.mxu0 %v8389
        %8937 = vmatpush2.bf16.msra.mxu0 %v8388
        %8938 = vmatprep.subr.bf16.mxu0 %v8386
        %8939 = vmatpush2.bf16.msra.mxu0 %v8385
        %8940 = vmatprep.subr.bf16.mxu0 %v8383
        %8941 = vmatpush2.bf16.msra.mxu0 %v8382
        %8942 = vmatprep.subr.bf16.mxu0 %v8380
        %8943 = vmatpush2.bf16.msra.mxu0 %v8379
        %8944 = vmatprep.subr.bf16.mxu0 %v8377
        %8945 = vmatpush2.bf16.msra.mxu0 %v8376
        %8946 = vmatprep.mubr.bf16.mxu0 %v6885
        %8947 = vmatmul.mubr.bf16.gmra.mxu0 %v6884
        %v8948 = vpop.f32.mrf.mxu0
        %v8949 = vadd.f32 %v8908, %v8948
        %v8950 = vpop.f32.mrf.mxu0
        %v8951 = vadd.f32 %v8910, %v8950
        %v8952 = vpop.f32.mrf.mxu0
        %v8953 = vpop.f32.mrf.mxu0
        %8954 = vdwg.mxu0
        %8955 = vmatprep.subr.bf16.mxu0 %v8422
        %8956 = vmatpush1.bf16.msra.mxu0 %v8421
        %8957 = vmatprep.subr.bf16.mxu0 %v8419
        %8958 = vmatpush1.bf16.msra.mxu0 %v8418
        %8959 = vmatprep.subr.bf16.mxu0 %v8416
        %8960 = vmatpush1.bf16.msra.mxu0 %v8415
        %8961 = vmatprep.subr.bf16.mxu0 %v8413
        %8962 = vmatpush1.bf16.msra.mxu0 %v8412
        %8963 = vmatprep.subr.bf16.mxu0 %v8410
        %8964 = vmatpush1.bf16.msra.mxu0 %v8409
        %8965 = vmatprep.subr.bf16.mxu0 %v8407
        %8966 = vmatpush1.bf16.msra.mxu0 %v8406
        %8967 = vmatprep.subr.bf16.mxu0 %v8404
        %8968 = vmatpush1.bf16.msra.mxu0 %v8403
        %8969 = vmatprep.subr.bf16.mxu0 %v8401
        %8970 = vmatpush1.bf16.msra.mxu0 %v8400
        %8971 = vmatprep.subr.bf16.mxu0 %v8446
        %8972 = vmatpush2.bf16.msra.mxu0 %v8445
        %8973 = vmatprep.subr.bf16.mxu0 %v8443
        %8974 = vmatpush2.bf16.msra.mxu0 %v8442
        %8975 = vmatprep.subr.bf16.mxu0 %v8440
        %8976 = vmatpush2.bf16.msra.mxu0 %v8439
        %8977 = vmatprep.subr.bf16.mxu0 %v8437
        %8978 = vmatpush2.bf16.msra.mxu0 %v8436
        %8979 = vmatprep.subr.bf16.mxu0 %v8434
        %8980 = vmatpush2.bf16.msra.mxu0 %v8433
        %8981 = vmatprep.subr.bf16.mxu0 %v8431
        %8982 = vmatpush2.bf16.msra.mxu0 %v8430
        %8983 = vmatprep.subr.bf16.mxu0 %v8428
        %8984 = vmatpush2.bf16.msra.mxu0 %v8427
        %8985 = vmatprep.subr.bf16.mxu0 %v8425
        %8986 = vmatpush2.bf16.msra.mxu0 %v8424
        %8987 = vmatprep.mubr.bf16.mxu0 %v6887
        %8988 = vmatmul.mubr.bf16.gmra.mxu0 %v6886
        %v8989 = vpop.f32.mrf.mxu0
        %v8990 = vadd.f32 %v8949, %v8989
        %v8991 = vpop.f32.mrf.mxu0
        %v8992 = vadd.f32 %v8951, %v8991
        %v8993 = vpop.f32.mrf.mxu0
        %v8994 = vpop.f32.mrf.mxu0
        %8995 = vdwg.mxu0
        %8996 = vmatprep.subr.bf16.mxu0 %v8470
        %8997 = vmatpush1.bf16.msra.mxu0 %v8469
        %8998 = vmatprep.subr.bf16.mxu0 %v8467
        %8999 = vmatpush1.bf16.msra.mxu0 %v8466
        %9000 = vmatprep.subr.bf16.mxu0 %v8464
        %9001 = vmatpush1.bf16.msra.mxu0 %v8463
        %9002 = vmatprep.subr.bf16.mxu0 %v8461
        %9003 = vmatpush1.bf16.msra.mxu0 %v8460
        %9004 = vmatprep.subr.bf16.mxu0 %v8458
        %9005 = vmatpush1.bf16.msra.mxu0 %v8457
        %9006 = vmatprep.subr.bf16.mxu0 %v8455
        %9007 = vmatpush1.bf16.msra.mxu0 %v8454
        %9008 = vmatprep.subr.bf16.mxu0 %v8452
        %9009 = vmatpush1.bf16.msra.mxu0 %v8451
        %9010 = vmatprep.subr.bf16.mxu0 %v8449
        %9011 = vmatpush1.bf16.msra.mxu0 %v8448
        %9012 = vmatprep.subr.bf16.mxu0 %v8494
        %9013 = vmatpush2.bf16.msra.mxu0 %v8493
        %9014 = vmatprep.subr.bf16.mxu0 %v8491
        %9015 = vmatpush2.bf16.msra.mxu0 %v8490
        %9016 = vmatprep.subr.bf16.mxu0 %v8488
        %9017 = vmatpush2.bf16.msra.mxu0 %v8487
        %9018 = vmatprep.subr.bf16.mxu0 %v8485
        %9019 = vmatpush2.bf16.msra.mxu0 %v8484
        %9020 = vmatprep.subr.bf16.mxu0 %v8482
        %9021 = vmatpush2.bf16.msra.mxu0 %v8481
        %9022 = vmatprep.subr.bf16.mxu0 %v8479
        %9023 = vmatpush2.bf16.msra.mxu0 %v8478
        %9024 = vmatprep.subr.bf16.mxu0 %v8476
        %9025 = vmatpush2.bf16.msra.mxu0 %v8475
        %9026 = vmatprep.subr.bf16.mxu0 %v8473
        %9027 = vmatpush2.bf16.msra.mxu0 %v8472
        %9028 = vmatprep.mubr.bf16.mxu0 %v6889
        %9029 = vmatmul.mubr.bf16.gmra.mxu0 %v6888
        %v9030 = vpop.f32.mrf.mxu0
        %v9031 = vadd.f32 %v8990, %v9030
        %v9032 = vpop.f32.mrf.mxu0
        %v9033 = vadd.f32 %v8992, %v9032
        %v9034 = vpop.f32.mrf.mxu0
        %v9035 = vpop.f32.mrf.mxu0
        %9036 = vdwg.mxu0
        %9037 = vmatprep.subr.bf16.mxu0 %v8518
        %9038 = vmatpush1.bf16.msra.mxu0 %v8517
        %9039 = vmatprep.subr.bf16.mxu0 %v8515
        %9040 = vmatpush1.bf16.msra.mxu0 %v8514
        %9041 = vmatprep.subr.bf16.mxu0 %v8512
        %9042 = vmatpush1.bf16.msra.mxu0 %v8511
        %9043 = vmatprep.subr.bf16.mxu0 %v8509
        %9044 = vmatpush1.bf16.msra.mxu0 %v8508
        %9045 = vmatprep.subr.bf16.mxu0 %v8506
        %9046 = vmatpush1.bf16.msra.mxu0 %v8505
        %9047 = vmatprep.subr.bf16.mxu0 %v8503
        %9048 = vmatpush1.bf16.msra.mxu0 %v8502
        %9049 = vmatprep.subr.bf16.mxu0 %v8500
        %9050 = vmatpush1.bf16.msra.mxu0 %v8499
        %9051 = vmatprep.subr.bf16.mxu0 %v8497
        %9052 = vmatpush1.bf16.msra.mxu0 %v8496
        %9053 = vmatprep.subr.bf16.mxu0 %v8542
        %9054 = vmatpush2.bf16.msra.mxu0 %v8541
        %9055 = vmatprep.subr.bf16.mxu0 %v8539
        %9056 = vmatpush2.bf16.msra.mxu0 %v8538
        %9057 = vmatprep.subr.bf16.mxu0 %v8536
        %9058 = vmatpush2.bf16.msra.mxu0 %v8535
        %9059 = vmatprep.subr.bf16.mxu0 %v8533
        %9060 = vmatpush2.bf16.msra.mxu0 %v8532
        %9061 = vmatprep.subr.bf16.mxu0 %v8530
        %9062 = vmatpush2.bf16.msra.mxu0 %v8529
        %9063 = vmatprep.subr.bf16.mxu0 %v8527
        %9064 = vmatpush2.bf16.msra.mxu0 %v8526
        %9065 = vmatprep.subr.bf16.mxu0 %v8524
        %9066 = vmatpush2.bf16.msra.mxu0 %v8523
        %9067 = vmatprep.subr.bf16.mxu0 %v8521
        %9068 = vmatpush2.bf16.msra.mxu0 %v8520
        %9069 = vmatprep.mubr.bf16.mxu0 %v6891
        %9070 = vmatmul.mubr.bf16.gmra.mxu0 %v6890
        %v9071 = vpop.f32.mrf.mxu0
        %v9072 = vadd.f32 %v9031, %v9071
        %v9073 = vpop.f32.mrf.mxu0
        %v9074 = vadd.f32 %v9033, %v9073
        %v9075 = vpop.f32.mrf.mxu0
        %v9076 = vpop.f32.mrf.mxu0
        %9077 = vdwg.mxu0
        %9078 = vmatprep.subr.bf16.mxu0 0
        %9079 = vmatpush1.bf16.msra.mxu0 %v8279
        %9080 = vmatprep.subr.bf16.mxu0 0
        %9081 = vmatpush1.bf16.msra.mxu0 %v8276
        %9082 = vmatprep.subr.bf16.mxu0 0
        %9083 = vmatpush1.bf16.msra.mxu0 %v8273
        %9084 = vmatprep.subr.bf16.mxu0 0
        %9085 = vmatpush1.bf16.msra.mxu0 %v8270
        %9086 = vmatprep.subr.bf16.mxu0 0
        %9087 = vmatpush1.bf16.msra.mxu0 %v8267
        %9088 = vmatprep.subr.bf16.mxu0 0
        %9089 = vmatpush1.bf16.msra.mxu0 %v8264
        %9090 = vmatprep.subr.bf16.mxu0 0
        %9091 = vmatpush1.bf16.msra.mxu0 %v8261
        %9092 = vmatprep.subr.bf16.mxu0 0
        %9093 = vmatpush1.bf16.msra.mxu0 %v8258
        %9094 = vmatprep.subr.bf16.mxu0 0
        %9095 = vmatpush2.bf16.msra.mxu0 %v8303
        %9096 = vmatprep.subr.bf16.mxu0 0
        %9097 = vmatpush2.bf16.msra.mxu0 %v8300
        %9098 = vmatprep.subr.bf16.mxu0 0
        %9099 = vmatpush2.bf16.msra.mxu0 %v8297
        %9100 = vmatprep.subr.bf16.mxu0 0
        %9101 = vmatpush2.bf16.msra.mxu0 %v8294
        %9102 = vmatprep.subr.bf16.mxu0 0
        %9103 = vmatpush2.bf16.msra.mxu0 %v8291
        %9104 = vmatprep.subr.bf16.mxu0 0
        %9105 = vmatpush2.bf16.msra.mxu0 %v8288
        %9106 = vmatprep.subr.bf16.mxu0 0
        %9107 = vmatpush2.bf16.msra.mxu0 %v8285
        %9108 = vmatprep.subr.bf16.mxu0 0
        %9109 = vmatpush2.bf16.msra.mxu0 %v8282
        %9110 = vmatprep.mubr.bf16.mxu0 %v6881
        %9111 = vmatmul.mubr.bf16.gmra.mxu0 %v6880
        %v9112 = vpop.f32.mrf.mxu0
        %v9113 = vadd.f32 %v7292, %v9112
        %v9114 = vpop.f32.mrf.mxu0
        %v9115 = vpop.f32.mrf.mxu0
        %v9116 = vpop.f32.mrf.mxu0
        %9117 = vdwg.mxu0
        %9118 = vmatprep.subr.bf16.mxu0 0
        %9119 = vmatpush1.bf16.msra.mxu0 %v8327
        %9120 = vmatprep.subr.bf16.mxu0 0
        %9121 = vmatpush1.bf16.msra.mxu0 %v8324
        %9122 = vmatprep.subr.bf16.mxu0 0
        %9123 = vmatpush1.bf16.msra.mxu0 %v8321
        %9124 = vmatprep.subr.bf16.mxu0 0
        %9125 = vmatpush1.bf16.msra.mxu0 %v8318
        %9126 = vmatprep.subr.bf16.mxu0 0
        %9127 = vmatpush1.bf16.msra.mxu0 %v8315
        %9128 = vmatprep.subr.bf16.mxu0 0
        %9129 = vmatpush1.bf16.msra.mxu0 %v8312
        %9130 = vmatprep.subr.bf16.mxu0 0
        %9131 = vmatpush1.bf16.msra.mxu0 %v8309
        %9132 = vmatprep.subr.bf16.mxu0 0
        %9133 = vmatpush1.bf16.msra.mxu0 %v8306
        %9134 = vmatprep.subr.bf16.mxu0 0
        %9135 = vmatpush2.bf16.msra.mxu0 %v8351
        %9136 = vmatprep.subr.bf16.mxu0 0
        %9137 = vmatpush2.bf16.msra.mxu0 %v8348
        %9138 = vmatprep.subr.bf16.mxu0 0
        %9139 = vmatpush2.bf16.msra.mxu0 %v8345
        %9140 = vmatprep.subr.bf16.mxu0 0
        %9141 = vmatpush2.bf16.msra.mxu0 %v8342
        %9142 = vmatprep.subr.bf16.mxu0 0
        %9143 = vmatpush2.bf16.msra.mxu0 %v8339
        %9144 = vmatprep.subr.bf16.mxu0 0
        %9145 = vmatpush2.bf16.msra.mxu0 %v8336
        %9146 = vmatprep.subr.bf16.mxu0 0
        %9147 = vmatpush2.bf16.msra.mxu0 %v8333
        %9148 = vmatprep.subr.bf16.mxu0 0
        %9149 = vmatpush2.bf16.msra.mxu0 %v8330
        %9150 = vmatprep.mubr.bf16.mxu0 %v6883
        %9151 = vmatmul.mubr.bf16.gmra.mxu0 %v6882
        %v9152 = vpop.f32.mrf.mxu0
        %v9153 = vadd.f32 %v9113, %v9152
        %v9154 = vpop.f32.mrf.mxu0
        %v9155 = vpop.f32.mrf.mxu0
        %v9156 = vpop.f32.mrf.mxu0
        %9157 = vdwg.mxu0
        %9158 = vmatprep.subr.bf16.mxu0 0
        %9159 = vmatpush1.bf16.msra.mxu0 %v8375
        %9160 = vmatprep.subr.bf16.mxu0 0
        %9161 = vmatpush1.bf16.msra.mxu0 %v8372
        %9162 = vmatprep.subr.bf16.mxu0 0
        %9163 = vmatpush1.bf16.msra.mxu0 %v8369
        %9164 = vmatprep.subr.bf16.mxu0 0
        %9165 = vmatpush1.bf16.msra.mxu0 %v8366
        %9166 = vmatprep.subr.bf16.mxu0 0
        %9167 = vmatpush1.bf16.msra.mxu0 %v8363
        %9168 = vmatprep.subr.bf16.mxu0 0
        %9169 = vmatpush1.bf16.msra.mxu0 %v8360
        %9170 = vmatprep.subr.bf16.mxu0 0
        %9171 = vmatpush1.bf16.msra.mxu0 %v8357
        %9172 = vmatprep.subr.bf16.mxu0 0
        %9173 = vmatpush1.bf16.msra.mxu0 %v8354
        %9174 = vmatprep.subr.bf16.mxu0 0
        %9175 = vmatpush2.bf16.msra.mxu0 %v8399
        %9176 = vmatprep.subr.bf16.mxu0 0
        %9177 = vmatpush2.bf16.msra.mxu0 %v8396
        %9178 = vmatprep.subr.bf16.mxu0 0
        %9179 = vmatpush2.bf16.msra.mxu0 %v8393
        %9180 = vmatprep.subr.bf16.mxu0 0
        %9181 = vmatpush2.bf16.msra.mxu0 %v8390
        %9182 = vmatprep.subr.bf16.mxu0 0
        %9183 = vmatpush2.bf16.msra.mxu0 %v8387
        %9184 = vmatprep.subr.bf16.mxu0 0
        %9185 = vmatpush2.bf16.msra.mxu0 %v8384
        %9186 = vmatprep.subr.bf16.mxu0 0
        %9187 = vmatpush2.bf16.msra.mxu0 %v8381
        %9188 = vmatprep.subr.bf16.mxu0 0
        %9189 = vmatpush2.bf16.msra.mxu0 %v8378
        %9190 = vmatprep.mubr.bf16.mxu0 %v6885
        %9191 = vmatmul.mubr.bf16.gmra.mxu0 %v6884
        %v9192 = vpop.f32.mrf.mxu0
        %v9193 = vadd.f32 %v9153, %v9192
        %v9194 = vpop.f32.mrf.mxu0
        %v9195 = vpop.f32.mrf.mxu0
        %v9196 = vpop.f32.mrf.mxu0
        %9197 = vdwg.mxu0
        %9198 = vmatprep.subr.bf16.mxu0 0
        %9199 = vmatpush1.bf16.msra.mxu0 %v8423
        %9200 = vmatprep.subr.bf16.mxu0 0
        %9201 = vmatpush1.bf16.msra.mxu0 %v8420
        %9202 = vmatprep.subr.bf16.mxu0 0
        %9203 = vmatpush1.bf16.msra.mxu0 %v8417
        %9204 = vmatprep.subr.bf16.mxu0 0
        %9205 = vmatpush1.bf16.msra.mxu0 %v8414
        %9206 = vmatprep.subr.bf16.mxu0 0
        %9207 = vmatpush1.bf16.msra.mxu0 %v8411
        %9208 = vmatprep.subr.bf16.mxu0 0
        %9209 = vmatpush1.bf16.msra.mxu0 %v8408
        %9210 = vmatprep.subr.bf16.mxu0 0
        %9211 = vmatpush1.bf16.msra.mxu0 %v8405
        %9212 = vmatprep.subr.bf16.mxu0 0
        %9213 = vmatpush1.bf16.msra.mxu0 %v8402
        %9214 = vmatprep.subr.bf16.mxu0 0
        %9215 = vmatpush2.bf16.msra.mxu0 %v8447
        %9216 = vmatprep.subr.bf16.mxu0 0
        %9217 = vmatpush2.bf16.msra.mxu0 %v8444
        %9218 = vmatprep.subr.bf16.mxu0 0
        %9219 = vmatpush2.bf16.msra.mxu0 %v8441
        %9220 = vmatprep.subr.bf16.mxu0 0
        %9221 = vmatpush2.bf16.msra.mxu0 %v8438
        %9222 = vmatprep.subr.bf16.mxu0 0
        %9223 = vmatpush2.bf16.msra.mxu0 %v8435
        %9224 = vmatprep.subr.bf16.mxu0 0
        %9225 = vmatpush2.bf16.msra.mxu0 %v8432
        %9226 = vmatprep.subr.bf16.mxu0 0
        %9227 = vmatpush2.bf16.msra.mxu0 %v8429
        %9228 = vmatprep.subr.bf16.mxu0 0
        %9229 = vmatpush2.bf16.msra.mxu0 %v8426
        %9230 = vmatprep.mubr.bf16.mxu0 %v6887
        %9231 = vmatmul.mubr.bf16.gmra.mxu0 %v6886
        %v9232 = vpop.f32.mrf.mxu0
        %v9233 = vadd.f32 %v9193, %v9232
        %v9234 = vpop.f32.mrf.mxu0
        %v9235 = vpop.f32.mrf.mxu0
        %v9236 = vpop.f32.mrf.mxu0
        %9237 = vdwg.mxu0
        %9238 = vmatprep.subr.bf16.mxu0 0
        %9239 = vmatpush1.bf16.msra.mxu0 %v8471
        %9240 = vmatprep.subr.bf16.mxu0 0
        %9241 = vmatpush1.bf16.msra.mxu0 %v8468
        %9242 = vmatprep.subr.bf16.mxu0 0
        %9243 = vmatpush1.bf16.msra.mxu0 %v8465
        %9244 = vmatprep.subr.bf16.mxu0 0
        %9245 = vmatpush1.bf16.msra.mxu0 %v8462
        %9246 = vmatprep.subr.bf16.mxu0 0
        %9247 = vmatpush1.bf16.msra.mxu0 %v8459
        %9248 = vmatprep.subr.bf16.mxu0 0
        %9249 = vmatpush1.bf16.msra.mxu0 %v8456
        %9250 = vmatprep.subr.bf16.mxu0 0
        %9251 = vmatpush1.bf16.msra.mxu0 %v8453
        %9252 = vmatprep.subr.bf16.mxu0 0
        %9253 = vmatpush1.bf16.msra.mxu0 %v8450
        %9254 = vmatprep.subr.bf16.mxu0 0
        %9255 = vmatpush2.bf16.msra.mxu0 %v8495
        %9256 = vmatprep.subr.bf16.mxu0 0
        %9257 = vmatpush2.bf16.msra.mxu0 %v8492
        %9258 = vmatprep.subr.bf16.mxu0 0
        %9259 = vmatpush2.bf16.msra.mxu0 %v8489
        %9260 = vmatprep.subr.bf16.mxu0 0
        %9261 = vmatpush2.bf16.msra.mxu0 %v8486
        %9262 = vmatprep.subr.bf16.mxu0 0
        %9263 = vmatpush2.bf16.msra.mxu0 %v8483
        %9264 = vmatprep.subr.bf16.mxu0 0
        %9265 = vmatpush2.bf16.msra.mxu0 %v8480
        %9266 = vmatprep.subr.bf16.mxu0 0
        %9267 = vmatpush2.bf16.msra.mxu0 %v8477
        %9268 = vmatprep.subr.bf16.mxu0 0
        %9269 = vmatpush2.bf16.msra.mxu0 %v8474
        %9270 = vmatprep.mubr.bf16.mxu0 %v6889
        %9271 = vmatmul.mubr.bf16.gmra.mxu0 %v6888
        %v9272 = vpop.f32.mrf.mxu0
        %v9273 = vadd.f32 %v9233, %v9272
        %v9274 = vpop.f32.mrf.mxu0
        %v9275 = vpop.f32.mrf.mxu0
        %v9276 = vpop.f32.mrf.mxu0
        %9277 = vdwg.mxu0
        %9278 = vmatprep.subr.bf16.mxu0 0
        %9279 = vmatpush1.bf16.msra.mxu0 %v8519
        %9280 = vmatprep.subr.bf16.mxu0 0
        %9281 = vmatpush1.bf16.msra.mxu0 %v8516
        %9282 = vmatprep.subr.bf16.mxu0 0
        %9283 = vmatpush1.bf16.msra.mxu0 %v8513
        %9284 = vmatprep.subr.bf16.mxu0 0
        %9285 = vmatpush1.bf16.msra.mxu0 %v8510
        %9286 = vmatprep.subr.bf16.mxu0 0
        %9287 = vmatpush1.bf16.msra.mxu0 %v8507
        %9288 = vmatprep.subr.bf16.mxu0 0
        %9289 = vmatpush1.bf16.msra.mxu0 %v8504
        %9290 = vmatprep.subr.bf16.mxu0 0
        %9291 = vmatpush1.bf16.msra.mxu0 %v8501
        %9292 = vmatprep.subr.bf16.mxu0 0
        %9293 = vmatpush1.bf16.msra.mxu0 %v8498
        %9294 = vmatprep.subr.bf16.mxu0 0
        %9295 = vmatpush2.bf16.msra.mxu0 %v8543
        %9296 = vmatprep.subr.bf16.mxu0 0
        %9297 = vmatpush2.bf16.msra.mxu0 %v8540
        %9298 = vmatprep.subr.bf16.mxu0 0
        %9299 = vmatpush2.bf16.msra.mxu0 %v8537
        %9300 = vmatprep.subr.bf16.mxu0 0
        %9301 = vmatpush2.bf16.msra.mxu0 %v8534
        %9302 = vmatprep.subr.bf16.mxu0 0
        %9303 = vmatpush2.bf16.msra.mxu0 %v8531
        %9304 = vmatprep.subr.bf16.mxu0 0
        %9305 = vmatpush2.bf16.msra.mxu0 %v8528
        %9306 = vmatprep.subr.bf16.mxu0 0
        %9307 = vmatpush2.bf16.msra.mxu0 %v8525
        %9308 = vmatprep.subr.bf16.mxu0 0
        %9309 = vmatpush2.bf16.msra.mxu0 %v8522
        %9310 = vmatprep.mubr.bf16.mxu0 %v6891
        %9311 = vmatmul.mubr.bf16.gmra.mxu0 %v6890
        %v9312 = vpop.f32.mrf.mxu0
        %v9313 = vadd.f32 %v9273, %v9312
        %v9314 = vpop.f32.mrf.mxu0
        %v9315 = vpop.f32.mrf.mxu0
        %v9316 = vpop.f32.mrf.mxu0
        %9317 = vdwg.mxu0
        %v9318 = vadd.f32 %v4511, %v9072
        %v9319 = vadd.f32 %v4512, %v9074
        %v9320 = vadd.f32 %v4513, %v9313
        %9321 = vst [vmem:[#allocation2] sm:$0xff] %v9318
        %9322 = vst [vmem:[#allocation2 + $0x8] sm:$0xff] %v9319
        %9323 = vst [vmem:[#allocation2 + $0x10] sm:$0xff] %v9320
        %p9324 = scmp.eq.s32.totalorder %s47, 3
        // Predicated region
        $region161: #{tpu_custom_call.1} parent=87 // pred_check
          %p9325 = pneg %p9324
        $region162: #{tpu_custom_call.1} parent=87 // pred_check_branch
          %9327 = sbr.rel (%p9325) target = $region164
        $region163: #{tpu_custom_call.1} parent=87 // pred_region
          %v9328 = vld [vmem:[#allocation24] sm:$0x7]
          %v9329 = vld [vmem:[#allocation26] sm:$0x7]
          %v9330 = vadd.f32 %v9318, %v9319
          %v9331 = vadd.f32 %v9330, %v9320
          %9332 = vadd.xlane.f32.xlu0 %v9331
          %v9333 = vpop.xlane.xlu0 %9332
          %v9334 = vmul.f32 %v9333, %v825
          %v9335 = vsub.f32 %v9318, %v9334
          %v9336 = vsub.f32 %v9319, %v9334
          %v9337 = vsub.f32 %v9320, %v9334
          %v9338 = vmul.f32 %v9335, %v9335
          %v9339 = vmul.f32 %v9336, %v9336
          %v9340 = vmul.f32 %v9337, %v9337
          %v9341 = vadd.f32 %v9338, %v9339
          %v9342 = vadd.f32 %v9341, %v9340
          %9343 = vadd.xlane.f32.xlu0 %v9342
          %v9344 = vpop.xlane.xlu0 %9343
          %v9345 = vmul.f32 %v9344, %v825
          %v9346 = vadd.f32 %v9345, 1e-05
          %v9347 = vrsqrt.pop %v9346
          %v9348 = vmul.f32 %v9335, %v9347
          %v9349 = vmul.f32 %v9336, %v9347
          %v9350 = vmul.f32 %v9337, %v9347
          %v9352 = vlaneseq
          %v9353 = vshrl.u32 %v9352, 7
          %v9354 = vsub.s32 0, %v9353
          %v9355 = vrot.slane %v9328, %v9354
          %v9356 = vlaneseq
          %v9357 = vshrl.u32 %v9356, 7
          %v9358 = vsub.s32 1, %v9357
          %v9359 = vrot.slane %v9328, %v9358
          %v9360 = vlaneseq
          %v9361 = vshrl.u32 %v9360, 7
          %v9362 = vsub.s32 2, %v9361
          %v9363 = vrot.slane %v9328, %v9362
          %v9367 = vmul.f32 %v9348, %v9355
          %v9368 = vmul.f32 %v9349, %v9359
          %v9369 = vmul.f32 %v9350, %v9363
          %v9371 = vlaneseq
          %v9372 = vshrl.u32 %v9371, 7
          %v9373 = vsub.s32 0, %v9372
          %v9374 = vrot.slane %v9329, %v9373
          %v9375 = vlaneseq
          %v9376 = vshrl.u32 %v9375, 7
          %v9377 = vsub.s32 1, %v9376
          %v9378 = vrot.slane %v9329, %v9377
          %v9379 = vlaneseq
          %v9380 = vshrl.u32 %v9379, 7
          %v9381 = vsub.s32 2, %v9380
          %v9382 = vrot.slane %v9329, %v9381
          %v9386 = vadd.f32 %v9367, %v9374
          %v9387 = vadd.f32 %v9368, %v9378
          %v9388 = vadd.f32 %v9369, %v9382
          %v9389 = vpack.c.bf16 %v9386, %v9386
          %v9390 = vpack.c.bf16 %v9387, %v9387
          %v9391 = vpack.c.bf16 %v9388, %v9388
          %v9392 = vld [vmem:[#allocation27] sm:$0xf]
          %v9393 = vld [vmem:[#allocation27 + $0x4] sm:$0xf]
          %v9394 = vld [vmem:[#allocation27 + $0x8] sm:$0xf]
          %v9395 = vld [vmem:[#allocation27 + $0xc] sm:$0xf]
          %v9396 = vld [vmem:[#allocation27 + $0x10] sm:$0xf]
          %v9397 = vld [vmem:[#allocation27 + $0x14] sm:$0xf]
          %v9398 = vld [vmem:[#allocation27 + $0x18] sm:$0xf]
          %v9399 = vld [vmem:[#allocation27 + $0x1c] sm:$0xf]
          %v9400 = vld [vmem:[#allocation27 + $0x20] sm:$0xf]
          %v9401 = vld [vmem:[#allocation27 + $0x24] sm:$0xf]
          %v9402 = vld [vmem:[#allocation27 + $0x28] sm:$0xf]
          %v9403 = vld [vmem:[#allocation27 + $0x2c] sm:$0xf]
          %v9404 = vld [vmem:[#allocation27 + $0x30] sm:$0xf]
          %v9405 = vld [vmem:[#allocation27 + $0x34] sm:$0xf]
          %v9406 = vld [vmem:[#allocation27 + $0x38] sm:$0xf]
          %v9407 = vld [vmem:[#allocation27 + $0x3c] sm:$0xf]
          %v9408 = vld [vmem:[#allocation27 + $0x40] sm:$0xf]
          %v9409 = vld [vmem:[#allocation27 + $0x44] sm:$0xf]
          %v9410 = vld [vmem:[#allocation27 + $0x48] sm:$0xf]
          %v9411 = vld [vmem:[#allocation27 + $0x4c] sm:$0xf]
          %v9412 = vld [vmem:[#allocation27 + $0x50] sm:$0xf]
          %v9413 = vld [vmem:[#allocation27 + $0x54] sm:$0xf]
          %v9414 = vld [vmem:[#allocation27 + $0x58] sm:$0xf]
          %v9415 = vld [vmem:[#allocation27 + $0x5c] sm:$0xf]
          %v9416 = vld [vmem:[#allocation27 + $0x60] sm:$0xf]
          %v9417 = vld [vmem:[#allocation27 + $0x64] sm:$0xf]
          %v9418 = vld [vmem:[#allocation27 + $0x68] sm:$0xf]
          %v9419 = vld [vmem:[#allocation27 + $0x6c] sm:$0xf]
          %v9420 = vld [vmem:[#allocation27 + $0x70] sm:$0xf]
          %v9421 = vld [vmem:[#allocation27 + $0x74] sm:$0xf]
          %v9422 = vld [vmem:[#allocation27 + $0x78] sm:$0xf]
          %v9423 = vld [vmem:[#allocation27 + $0x7c] sm:$0xf]
          %v9424 = vld [vmem:[#allocation27 + $0x80] sm:$0xf]
          %v9425 = vld [vmem:[#allocation27 + $0x84] sm:$0xf]
          %v9426 = vld [vmem:[#allocation27 + $0x88] sm:$0xf]
          %v9427 = vld [vmem:[#allocation27 + $0x8c] sm:$0xf]
          %v9428 = vld [vmem:[#allocation27 + $0x90] sm:$0xf]
          %v9429 = vld [vmem:[#allocation27 + $0x94] sm:$0xf]
          %v9430 = vld [vmem:[#allocation27 + $0x98] sm:$0xf]
          %v9431 = vld [vmem:[#allocation27 + $0x9c] sm:$0xf]
          %v9432 = vld [vmem:[#allocation27 + $0xa0] sm:$0xf]
          %v9433 = vld [vmem:[#allocation27 + $0xa4] sm:$0xf]
          %v9434 = vld [vmem:[#allocation27 + $0xa8] sm:$0xf]
          %v9435 = vld [vmem:[#allocation27 + $0xac] sm:$0xf]
          %v9436 = vld [vmem:[#allocation27 + $0xb0] sm:$0xf]
          %v9437 = vld [vmem:[#allocation27 + $0xb4] sm:$0xf]
          %v9438 = vld [vmem:[#allocation27 + $0xb8] sm:$0xf]
          %v9439 = vld [vmem:[#allocation27 + $0xbc] sm:$0xf]
          %v9440 = vld [vmem:[#allocation29] sm:$0x1]
          %v9442 = vlaneseq
          %v9443 = vshrl.u32 %v9442, 7
          %v9444 = vsub.s32 0, %v9443
          %v9445 = vrot.slane %v9440, %v9444
          %v9495 = vunpack.c.l.b16 %v9392
          %v9496 = vunpack.c.l.b16 %v9393
          %v9497 = vunpack.c.l.b16 %v9394
          %v9498 = vunpack.c.l.b16 %v9395
          %v9499 = vunpack.c.l.b16 %v9396
          %v9500 = vunpack.c.l.b16 %v9397
          %v9501 = vunpack.c.l.b16 %v9398
          %v9502 = vunpack.c.l.b16 %v9399
          %v9503 = vunpack.c.l.b16 %v9400
          %v9504 = vunpack.c.l.b16 %v9401
          %v9505 = vunpack.c.l.b16 %v9402
          %v9506 = vunpack.c.l.b16 %v9403
          %v9507 = vunpack.c.l.b16 %v9404
          %v9508 = vunpack.c.l.b16 %v9405
          %v9509 = vunpack.c.l.b16 %v9406
          %v9510 = vunpack.c.l.b16 %v9407
          %v9511 = vunpack.c.l.b16 %v9408
          %v9512 = vunpack.c.l.b16 %v9409
          %v9513 = vunpack.c.l.b16 %v9410
          %v9514 = vunpack.c.l.b16 %v9411
          %v9515 = vunpack.c.l.b16 %v9412
          %v9516 = vunpack.c.l.b16 %v9413
          %v9517 = vunpack.c.l.b16 %v9414
          %v9518 = vunpack.c.l.b16 %v9415
          %v9519 = vunpack.c.l.b16 %v9416
          %v9520 = vunpack.c.l.b16 %v9417
          %v9521 = vunpack.c.l.b16 %v9418
          %v9522 = vunpack.c.l.b16 %v9419
          %v9523 = vunpack.c.l.b16 %v9420
          %v9524 = vunpack.c.l.b16 %v9421
          %v9525 = vunpack.c.l.b16 %v9422
          %v9526 = vunpack.c.l.b16 %v9423
          %v9527 = vunpack.c.l.b16 %v9424
          %v9528 = vunpack.c.l.b16 %v9425
          %v9529 = vunpack.c.l.b16 %v9426
          %v9530 = vunpack.c.l.b16 %v9427
          %v9531 = vunpack.c.l.b16 %v9428
          %v9532 = vunpack.c.l.b16 %v9429
          %v9533 = vunpack.c.l.b16 %v9430
          %v9534 = vunpack.c.l.b16 %v9431
          %v9535 = vunpack.c.l.b16 %v9432
          %v9536 = vunpack.c.l.b16 %v9433
          %v9537 = vunpack.c.l.b16 %v9434
          %v9538 = vunpack.c.l.b16 %v9435
          %v9539 = vunpack.c.l.b16 %v9436
          %v9540 = vunpack.c.l.b16 %v9437
          %v9541 = vunpack.c.l.b16 %v9438
          %v9542 = vunpack.c.l.b16 %v9439
          %v9543 = vpack.c.b16 %v9496, %v9495
          %v9544 = vpack.c.b16 %v9498, %v9497
          %v9545 = vpack.c.b16 %v9500, %v9499
          %v9546 = vpack.c.b16 %v9502, %v9501
          %v9547 = vpack.c.b16 %v9504, %v9503
          %v9548 = vpack.c.b16 %v9506, %v9505
          %v9549 = vpack.c.b16 %v9508, %v9507
          %v9550 = vpack.c.b16 %v9510, %v9509
          %v9551 = vpack.c.b16 %v9512, %v9511
          %v9552 = vpack.c.b16 %v9514, %v9513
          %v9553 = vpack.c.b16 %v9516, %v9515
          %v9554 = vpack.c.b16 %v9518, %v9517
          %v9555 = vpack.c.b16 %v9520, %v9519
          %v9556 = vpack.c.b16 %v9522, %v9521
          %v9557 = vpack.c.b16 %v9524, %v9523
          %v9558 = vpack.c.b16 %v9526, %v9525
          %v9559 = vpack.c.b16 %v9528, %v9527
          %v9560 = vpack.c.b16 %v9530, %v9529
          %v9561 = vpack.c.b16 %v9532, %v9531
          %v9562 = vpack.c.b16 %v9534, %v9533
          %v9563 = vpack.c.b16 %v9536, %v9535
          %v9564 = vpack.c.b16 %v9538, %v9537
          %v9565 = vpack.c.b16 %v9540, %v9539
          %v9566 = vpack.c.b16 %v9542, %v9541
          %9591 = vmatprep.subr.bf16.mxu0 0
          %9592 = vmatpush1.bf16.msra.mxu0 %v9550
          %9593 = vmatprep.subr.bf16.mxu0 0
          %9594 = vmatpush1.bf16.msra.mxu0 %v9549
          %9595 = vmatprep.subr.bf16.mxu0 0
          %9596 = vmatpush1.bf16.msra.mxu0 %v9548
          %9597 = vmatprep.subr.bf16.mxu0 0
          %9598 = vmatpush1.bf16.msra.mxu0 %v9547
          %9599 = vmatprep.subr.bf16.mxu0 0
          %9600 = vmatpush1.bf16.msra.mxu0 %v9546
          %9601 = vmatprep.subr.bf16.mxu0 0
          %9602 = vmatpush1.bf16.msra.mxu0 %v9545
          %9603 = vmatprep.subr.bf16.mxu0 0
          %9604 = vmatpush1.bf16.msra.mxu0 %v9544
          %9605 = vmatprep.subr.bf16.mxu0 0
          %9606 = vmatpush1.bf16.msra.mxu0 %v9543
          %9607 = vmatprep.subr.bf16.mxu0 0
          %9608 = vmatpush2.bf16.msra.mxu0 %v9558
          %9609 = vmatprep.subr.bf16.mxu0 0
          %9610 = vmatpush2.bf16.msra.mxu0 %v9557
          %9611 = vmatprep.subr.bf16.mxu0 0
          %9612 = vmatpush2.bf16.msra.mxu0 %v9556
          %9613 = vmatprep.subr.bf16.mxu0 0
          %9614 = vmatpush2.bf16.msra.mxu0 %v9555
          %9615 = vmatprep.subr.bf16.mxu0 0
          %9616 = vmatpush2.bf16.msra.mxu0 %v9554
          %9617 = vmatprep.subr.bf16.mxu0 0
          %9618 = vmatpush2.bf16.msra.mxu0 %v9553
          %9619 = vmatprep.subr.bf16.mxu0 0
          %9620 = vmatpush2.bf16.msra.mxu0 %v9552
          %9621 = vmatprep.subr.bf16.mxu0 0
          %9622 = vmatpush2.bf16.msra.mxu0 %v9551
          %9623 = vmatprep.mubr.bf16.mxu0 %v9390
          %9624 = vmatmul.mubr.bf16.gmra.mxu0 %v9389
          %v9625 = vpop.f32.mrf.mxu0
          %v9626 = vadd.f32 %v9445, %v9625
          %v9627 = vpop.f32.mrf.mxu0
          %v9628 = vpop.f32.mrf.mxu0
          %v9629 = vpop.f32.mrf.mxu0
          %9630 = vdwg.mxu0
          %9631 = vmatprep.subr.bf16.mxu0 0
          %9632 = vmatpush1.bf16.msra.mxu0 %v9566
          %9633 = vmatprep.subr.bf16.mxu0 0
          %9634 = vmatpush1.bf16.msra.mxu0 %v9565
          %9635 = vmatprep.subr.bf16.mxu0 0
          %9636 = vmatpush1.bf16.msra.mxu0 %v9564
          %9637 = vmatprep.subr.bf16.mxu0 0
          %9638 = vmatpush1.bf16.msra.mxu0 %v9563
          %9639 = vmatprep.subr.bf16.mxu0 0
          %9640 = vmatpush1.bf16.msra.mxu0 %v9562
          %9641 = vmatprep.subr.bf16.mxu0 0
          %9642 = vmatpush1.bf16.msra.mxu0 %v9561
          %9643 = vmatprep.subr.bf16.mxu0 0
          %9644 = vmatpush1.bf16.msra.mxu0 %v9560
          %9645 = vmatprep.subr.bf16.mxu0 0
          %9646 = vmatpush1.bf16.msra.mxu0 %v9559
          %9647 = vmatprep.subr.bf16.mxu0 0
          %9648 = vmatpush2.bf16.msra.mxu0 0
          %9649 = vmatprep.subr.bf16.mxu0 0
          %9650 = vmatpush2.bf16.msra.mxu0 0
          %9651 = vmatprep.subr.bf16.mxu0 0
          %9652 = vmatpush2.bf16.msra.mxu0 0
          %9653 = vmatprep.subr.bf16.mxu0 0
          %9654 = vmatpush2.bf16.msra.mxu0 0
          %9655 = vmatprep.subr.bf16.mxu0 0
          %9656 = vmatpush2.bf16.msra.mxu0 0
          %9657 = vmatprep.subr.bf16.mxu0 0
          %9658 = vmatpush2.bf16.msra.mxu0 0
          %9659 = vmatprep.subr.bf16.mxu0 0
          %9660 = vmatpush2.bf16.msra.mxu0 0
          %9661 = vmatprep.subr.bf16.mxu0 0
          %9662 = vmatpush2.bf16.msra.mxu0 0
          %9663 = vmatprep.mubr.bf16.mxu0 0
          %9664 = vmatmul.mubr.bf16.gmra.mxu0 %v9391
          %v9665 = vpop.f32.mrf.mxu0
          %v9666 = vadd.f32 %v9626, %v9665
          %v9667 = vpop.f32.mrf.mxu0
          %v9668 = vpop.f32.mrf.mxu0
          %v9669 = vpop.f32.mrf.mxu0
          %9670 = vdwg.mxu0
          %9671 = vst [vmem:[%s800] sm:$0xff] %v9666
        $region164: #{tpu_custom_call.1} parent=87 // pred_fallthru
          _
        %s9672 = sand.u32 %s424, 1
        %s9673 = scalar_lea.sflag [#allocation5], %s9672
        %s9674 = sand.u32 %s424, 1
        %s9675 = smul.addr %s9674, 8
        %s9676 = scalar_lea.vmem [#allocation30], %s9675
        // Predicated region
        $region165: #{tpu_custom_call.1} parent=87 // pred_check
          %p9677 = pneg %p434
        $region166: #{tpu_custom_call.1} parent=87 // pred_check_branch
          %9679 = sbr.rel (%p9677) target = $region168
        $region167: #{tpu_custom_call.1} parent=87 // pred_region
          %s9681 = ssub.s32 128, 128
          %9682 = vsyncadd %s9673, %s9681
          %s9683 = smul.addr %s46, 128
          %s9684 = scalar_lea.hbm %s17, %s9683
          %s9686 = sshll.u32 %s9676, 4
          %s9687 = int_to_ptr.vmem [resolvable:$true] %s9686
          %9689 = dma.vmem_to_hbm [thread:$0]  %s9687, 128, %s9684, %s9673
        $region168: #{tpu_custom_call.1} parent=87 // pred_fallthru
          _
      $region88: #{tpu_custom_call.1} parent=5 // pred_fallthru
        _
      %p9690 = scmp.le.s32.totalorder 2, %s37
      // Predicated region
      $region169: #{tpu_custom_call.1} parent=5 // pred_check
        %p9691 = pneg %p9690
      $region170: #{tpu_custom_call.1} parent=5 // pred_check_branch
        %9693 = sbr.rel (%p9691) target = $region172
      $region171: #{tpu_custom_call.1} parent=5 // pred_region
        %s9694 = ssub.s32 %s37, 2
        // Predicated region
        $region173: #{tpu_custom_call.1} parent=171 // pred_check
          %p9695 = pneg %p440
        $region174: #{tpu_custom_call.1} parent=171 // pred_check_branch
          %9697 = sbr.rel (%p9695) target = $region176
        $region175: #{tpu_custom_call.1} parent=171 // pred_region
          %s9698 = sand.u32 %s425, 1
          %s9699 = scalar_lea.sflag [#allocation5], %s9698
          %s9700 = sand.u32 %s425, 1
          %s9701 = smul.addr %s9700, 8
          %s9702 = scalar_lea.vmem [#allocation30], %s9701
          %9703 = dma.done %s9699, 128
        $region176: #{tpu_custom_call.1} parent=171 // pred_fallthru
          _
      $region172: #{tpu_custom_call.1} parent=5 // pred_fallthru
        _
    $region6: #{tpu_custom_call.1} parent=1 // loop_footer
      %s41 = sadd.s32 1, %s37
    $region7: #{tpu_custom_call.1} parent=1 // loop_footer_branch
      %36 = sbr.rel target = $region3
    $region8: #{tpu_custom_call.1} parent=1 // loop_exit
      _
    %9704 = vsyncpa [#allocation4], 1
    %s9705 = scalar_lea.sflag [#allocation4], 1
    %9706 = vsyncpa %s9705, 1
    %9707 = vsyncpa [#allocation7], 1
    %9708 = vsyncpa [#allocation10], 1
    %9709 = vsyncpa [#allocation13], 1
    %9710 = vsyncpa [#allocation16], 1
    %9711 = vsyncpa [#allocation19], 1
    %9712 = vsyncpa [#allocation22], 1
    %9713 = vsyncpa [#allocation25], 1
    %9714 = vsyncpa [#allocation28], 1
    %9715 = vsyncpa [#allocation5], 1
    %s9716 = scalar_lea.sflag [#allocation5], 1
    %9717 = vsyncpa %s9716, 1

</llo_original>
